<compile_context>
chip_gen: v5e
topology: v5e:2x2
jax: 0.10.0
libtpu: 0.0.40
codegen_flags: <defaults>
</compile_context>

<pallas_src>
import functools

import jax
import jax.numpy as jnp
import numpy as np
from jax.experimental import pallas as pl
from jax.experimental.pallas import tpu as pltpu


def _round_up(x, m):
    return (x + m - 1) // m * m


def _is_pow2(n):
    return n > 0 and (n & (n - 1)) == 0


def _resnet_kernel(x_ref, w1_ref, b1_ref, w2_ref, b2_ref, sbias_ref, out_ref,
                   *, D, H, W, M, B, k1, k2, CIP, C1P, C2P):
    L = B * M                 # lane width: B stacked (D,H,W) volumes
    HW = H * W
    SMAX = max(CIP, C1P)

    # ---- lane-coordinate maps (built once, shared by both convs) ----------------
    g_idx = jax.lax.broadcasted_iota(jnp.int32, (SMAX, L), 1)

    def _mod(a, n):
        return (a & (n - 1)) if _is_pow2(n) else (a % n)

    def _div(a, n):
        return (a >> (n.bit_length() - 1)) if _is_pow2(n) else (a // n)

    m_idx = _mod(g_idx, M)            # flat spatial index within one volume
    w_idx = _mod(m_idx, W)
    h_idx = _mod(_div(m_idx, W), H)

    # ---- per-axis boundary masks, hoisted & reused across both convs ------------
    mask_cache = {}

    def axis_masks(k):
        if k in mask_cache:
            return mask_cache[k]
        p = (k - 1) // 2

        def bound(coord, o, lim, scale=1):
            # One-sided check is exact: the other side is always satisfied.
            if o == 0:
                return None                      # center tap: always in bounds
            if o < 0:
                return coord >= (-o) * scale
            return coord < (lim - o) * scale

        d_ok = [bound(m_idx, kk - p, D, HW) for kk in range(k)]
        h_ok = [bound(h_idx, kk - p, H) for kk in range(k)]
        w_ok = [bound(w_idx, kk - p, W) for kk in range(k)]
        mask_cache[k] = (d_ok, h_ok, w_ok)
        return mask_cache[k]

    def combine(a, b):
        if a is None:
            return b
        if b is None:
            return a
        return a & b

    def conv_same(src, w_ref, b_ref, k, cin_p):
        """'same' zero-padded 3-D conv. src: (cin_p, L) f32 -> (cout_p, L) f32.
        One small accumulating MXU matmul per tap; tap windows are pltpu.roll's of
        src masked at volume boundaries (so stacked volumes never mix)."""
        p = (k - 1) // 2
        d_ok, h_ok, w_ok = axis_masks(k)
        acc = None
        t = 0
        for kd in range(k):
            dd = kd - p
            for kh in range(k):
                dh = kh - p
                m_dh = combine(d_ok[kd], h_ok[kh])
                for kw in range(k):
                    dw = kw - p
                    off = dd * HW + dh * W + dw
                    # win[g] = src[g + off]  (wrap lanes are masked below)
                    win = src if off == 0 else pltpu.roll(src, (-off) % L, axis=1)
                    valid = combine(m_dh, w_ok[kw])
                    if valid is not None:
                        vm = valid if cin_p == SMAX else valid[:cin_p, :]
                        win = jnp.where(vm, win, 0.0)
                    part = jnp.dot(w_ref[t], win,
                                   preferred_element_type=jnp.float32)
                    acc = part if acc is None else acc + part
                    t += 1
        return acc + b_ref[...]

    x_val = x_ref[...]                                                  # (CIP, L)
    hid = jnp.maximum(conv_same(x_val, w1_ref, b1_ref, k1, CIP), 0.0)   # (C1P, L)
    y = conv_same(hid, w2_ref, b2_ref, k2, C1P)                         # (C2P, L)

    # residual: 0.001 * bias * y + x_skip ; padded channel rows of both are zero,
    # store is a full unmasked (C2P, L) block.
    x_res = x_val if C2P == CIP else x_val[:C2P, :]
    out_ref[...] = (0.001 * sbias_ref[0]) * y + x_res


def resnet_forward(x, w1, b1, w2, b2, res_bias, *, k1, k2, batch_per_step=None):
    """x: (N, D, H, W, C_in) f32; w*: (k,k,k,Cin,Cout) DHWIO; b*: (Cout,) or (1,Cout).
    Returns (N, D, H, W, C_out) = 0.001*res_bias*conv2(relu(conv1(x))) + x."""
    N, D, H, W, c_in = x.shape
    c_hid = w1.shape[-1]
    c_out = w2.shape[-1]
    assert c_out == c_in, "residual add requires out_channels == in_channels"
    assert k1 % 2 == 1 and k2 % 2 == 1, "'same' padding implemented for odd kernels"

    M = D * H * W
    CIP = _round_up(c_in, 8)          # input-channel sublane pad
    C1P = _round_up(c_hid, 8)         # hidden-channel sublane pad
    C2P = _round_up(c_out, 8)         # output-channel sublane pad (unmasked stores)
    assert C2P == CIP                 # follows from c_out == c_in

    # Stack B batch elements on the lane axis per grid step (amortizes per-step
    # overhead); cap the stacked block size so it stays a small VMEM tile.
    if batch_per_step is None:
        B = 1
        for cand in (8, 4, 2):
            if N % cand == 0 and cand * M * max(CIP, C1P) * 4 <= (1 << 22):
                B = cand
                break
    else:
        B = batch_per_step
    assert N % B == 0
    G = N // B
    L = B * M

    # ---- pure layout glue: channels-first, lane-dense flattened spatial ---------
    x_cf = jnp.transpose(x, (0, 4, 1, 2, 3)).reshape(N, c_in, M)
    x_cf = jnp.pad(x_cf, ((0, 0), (0, CIP - c_in), (0, 0)))             # (N, CIP, M)
    x_cf = x_cf.reshape(G, B, CIP, M).transpose(0, 2, 1, 3).reshape(G, CIP, L)

    # weights: (k,k,k,Cin,Cout) -> per-tap (k^3, Cout_pad, Cin_pad)
    w1_r = jnp.transpose(w1, (0, 1, 2, 4, 3)).reshape(k1 ** 3, c_hid, c_in)
    w1_r = jnp.pad(w1_r, ((0, 0), (0, C1P - c_hid), (0, CIP - c_in)))
    w2_r = jnp.transpose(w2, (0, 1, 2, 4, 3)).reshape(k2 ** 3, c_out, c_hid)
    w2_r = jnp.pad(w2_r, ((0, 0), (0, C2P - c_out), (0, C1P - c_hid)))

    b1_c = jnp.pad(b1.reshape(-1).astype(jnp.float32), (0, C1P - c_hid)).reshape(C1P, 1)
    b2_c = jnp.pad(b2.reshape(-1).astype(jnp.float32), (0, C2P - c_out)).reshape(C2P, 1)

    kernel = functools.partial(
        _resnet_kernel, D=D, H=H, W=W, M=M, B=B, k1=k1, k2=k2,
        CIP=CIP, C1P=C1P, C2P=C2P)

    out_cf = pl.pallas_call(
        kernel,
        out_shape=jax.ShapeDtypeStruct((G, C2P, L), jnp.float32),
        grid_spec=pltpu.PrefetchScalarGridSpec(
            num_scalar_prefetch=0,
            grid=(G,),                                   # B batch elements per step
            in_specs=[
                pl.BlockSpec((None, CIP, L), lambda g: (g, 0, 0)),
                pl.BlockSpec((k1 ** 3, C1P, CIP), lambda g: (0, 0, 0)),
                pl.BlockSpec((C1P, 1), lambda g: (0, 0)),
                pl.BlockSpec((k2 ** 3, C2P, C1P), lambda g: (0, 0, 0)),
                pl.BlockSpec((C2P, 1), lambda g: (0, 0)),
                pl.BlockSpec(memory_space=pltpu.MemorySpace.SMEM),   # residual scale
            ],
            out_specs=pl.BlockSpec((None, C2P, L), lambda g: (g, 0, 0)),
        ),
        compiler_params=pltpu.CompilerParams(
            dimension_semantics=("parallel",)),          # grid steps are independent
    )(x_cf, w1_r, b1_c, w2_r, b2_c, res_bias.astype(jnp.float32))

    out = out_cf.reshape(G, C2P, B, M).transpose(0, 2, 1, 3)
    out = out.reshape(N, C2P, D, H, W)[:, :c_out]
    return jnp.transpose(out, (0, 2, 3, 4, 1))


def ref_forward(x, w1, b1, w2, b2, res_bias):
    """Pure-JAX reference (lax conv) for correctness checking."""
    dn = ('NDHWC', 'DHWIO', 'NDHWC')
    h = jax.lax.conv_general_dilated(x, w1, (1, 1, 1), 'SAME', dimension_numbers=dn)
    h = jax.nn.relu(h + b1.reshape(1, 1, 1, 1, -1))
    y = jax.lax.conv_general_dilated(h, w2, (1, 1, 1), 'SAME', dimension_numbers=dn)
    y = y + b2.reshape(1, 1, 1, 1, -1)
    return 0.001 * res_bias[0] * y + x


if __name__ == "__main__":
    # Module config: ResNet(in_channels=4, hidden_channels=8, out_channels=4,
    #                       kernel_size_1=3, kernel_size_2=3, bias=True)
    N, D, H, W = 2, 8, 8, 8
    c_in, c_hid, c_out = 4, 8, 4          # out_channels == in_channels for the residual
    k1, k2 = 3, 3

    key = jax.random.PRNGKey(0)
    kx, kw1, kb1, kw2, kb2, kbias = jax.random.split(key, 6)

    x = jax.random.normal(kx, (N, D, H, W, c_in), dtype=jnp.float32)
    w1 = jax.random.normal(kw1, (k1, k1, k1, c_in, c_hid), jnp.float32) / np.sqrt(c_in * k1 ** 3)
    b1 = jax.random.normal(kb1, (c_hid,), jnp.float32) * 0.01
    w2 = jax.random.normal(kw2, (k2, k2, k2, c_hid, c_out), jnp.float32) / np.sqrt(c_hid * k2 ** 3)
    b2 = jax.random.normal(kb2, (c_out,), jnp.float32) * 0.01
    res_bias = jax.random.normal(kbias, (1,), jnp.float32) * 0.1 + 1.0   # torch.randn(1)*0.1+1.0

    out = resnet_forward(x, w1, b1, w2, b2, res_bias, k1=k1, k2=k2)
    out = jax.block_until_ready(out)

    ref = jax.block_until_ready(ref_forward(x, w1, b1, w2, b2, res_bias))
    np.testing.assert_allclose(np.asarray(out), np.asarray(ref), rtol=1e-3, atol=1e-3)

    print("KERNEL_OK")
</pallas_src>

<mosaic_0001>
module attributes {stable_mosaic.version = 11 : i64} {
  func.func @_resnet_kernel(%arg0: i32, %arg1: memref<1x8x1024xf32, #tpu.memory_space<vmem>>, %arg2: memref<27x8x8xf32, #tpu.memory_space<vmem>>, %arg3: memref<8x1xf32, #tpu.memory_space<vmem>>, %arg4: memref<27x8x8xf32, #tpu.memory_space<vmem>>, %arg5: memref<8x1xf32, #tpu.memory_space<vmem>>, %arg6: memref<1xf32, #tpu.memory_space<smem>>, %arg7: memref<1x8x1024xf32, #tpu.memory_space<vmem>>) attributes {dimension_semantics = [#tpu.dimension_semantics<parallel>], iteration_bounds = array<i64: 1>, scalar_prefetch = 0 : i64, scratch_operands = 0 : i64, tpu.core_type = #tpu.core_type<tc>, window_params = [{transform_indices = @transform_0, window_bounds = array<i64: 1, 8, 1024>}, {pipeline_mode = #tpu.pipeline_mode<synchronous>, transform_indices = @transform_1, window_bounds = array<i64: 27, 8, 8>}, {pipeline_mode = #tpu.pipeline_mode<synchronous>, transform_indices = @transform_2, window_bounds = array<i64: 8, 1>}, {pipeline_mode = #tpu.pipeline_mode<synchronous>, transform_indices = @transform_3, window_bounds = array<i64: 27, 8, 8>}, {pipeline_mode = #tpu.pipeline_mode<synchronous>, transform_indices = @transform_4, window_bounds = array<i64: 8, 1>}, {transform_indices = @transform_5, window_bounds = array<i64: 1>}, {transform_indices = @transform_6, window_bounds = array<i64: 1, 8, 1024>}]} {
    %0 = tpu.iota {dimensions = array<i32: 1>} : vector<8x1024xi32>
    %c511_i32 = arith.constant 511 : i32
    %1 = vector.broadcast %c511_i32 : i32 to vector<8x1024xi32>
    %2 = arith.andi %0, %1 : vector<8x1024xi32>
    %c7_i32 = arith.constant 7 : i32
    %3 = vector.broadcast %c7_i32 : i32 to vector<8x1024xi32>
    %4 = arith.andi %2, %3 : vector<8x1024xi32>
    %c3_i32 = arith.constant 3 : i32
    %5 = vector.broadcast %c3_i32 : i32 to vector<8x1024xi32>
    %6 = arith.shrsi %2, %5 : vector<8x1024xi32>
    %c7_i32_0 = arith.constant 7 : i32
    %7 = vector.broadcast %c7_i32_0 : i32 to vector<8x1024xi32>
    %8 = arith.andi %6, %7 : vector<8x1024xi32>
    %c0 = arith.constant 0 : index
    %c0_1 = arith.constant 0 : index
    %c0_2 = arith.constant 0 : index
    %9 = vector.load %arg1[%c0, %c0_1, %c0_2] : memref<1x8x1024xf32, #tpu.memory_space<vmem>>, vector<1x8x1024xf32>
    %10 = vector.shape_cast %9 : vector<1x8x1024xf32> to vector<8x1024xf32>
    %c64_i32 = arith.constant 64 : i32
    %11 = vector.broadcast %c64_i32 : i32 to vector<8x1024xi32>
    %12 = arith.cmpi sge, %2, %11 : vector<8x1024xi32>
    %c448_i32 = arith.constant 448 : i32
    %13 = vector.broadcast %c448_i32 : i32 to vector<8x1024xi32>
    %14 = arith.cmpi slt, %2, %13 : vector<8x1024xi32>
    %c1_i32 = arith.constant 1 : i32
    %15 = vector.broadcast %c1_i32 : i32 to vector<8x1024xi32>
    %16 = arith.cmpi sge, %8, %15 : vector<8x1024xi32>
    %c7_i32_3 = arith.constant 7 : i32
    %17 = vector.broadcast %c7_i32_3 : i32 to vector<8x1024xi32>
    %18 = arith.cmpi slt, %8, %17 : vector<8x1024xi32>
    %c1_i32_4 = arith.constant 1 : i32
    %19 = vector.broadcast %c1_i32_4 : i32 to vector<8x1024xi32>
    %20 = arith.cmpi sge, %4, %19 : vector<8x1024xi32>
    %c7_i32_5 = arith.constant 7 : i32
    %21 = vector.broadcast %c7_i32_5 : i32 to vector<8x1024xi32>
    %22 = arith.cmpi slt, %4, %21 : vector<8x1024xi32>
    %23 = arith.andi %12, %16 : vector<8x1024xi1>
    %c73_i32 = arith.constant 73 : i32
    %24 = tpu.dynamic_rotate %10 by %c73_i32 dim 1 : vector<8x1024xf32>, i32 -> vector<8x1024xf32>
    %25 = arith.andi %23, %20 : vector<8x1024xi1>
    %cst = arith.constant 0.000000e+00 : f32
    %26 = vector.broadcast %cst : f32 to vector<8x1024xf32>
    %27 = arith.select %25, %24, %26 : vector<8x1024xi1>, vector<8x1024xf32>
    %c0_6 = arith.constant 0 : index
    %c0_7 = arith.constant 0 : index
    %c0_8 = arith.constant 0 : index
    %28 = vector.load %arg2[%c0_6, %c0_7, %c0_8] : memref<27x8x8xf32, #tpu.memory_space<vmem>>, vector<1x8x8xf32>
    %29 = vector.shape_cast %28 : vector<1x8x8xf32> to vector<8x8xf32>
    %cst_9 = arith.constant dense<0.000000e+00> : vector<8x1024xf32>
    %30 = tpu.matmul %29, %27, %cst_9 {dimension_numbers = #tpu.dot_dimension_numbers<[1], [0], [0], [1], [0, 0, 1, 1], [], []>} : vector<8x8xf32>, vector<8x1024xf32>, vector<8x1024xf32> -> vector<8x1024xf32>
    %c72_i32 = arith.constant 72 : i32
    %31 = tpu.dynamic_rotate %10 by %c72_i32 dim 1 : vector<8x1024xf32>, i32 -> vector<8x1024xf32>
    %cst_10 = arith.constant 0.000000e+00 : f32
    %32 = vector.broadcast %cst_10 : f32 to vector<8x1024xf32>
    %33 = arith.select %23, %31, %32 : vector<8x1024xi1>, vector<8x1024xf32>
    %c1 = arith.constant 1 : index
    %c0_11 = arith.constant 0 : index
    %c0_12 = arith.constant 0 : index
    %34 = vector.load %arg2[%c1, %c0_11, %c0_12] : memref<27x8x8xf32, #tpu.memory_space<vmem>>, vector<1x8x8xf32>
    %35 = vector.shape_cast %34 : vector<1x8x8xf32> to vector<8x8xf32>
    %cst_13 = arith.constant dense<0.000000e+00> : vector<8x1024xf32>
    %36 = tpu.matmul %35, %33, %cst_13 {dimension_numbers = #tpu.dot_dimension_numbers<[1], [0], [0], [1], [0, 0, 1, 1], [], []>} : vector<8x8xf32>, vector<8x1024xf32>, vector<8x1024xf32> -> vector<8x1024xf32>
    %37 = arith.addf %30, %36 : vector<8x1024xf32>
    %c71_i32 = arith.constant 71 : i32
    %38 = tpu.dynamic_rotate %10 by %c71_i32 dim 1 : vector<8x1024xf32>, i32 -> vector<8x1024xf32>
    %39 = arith.andi %23, %22 : vector<8x1024xi1>
    %cst_14 = arith.constant 0.000000e+00 : f32
    %40 = vector.broadcast %cst_14 : f32 to vector<8x1024xf32>
    %41 = arith.select %39, %38, %40 : vector<8x1024xi1>, vector<8x1024xf32>
    %c2 = arith.constant 2 : index
    %c0_15 = arith.constant 0 : index
    %c0_16 = arith.constant 0 : index
    %42 = vector.load %arg2[%c2, %c0_15, %c0_16] : memref<27x8x8xf32, #tpu.memory_space<vmem>>, vector<1x8x8xf32>
    %43 = vector.shape_cast %42 : vector<1x8x8xf32> to vector<8x8xf32>
    %cst_17 = arith.constant dense<0.000000e+00> : vector<8x1024xf32>
    %44 = tpu.matmul %43, %41, %cst_17 {dimension_numbers = #tpu.dot_dimension_numbers<[1], [0], [0], [1], [0, 0, 1, 1], [], []>} : vector<8x8xf32>, vector<8x1024xf32>, vector<8x1024xf32> -> vector<8x1024xf32>
    %45 = arith.addf %37, %44 : vector<8x1024xf32>
    %c65_i32 = arith.constant 65 : i32
    %46 = tpu.dynamic_rotate %10 by %c65_i32 dim 1 : vector<8x1024xf32>, i32 -> vector<8x1024xf32>
    %47 = arith.andi %12, %20 : vector<8x1024xi1>
    %cst_18 = arith.constant 0.000000e+00 : f32
    %48 = vector.broadcast %cst_18 : f32 to vector<8x1024xf32>
    %49 = arith.select %47, %46, %48 : vector<8x1024xi1>, vector<8x1024xf32>
    %c3 = arith.constant 3 : index
    %c0_19 = arith.constant 0 : index
    %c0_20 = arith.constant 0 : index
    %50 = vector.load %arg2[%c3, %c0_19, %c0_20] : memref<27x8x8xf32, #tpu.memory_space<vmem>>, vector<1x8x8xf32>
    %51 = vector.shape_cast %50 : vector<1x8x8xf32> to vector<8x8xf32>
    %cst_21 = arith.constant dense<0.000000e+00> : vector<8x1024xf32>
    %52 = tpu.matmul %51, %49, %cst_21 {dimension_numbers = #tpu.dot_dimension_numbers<[1], [0], [0], [1], [0, 0, 1, 1], [], []>} : vector<8x8xf32>, vector<8x1024xf32>, vector<8x1024xf32> -> vector<8x1024xf32>
    %53 = arith.addf %45, %52 : vector<8x1024xf32>
    %c64_i32_22 = arith.constant 64 : i32
    %54 = tpu.dynamic_rotate %10 by %c64_i32_22 dim 1 : vector<8x1024xf32>, i32 -> vector<8x1024xf32>
    %cst_23 = arith.constant 0.000000e+00 : f32
    %55 = vector.broadcast %cst_23 : f32 to vector<8x1024xf32>
    %56 = arith.select %12, %54, %55 : vector<8x1024xi1>, vector<8x1024xf32>
    %c4 = arith.constant 4 : index
    %c0_24 = arith.constant 0 : index
    %c0_25 = arith.constant 0 : index
    %57 = vector.load %arg2[%c4, %c0_24, %c0_25] : memref<27x8x8xf32, #tpu.memory_space<vmem>>, vector<1x8x8xf32>
    %58 = vector.shape_cast %57 : vector<1x8x8xf32> to vector<8x8xf32>
    %cst_26 = arith.constant dense<0.000000e+00> : vector<8x1024xf32>
    %59 = tpu.matmul %58, %56, %cst_26 {dimension_numbers = #tpu.dot_dimension_numbers<[1], [0], [0], [1], [0, 0, 1, 1], [], []>} : vector<8x8xf32>, vector<8x1024xf32>, vector<8x1024xf32> -> vector<8x1024xf32>
    %60 = arith.addf %53, %59 : vector<8x1024xf32>
    %c63_i32 = arith.constant 63 : i32
    %61 = tpu.dynamic_rotate %10 by %c63_i32 dim 1 : vector<8x1024xf32>, i32 -> vector<8x1024xf32>
    %62 = arith.andi %12, %22 : vector<8x1024xi1>
    %cst_27 = arith.constant 0.000000e+00 : f32
    %63 = vector.broadcast %cst_27 : f32 to vector<8x1024xf32>
    %64 = arith.select %62, %61, %63 : vector<8x1024xi1>, vector<8x1024xf32>
    %c5 = arith.constant 5 : index
    %c0_28 = arith.constant 0 : index
    %c0_29 = arith.constant 0 : index
    %65 = vector.load %arg2[%c5, %c0_28, %c0_29] : memref<27x8x8xf32, #tpu.memory_space<vmem>>, vector<1x8x8xf32>
    %66 = vector.shape_cast %65 : vector<1x8x8xf32> to vector<8x8xf32>
    %cst_30 = arith.constant dense<0.000000e+00> : vector<8x1024xf32>
    %67 = tpu.matmul %66, %64, %cst_30 {dimension_numbers = #tpu.dot_dimension_numbers<[1], [0], [0], [1], [0, 0, 1, 1], [], []>} : vector<8x8xf32>, vector<8x1024xf32>, vector<8x1024xf32> -> vector<8x1024xf32>
    %68 = arith.addf %60, %67 : vector<8x1024xf32>
    %69 = arith.andi %12, %18 : vector<8x1024xi1>
    %c57_i32 = arith.constant 57 : i32
    %70 = tpu.dynamic_rotate %10 by %c57_i32 dim 1 : vector<8x1024xf32>, i32 -> vector<8x1024xf32>
    %71 = arith.andi %69, %20 : vector<8x1024xi1>
    %cst_31 = arith.constant 0.000000e+00 : f32
    %72 = vector.broadcast %cst_31 : f32 to vector<8x1024xf32>
    %73 = arith.select %71, %70, %72 : vector<8x1024xi1>, vector<8x1024xf32>
    %c6 = arith.constant 6 : index
    %c0_32 = arith.constant 0 : index
    %c0_33 = arith.constant 0 : index
    %74 = vector.load %arg2[%c6, %c0_32, %c0_33] : memref<27x8x8xf32, #tpu.memory_space<vmem>>, vector<1x8x8xf32>
    %75 = vector.shape_cast %74 : vector<1x8x8xf32> to vector<8x8xf32>
    %cst_34 = arith.constant dense<0.000000e+00> : vector<8x1024xf32>
    %76 = tpu.matmul %75, %73, %cst_34 {dimension_numbers = #tpu.dot_dimension_numbers<[1], [0], [0], [1], [0, 0, 1, 1], [], []>} : vector<8x8xf32>, vector<8x1024xf32>, vector<8x1024xf32> -> vector<8x1024xf32>
    %77 = arith.addf %68, %76 : vector<8x1024xf32>
    %c56_i32 = arith.constant 56 : i32
    %78 = tpu.dynamic_rotate %10 by %c56_i32 dim 1 : vector<8x1024xf32>, i32 -> vector<8x1024xf32>
    %cst_35 = arith.constant 0.000000e+00 : f32
    %79 = vector.broadcast %cst_35 : f32 to vector<8x1024xf32>
    %80 = arith.select %69, %78, %79 : vector<8x1024xi1>, vector<8x1024xf32>
    %c7 = arith.constant 7 : index
    %c0_36 = arith.constant 0 : index
    %c0_37 = arith.constant 0 : index
    %81 = vector.load %arg2[%c7, %c0_36, %c0_37] : memref<27x8x8xf32, #tpu.memory_space<vmem>>, vector<1x8x8xf32>
    %82 = vector.shape_cast %81 : vector<1x8x8xf32> to vector<8x8xf32>
    %cst_38 = arith.constant dense<0.000000e+00> : vector<8x1024xf32>
    %83 = tpu.matmul %82, %80, %cst_38 {dimension_numbers = #tpu.dot_dimension_numbers<[1], [0], [0], [1], [0, 0, 1, 1], [], []>} : vector<8x8xf32>, vector<8x1024xf32>, vector<8x1024xf32> -> vector<8x1024xf32>
    %84 = arith.addf %77, %83 : vector<8x1024xf32>
    %c55_i32 = arith.constant 55 : i32
    %85 = tpu.dynamic_rotate %10 by %c55_i32 dim 1 : vector<8x1024xf32>, i32 -> vector<8x1024xf32>
    %86 = arith.andi %69, %22 : vector<8x1024xi1>
    %cst_39 = arith.constant 0.000000e+00 : f32
    %87 = vector.broadcast %cst_39 : f32 to vector<8x1024xf32>
    %88 = arith.select %86, %85, %87 : vector<8x1024xi1>, vector<8x1024xf32>
    %c8 = arith.constant 8 : index
    %c0_40 = arith.constant 0 : index
    %c0_41 = arith.constant 0 : index
    %89 = vector.load %arg2[%c8, %c0_40, %c0_41] : memref<27x8x8xf32, #tpu.memory_space<vmem>>, vector<1x8x8xf32>
    %90 = vector.shape_cast %89 : vector<1x8x8xf32> to vector<8x8xf32>
    %cst_42 = arith.constant dense<0.000000e+00> : vector<8x1024xf32>
    %91 = tpu.matmul %90, %88, %cst_42 {dimension_numbers = #tpu.dot_dimension_numbers<[1], [0], [0], [1], [0, 0, 1, 1], [], []>} : vector<8x8xf32>, vector<8x1024xf32>, vector<8x1024xf32> -> vector<8x1024xf32>
    %92 = arith.addf %84, %91 : vector<8x1024xf32>
    %c9_i32 = arith.constant 9 : i32
    %93 = tpu.dynamic_rotate %10 by %c9_i32 dim 1 : vector<8x1024xf32>, i32 -> vector<8x1024xf32>
    %94 = arith.andi %16, %20 : vector<8x1024xi1>
    %cst_43 = arith.constant 0.000000e+00 : f32
    %95 = vector.broadcast %cst_43 : f32 to vector<8x1024xf32>
    %96 = arith.select %94, %93, %95 : vector<8x1024xi1>, vector<8x1024xf32>
    %c9 = arith.constant 9 : index
    %c0_44 = arith.constant 0 : index
    %c0_45 = arith.constant 0 : index
    %97 = vector.load %arg2[%c9, %c0_44, %c0_45] : memref<27x8x8xf32, #tpu.memory_space<vmem>>, vector<1x8x8xf32>
    %98 = vector.shape_cast %97 : vector<1x8x8xf32> to vector<8x8xf32>
    %cst_46 = arith.constant dense<0.000000e+00> : vector<8x1024xf32>
    %99 = tpu.matmul %98, %96, %cst_46 {dimension_numbers = #tpu.dot_dimension_numbers<[1], [0], [0], [1], [0, 0, 1, 1], [], []>} : vector<8x8xf32>, vector<8x1024xf32>, vector<8x1024xf32> -> vector<8x1024xf32>
    %100 = arith.addf %92, %99 : vector<8x1024xf32>
    %c8_i32 = arith.constant 8 : i32
    %101 = tpu.dynamic_rotate %10 by %c8_i32 dim 1 : vector<8x1024xf32>, i32 -> vector<8x1024xf32>
    %cst_47 = arith.constant 0.000000e+00 : f32
    %102 = vector.broadcast %cst_47 : f32 to vector<8x1024xf32>
    %103 = arith.select %16, %101, %102 : vector<8x1024xi1>, vector<8x1024xf32>
    %c10 = arith.constant 10 : index
    %c0_48 = arith.constant 0 : index
    %c0_49 = arith.constant 0 : index
    %104 = vector.load %arg2[%c10, %c0_48, %c0_49] : memref<27x8x8xf32, #tpu.memory_space<vmem>>, vector<1x8x8xf32>
    %105 = vector.shape_cast %104 : vector<1x8x8xf32> to vector<8x8xf32>
    %cst_50 = arith.constant dense<0.000000e+00> : vector<8x1024xf32>
    %106 = tpu.matmul %105, %103, %cst_50 {dimension_numbers = #tpu.dot_dimension_numbers<[1], [0], [0], [1], [0, 0, 1, 1], [], []>} : vector<8x8xf32>, vector<8x1024xf32>, vector<8x1024xf32> -> vector<8x1024xf32>
    %107 = arith.addf %100, %106 : vector<8x1024xf32>
    %c7_i32_51 = arith.constant 7 : i32
    %108 = tpu.dynamic_rotate %10 by %c7_i32_51 dim 1 : vector<8x1024xf32>, i32 -> vector<8x1024xf32>
    %109 = arith.andi %16, %22 : vector<8x1024xi1>
    %cst_52 = arith.constant 0.000000e+00 : f32
    %110 = vector.broadcast %cst_52 : f32 to vector<8x1024xf32>
    %111 = arith.select %109, %108, %110 : vector<8x1024xi1>, vector<8x1024xf32>
    %c11 = arith.constant 11 : index
    %c0_53 = arith.constant 0 : index
    %c0_54 = arith.constant 0 : index
    %112 = vector.load %arg2[%c11, %c0_53, %c0_54] : memref<27x8x8xf32, #tpu.memory_space<vmem>>, vector<1x8x8xf32>
    %113 = vector.shape_cast %112 : vector<1x8x8xf32> to vector<8x8xf32>
    %cst_55 = arith.constant dense<0.000000e+00> : vector<8x1024xf32>
    %114 = tpu.matmul %113, %111, %cst_55 {dimension_numbers = #tpu.dot_dimension_numbers<[1], [0], [0], [1], [0, 0, 1, 1], [], []>} : vector<8x8xf32>, vector<8x1024xf32>, vector<8x1024xf32> -> vector<8x1024xf32>
    %115 = arith.addf %107, %114 : vector<8x1024xf32>
    %c1_i32_56 = arith.constant 1 : i32
    %116 = tpu.dynamic_rotate %10 by %c1_i32_56 dim 1 : vector<8x1024xf32>, i32 -> vector<8x1024xf32>
    %cst_57 = arith.constant 0.000000e+00 : f32
    %117 = vector.broadcast %cst_57 : f32 to vector<8x1024xf32>
    %118 = arith.select %20, %116, %117 : vector<8x1024xi1>, vector<8x1024xf32>
    %c12 = arith.constant 12 : index
    %c0_58 = arith.constant 0 : index
    %c0_59 = arith.constant 0 : index
    %119 = vector.load %arg2[%c12, %c0_58, %c0_59] : memref<27x8x8xf32, #tpu.memory_space<vmem>>, vector<1x8x8xf32>
    %120 = vector.shape_cast %119 : vector<1x8x8xf32> to vector<8x8xf32>
    %cst_60 = arith.constant dense<0.000000e+00> : vector<8x1024xf32>
    %121 = tpu.matmul %120, %118, %cst_60 {dimension_numbers = #tpu.dot_dimension_numbers<[1], [0], [0], [1], [0, 0, 1, 1], [], []>} : vector<8x8xf32>, vector<8x1024xf32>, vector<8x1024xf32> -> vector<8x1024xf32>
    %122 = arith.addf %115, %121 : vector<8x1024xf32>
    %c13 = arith.constant 13 : index
    %c0_61 = arith.constant 0 : index
    %c0_62 = arith.constant 0 : index
    %123 = vector.load %arg2[%c13, %c0_61, %c0_62] : memref<27x8x8xf32, #tpu.memory_space<vmem>>, vector<1x8x8xf32>
    %124 = vector.shape_cast %123 : vector<1x8x8xf32> to vector<8x8xf32>
    %cst_63 = arith.constant dense<0.000000e+00> : vector<8x1024xf32>
    %125 = tpu.matmul %124, %10, %cst_63 {dimension_numbers = #tpu.dot_dimension_numbers<[1], [0], [0], [1], [0, 0, 1, 1], [], []>} : vector<8x8xf32>, vector<8x1024xf32>, vector<8x1024xf32> -> vector<8x1024xf32>
    %126 = arith.addf %122, %125 : vector<8x1024xf32>
    %c1023_i32 = arith.constant 1023 : i32
    %127 = tpu.dynamic_rotate %10 by %c1023_i32 dim 1 : vector<8x1024xf32>, i32 -> vector<8x1024xf32>
    %cst_64 = arith.constant 0.000000e+00 : f32
    %128 = vector.broadcast %cst_64 : f32 to vector<8x1024xf32>
    %129 = arith.select %22, %127, %128 : vector<8x1024xi1>, vector<8x1024xf32>
    %c14 = arith.constant 14 : index
    %c0_65 = arith.constant 0 : index
    %c0_66 = arith.constant 0 : index
    %130 = vector.load %arg2[%c14, %c0_65, %c0_66] : memref<27x8x8xf32, #tpu.memory_space<vmem>>, vector<1x8x8xf32>
    %131 = vector.shape_cast %130 : vector<1x8x8xf32> to vector<8x8xf32>
    %cst_67 = arith.constant dense<0.000000e+00> : vector<8x1024xf32>
    %132 = tpu.matmul %131, %129, %cst_67 {dimension_numbers = #tpu.dot_dimension_numbers<[1], [0], [0], [1], [0, 0, 1, 1], [], []>} : vector<8x8xf32>, vector<8x1024xf32>, vector<8x1024xf32> -> vector<8x1024xf32>
    %133 = arith.addf %126, %132 : vector<8x1024xf32>
    %c1017_i32 = arith.constant 1017 : i32
    %134 = tpu.dynamic_rotate %10 by %c1017_i32 dim 1 : vector<8x1024xf32>, i32 -> vector<8x1024xf32>
    %135 = arith.andi %18, %20 : vector<8x1024xi1>
    %cst_68 = arith.constant 0.000000e+00 : f32
    %136 = vector.broadcast %cst_68 : f32 to vector<8x1024xf32>
    %137 = arith.select %135, %134, %136 : vector<8x1024xi1>, vector<8x1024xf32>
    %c15 = arith.constant 15 : index
    %c0_69 = arith.constant 0 : index
    %c0_70 = arith.constant 0 : index
    %138 = vector.load %arg2[%c15, %c0_69, %c0_70] : memref<27x8x8xf32, #tpu.memory_space<vmem>>, vector<1x8x8xf32>
    %139 = vector.shape_cast %138 : vector<1x8x8xf32> to vector<8x8xf32>
    %cst_71 = arith.constant dense<0.000000e+00> : vector<8x1024xf32>
    %140 = tpu.matmul %139, %137, %cst_71 {dimension_numbers = #tpu.dot_dimension_numbers<[1], [0], [0], [1], [0, 0, 1, 1], [], []>} : vector<8x8xf32>, vector<8x1024xf32>, vector<8x1024xf32> -> vector<8x1024xf32>
    %141 = arith.addf %133, %140 : vector<8x1024xf32>
    %c1016_i32 = arith.constant 1016 : i32
    %142 = tpu.dynamic_rotate %10 by %c1016_i32 dim 1 : vector<8x1024xf32>, i32 -> vector<8x1024xf32>
    %cst_72 = arith.constant 0.000000e+00 : f32
    %143 = vector.broadcast %cst_72 : f32 to vector<8x1024xf32>
    %144 = arith.select %18, %142, %143 : vector<8x1024xi1>, vector<8x1024xf32>
    %c16 = arith.constant 16 : index
    %c0_73 = arith.constant 0 : index
    %c0_74 = arith.constant 0 : index
    %145 = vector.load %arg2[%c16, %c0_73, %c0_74] : memref<27x8x8xf32, #tpu.memory_space<vmem>>, vector<1x8x8xf32>
    %146 = vector.shape_cast %145 : vector<1x8x8xf32> to vector<8x8xf32>
    %cst_75 = arith.constant dense<0.000000e+00> : vector<8x1024xf32>
    %147 = tpu.matmul %146, %144, %cst_75 {dimension_numbers = #tpu.dot_dimension_numbers<[1], [0], [0], [1], [0, 0, 1, 1], [], []>} : vector<8x8xf32>, vector<8x1024xf32>, vector<8x1024xf32> -> vector<8x1024xf32>
    %148 = arith.addf %141, %147 : vector<8x1024xf32>
    %c1015_i32 = arith.constant 1015 : i32
    %149 = tpu.dynamic_rotate %10 by %c1015_i32 dim 1 : vector<8x1024xf32>, i32 -> vector<8x1024xf32>
    %150 = arith.andi %18, %22 : vector<8x1024xi1>
    %cst_76 = arith.constant 0.000000e+00 : f32
    %151 = vector.broadcast %cst_76 : f32 to vector<8x1024xf32>
    %152 = arith.select %150, %149, %151 : vector<8x1024xi1>, vector<8x1024xf32>
    %c17 = arith.constant 17 : index
    %c0_77 = arith.constant 0 : index
    %c0_78 = arith.constant 0 : index
    %153 = vector.load %arg2[%c17, %c0_77, %c0_78] : memref<27x8x8xf32, #tpu.memory_space<vmem>>, vector<1x8x8xf32>
    %154 = vector.shape_cast %153 : vector<1x8x8xf32> to vector<8x8xf32>
    %cst_79 = arith.constant dense<0.000000e+00> : vector<8x1024xf32>
    %155 = tpu.matmul %154, %152, %cst_79 {dimension_numbers = #tpu.dot_dimension_numbers<[1], [0], [0], [1], [0, 0, 1, 1], [], []>} : vector<8x8xf32>, vector<8x1024xf32>, vector<8x1024xf32> -> vector<8x1024xf32>
    %156 = arith.addf %148, %155 : vector<8x1024xf32>
    %157 = arith.andi %14, %16 : vector<8x1024xi1>
    %c969_i32 = arith.constant 969 : i32
    %158 = tpu.dynamic_rotate %10 by %c969_i32 dim 1 : vector<8x1024xf32>, i32 -> vector<8x1024xf32>
    %159 = arith.andi %157, %20 : vector<8x1024xi1>
    %cst_80 = arith.constant 0.000000e+00 : f32
    %160 = vector.broadcast %cst_80 : f32 to vector<8x1024xf32>
    %161 = arith.select %159, %158, %160 : vector<8x1024xi1>, vector<8x1024xf32>
    %c18 = arith.constant 18 : index
    %c0_81 = arith.constant 0 : index
    %c0_82 = arith.constant 0 : index
    %162 = vector.load %arg2[%c18, %c0_81, %c0_82] : memref<27x8x8xf32, #tpu.memory_space<vmem>>, vector<1x8x8xf32>
    %163 = vector.shape_cast %162 : vector<1x8x8xf32> to vector<8x8xf32>
    %cst_83 = arith.constant dense<0.000000e+00> : vector<8x1024xf32>
    %164 = tpu.matmul %163, %161, %cst_83 {dimension_numbers = #tpu.dot_dimension_numbers<[1], [0], [0], [1], [0, 0, 1, 1], [], []>} : vector<8x8xf32>, vector<8x1024xf32>, vector<8x1024xf32> -> vector<8x1024xf32>
    %165 = arith.addf %156, %164 : vector<8x1024xf32>
    %c968_i32 = arith.constant 968 : i32
    %166 = tpu.dynamic_rotate %10 by %c968_i32 dim 1 : vector<8x1024xf32>, i32 -> vector<8x1024xf32>
    %cst_84 = arith.constant 0.000000e+00 : f32
    %167 = vector.broadcast %cst_84 : f32 to vector<8x1024xf32>
    %168 = arith.select %157, %166, %167 : vector<8x1024xi1>, vector<8x1024xf32>
    %c19 = arith.constant 19 : index
    %c0_85 = arith.constant 0 : index
    %c0_86 = arith.constant 0 : index
    %169 = vector.load %arg2[%c19, %c0_85, %c0_86] : memref<27x8x8xf32, #tpu.memory_space<vmem>>, vector<1x8x8xf32>
    %170 = vector.shape_cast %169 : vector<1x8x8xf32> to vector<8x8xf32>
    %cst_87 = arith.constant dense<0.000000e+00> : vector<8x1024xf32>
    %171 = tpu.matmul %170, %168, %cst_87 {dimension_numbers = #tpu.dot_dimension_numbers<[1], [0], [0], [1], [0, 0, 1, 1], [], []>} : vector<8x8xf32>, vector<8x1024xf32>, vector<8x1024xf32> -> vector<8x1024xf32>
    %172 = arith.addf %165, %171 : vector<8x1024xf32>
    %c967_i32 = arith.constant 967 : i32
    %173 = tpu.dynamic_rotate %10 by %c967_i32 dim 1 : vector<8x1024xf32>, i32 -> vector<8x1024xf32>
    %174 = arith.andi %157, %22 : vector<8x1024xi1>
    %cst_88 = arith.constant 0.000000e+00 : f32
    %175 = vector.broadcast %cst_88 : f32 to vector<8x1024xf32>
    %176 = arith.select %174, %173, %175 : vector<8x1024xi1>, vector<8x1024xf32>
    %c20 = arith.constant 20 : index
    %c0_89 = arith.constant 0 : index
    %c0_90 = arith.constant 0 : index
    %177 = vector.load %arg2[%c20, %c0_89, %c0_90] : memref<27x8x8xf32, #tpu.memory_space<vmem>>, vector<1x8x8xf32>
    %178 = vector.shape_cast %177 : vector<1x8x8xf32> to vector<8x8xf32>
    %cst_91 = arith.constant dense<0.000000e+00> : vector<8x1024xf32>
    %179 = tpu.matmul %178, %176, %cst_91 {dimension_numbers = #tpu.dot_dimension_numbers<[1], [0], [0], [1], [0, 0, 1, 1], [], []>} : vector<8x8xf32>, vector<8x1024xf32>, vector<8x1024xf32> -> vector<8x1024xf32>
    %180 = arith.addf %172, %179 : vector<8x1024xf32>
    %c961_i32 = arith.constant 961 : i32
    %181 = tpu.dynamic_rotate %10 by %c961_i32 dim 1 : vector<8x1024xf32>, i32 -> vector<8x1024xf32>
    %182 = arith.andi %14, %20 : vector<8x1024xi1>
    %cst_92 = arith.constant 0.000000e+00 : f32
    %183 = vector.broadcast %cst_92 : f32 to vector<8x1024xf32>
    %184 = arith.select %182, %181, %183 : vector<8x1024xi1>, vector<8x1024xf32>
    %c21 = arith.constant 21 : index
    %c0_93 = arith.constant 0 : index
    %c0_94 = arith.constant 0 : index
    %185 = vector.load %arg2[%c21, %c0_93, %c0_94] : memref<27x8x8xf32, #tpu.memory_space<vmem>>, vector<1x8x8xf32>
    %186 = vector.shape_cast %185 : vector<1x8x8xf32> to vector<8x8xf32>
    %cst_95 = arith.constant dense<0.000000e+00> : vector<8x1024xf32>
    %187 = tpu.matmul %186, %184, %cst_95 {dimension_numbers = #tpu.dot_dimension_numbers<[1], [0], [0], [1], [0, 0, 1, 1], [], []>} : vector<8x8xf32>, vector<8x1024xf32>, vector<8x1024xf32> -> vector<8x1024xf32>
    %188 = arith.addf %180, %187 : vector<8x1024xf32>
    %c960_i32 = arith.constant 960 : i32
    %189 = tpu.dynamic_rotate %10 by %c960_i32 dim 1 : vector<8x1024xf32>, i32 -> vector<8x1024xf32>
    %cst_96 = arith.constant 0.000000e+00 : f32
    %190 = vector.broadcast %cst_96 : f32 to vector<8x1024xf32>
    %191 = arith.select %14, %189, %190 : vector<8x1024xi1>, vector<8x1024xf32>
    %c22 = arith.constant 22 : index
    %c0_97 = arith.constant 0 : index
    %c0_98 = arith.constant 0 : index
    %192 = vector.load %arg2[%c22, %c0_97, %c0_98] : memref<27x8x8xf32, #tpu.memory_space<vmem>>, vector<1x8x8xf32>
    %193 = vector.shape_cast %192 : vector<1x8x8xf32> to vector<8x8xf32>
    %cst_99 = arith.constant dense<0.000000e+00> : vector<8x1024xf32>
    %194 = tpu.matmul %193, %191, %cst_99 {dimension_numbers = #tpu.dot_dimension_numbers<[1], [0], [0], [1], [0, 0, 1, 1], [], []>} : vector<8x8xf32>, vector<8x1024xf32>, vector<8x1024xf32> -> vector<8x1024xf32>
    %195 = arith.addf %188, %194 : vector<8x1024xf32>
    %c959_i32 = arith.constant 959 : i32
    %196 = tpu.dynamic_rotate %10 by %c959_i32 dim 1 : vector<8x1024xf32>, i32 -> vector<8x1024xf32>
    %197 = arith.andi %14, %22 : vector<8x1024xi1>
    %cst_100 = arith.constant 0.000000e+00 : f32
    %198 = vector.broadcast %cst_100 : f32 to vector<8x1024xf32>
    %199 = arith.select %197, %196, %198 : vector<8x1024xi1>, vector<8x1024xf32>
    %c23 = arith.constant 23 : index
    %c0_101 = arith.constant 0 : index
    %c0_102 = arith.constant 0 : index
    %200 = vector.load %arg2[%c23, %c0_101, %c0_102] : memref<27x8x8xf32, #tpu.memory_space<vmem>>, vector<1x8x8xf32>
    %201 = vector.shape_cast %200 : vector<1x8x8xf32> to vector<8x8xf32>
    %cst_103 = arith.constant dense<0.000000e+00> : vector<8x1024xf32>
    %202 = tpu.matmul %201, %199, %cst_103 {dimension_numbers = #tpu.dot_dimension_numbers<[1], [0], [0], [1], [0, 0, 1, 1], [], []>} : vector<8x8xf32>, vector<8x1024xf32>, vector<8x1024xf32> -> vector<8x1024xf32>
    %203 = arith.addf %195, %202 : vector<8x1024xf32>
    %204 = arith.andi %14, %18 : vector<8x1024xi1>
    %c953_i32 = arith.constant 953 : i32
    %205 = tpu.dynamic_rotate %10 by %c953_i32 dim 1 : vector<8x1024xf32>, i32 -> vector<8x1024xf32>
    %206 = arith.andi %204, %20 : vector<8x1024xi1>
    %cst_104 = arith.constant 0.000000e+00 : f32
    %207 = vector.broadcast %cst_104 : f32 to vector<8x1024xf32>
    %208 = arith.select %206, %205, %207 : vector<8x1024xi1>, vector<8x1024xf32>
    %c24 = arith.constant 24 : index
    %c0_105 = arith.constant 0 : index
    %c0_106 = arith.constant 0 : index
    %209 = vector.load %arg2[%c24, %c0_105, %c0_106] : memref<27x8x8xf32, #tpu.memory_space<vmem>>, vector<1x8x8xf32>
    %210 = vector.shape_cast %209 : vector<1x8x8xf32> to vector<8x8xf32>
    %cst_107 = arith.constant dense<0.000000e+00> : vector<8x1024xf32>
    %211 = tpu.matmul %210, %208, %cst_107 {dimension_numbers = #tpu.dot_dimension_numbers<[1], [0], [0], [1], [0, 0, 1, 1], [], []>} : vector<8x8xf32>, vector<8x1024xf32>, vector<8x1024xf32> -> vector<8x1024xf32>
    %212 = arith.addf %203, %211 : vector<8x1024xf32>
    %c952_i32 = arith.constant 952 : i32
    %213 = tpu.dynamic_rotate %10 by %c952_i32 dim 1 : vector<8x1024xf32>, i32 -> vector<8x1024xf32>
    %cst_108 = arith.constant 0.000000e+00 : f32
    %214 = vector.broadcast %cst_108 : f32 to vector<8x1024xf32>
    %215 = arith.select %204, %213, %214 : vector<8x1024xi1>, vector<8x1024xf32>
    %c25 = arith.constant 25 : index
    %c0_109 = arith.constant 0 : index
    %c0_110 = arith.constant 0 : index
    %216 = vector.load %arg2[%c25, %c0_109, %c0_110] : memref<27x8x8xf32, #tpu.memory_space<vmem>>, vector<1x8x8xf32>
    %217 = vector.shape_cast %216 : vector<1x8x8xf32> to vector<8x8xf32>
    %cst_111 = arith.constant dense<0.000000e+00> : vector<8x1024xf32>
    %218 = tpu.matmul %217, %215, %cst_111 {dimension_numbers = #tpu.dot_dimension_numbers<[1], [0], [0], [1], [0, 0, 1, 1], [], []>} : vector<8x8xf32>, vector<8x1024xf32>, vector<8x1024xf32> -> vector<8x1024xf32>
    %219 = arith.addf %212, %218 : vector<8x1024xf32>
    %c951_i32 = arith.constant 951 : i32
    %220 = tpu.dynamic_rotate %10 by %c951_i32 dim 1 : vector<8x1024xf32>, i32 -> vector<8x1024xf32>
    %221 = arith.andi %204, %22 : vector<8x1024xi1>
    %cst_112 = arith.constant 0.000000e+00 : f32
    %222 = vector.broadcast %cst_112 : f32 to vector<8x1024xf32>
    %223 = arith.select %221, %220, %222 : vector<8x1024xi1>, vector<8x1024xf32>
    %c26 = arith.constant 26 : index
    %c0_113 = arith.constant 0 : index
    %c0_114 = arith.constant 0 : index
    %224 = vector.load %arg2[%c26, %c0_113, %c0_114] : memref<27x8x8xf32, #tpu.memory_space<vmem>>, vector<1x8x8xf32>
    %225 = vector.shape_cast %224 : vector<1x8x8xf32> to vector<8x8xf32>
    %cst_115 = arith.constant dense<0.000000e+00> : vector<8x1024xf32>
    %226 = tpu.matmul %225, %223, %cst_115 {dimension_numbers = #tpu.dot_dimension_numbers<[1], [0], [0], [1], [0, 0, 1, 1], [], []>} : vector<8x8xf32>, vector<8x1024xf32>, vector<8x1024xf32> -> vector<8x1024xf32>
    %227 = arith.addf %219, %226 : vector<8x1024xf32>
    %c0_116 = arith.constant 0 : index
    %c0_117 = arith.constant 0 : index
    %228 = vector.load %arg3[%c0_116, %c0_117] : memref<8x1xf32, #tpu.memory_space<vmem>>, vector<8x1xf32>
    %229 = vector.broadcast %228 : vector<8x1xf32> to vector<8x1024xf32>
    %230 = arith.addf %227, %229 : vector<8x1024xf32>
    %cst_118 = arith.constant 0.000000e+00 : f32
    %231 = vector.broadcast %cst_118 : f32 to vector<8x1024xf32>
    %232 = arith.maximumf %230, %231 : vector<8x1024xf32>
    %233 = arith.andi %12, %16 : vector<8x1024xi1>
    %c73_i32_119 = arith.constant 73 : i32
    %234 = tpu.dynamic_rotate %232 by %c73_i32_119 dim 1 : vector<8x1024xf32>, i32 -> vector<8x1024xf32>
    %235 = arith.andi %233, %20 : vector<8x1024xi1>
    %cst_120 = arith.constant 0.000000e+00 : f32
    %236 = vector.broadcast %cst_120 : f32 to vector<8x1024xf32>
    %237 = arith.select %235, %234, %236 : vector<8x1024xi1>, vector<8x1024xf32>
    %c0_121 = arith.constant 0 : index
    %c0_122 = arith.constant 0 : index
    %c0_123 = arith.constant 0 : index
    %238 = vector.load %arg4[%c0_121, %c0_122, %c0_123] : memref<27x8x8xf32, #tpu.memory_space<vmem>>, vector<1x8x8xf32>
    %239 = vector.shape_cast %238 : vector<1x8x8xf32> to vector<8x8xf32>
    %cst_124 = arith.constant dense<0.000000e+00> : vector<8x1024xf32>
    %240 = tpu.matmul %239, %237, %cst_124 {dimension_numbers = #tpu.dot_dimension_numbers<[1], [0], [0], [1], [0, 0, 1, 1], [], []>} : vector<8x8xf32>, vector<8x1024xf32>, vector<8x1024xf32> -> vector<8x1024xf32>
    %c72_i32_125 = arith.constant 72 : i32
    %241 = tpu.dynamic_rotate %232 by %c72_i32_125 dim 1 : vector<8x1024xf32>, i32 -> vector<8x1024xf32>
    %cst_126 = arith.constant 0.000000e+00 : f32
    %242 = vector.broadcast %cst_126 : f32 to vector<8x1024xf32>
    %243 = arith.select %233, %241, %242 : vector<8x1024xi1>, vector<8x1024xf32>
    %c1_127 = arith.constant 1 : index
    %c0_128 = arith.constant 0 : index
    %c0_129 = arith.constant 0 : index
    %244 = vector.load %arg4[%c1_127, %c0_128, %c0_129] : memref<27x8x8xf32, #tpu.memory_space<vmem>>, vector<1x8x8xf32>
    %245 = vector.shape_cast %244 : vector<1x8x8xf32> to vector<8x8xf32>
    %cst_130 = arith.constant dense<0.000000e+00> : vector<8x1024xf32>
    %246 = tpu.matmul %245, %243, %cst_130 {dimension_numbers = #tpu.dot_dimension_numbers<[1], [0], [0], [1], [0, 0, 1, 1], [], []>} : vector<8x8xf32>, vector<8x1024xf32>, vector<8x1024xf32> -> vector<8x1024xf32>
    %247 = arith.addf %240, %246 : vector<8x1024xf32>
    %c71_i32_131 = arith.constant 71 : i32
    %248 = tpu.dynamic_rotate %232 by %c71_i32_131 dim 1 : vector<8x1024xf32>, i32 -> vector<8x1024xf32>
    %249 = arith.andi %233, %22 : vector<8x1024xi1>
    %cst_132 = arith.constant 0.000000e+00 : f32
    %250 = vector.broadcast %cst_132 : f32 to vector<8x1024xf32>
    %251 = arith.select %249, %248, %250 : vector<8x1024xi1>, vector<8x1024xf32>
    %c2_133 = arith.constant 2 : index
    %c0_134 = arith.constant 0 : index
    %c0_135 = arith.constant 0 : index
    %252 = vector.load %arg4[%c2_133, %c0_134, %c0_135] : memref<27x8x8xf32, #tpu.memory_space<vmem>>, vector<1x8x8xf32>
    %253 = vector.shape_cast %252 : vector<1x8x8xf32> to vector<8x8xf32>
    %cst_136 = arith.constant dense<0.000000e+00> : vector<8x1024xf32>
    %254 = tpu.matmul %253, %251, %cst_136 {dimension_numbers = #tpu.dot_dimension_numbers<[1], [0], [0], [1], [0, 0, 1, 1], [], []>} : vector<8x8xf32>, vector<8x1024xf32>, vector<8x1024xf32> -> vector<8x1024xf32>
    %255 = arith.addf %247, %254 : vector<8x1024xf32>
    %c65_i32_137 = arith.constant 65 : i32
    %256 = tpu.dynamic_rotate %232 by %c65_i32_137 dim 1 : vector<8x1024xf32>, i32 -> vector<8x1024xf32>
    %257 = arith.andi %12, %20 : vector<8x1024xi1>
    %cst_138 = arith.constant 0.000000e+00 : f32
    %258 = vector.broadcast %cst_138 : f32 to vector<8x1024xf32>
    %259 = arith.select %257, %256, %258 : vector<8x1024xi1>, vector<8x1024xf32>
    %c3_139 = arith.constant 3 : index
    %c0_140 = arith.constant 0 : index
    %c0_141 = arith.constant 0 : index
    %260 = vector.load %arg4[%c3_139, %c0_140, %c0_141] : memref<27x8x8xf32, #tpu.memory_space<vmem>>, vector<1x8x8xf32>
    %261 = vector.shape_cast %260 : vector<1x8x8xf32> to vector<8x8xf32>
    %cst_142 = arith.constant dense<0.000000e+00> : vector<8x1024xf32>
    %262 = tpu.matmul %261, %259, %cst_142 {dimension_numbers = #tpu.dot_dimension_numbers<[1], [0], [0], [1], [0, 0, 1, 1], [], []>} : vector<8x8xf32>, vector<8x1024xf32>, vector<8x1024xf32> -> vector<8x1024xf32>
    %263 = arith.addf %255, %262 : vector<8x1024xf32>
    %c64_i32_143 = arith.constant 64 : i32
    %264 = tpu.dynamic_rotate %232 by %c64_i32_143 dim 1 : vector<8x1024xf32>, i32 -> vector<8x1024xf32>
    %cst_144 = arith.constant 0.000000e+00 : f32
    %265 = vector.broadcast %cst_144 : f32 to vector<8x1024xf32>
    %266 = arith.select %12, %264, %265 : vector<8x1024xi1>, vector<8x1024xf32>
    %c4_145 = arith.constant 4 : index
    %c0_146 = arith.constant 0 : index
    %c0_147 = arith.constant 0 : index
    %267 = vector.load %arg4[%c4_145, %c0_146, %c0_147] : memref<27x8x8xf32, #tpu.memory_space<vmem>>, vector<1x8x8xf32>
    %268 = vector.shape_cast %267 : vector<1x8x8xf32> to vector<8x8xf32>
    %cst_148 = arith.constant dense<0.000000e+00> : vector<8x1024xf32>
    %269 = tpu.matmul %268, %266, %cst_148 {dimension_numbers = #tpu.dot_dimension_numbers<[1], [0], [0], [1], [0, 0, 1, 1], [], []>} : vector<8x8xf32>, vector<8x1024xf32>, vector<8x1024xf32> -> vector<8x1024xf32>
    %270 = arith.addf %263, %269 : vector<8x1024xf32>
    %c63_i32_149 = arith.constant 63 : i32
    %271 = tpu.dynamic_rotate %232 by %c63_i32_149 dim 1 : vector<8x1024xf32>, i32 -> vector<8x1024xf32>
    %272 = arith.andi %12, %22 : vector<8x1024xi1>
    %cst_150 = arith.constant 0.000000e+00 : f32
    %273 = vector.broadcast %cst_150 : f32 to vector<8x1024xf32>
    %274 = arith.select %272, %271, %273 : vector<8x1024xi1>, vector<8x1024xf32>
    %c5_151 = arith.constant 5 : index
    %c0_152 = arith.constant 0 : index
    %c0_153 = arith.constant 0 : index
    %275 = vector.load %arg4[%c5_151, %c0_152, %c0_153] : memref<27x8x8xf32, #tpu.memory_space<vmem>>, vector<1x8x8xf32>
    %276 = vector.shape_cast %275 : vector<1x8x8xf32> to vector<8x8xf32>
    %cst_154 = arith.constant dense<0.000000e+00> : vector<8x1024xf32>
    %277 = tpu.matmul %276, %274, %cst_154 {dimension_numbers = #tpu.dot_dimension_numbers<[1], [0], [0], [1], [0, 0, 1, 1], [], []>} : vector<8x8xf32>, vector<8x1024xf32>, vector<8x1024xf32> -> vector<8x1024xf32>
    %278 = arith.addf %270, %277 : vector<8x1024xf32>
    %279 = arith.andi %12, %18 : vector<8x1024xi1>
    %c57_i32_155 = arith.constant 57 : i32
    %280 = tpu.dynamic_rotate %232 by %c57_i32_155 dim 1 : vector<8x1024xf32>, i32 -> vector<8x1024xf32>
    %281 = arith.andi %279, %20 : vector<8x1024xi1>
    %cst_156 = arith.constant 0.000000e+00 : f32
    %282 = vector.broadcast %cst_156 : f32 to vector<8x1024xf32>
    %283 = arith.select %281, %280, %282 : vector<8x1024xi1>, vector<8x1024xf32>
    %c6_157 = arith.constant 6 : index
    %c0_158 = arith.constant 0 : index
    %c0_159 = arith.constant 0 : index
    %284 = vector.load %arg4[%c6_157, %c0_158, %c0_159] : memref<27x8x8xf32, #tpu.memory_space<vmem>>, vector<1x8x8xf32>
    %285 = vector.shape_cast %284 : vector<1x8x8xf32> to vector<8x8xf32>
    %cst_160 = arith.constant dense<0.000000e+00> : vector<8x1024xf32>
    %286 = tpu.matmul %285, %283, %cst_160 {dimension_numbers = #tpu.dot_dimension_numbers<[1], [0], [0], [1], [0, 0, 1, 1], [], []>} : vector<8x8xf32>, vector<8x1024xf32>, vector<8x1024xf32> -> vector<8x1024xf32>
    %287 = arith.addf %278, %286 : vector<8x1024xf32>
    %c56_i32_161 = arith.constant 56 : i32
    %288 = tpu.dynamic_rotate %232 by %c56_i32_161 dim 1 : vector<8x1024xf32>, i32 -> vector<8x1024xf32>
    %cst_162 = arith.constant 0.000000e+00 : f32
    %289 = vector.broadcast %cst_162 : f32 to vector<8x1024xf32>
    %290 = arith.select %279, %288, %289 : vector<8x1024xi1>, vector<8x1024xf32>
    %c7_163 = arith.constant 7 : index
    %c0_164 = arith.constant 0 : index
    %c0_165 = arith.constant 0 : index
    %291 = vector.load %arg4[%c7_163, %c0_164, %c0_165] : memref<27x8x8xf32, #tpu.memory_space<vmem>>, vector<1x8x8xf32>
    %292 = vector.shape_cast %291 : vector<1x8x8xf32> to vector<8x8xf32>
    %cst_166 = arith.constant dense<0.000000e+00> : vector<8x1024xf32>
    %293 = tpu.matmul %292, %290, %cst_166 {dimension_numbers = #tpu.dot_dimension_numbers<[1], [0], [0], [1], [0, 0, 1, 1], [], []>} : vector<8x8xf32>, vector<8x1024xf32>, vector<8x1024xf32> -> vector<8x1024xf32>
    %294 = arith.addf %287, %293 : vector<8x1024xf32>
    %c55_i32_167 = arith.constant 55 : i32
    %295 = tpu.dynamic_rotate %232 by %c55_i32_167 dim 1 : vector<8x1024xf32>, i32 -> vector<8x1024xf32>
    %296 = arith.andi %279, %22 : vector<8x1024xi1>
    %cst_168 = arith.constant 0.000000e+00 : f32
    %297 = vector.broadcast %cst_168 : f32 to vector<8x1024xf32>
    %298 = arith.select %296, %295, %297 : vector<8x1024xi1>, vector<8x1024xf32>
    %c8_169 = arith.constant 8 : index
    %c0_170 = arith.constant 0 : index
    %c0_171 = arith.constant 0 : index
    %299 = vector.load %arg4[%c8_169, %c0_170, %c0_171] : memref<27x8x8xf32, #tpu.memory_space<vmem>>, vector<1x8x8xf32>
    %300 = vector.shape_cast %299 : vector<1x8x8xf32> to vector<8x8xf32>
    %cst_172 = arith.constant dense<0.000000e+00> : vector<8x1024xf32>
    %301 = tpu.matmul %300, %298, %cst_172 {dimension_numbers = #tpu.dot_dimension_numbers<[1], [0], [0], [1], [0, 0, 1, 1], [], []>} : vector<8x8xf32>, vector<8x1024xf32>, vector<8x1024xf32> -> vector<8x1024xf32>
    %302 = arith.addf %294, %301 : vector<8x1024xf32>
    %c9_i32_173 = arith.constant 9 : i32
    %303 = tpu.dynamic_rotate %232 by %c9_i32_173 dim 1 : vector<8x1024xf32>, i32 -> vector<8x1024xf32>
    %304 = arith.andi %16, %20 : vector<8x1024xi1>
    %cst_174 = arith.constant 0.000000e+00 : f32
    %305 = vector.broadcast %cst_174 : f32 to vector<8x1024xf32>
    %306 = arith.select %304, %303, %305 : vector<8x1024xi1>, vector<8x1024xf32>
    %c9_175 = arith.constant 9 : index
    %c0_176 = arith.constant 0 : index
    %c0_177 = arith.constant 0 : index
    %307 = vector.load %arg4[%c9_175, %c0_176, %c0_177] : memref<27x8x8xf32, #tpu.memory_space<vmem>>, vector<1x8x8xf32>
    %308 = vector.shape_cast %307 : vector<1x8x8xf32> to vector<8x8xf32>
    %cst_178 = arith.constant dense<0.000000e+00> : vector<8x1024xf32>
    %309 = tpu.matmul %308, %306, %cst_178 {dimension_numbers = #tpu.dot_dimension_numbers<[1], [0], [0], [1], [0, 0, 1, 1], [], []>} : vector<8x8xf32>, vector<8x1024xf32>, vector<8x1024xf32> -> vector<8x1024xf32>
    %310 = arith.addf %302, %309 : vector<8x1024xf32>
    %c8_i32_179 = arith.constant 8 : i32
    %311 = tpu.dynamic_rotate %232 by %c8_i32_179 dim 1 : vector<8x1024xf32>, i32 -> vector<8x1024xf32>
    %cst_180 = arith.constant 0.000000e+00 : f32
    %312 = vector.broadcast %cst_180 : f32 to vector<8x1024xf32>
    %313 = arith.select %16, %311, %312 : vector<8x1024xi1>, vector<8x1024xf32>
    %c10_181 = arith.constant 10 : index
    %c0_182 = arith.constant 0 : index
    %c0_183 = arith.constant 0 : index
    %314 = vector.load %arg4[%c10_181, %c0_182, %c0_183] : memref<27x8x8xf32, #tpu.memory_space<vmem>>, vector<1x8x8xf32>
    %315 = vector.shape_cast %314 : vector<1x8x8xf32> to vector<8x8xf32>
    %cst_184 = arith.constant dense<0.000000e+00> : vector<8x1024xf32>
    %316 = tpu.matmul %315, %313, %cst_184 {dimension_numbers = #tpu.dot_dimension_numbers<[1], [0], [0], [1], [0, 0, 1, 1], [], []>} : vector<8x8xf32>, vector<8x1024xf32>, vector<8x1024xf32> -> vector<8x1024xf32>
    %317 = arith.addf %310, %316 : vector<8x1024xf32>
    %c7_i32_185 = arith.constant 7 : i32
    %318 = tpu.dynamic_rotate %232 by %c7_i32_185 dim 1 : vector<8x1024xf32>, i32 -> vector<8x1024xf32>
    %319 = arith.andi %16, %22 : vector<8x1024xi1>
    %cst_186 = arith.constant 0.000000e+00 : f32
    %320 = vector.broadcast %cst_186 : f32 to vector<8x1024xf32>
    %321 = arith.select %319, %318, %320 : vector<8x1024xi1>, vector<8x1024xf32>
    %c11_187 = arith.constant 11 : index
    %c0_188 = arith.constant 0 : index
    %c0_189 = arith.constant 0 : index
    %322 = vector.load %arg4[%c11_187, %c0_188, %c0_189] : memref<27x8x8xf32, #tpu.memory_space<vmem>>, vector<1x8x8xf32>
    %323 = vector.shape_cast %322 : vector<1x8x8xf32> to vector<8x8xf32>
    %cst_190 = arith.constant dense<0.000000e+00> : vector<8x1024xf32>
    %324 = tpu.matmul %323, %321, %cst_190 {dimension_numbers = #tpu.dot_dimension_numbers<[1], [0], [0], [1], [0, 0, 1, 1], [], []>} : vector<8x8xf32>, vector<8x1024xf32>, vector<8x1024xf32> -> vector<8x1024xf32>
    %325 = arith.addf %317, %324 : vector<8x1024xf32>
    %c1_i32_191 = arith.constant 1 : i32
    %326 = tpu.dynamic_rotate %232 by %c1_i32_191 dim 1 : vector<8x1024xf32>, i32 -> vector<8x1024xf32>
    %cst_192 = arith.constant 0.000000e+00 : f32
    %327 = vector.broadcast %cst_192 : f32 to vector<8x1024xf32>
    %328 = arith.select %20, %326, %327 : vector<8x1024xi1>, vector<8x1024xf32>
    %c12_193 = arith.constant 12 : index
    %c0_194 = arith.constant 0 : index
    %c0_195 = arith.constant 0 : index
    %329 = vector.load %arg4[%c12_193, %c0_194, %c0_195] : memref<27x8x8xf32, #tpu.memory_space<vmem>>, vector<1x8x8xf32>
    %330 = vector.shape_cast %329 : vector<1x8x8xf32> to vector<8x8xf32>
    %cst_196 = arith.constant dense<0.000000e+00> : vector<8x1024xf32>
    %331 = tpu.matmul %330, %328, %cst_196 {dimension_numbers = #tpu.dot_dimension_numbers<[1], [0], [0], [1], [0, 0, 1, 1], [], []>} : vector<8x8xf32>, vector<8x1024xf32>, vector<8x1024xf32> -> vector<8x1024xf32>
    %332 = arith.addf %325, %331 : vector<8x1024xf32>
    %c13_197 = arith.constant 13 : index
    %c0_198 = arith.constant 0 : index
    %c0_199 = arith.constant 0 : index
    %333 = vector.load %arg4[%c13_197, %c0_198, %c0_199] : memref<27x8x8xf32, #tpu.memory_space<vmem>>, vector<1x8x8xf32>
    %334 = vector.shape_cast %333 : vector<1x8x8xf32> to vector<8x8xf32>
    %cst_200 = arith.constant dense<0.000000e+00> : vector<8x1024xf32>
    %335 = tpu.matmul %334, %232, %cst_200 {dimension_numbers = #tpu.dot_dimension_numbers<[1], [0], [0], [1], [0, 0, 1, 1], [], []>} : vector<8x8xf32>, vector<8x1024xf32>, vector<8x1024xf32> -> vector<8x1024xf32>
    %336 = arith.addf %332, %335 : vector<8x1024xf32>
    %c1023_i32_201 = arith.constant 1023 : i32
    %337 = tpu.dynamic_rotate %232 by %c1023_i32_201 dim 1 : vector<8x1024xf32>, i32 -> vector<8x1024xf32>
    %cst_202 = arith.constant 0.000000e+00 : f32
    %338 = vector.broadcast %cst_202 : f32 to vector<8x1024xf32>
    %339 = arith.select %22, %337, %338 : vector<8x1024xi1>, vector<8x1024xf32>
    %c14_203 = arith.constant 14 : index
    %c0_204 = arith.constant 0 : index
    %c0_205 = arith.constant 0 : index
    %340 = vector.load %arg4[%c14_203, %c0_204, %c0_205] : memref<27x8x8xf32, #tpu.memory_space<vmem>>, vector<1x8x8xf32>
    %341 = vector.shape_cast %340 : vector<1x8x8xf32> to vector<8x8xf32>
    %cst_206 = arith.constant dense<0.000000e+00> : vector<8x1024xf32>
    %342 = tpu.matmul %341, %339, %cst_206 {dimension_numbers = #tpu.dot_dimension_numbers<[1], [0], [0], [1], [0, 0, 1, 1], [], []>} : vector<8x8xf32>, vector<8x1024xf32>, vector<8x1024xf32> -> vector<8x1024xf32>
    %343 = arith.addf %336, %342 : vector<8x1024xf32>
    %c1017_i32_207 = arith.constant 1017 : i32
    %344 = tpu.dynamic_rotate %232 by %c1017_i32_207 dim 1 : vector<8x1024xf32>, i32 -> vector<8x1024xf32>
    %345 = arith.andi %18, %20 : vector<8x1024xi1>
    %cst_208 = arith.constant 0.000000e+00 : f32
    %346 = vector.broadcast %cst_208 : f32 to vector<8x1024xf32>
    %347 = arith.select %345, %344, %346 : vector<8x1024xi1>, vector<8x1024xf32>
    %c15_209 = arith.constant 15 : index
    %c0_210 = arith.constant 0 : index
    %c0_211 = arith.constant 0 : index
    %348 = vector.load %arg4[%c15_209, %c0_210, %c0_211] : memref<27x8x8xf32, #tpu.memory_space<vmem>>, vector<1x8x8xf32>
    %349 = vector.shape_cast %348 : vector<1x8x8xf32> to vector<8x8xf32>
    %cst_212 = arith.constant dense<0.000000e+00> : vector<8x1024xf32>
    %350 = tpu.matmul %349, %347, %cst_212 {dimension_numbers = #tpu.dot_dimension_numbers<[1], [0], [0], [1], [0, 0, 1, 1], [], []>} : vector<8x8xf32>, vector<8x1024xf32>, vector<8x1024xf32> -> vector<8x1024xf32>
    %351 = arith.addf %343, %350 : vector<8x1024xf32>
    %c1016_i32_213 = arith.constant 1016 : i32
    %352 = tpu.dynamic_rotate %232 by %c1016_i32_213 dim 1 : vector<8x1024xf32>, i32 -> vector<8x1024xf32>
    %cst_214 = arith.constant 0.000000e+00 : f32
    %353 = vector.broadcast %cst_214 : f32 to vector<8x1024xf32>
    %354 = arith.select %18, %352, %353 : vector<8x1024xi1>, vector<8x1024xf32>
    %c16_215 = arith.constant 16 : index
    %c0_216 = arith.constant 0 : index
    %c0_217 = arith.constant 0 : index
    %355 = vector.load %arg4[%c16_215, %c0_216, %c0_217] : memref<27x8x8xf32, #tpu.memory_space<vmem>>, vector<1x8x8xf32>
    %356 = vector.shape_cast %355 : vector<1x8x8xf32> to vector<8x8xf32>
    %cst_218 = arith.constant dense<0.000000e+00> : vector<8x1024xf32>
    %357 = tpu.matmul %356, %354, %cst_218 {dimension_numbers = #tpu.dot_dimension_numbers<[1], [0], [0], [1], [0, 0, 1, 1], [], []>} : vector<8x8xf32>, vector<8x1024xf32>, vector<8x1024xf32> -> vector<8x1024xf32>
    %358 = arith.addf %351, %357 : vector<8x1024xf32>
    %c1015_i32_219 = arith.constant 1015 : i32
    %359 = tpu.dynamic_rotate %232 by %c1015_i32_219 dim 1 : vector<8x1024xf32>, i32 -> vector<8x1024xf32>
    %360 = arith.andi %18, %22 : vector<8x1024xi1>
    %cst_220 = arith.constant 0.000000e+00 : f32
    %361 = vector.broadcast %cst_220 : f32 to vector<8x1024xf32>
    %362 = arith.select %360, %359, %361 : vector<8x1024xi1>, vector<8x1024xf32>
    %c17_221 = arith.constant 17 : index
    %c0_222 = arith.constant 0 : index
    %c0_223 = arith.constant 0 : index
    %363 = vector.load %arg4[%c17_221, %c0_222, %c0_223] : memref<27x8x8xf32, #tpu.memory_space<vmem>>, vector<1x8x8xf32>
    %364 = vector.shape_cast %363 : vector<1x8x8xf32> to vector<8x8xf32>
    %cst_224 = arith.constant dense<0.000000e+00> : vector<8x1024xf32>
    %365 = tpu.matmul %364, %362, %cst_224 {dimension_numbers = #tpu.dot_dimension_numbers<[1], [0], [0], [1], [0, 0, 1, 1], [], []>} : vector<8x8xf32>, vector<8x1024xf32>, vector<8x1024xf32> -> vector<8x1024xf32>
    %366 = arith.addf %358, %365 : vector<8x1024xf32>
    %367 = arith.andi %14, %16 : vector<8x1024xi1>
    %c969_i32_225 = arith.constant 969 : i32
    %368 = tpu.dynamic_rotate %232 by %c969_i32_225 dim 1 : vector<8x1024xf32>, i32 -> vector<8x1024xf32>
    %369 = arith.andi %367, %20 : vector<8x1024xi1>
    %cst_226 = arith.constant 0.000000e+00 : f32
    %370 = vector.broadcast %cst_226 : f32 to vector<8x1024xf32>
    %371 = arith.select %369, %368, %370 : vector<8x1024xi1>, vector<8x1024xf32>
    %c18_227 = arith.constant 18 : index
    %c0_228 = arith.constant 0 : index
    %c0_229 = arith.constant 0 : index
    %372 = vector.load %arg4[%c18_227, %c0_228, %c0_229] : memref<27x8x8xf32, #tpu.memory_space<vmem>>, vector<1x8x8xf32>
    %373 = vector.shape_cast %372 : vector<1x8x8xf32> to vector<8x8xf32>
    %cst_230 = arith.constant dense<0.000000e+00> : vector<8x1024xf32>
    %374 = tpu.matmul %373, %371, %cst_230 {dimension_numbers = #tpu.dot_dimension_numbers<[1], [0], [0], [1], [0, 0, 1, 1], [], []>} : vector<8x8xf32>, vector<8x1024xf32>, vector<8x1024xf32> -> vector<8x1024xf32>
    %375 = arith.addf %366, %374 : vector<8x1024xf32>
    %c968_i32_231 = arith.constant 968 : i32
    %376 = tpu.dynamic_rotate %232 by %c968_i32_231 dim 1 : vector<8x1024xf32>, i32 -> vector<8x1024xf32>
    %cst_232 = arith.constant 0.000000e+00 : f32
    %377 = vector.broadcast %cst_232 : f32 to vector<8x1024xf32>
    %378 = arith.select %367, %376, %377 : vector<8x1024xi1>, vector<8x1024xf32>
    %c19_233 = arith.constant 19 : index
    %c0_234 = arith.constant 0 : index
    %c0_235 = arith.constant 0 : index
    %379 = vector.load %arg4[%c19_233, %c0_234, %c0_235] : memref<27x8x8xf32, #tpu.memory_space<vmem>>, vector<1x8x8xf32>
    %380 = vector.shape_cast %379 : vector<1x8x8xf32> to vector<8x8xf32>
    %cst_236 = arith.constant dense<0.000000e+00> : vector<8x1024xf32>
    %381 = tpu.matmul %380, %378, %cst_236 {dimension_numbers = #tpu.dot_dimension_numbers<[1], [0], [0], [1], [0, 0, 1, 1], [], []>} : vector<8x8xf32>, vector<8x1024xf32>, vector<8x1024xf32> -> vector<8x1024xf32>
    %382 = arith.addf %375, %381 : vector<8x1024xf32>
    %c967_i32_237 = arith.constant 967 : i32
    %383 = tpu.dynamic_rotate %232 by %c967_i32_237 dim 1 : vector<8x1024xf32>, i32 -> vector<8x1024xf32>
    %384 = arith.andi %367, %22 : vector<8x1024xi1>
    %cst_238 = arith.constant 0.000000e+00 : f32
    %385 = vector.broadcast %cst_238 : f32 to vector<8x1024xf32>
    %386 = arith.select %384, %383, %385 : vector<8x1024xi1>, vector<8x1024xf32>
    %c20_239 = arith.constant 20 : index
    %c0_240 = arith.constant 0 : index
    %c0_241 = arith.constant 0 : index
    %387 = vector.load %arg4[%c20_239, %c0_240, %c0_241] : memref<27x8x8xf32, #tpu.memory_space<vmem>>, vector<1x8x8xf32>
    %388 = vector.shape_cast %387 : vector<1x8x8xf32> to vector<8x8xf32>
    %cst_242 = arith.constant dense<0.000000e+00> : vector<8x1024xf32>
    %389 = tpu.matmul %388, %386, %cst_242 {dimension_numbers = #tpu.dot_dimension_numbers<[1], [0], [0], [1], [0, 0, 1, 1], [], []>} : vector<8x8xf32>, vector<8x1024xf32>, vector<8x1024xf32> -> vector<8x1024xf32>
    %390 = arith.addf %382, %389 : vector<8x1024xf32>
    %c961_i32_243 = arith.constant 961 : i32
    %391 = tpu.dynamic_rotate %232 by %c961_i32_243 dim 1 : vector<8x1024xf32>, i32 -> vector<8x1024xf32>
    %392 = arith.andi %14, %20 : vector<8x1024xi1>
    %cst_244 = arith.constant 0.000000e+00 : f32
    %393 = vector.broadcast %cst_244 : f32 to vector<8x1024xf32>
    %394 = arith.select %392, %391, %393 : vector<8x1024xi1>, vector<8x1024xf32>
    %c21_245 = arith.constant 21 : index
    %c0_246 = arith.constant 0 : index
    %c0_247 = arith.constant 0 : index
    %395 = vector.load %arg4[%c21_245, %c0_246, %c0_247] : memref<27x8x8xf32, #tpu.memory_space<vmem>>, vector<1x8x8xf32>
    %396 = vector.shape_cast %395 : vector<1x8x8xf32> to vector<8x8xf32>
    %cst_248 = arith.constant dense<0.000000e+00> : vector<8x1024xf32>
    %397 = tpu.matmul %396, %394, %cst_248 {dimension_numbers = #tpu.dot_dimension_numbers<[1], [0], [0], [1], [0, 0, 1, 1], [], []>} : vector<8x8xf32>, vector<8x1024xf32>, vector<8x1024xf32> -> vector<8x1024xf32>
    %398 = arith.addf %390, %397 : vector<8x1024xf32>
    %c960_i32_249 = arith.constant 960 : i32
    %399 = tpu.dynamic_rotate %232 by %c960_i32_249 dim 1 : vector<8x1024xf32>, i32 -> vector<8x1024xf32>
    %cst_250 = arith.constant 0.000000e+00 : f32
    %400 = vector.broadcast %cst_250 : f32 to vector<8x1024xf32>
    %401 = arith.select %14, %399, %400 : vector<8x1024xi1>, vector<8x1024xf32>
    %c22_251 = arith.constant 22 : index
    %c0_252 = arith.constant 0 : index
    %c0_253 = arith.constant 0 : index
    %402 = vector.load %arg4[%c22_251, %c0_252, %c0_253] : memref<27x8x8xf32, #tpu.memory_space<vmem>>, vector<1x8x8xf32>
    %403 = vector.shape_cast %402 : vector<1x8x8xf32> to vector<8x8xf32>
    %cst_254 = arith.constant dense<0.000000e+00> : vector<8x1024xf32>
    %404 = tpu.matmul %403, %401, %cst_254 {dimension_numbers = #tpu.dot_dimension_numbers<[1], [0], [0], [1], [0, 0, 1, 1], [], []>} : vector<8x8xf32>, vector<8x1024xf32>, vector<8x1024xf32> -> vector<8x1024xf32>
    %405 = arith.addf %398, %404 : vector<8x1024xf32>
    %c959_i32_255 = arith.constant 959 : i32
    %406 = tpu.dynamic_rotate %232 by %c959_i32_255 dim 1 : vector<8x1024xf32>, i32 -> vector<8x1024xf32>
    %407 = arith.andi %14, %22 : vector<8x1024xi1>
    %cst_256 = arith.constant 0.000000e+00 : f32
    %408 = vector.broadcast %cst_256 : f32 to vector<8x1024xf32>
    %409 = arith.select %407, %406, %408 : vector<8x1024xi1>, vector<8x1024xf32>
    %c23_257 = arith.constant 23 : index
    %c0_258 = arith.constant 0 : index
    %c0_259 = arith.constant 0 : index
    %410 = vector.load %arg4[%c23_257, %c0_258, %c0_259] : memref<27x8x8xf32, #tpu.memory_space<vmem>>, vector<1x8x8xf32>
    %411 = vector.shape_cast %410 : vector<1x8x8xf32> to vector<8x8xf32>
    %cst_260 = arith.constant dense<0.000000e+00> : vector<8x1024xf32>
    %412 = tpu.matmul %411, %409, %cst_260 {dimension_numbers = #tpu.dot_dimension_numbers<[1], [0], [0], [1], [0, 0, 1, 1], [], []>} : vector<8x8xf32>, vector<8x1024xf32>, vector<8x1024xf32> -> vector<8x1024xf32>
    %413 = arith.addf %405, %412 : vector<8x1024xf32>
    %414 = arith.andi %14, %18 : vector<8x1024xi1>
    %c953_i32_261 = arith.constant 953 : i32
    %415 = tpu.dynamic_rotate %232 by %c953_i32_261 dim 1 : vector<8x1024xf32>, i32 -> vector<8x1024xf32>
    %416 = arith.andi %414, %20 : vector<8x1024xi1>
    %cst_262 = arith.constant 0.000000e+00 : f32
    %417 = vector.broadcast %cst_262 : f32 to vector<8x1024xf32>
    %418 = arith.select %416, %415, %417 : vector<8x1024xi1>, vector<8x1024xf32>
    %c24_263 = arith.constant 24 : index
    %c0_264 = arith.constant 0 : index
    %c0_265 = arith.constant 0 : index
    %419 = vector.load %arg4[%c24_263, %c0_264, %c0_265] : memref<27x8x8xf32, #tpu.memory_space<vmem>>, vector<1x8x8xf32>
    %420 = vector.shape_cast %419 : vector<1x8x8xf32> to vector<8x8xf32>
    %cst_266 = arith.constant dense<0.000000e+00> : vector<8x1024xf32>
    %421 = tpu.matmul %420, %418, %cst_266 {dimension_numbers = #tpu.dot_dimension_numbers<[1], [0], [0], [1], [0, 0, 1, 1], [], []>} : vector<8x8xf32>, vector<8x1024xf32>, vector<8x1024xf32> -> vector<8x1024xf32>
    %422 = arith.addf %413, %421 : vector<8x1024xf32>
    %c952_i32_267 = arith.constant 952 : i32
    %423 = tpu.dynamic_rotate %232 by %c952_i32_267 dim 1 : vector<8x1024xf32>, i32 -> vector<8x1024xf32>
    %cst_268 = arith.constant 0.000000e+00 : f32
    %424 = vector.broadcast %cst_268 : f32 to vector<8x1024xf32>
    %425 = arith.select %414, %423, %424 : vector<8x1024xi1>, vector<8x1024xf32>
    %c25_269 = arith.constant 25 : index
    %c0_270 = arith.constant 0 : index
    %c0_271 = arith.constant 0 : index
    %426 = vector.load %arg4[%c25_269, %c0_270, %c0_271] : memref<27x8x8xf32, #tpu.memory_space<vmem>>, vector<1x8x8xf32>
    %427 = vector.shape_cast %426 : vector<1x8x8xf32> to vector<8x8xf32>
    %cst_272 = arith.constant dense<0.000000e+00> : vector<8x1024xf32>
    %428 = tpu.matmul %427, %425, %cst_272 {dimension_numbers = #tpu.dot_dimension_numbers<[1], [0], [0], [1], [0, 0, 1, 1], [], []>} : vector<8x8xf32>, vector<8x1024xf32>, vector<8x1024xf32> -> vector<8x1024xf32>
    %429 = arith.addf %422, %428 : vector<8x1024xf32>
    %c951_i32_273 = arith.constant 951 : i32
    %430 = tpu.dynamic_rotate %232 by %c951_i32_273 dim 1 : vector<8x1024xf32>, i32 -> vector<8x1024xf32>
    %431 = arith.andi %414, %22 : vector<8x1024xi1>
    %cst_274 = arith.constant 0.000000e+00 : f32
    %432 = vector.broadcast %cst_274 : f32 to vector<8x1024xf32>
    %433 = arith.select %431, %430, %432 : vector<8x1024xi1>, vector<8x1024xf32>
    %c26_275 = arith.constant 26 : index
    %c0_276 = arith.constant 0 : index
    %c0_277 = arith.constant 0 : index
    %434 = vector.load %arg4[%c26_275, %c0_276, %c0_277] : memref<27x8x8xf32, #tpu.memory_space<vmem>>, vector<1x8x8xf32>
    %435 = vector.shape_cast %434 : vector<1x8x8xf32> to vector<8x8xf32>
    %cst_278 = arith.constant dense<0.000000e+00> : vector<8x1024xf32>
    %436 = tpu.matmul %435, %433, %cst_278 {dimension_numbers = #tpu.dot_dimension_numbers<[1], [0], [0], [1], [0, 0, 1, 1], [], []>} : vector<8x8xf32>, vector<8x1024xf32>, vector<8x1024xf32> -> vector<8x1024xf32>
    %437 = arith.addf %429, %436 : vector<8x1024xf32>
    %c0_279 = arith.constant 0 : index
    %c0_280 = arith.constant 0 : index
    %438 = vector.load %arg5[%c0_279, %c0_280] : memref<8x1xf32, #tpu.memory_space<vmem>>, vector<8x1xf32>
    %439 = vector.broadcast %438 : vector<8x1xf32> to vector<8x1024xf32>
    %440 = arith.addf %437, %439 : vector<8x1024xf32>
    %c0_281 = arith.constant 0 : index
    %441 = memref.load %arg6[%c0_281] : memref<1xf32, #tpu.memory_space<smem>>
    %cst_282 = arith.constant 1.000000e-03 : f32
    %442 = arith.mulf %cst_282, %441 : f32
    %443 = vector.broadcast %442 : f32 to vector<8x1024xf32>
    %444 = arith.mulf %443, %440 : vector<8x1024xf32>
    %445 = arith.addf %444, %10 : vector<8x1024xf32>
    %c0_283 = arith.constant 0 : index
    %c0_284 = arith.constant 0 : index
    %c0_285 = arith.constant 0 : index
    %446 = vector.load %arg7[%c0_283, %c0_284, %c0_285] : memref<1x8x1024xf32, #tpu.memory_space<vmem>>, vector<1x8x1024xf32>
    %447 = vector.shape_cast %446 : vector<1x8x1024xf32> to vector<8x1024xf32>
    %448 = vector.shape_cast %445 : vector<8x1024xf32> to vector<1x8x1024xf32>
    tpu.vector_store %arg7[%c0_283, %c0_284, %c0_285], %448 {strides = array<i32>} : memref<1x8x1024xf32, #tpu.memory_space<vmem>>, vector<1x8x1024xf32>,
    return
  }
  func.func @transform_0(%arg0: i32) -> (i32, i32, i32) {
    %c0_i32 = arith.constant 0 : i32
    %c0_i32_0 = arith.constant 0 : i32
    %c0_i32_1 = arith.constant 0 : i32
    return %arg0, %c0_i32, %c0_i32_0 : i32, i32, i32
  }
  func.func @transform_1(%arg0: i32) -> (i32, i32, i32) {
    %c0_i32 = arith.constant 0 : i32
    %c0_i32_0 = arith.constant 0 : i32
    %c0_i32_1 = arith.constant 0 : i32
    %c0_i32_2 = arith.constant 0 : i32
    return %c0_i32, %c0_i32_0, %c0_i32_1 : i32, i32, i32
  }
  func.func @transform_2(%arg0: i32) -> (i32, i32) {
    %c0_i32 = arith.constant 0 : i32
    %c0_i32_0 = arith.constant 0 : i32
    %c0_i32_1 = arith.constant 0 : i32
    return %c0_i32, %c0_i32_0 : i32, i32
  }
  func.func @transform_3(%arg0: i32) -> (i32, i32, i32) {
    %c0_i32 = arith.constant 0 : i32
    %c0_i32_0 = arith.constant 0 : i32
    %c0_i32_1 = arith.constant 0 : i32
    %c0_i32_2 = arith.constant 0 : i32
    return %c0_i32, %c0_i32_0, %c0_i32_1 : i32, i32, i32
  }
  func.func @transform_4(%arg0: i32) -> (i32, i32) {
    %c0_i32 = arith.constant 0 : i32
    %c0_i32_0 = arith.constant 0 : i32
    %c0_i32_1 = arith.constant 0 : i32
    return %c0_i32, %c0_i32_0 : i32, i32
  }
  func.func @transform_5(%arg0: i32) -> i32 {
    %c0_i32 = arith.constant 0 : i32
    %c0_i32_0 = arith.constant 0 : i32
    return %c0_i32 : i32
  }
  func.func @transform_6(%arg0: i32) -> (i32, i32, i32) {
    %c0_i32 = arith.constant 0 : i32
    %c0_i32_0 = arith.constant 0 : i32
    %c0_i32_1 = arith.constant 0 : i32
    return %arg0, %c0_i32, %c0_i32_0 : i32, i32, i32
  }
}

</mosaic_0001>

<llo_original>
// kernel: tpu_custom_call.1
$region0: #{tpu_custom_call.1}
  #allocation0 [shape = 'u32[]', space=smem, size = 0x4, offset = 0x4, fixed_abs, tag = 'smem constant byte address 0x4 - core index']
  #allocation1 [shape = 'u32[72,128]{1,0:T(1,128)}', space=vmem, size = 0x9000, scoped, tag = 'internal scratch']
  #allocation2 [shape = 'f32[1]{0:T(128)S(6)}', space=smem, size = 0x200, scoped, tag = 'scoped memory for tpu_custom_call.1']
  %s0 = inlined_call_operand.vmem [shape: f32[1,8,1024], index: 0, kind: input, shape index: {}]
  %s1 = inlined_call_operand.vmem [shape: f32[27,8,8], index: 1, kind: input, shape index: {}]
  %s2 = inlined_call_operand.vmem [shape: f32[8,1], index: 2, kind: input, shape index: {}]
  %s3 = inlined_call_operand.vmem [shape: f32[27,8,8], index: 3, kind: input, shape index: {}]
  %s4 = inlined_call_operand.vmem [shape: f32[8,1], index: 4, kind: input, shape index: {}]
  %s5 = inlined_call_operand.<no memory space> [shape: f32[1], index: 5, kind: input, shape index: {}]
  %s6 = inlined_call_operand.hbm [shape: f32[1,8,1024], index: 6, kind: output, shape index: {}]
  %s7 = sld [smem:[#allocation0]]
  $region34: #{tpu_custom_call.1} parent=0
    _
  %s9 = ssub.s32 1, %s7
  %s10 = scalar_select 0, %s9, %s7
  %11 = sst [smem:[#allocation2]] %s5
  $region1: #{tpu_custom_call.1} parent=0
    #allocation3 [shape = 'u8[32768]{0}', space=vmem, size = 0x8000, scoped, tag = 'output window, operand 0, single buffered']
    #allocation4 [shape = 's32[1]{0}', space=sflag, size = 0x4, scoped, tag = 'scoped memory for tpu_custom_call.1']
    %12 = vsyncpa [#allocation4], 0
    // Predicated region
    $region2: #{tpu_custom_call.1} parent=1 // pred_check
      _
    $region3: #{tpu_custom_call.1} parent=1 // pred_check_branch
      %14 = sbr.rel (0) target = $region5
    $region4: #{tpu_custom_call.1} parent=1 // pred_region
      _
    $region5: #{tpu_custom_call.1} parent=1 // pred_fallthru
      _
    // Predicated region
    $region6: #{tpu_custom_call.1} parent=1 // pred_check
      _
    $region7: #{tpu_custom_call.1} parent=1 // pred_check_branch
      %16 = sbr.rel (0) target = $region9
    $region8: #{tpu_custom_call.1} parent=1 // pred_region
      _
    $region9: #{tpu_custom_call.1} parent=1 // pred_fallthru
      _
    // Predicated region
    $region10: #{tpu_custom_call.1} parent=1 // pred_check
      _
    $region11: #{tpu_custom_call.1} parent=1 // pred_check_branch
      %18 = sbr.rel (0) target = $region13
    $region12: #{tpu_custom_call.1} parent=1 // pred_region
      _
    $region13: #{tpu_custom_call.1} parent=1 // pred_fallthru
      _
    // Predicated region
    $region14: #{tpu_custom_call.1} parent=1 // pred_check
      _
    $region15: #{tpu_custom_call.1} parent=1 // pred_check_branch
      %20 = sbr.rel (0) target = $region17
    $region16: #{tpu_custom_call.1} parent=1 // pred_region
      _
    $region17: #{tpu_custom_call.1} parent=1 // pred_fallthru
      _
    // Predicated region
    $region18: #{tpu_custom_call.1} parent=1 // pred_check
      _
    $region19: #{tpu_custom_call.1} parent=1 // pred_check_branch
      %22 = sbr.rel (0) target = $region21
    $region20: #{tpu_custom_call.1} parent=1 // pred_region
      _
    $region21: #{tpu_custom_call.1} parent=1 // pred_fallthru
      _
    // Predicated region
    $region22: #{tpu_custom_call.1} parent=1 // pred_check
      _
    $region23: #{tpu_custom_call.1} parent=1 // pred_check_branch
      %24 = sbr.rel (0) target = $region25
    $region24: #{tpu_custom_call.1} parent=1 // pred_region
      _
    $region25: #{tpu_custom_call.1} parent=1 // pred_fallthru
      _
    %v25 = vlaneseq
    %v26 = vand.u32 %v25, 127
    %v27 = vadd.s32 %v26, 128
    %v28 = vadd.s32 %v26, 256
    %v29 = vadd.s32 %v26, 384
    %v30 = vadd.s32 %v26, 512
    %v31 = vadd.s32 %v26, 640
    %v32 = vadd.s32 %v26, 768
    %v33 = vadd.s32 %v26, 896
    %v34 = vand.u32 %v26, 511
    %v35 = vand.u32 %v27, 511
    %v36 = vand.u32 %v28, 511
    %v37 = vand.u32 %v29, 511
    %v38 = vand.u32 %v30, 511
    %v39 = vand.u32 %v31, 511
    %v40 = vand.u32 %v32, 511
    %v41 = vand.u32 %v33, 511
    %v42 = vand.u32 %v34, 7
    %v43 = vand.u32 %v35, 7
    %v44 = vand.u32 %v36, 7
    %v45 = vand.u32 %v37, 7
    %v46 = vand.u32 %v38, 7
    %v47 = vand.u32 %v39, 7
    %v48 = vand.u32 %v40, 7
    %v49 = vand.u32 %v41, 7
    %v50 = vshra.s32 %v34, 3
    %v51 = vshra.s32 %v35, 3
    %v52 = vshra.s32 %v36, 3
    %v53 = vshra.s32 %v37, 3
    %v54 = vshra.s32 %v38, 3
    %v55 = vshra.s32 %v39, 3
    %v56 = vshra.s32 %v40, 3
    %v57 = vshra.s32 %v41, 3
    %v58 = vand.u32 %v50, 7
    %v59 = vand.u32 %v51, 7
    %v60 = vand.u32 %v52, 7
    %v61 = vand.u32 %v53, 7
    %v62 = vand.u32 %v54, 7
    %v63 = vand.u32 %v55, 7
    %v64 = vand.u32 %v56, 7
    %v65 = vand.u32 %v57, 7
    %v66 = vld [vmem:[%s0] sm:$0xff]
    %v67 = vld [vmem:[%s0 + $0x8] sm:$0xff]
    %v68 = vld [vmem:[%s0 + $0x10] sm:$0xff]
    %v69 = vld [vmem:[%s0 + $0x18] sm:$0xff]
    %v70 = vld [vmem:[%s0 + $0x20] sm:$0xff]
    %v71 = vld [vmem:[%s0 + $0x28] sm:$0xff]
    %v72 = vld [vmem:[%s0 + $0x30] sm:$0xff]
    %v73 = vld [vmem:[%s0 + $0x38] sm:$0xff]
    %vm74 = vcmp.ge.s32.totalorder %v34, 64
    %vm75 = vcmp.ge.s32.totalorder %v35, 64
    %vm76 = vcmp.ge.s32.totalorder %v36, 64
    %vm77 = vcmp.ge.s32.totalorder %v37, 64
    %vm78 = vcmp.ge.s32.totalorder %v38, 64
    %vm79 = vcmp.ge.s32.totalorder %v39, 64
    %vm80 = vcmp.ge.s32.totalorder %v40, 64
    %vm81 = vcmp.ge.s32.totalorder %v41, 64
    %vm82 = vcmp.lt.s32.totalorder %v34, 448
    %vm83 = vcmp.lt.s32.totalorder %v35, 448
    %vm84 = vcmp.lt.s32.totalorder %v36, 448
    %vm85 = vcmp.lt.s32.totalorder %v37, 448
    %vm86 = vcmp.lt.s32.totalorder %v38, 448
    %vm87 = vcmp.lt.s32.totalorder %v39, 448
    %vm88 = vcmp.lt.s32.totalorder %v40, 448
    %vm89 = vcmp.lt.s32.totalorder %v41, 448
    %vm90 = vcmp.ge.s32.totalorder %v58, 1
    %vm91 = vcmp.ge.s32.totalorder %v59, 1
    %vm92 = vcmp.ge.s32.totalorder %v60, 1
    %vm93 = vcmp.ge.s32.totalorder %v61, 1
    %vm94 = vcmp.ge.s32.totalorder %v62, 1
    %vm95 = vcmp.ge.s32.totalorder %v63, 1
    %vm96 = vcmp.ge.s32.totalorder %v64, 1
    %vm97 = vcmp.ge.s32.totalorder %v65, 1
    %vm98 = vcmp.lt.s32.totalorder %v58, 7
    %vm99 = vcmp.lt.s32.totalorder %v59, 7
    %vm100 = vcmp.lt.s32.totalorder %v60, 7
    %vm101 = vcmp.lt.s32.totalorder %v61, 7
    %vm102 = vcmp.lt.s32.totalorder %v62, 7
    %vm103 = vcmp.lt.s32.totalorder %v63, 7
    %vm104 = vcmp.lt.s32.totalorder %v64, 7
    %vm105 = vcmp.lt.s32.totalorder %v65, 7
    %vm106 = vcmp.ge.s32.totalorder %v42, 1
    %vm107 = vcmp.ge.s32.totalorder %v43, 1
    %vm108 = vcmp.ge.s32.totalorder %v44, 1
    %vm109 = vcmp.ge.s32.totalorder %v45, 1
    %vm110 = vcmp.ge.s32.totalorder %v46, 1
    %vm111 = vcmp.ge.s32.totalorder %v47, 1
    %vm112 = vcmp.ge.s32.totalorder %v48, 1
    %vm113 = vcmp.ge.s32.totalorder %v49, 1
    %vm114 = vcmp.lt.s32.totalorder %v42, 7
    %vm115 = vcmp.lt.s32.totalorder %v43, 7
    %vm116 = vcmp.lt.s32.totalorder %v44, 7
    %vm117 = vcmp.lt.s32.totalorder %v45, 7
    %vm118 = vcmp.lt.s32.totalorder %v46, 7
    %vm119 = vcmp.lt.s32.totalorder %v47, 7
    %vm120 = vcmp.lt.s32.totalorder %v48, 7
    %vm121 = vcmp.lt.s32.totalorder %v49, 7
    %vm122 = vmand %vm74, %vm90
    %vm123 = vmand %vm75, %vm91
    %vm124 = vmand %vm76, %vm92
    %vm125 = vmand %vm77, %vm93
    %vm126 = vmand %vm78, %vm94
    %vm127 = vmand %vm79, %vm95
    %vm128 = vmand %vm80, %vm96
    %vm129 = vmand %vm81, %vm97
    %130 = vrot.lane.b32.xlu0 %v66, 73
    %v131 = vpop.permute.xlu0 %130
    %132 = vrot.lane.b32.xlu0 %v67, 73
    %v133 = vpop.permute.xlu0 %132
    %134 = vrot.lane.b32.xlu0 %v68, 73
    %v135 = vpop.permute.xlu0 %134
    %136 = vrot.lane.b32.xlu0 %v69, 73
    %v137 = vpop.permute.xlu0 %136
    %138 = vrot.lane.b32.xlu0 %v70, 73
    %v139 = vpop.permute.xlu0 %138
    %140 = vrot.lane.b32.xlu0 %v71, 73
    %v141 = vpop.permute.xlu0 %140
    %142 = vrot.lane.b32.xlu0 %v72, 73
    %v143 = vpop.permute.xlu0 %142
    %144 = vrot.lane.b32.xlu0 %v73, 73
    %v145 = vpop.permute.xlu0 %144
    %vm146 = vcmp.lt.s32.totalorder %v26, 73
    %v147 = vsel %vm146, %v143, %v145
    %v148 = vsel %vm146, %v141, %v143
    %v149 = vsel %vm146, %v139, %v141
    %v150 = vsel %vm146, %v137, %v139
    %v151 = vsel %vm146, %v135, %v137
    %v152 = vsel %vm146, %v133, %v135
    %v153 = vsel %vm146, %v131, %v133
    %v154 = vsel %vm146, %v145, %v131
    %vm155 = vmand %vm122, %vm106
    %vm156 = vmand %vm123, %vm107
    %vm157 = vmand %vm124, %vm108
    %vm158 = vmand %vm125, %vm109
    %vm159 = vmand %vm126, %vm110
    %vm160 = vmand %vm127, %vm111
    %vm161 = vmand %vm128, %vm112
    %vm162 = vmand %vm129, %vm113
    %v163 = vsel %vm155, %v154, 0.0
    %v164 = vsel %vm156, %v153, 0.0
    %v165 = vsel %vm157, %v152, 0.0
    %v166 = vsel %vm158, %v151, 0.0
    %v167 = vsel %vm159, %v150, 0.0
    %v168 = vsel %vm160, %v149, 0.0
    %v169 = vsel %vm161, %v148, 0.0
    %v170 = vsel %vm162, %v147, 0.0
    %v171 = vld [vmem:[%s1] sm:$0xff]
    %172 = vrot.lane.b32.xlu0 %v66, 72
    %v173 = vpop.permute.xlu0 %172
    %174 = vrot.lane.b32.xlu0 %v67, 72
    %v175 = vpop.permute.xlu0 %174
    %176 = vrot.lane.b32.xlu0 %v68, 72
    %v177 = vpop.permute.xlu0 %176
    %178 = vrot.lane.b32.xlu0 %v69, 72
    %v179 = vpop.permute.xlu0 %178
    %180 = vrot.lane.b32.xlu0 %v70, 72
    %v181 = vpop.permute.xlu0 %180
    %182 = vrot.lane.b32.xlu0 %v71, 72
    %v183 = vpop.permute.xlu0 %182
    %184 = vrot.lane.b32.xlu0 %v72, 72
    %v185 = vpop.permute.xlu0 %184
    %186 = vrot.lane.b32.xlu0 %v73, 72
    %v187 = vpop.permute.xlu0 %186
    %vm188 = vcmp.lt.s32.totalorder %v26, 72
    %v189 = vsel %vm188, %v185, %v187
    %v190 = vsel %vm188, %v183, %v185
    %v191 = vsel %vm188, %v181, %v183
    %v192 = vsel %vm188, %v179, %v181
    %v193 = vsel %vm188, %v177, %v179
    %v194 = vsel %vm188, %v175, %v177
    %v195 = vsel %vm188, %v173, %v175
    %v196 = vsel %vm188, %v187, %v173
    %v197 = vsel %vm122, %v196, 0.0
    %v198 = vsel %vm123, %v195, 0.0
    %v199 = vsel %vm124, %v194, 0.0
    %v200 = vsel %vm125, %v193, 0.0
    %v201 = vsel %vm126, %v192, 0.0
    %v202 = vsel %vm127, %v191, 0.0
    %v203 = vsel %vm128, %v190, 0.0
    %v204 = vsel %vm129, %v189, 0.0
    %s205 = scalar_lea.vmem %s1, 8
    %v206 = vld [vmem:[%s205] sm:$0xff]
    %vm207 = vcmask 64512
    %v209 = vsel %vm207, %v206, 0
    %211 = vmatpush.msra.mxu0 0.0
    %212 = vmatpush.msra.mxu0 0.0
    %213 = vmatpush.msra.mxu0 0.0
    %214 = vmatpush.msra.mxu0 0.0
    %215 = vmatpush.msra.mxu0 0.0
    %216 = vmatpush.msra.mxu0 0.0
    %217 = vmatpush.msra.mxu0 0.0
    %218 = vmatpush.msra.mxu0 0.0
    %219 = vmatpush.msra.mxu0 0.0
    %220 = vmatpush.msra.mxu0 0.0
    %221 = vmatpush.msra.mxu0 0.0
    %222 = vmatpush.msra.mxu0 0.0
    %223 = vmatpush.msra.mxu0 0.0
    %224 = vmatpush.msra.mxu0 0.0
    %225 = vmatpush.msra.mxu0 0.0
    %226 = vmatpush.msra.mxu0 %v197
    %227 = vmatmul.f32.gmra.mxu0 %v209
    %v228 = vpop.f32.mrf.mxu0
    %v229 = vadd.f32 0.0, %v228
    %230 = vdwg.mxu0
    %231 = vmatpush.msra.mxu0 0.0
    %232 = vmatpush.msra.mxu0 0.0
    %233 = vmatpush.msra.mxu0 0.0
    %234 = vmatpush.msra.mxu0 0.0
    %235 = vmatpush.msra.mxu0 0.0
    %236 = vmatpush.msra.mxu0 0.0
    %237 = vmatpush.msra.mxu0 0.0
    %238 = vmatpush.msra.mxu0 0.0
    %239 = vmatpush.msra.mxu0 0.0
    %240 = vmatpush.msra.mxu0 0.0
    %241 = vmatpush.msra.mxu0 0.0
    %242 = vmatpush.msra.mxu0 0.0
    %243 = vmatpush.msra.mxu0 0.0
    %244 = vmatpush.msra.mxu0 0.0
    %245 = vmatpush.msra.mxu0 0.0
    %246 = vmatpush.msra.mxu0 %v198
    %247 = vmatmul.f32.gmra.mxu0 %v209
    %v248 = vpop.f32.mrf.mxu0
    %v249 = vadd.f32 0.0, %v248
    %250 = vdwg.mxu0
    %251 = vmatpush.msra.mxu0 0.0
    %252 = vmatpush.msra.mxu0 0.0
    %253 = vmatpush.msra.mxu0 0.0
    %254 = vmatpush.msra.mxu0 0.0
    %255 = vmatpush.msra.mxu0 0.0
    %256 = vmatpush.msra.mxu0 0.0
    %257 = vmatpush.msra.mxu0 0.0
    %258 = vmatpush.msra.mxu0 0.0
    %259 = vmatpush.msra.mxu0 0.0
    %260 = vmatpush.msra.mxu0 0.0
    %261 = vmatpush.msra.mxu0 0.0
    %262 = vmatpush.msra.mxu0 0.0
    %263 = vmatpush.msra.mxu0 0.0
    %264 = vmatpush.msra.mxu0 0.0
    %265 = vmatpush.msra.mxu0 0.0
    %266 = vmatpush.msra.mxu0 %v199
    %267 = vmatmul.f32.gmra.mxu0 %v209
    %v268 = vpop.f32.mrf.mxu0
    %v269 = vadd.f32 0.0, %v268
    %270 = vdwg.mxu0
    %271 = vmatpush.msra.mxu0 0.0
    %272 = vmatpush.msra.mxu0 0.0
    %273 = vmatpush.msra.mxu0 0.0
    %274 = vmatpush.msra.mxu0 0.0
    %275 = vmatpush.msra.mxu0 0.0
    %276 = vmatpush.msra.mxu0 0.0
    %277 = vmatpush.msra.mxu0 0.0
    %278 = vmatpush.msra.mxu0 0.0
    %279 = vmatpush.msra.mxu0 0.0
    %280 = vmatpush.msra.mxu0 0.0
    %281 = vmatpush.msra.mxu0 0.0
    %282 = vmatpush.msra.mxu0 0.0
    %283 = vmatpush.msra.mxu0 0.0
    %284 = vmatpush.msra.mxu0 0.0
    %285 = vmatpush.msra.mxu0 0.0
    %286 = vmatpush.msra.mxu0 %v200
    %287 = vmatmul.f32.gmra.mxu0 %v209
    %v288 = vpop.f32.mrf.mxu0
    %v289 = vadd.f32 0.0, %v288
    %290 = vdwg.mxu0
    %291 = vmatpush.msra.mxu0 0.0
    %292 = vmatpush.msra.mxu0 0.0
    %293 = vmatpush.msra.mxu0 0.0
    %294 = vmatpush.msra.mxu0 0.0
    %295 = vmatpush.msra.mxu0 0.0
    %296 = vmatpush.msra.mxu0 0.0
    %297 = vmatpush.msra.mxu0 0.0
    %298 = vmatpush.msra.mxu0 0.0
    %299 = vmatpush.msra.mxu0 0.0
    %300 = vmatpush.msra.mxu0 0.0
    %301 = vmatpush.msra.mxu0 0.0
    %302 = vmatpush.msra.mxu0 0.0
    %303 = vmatpush.msra.mxu0 0.0
    %304 = vmatpush.msra.mxu0 0.0
    %305 = vmatpush.msra.mxu0 0.0
    %306 = vmatpush.msra.mxu0 %v201
    %307 = vmatmul.f32.gmra.mxu0 %v209
    %v308 = vpop.f32.mrf.mxu0
    %v309 = vadd.f32 0.0, %v308
    %310 = vdwg.mxu0
    %311 = vmatpush.msra.mxu0 0.0
    %312 = vmatpush.msra.mxu0 0.0
    %313 = vmatpush.msra.mxu0 0.0
    %314 = vmatpush.msra.mxu0 0.0
    %315 = vmatpush.msra.mxu0 0.0
    %316 = vmatpush.msra.mxu0 0.0
    %317 = vmatpush.msra.mxu0 0.0
    %318 = vmatpush.msra.mxu0 0.0
    %319 = vmatpush.msra.mxu0 0.0
    %320 = vmatpush.msra.mxu0 0.0
    %321 = vmatpush.msra.mxu0 0.0
    %322 = vmatpush.msra.mxu0 0.0
    %323 = vmatpush.msra.mxu0 0.0
    %324 = vmatpush.msra.mxu0 0.0
    %325 = vmatpush.msra.mxu0 0.0
    %326 = vmatpush.msra.mxu0 %v202
    %327 = vmatmul.f32.gmra.mxu0 %v209
    %v328 = vpop.f32.mrf.mxu0
    %v329 = vadd.f32 0.0, %v328
    %330 = vdwg.mxu0
    %331 = vmatpush.msra.mxu0 0.0
    %332 = vmatpush.msra.mxu0 0.0
    %333 = vmatpush.msra.mxu0 0.0
    %334 = vmatpush.msra.mxu0 0.0
    %335 = vmatpush.msra.mxu0 0.0
    %336 = vmatpush.msra.mxu0 0.0
    %337 = vmatpush.msra.mxu0 0.0
    %338 = vmatpush.msra.mxu0 0.0
    %339 = vmatpush.msra.mxu0 0.0
    %340 = vmatpush.msra.mxu0 0.0
    %341 = vmatpush.msra.mxu0 0.0
    %342 = vmatpush.msra.mxu0 0.0
    %343 = vmatpush.msra.mxu0 0.0
    %344 = vmatpush.msra.mxu0 0.0
    %345 = vmatpush.msra.mxu0 0.0
    %346 = vmatpush.msra.mxu0 %v203
    %347 = vmatmul.f32.gmra.mxu0 %v209
    %v348 = vpop.f32.mrf.mxu0
    %v349 = vadd.f32 0.0, %v348
    %350 = vdwg.mxu0
    %351 = vmatpush.msra.mxu0 0.0
    %352 = vmatpush.msra.mxu0 0.0
    %353 = vmatpush.msra.mxu0 0.0
    %354 = vmatpush.msra.mxu0 0.0
    %355 = vmatpush.msra.mxu0 0.0
    %356 = vmatpush.msra.mxu0 0.0
    %357 = vmatpush.msra.mxu0 0.0
    %358 = vmatpush.msra.mxu0 0.0
    %359 = vmatpush.msra.mxu0 0.0
    %360 = vmatpush.msra.mxu0 0.0
    %361 = vmatpush.msra.mxu0 0.0
    %362 = vmatpush.msra.mxu0 0.0
    %363 = vmatpush.msra.mxu0 0.0
    %364 = vmatpush.msra.mxu0 0.0
    %365 = vmatpush.msra.mxu0 0.0
    %366 = vmatpush.msra.mxu0 %v204
    %367 = vmatmul.f32.gmra.mxu0 %v209
    %v368 = vpop.f32.mrf.mxu0
    %v369 = vadd.f32 0.0, %v368
    %370 = vdwg.mxu0
    %v372 = vsel %vm207, %v171, 0
    %374 = vmatpush.msra.mxu0 0.0
    %375 = vmatpush.msra.mxu0 0.0
    %376 = vmatpush.msra.mxu0 0.0
    %377 = vmatpush.msra.mxu0 0.0
    %378 = vmatpush.msra.mxu0 0.0
    %379 = vmatpush.msra.mxu0 0.0
    %380 = vmatpush.msra.mxu0 0.0
    %381 = vmatpush.msra.mxu0 0.0
    %382 = vmatpush.msra.mxu0 0.0
    %383 = vmatpush.msra.mxu0 0.0
    %384 = vmatpush.msra.mxu0 0.0
    %385 = vmatpush.msra.mxu0 0.0
    %386 = vmatpush.msra.mxu0 0.0
    %387 = vmatpush.msra.mxu0 0.0
    %388 = vmatpush.msra.mxu0 0.0
    %389 = vmatpush.msra.mxu0 %v163
    %390 = vmatmul.f32.gmra.mxu0 %v372
    %v391 = vpop.f32.mrf.mxu0
    %v392 = vadd.f32 %v229, %v391
    %393 = vdwg.mxu0
    %394 = vmatpush.msra.mxu0 0.0
    %395 = vmatpush.msra.mxu0 0.0
    %396 = vmatpush.msra.mxu0 0.0
    %397 = vmatpush.msra.mxu0 0.0
    %398 = vmatpush.msra.mxu0 0.0
    %399 = vmatpush.msra.mxu0 0.0
    %400 = vmatpush.msra.mxu0 0.0
    %401 = vmatpush.msra.mxu0 0.0
    %402 = vmatpush.msra.mxu0 0.0
    %403 = vmatpush.msra.mxu0 0.0
    %404 = vmatpush.msra.mxu0 0.0
    %405 = vmatpush.msra.mxu0 0.0
    %406 = vmatpush.msra.mxu0 0.0
    %407 = vmatpush.msra.mxu0 0.0
    %408 = vmatpush.msra.mxu0 0.0
    %409 = vmatpush.msra.mxu0 %v164
    %410 = vmatmul.f32.gmra.mxu0 %v372
    %v411 = vpop.f32.mrf.mxu0
    %v412 = vadd.f32 %v249, %v411
    %413 = vdwg.mxu0
    %414 = vmatpush.msra.mxu0 0.0
    %415 = vmatpush.msra.mxu0 0.0
    %416 = vmatpush.msra.mxu0 0.0
    %417 = vmatpush.msra.mxu0 0.0
    %418 = vmatpush.msra.mxu0 0.0
    %419 = vmatpush.msra.mxu0 0.0
    %420 = vmatpush.msra.mxu0 0.0
    %421 = vmatpush.msra.mxu0 0.0
    %422 = vmatpush.msra.mxu0 0.0
    %423 = vmatpush.msra.mxu0 0.0
    %424 = vmatpush.msra.mxu0 0.0
    %425 = vmatpush.msra.mxu0 0.0
    %426 = vmatpush.msra.mxu0 0.0
    %427 = vmatpush.msra.mxu0 0.0
    %428 = vmatpush.msra.mxu0 0.0
    %429 = vmatpush.msra.mxu0 %v165
    %430 = vmatmul.f32.gmra.mxu0 %v372
    %v431 = vpop.f32.mrf.mxu0
    %v432 = vadd.f32 %v269, %v431
    %433 = vdwg.mxu0
    %434 = vmatpush.msra.mxu0 0.0
    %435 = vmatpush.msra.mxu0 0.0
    %436 = vmatpush.msra.mxu0 0.0
    %437 = vmatpush.msra.mxu0 0.0
    %438 = vmatpush.msra.mxu0 0.0
    %439 = vmatpush.msra.mxu0 0.0
    %440 = vmatpush.msra.mxu0 0.0
    %441 = vmatpush.msra.mxu0 0.0
    %442 = vmatpush.msra.mxu0 0.0
    %443 = vmatpush.msra.mxu0 0.0
    %444 = vmatpush.msra.mxu0 0.0
    %445 = vmatpush.msra.mxu0 0.0
    %446 = vmatpush.msra.mxu0 0.0
    %447 = vmatpush.msra.mxu0 0.0
    %448 = vmatpush.msra.mxu0 0.0
    %449 = vmatpush.msra.mxu0 %v166
    %450 = vmatmul.f32.gmra.mxu0 %v372
    %v451 = vpop.f32.mrf.mxu0
    %v452 = vadd.f32 %v289, %v451
    %453 = vdwg.mxu0
    %454 = vmatpush.msra.mxu0 0.0
    %455 = vmatpush.msra.mxu0 0.0
    %456 = vmatpush.msra.mxu0 0.0
    %457 = vmatpush.msra.mxu0 0.0
    %458 = vmatpush.msra.mxu0 0.0
    %459 = vmatpush.msra.mxu0 0.0
    %460 = vmatpush.msra.mxu0 0.0
    %461 = vmatpush.msra.mxu0 0.0
    %462 = vmatpush.msra.mxu0 0.0
    %463 = vmatpush.msra.mxu0 0.0
    %464 = vmatpush.msra.mxu0 0.0
    %465 = vmatpush.msra.mxu0 0.0
    %466 = vmatpush.msra.mxu0 0.0
    %467 = vmatpush.msra.mxu0 0.0
    %468 = vmatpush.msra.mxu0 0.0
    %469 = vmatpush.msra.mxu0 %v167
    %470 = vmatmul.f32.gmra.mxu0 %v372
    %v471 = vpop.f32.mrf.mxu0
    %v472 = vadd.f32 %v309, %v471
    %473 = vdwg.mxu0
    %474 = vmatpush.msra.mxu0 0.0
    %475 = vmatpush.msra.mxu0 0.0
    %476 = vmatpush.msra.mxu0 0.0
    %477 = vmatpush.msra.mxu0 0.0
    %478 = vmatpush.msra.mxu0 0.0
    %479 = vmatpush.msra.mxu0 0.0
    %480 = vmatpush.msra.mxu0 0.0
    %481 = vmatpush.msra.mxu0 0.0
    %482 = vmatpush.msra.mxu0 0.0
    %483 = vmatpush.msra.mxu0 0.0
    %484 = vmatpush.msra.mxu0 0.0
    %485 = vmatpush.msra.mxu0 0.0
    %486 = vmatpush.msra.mxu0 0.0
    %487 = vmatpush.msra.mxu0 0.0
    %488 = vmatpush.msra.mxu0 0.0
    %489 = vmatpush.msra.mxu0 %v168
    %490 = vmatmul.f32.gmra.mxu0 %v372
    %v491 = vpop.f32.mrf.mxu0
    %v492 = vadd.f32 %v329, %v491
    %493 = vdwg.mxu0
    %494 = vmatpush.msra.mxu0 0.0
    %495 = vmatpush.msra.mxu0 0.0
    %496 = vmatpush.msra.mxu0 0.0
    %497 = vmatpush.msra.mxu0 0.0
    %498 = vmatpush.msra.mxu0 0.0
    %499 = vmatpush.msra.mxu0 0.0
    %500 = vmatpush.msra.mxu0 0.0
    %501 = vmatpush.msra.mxu0 0.0
    %502 = vmatpush.msra.mxu0 0.0
    %503 = vmatpush.msra.mxu0 0.0
    %504 = vmatpush.msra.mxu0 0.0
    %505 = vmatpush.msra.mxu0 0.0
    %506 = vmatpush.msra.mxu0 0.0
    %507 = vmatpush.msra.mxu0 0.0
    %508 = vmatpush.msra.mxu0 0.0
    %509 = vmatpush.msra.mxu0 %v169
    %510 = vmatmul.f32.gmra.mxu0 %v372
    %v511 = vpop.f32.mrf.mxu0
    %v512 = vadd.f32 %v349, %v511
    %513 = vdwg.mxu0
    %514 = vmatpush.msra.mxu0 0.0
    %515 = vmatpush.msra.mxu0 0.0
    %516 = vmatpush.msra.mxu0 0.0
    %517 = vmatpush.msra.mxu0 0.0
    %518 = vmatpush.msra.mxu0 0.0
    %519 = vmatpush.msra.mxu0 0.0
    %520 = vmatpush.msra.mxu0 0.0
    %521 = vmatpush.msra.mxu0 0.0
    %522 = vmatpush.msra.mxu0 0.0
    %523 = vmatpush.msra.mxu0 0.0
    %524 = vmatpush.msra.mxu0 0.0
    %525 = vmatpush.msra.mxu0 0.0
    %526 = vmatpush.msra.mxu0 0.0
    %527 = vmatpush.msra.mxu0 0.0
    %528 = vmatpush.msra.mxu0 0.0
    %529 = vmatpush.msra.mxu0 %v170
    %530 = vmatmul.f32.gmra.mxu0 %v372
    %v531 = vpop.f32.mrf.mxu0
    %v532 = vadd.f32 %v369, %v531
    %533 = vdwg.mxu0
    %534 = vrot.lane.b32.xlu0 %v66, 71
    %v535 = vpop.permute.xlu0 %534
    %536 = vrot.lane.b32.xlu0 %v67, 71
    %v537 = vpop.permute.xlu0 %536
    %538 = vrot.lane.b32.xlu0 %v68, 71
    %v539 = vpop.permute.xlu0 %538
    %540 = vrot.lane.b32.xlu0 %v69, 71
    %v541 = vpop.permute.xlu0 %540
    %542 = vrot.lane.b32.xlu0 %v70, 71
    %v543 = vpop.permute.xlu0 %542
    %544 = vrot.lane.b32.xlu0 %v71, 71
    %v545 = vpop.permute.xlu0 %544
    %546 = vrot.lane.b32.xlu0 %v72, 71
    %v547 = vpop.permute.xlu0 %546
    %548 = vrot.lane.b32.xlu0 %v73, 71
    %v549 = vpop.permute.xlu0 %548
    %vm550 = vcmp.lt.s32.totalorder %v26, 71
    %v551 = vsel %vm550, %v547, %v549
    %v552 = vsel %vm550, %v545, %v547
    %v553 = vsel %vm550, %v543, %v545
    %v554 = vsel %vm550, %v541, %v543
    %v555 = vsel %vm550, %v539, %v541
    %v556 = vsel %vm550, %v537, %v539
    %v557 = vsel %vm550, %v535, %v537
    %v558 = vsel %vm550, %v549, %v535
    %vm559 = vmand %vm122, %vm114
    %vm560 = vmand %vm123, %vm115
    %vm561 = vmand %vm124, %vm116
    %vm562 = vmand %vm125, %vm117
    %vm563 = vmand %vm126, %vm118
    %vm564 = vmand %vm127, %vm119
    %vm565 = vmand %vm128, %vm120
    %vm566 = vmand %vm129, %vm121
    %v567 = vsel %vm559, %v558, 0.0
    %v568 = vsel %vm560, %v557, 0.0
    %v569 = vsel %vm561, %v556, 0.0
    %v570 = vsel %vm562, %v555, 0.0
    %v571 = vsel %vm563, %v554, 0.0
    %v572 = vsel %vm564, %v553, 0.0
    %v573 = vsel %vm565, %v552, 0.0
    %v574 = vsel %vm566, %v551, 0.0
    %s575 = scalar_lea.vmem %s1, 16
    %v576 = vld [vmem:[%s575] sm:$0xff]
    %v578 = vsel %vm207, %v576, 0
    %580 = vmatpush.msra.mxu0 0.0
    %581 = vmatpush.msra.mxu0 0.0
    %582 = vmatpush.msra.mxu0 0.0
    %583 = vmatpush.msra.mxu0 0.0
    %584 = vmatpush.msra.mxu0 0.0
    %585 = vmatpush.msra.mxu0 0.0
    %586 = vmatpush.msra.mxu0 0.0
    %587 = vmatpush.msra.mxu0 0.0
    %588 = vmatpush.msra.mxu0 0.0
    %589 = vmatpush.msra.mxu0 0.0
    %590 = vmatpush.msra.mxu0 0.0
    %591 = vmatpush.msra.mxu0 0.0
    %592 = vmatpush.msra.mxu0 0.0
    %593 = vmatpush.msra.mxu0 0.0
    %594 = vmatpush.msra.mxu0 0.0
    %595 = vmatpush.msra.mxu0 %v567
    %596 = vmatmul.f32.gmra.mxu0 %v578
    %v597 = vpop.f32.mrf.mxu0
    %v598 = vadd.f32 0.0, %v597
    %599 = vdwg.mxu0
    %600 = vmatpush.msra.mxu0 0.0
    %601 = vmatpush.msra.mxu0 0.0
    %602 = vmatpush.msra.mxu0 0.0
    %603 = vmatpush.msra.mxu0 0.0
    %604 = vmatpush.msra.mxu0 0.0
    %605 = vmatpush.msra.mxu0 0.0
    %606 = vmatpush.msra.mxu0 0.0
    %607 = vmatpush.msra.mxu0 0.0
    %608 = vmatpush.msra.mxu0 0.0
    %609 = vmatpush.msra.mxu0 0.0
    %610 = vmatpush.msra.mxu0 0.0
    %611 = vmatpush.msra.mxu0 0.0
    %612 = vmatpush.msra.mxu0 0.0
    %613 = vmatpush.msra.mxu0 0.0
    %614 = vmatpush.msra.mxu0 0.0
    %615 = vmatpush.msra.mxu0 %v568
    %616 = vmatmul.f32.gmra.mxu0 %v578
    %v617 = vpop.f32.mrf.mxu0
    %v618 = vadd.f32 0.0, %v617
    %619 = vdwg.mxu0
    %620 = vmatpush.msra.mxu0 0.0
    %621 = vmatpush.msra.mxu0 0.0
    %622 = vmatpush.msra.mxu0 0.0
    %623 = vmatpush.msra.mxu0 0.0
    %624 = vmatpush.msra.mxu0 0.0
    %625 = vmatpush.msra.mxu0 0.0
    %626 = vmatpush.msra.mxu0 0.0
    %627 = vmatpush.msra.mxu0 0.0
    %628 = vmatpush.msra.mxu0 0.0
    %629 = vmatpush.msra.mxu0 0.0
    %630 = vmatpush.msra.mxu0 0.0
    %631 = vmatpush.msra.mxu0 0.0
    %632 = vmatpush.msra.mxu0 0.0
    %633 = vmatpush.msra.mxu0 0.0
    %634 = vmatpush.msra.mxu0 0.0
    %635 = vmatpush.msra.mxu0 %v569
    %636 = vmatmul.f32.gmra.mxu0 %v578
    %v637 = vpop.f32.mrf.mxu0
    %v638 = vadd.f32 0.0, %v637
    %639 = vdwg.mxu0
    %640 = vmatpush.msra.mxu0 0.0
    %641 = vmatpush.msra.mxu0 0.0
    %642 = vmatpush.msra.mxu0 0.0
    %643 = vmatpush.msra.mxu0 0.0
    %644 = vmatpush.msra.mxu0 0.0
    %645 = vmatpush.msra.mxu0 0.0
    %646 = vmatpush.msra.mxu0 0.0
    %647 = vmatpush.msra.mxu0 0.0
    %648 = vmatpush.msra.mxu0 0.0
    %649 = vmatpush.msra.mxu0 0.0
    %650 = vmatpush.msra.mxu0 0.0
    %651 = vmatpush.msra.mxu0 0.0
    %652 = vmatpush.msra.mxu0 0.0
    %653 = vmatpush.msra.mxu0 0.0
    %654 = vmatpush.msra.mxu0 0.0
    %655 = vmatpush.msra.mxu0 %v570
    %656 = vmatmul.f32.gmra.mxu0 %v578
    %v657 = vpop.f32.mrf.mxu0
    %v658 = vadd.f32 0.0, %v657
    %659 = vdwg.mxu0
    %660 = vmatpush.msra.mxu0 0.0
    %661 = vmatpush.msra.mxu0 0.0
    %662 = vmatpush.msra.mxu0 0.0
    %663 = vmatpush.msra.mxu0 0.0
    %664 = vmatpush.msra.mxu0 0.0
    %665 = vmatpush.msra.mxu0 0.0
    %666 = vmatpush.msra.mxu0 0.0
    %667 = vmatpush.msra.mxu0 0.0
    %668 = vmatpush.msra.mxu0 0.0
    %669 = vmatpush.msra.mxu0 0.0
    %670 = vmatpush.msra.mxu0 0.0
    %671 = vmatpush.msra.mxu0 0.0
    %672 = vmatpush.msra.mxu0 0.0
    %673 = vmatpush.msra.mxu0 0.0
    %674 = vmatpush.msra.mxu0 0.0
    %675 = vmatpush.msra.mxu0 %v571
    %676 = vmatmul.f32.gmra.mxu0 %v578
    %v677 = vpop.f32.mrf.mxu0
    %v678 = vadd.f32 0.0, %v677
    %679 = vdwg.mxu0
    %680 = vmatpush.msra.mxu0 0.0
    %681 = vmatpush.msra.mxu0 0.0
    %682 = vmatpush.msra.mxu0 0.0
    %683 = vmatpush.msra.mxu0 0.0
    %684 = vmatpush.msra.mxu0 0.0
    %685 = vmatpush.msra.mxu0 0.0
    %686 = vmatpush.msra.mxu0 0.0
    %687 = vmatpush.msra.mxu0 0.0
    %688 = vmatpush.msra.mxu0 0.0
    %689 = vmatpush.msra.mxu0 0.0
    %690 = vmatpush.msra.mxu0 0.0
    %691 = vmatpush.msra.mxu0 0.0
    %692 = vmatpush.msra.mxu0 0.0
    %693 = vmatpush.msra.mxu0 0.0
    %694 = vmatpush.msra.mxu0 0.0
    %695 = vmatpush.msra.mxu0 %v572
    %696 = vmatmul.f32.gmra.mxu0 %v578
    %v697 = vpop.f32.mrf.mxu0
    %v698 = vadd.f32 0.0, %v697
    %699 = vdwg.mxu0
    %700 = vmatpush.msra.mxu0 0.0
    %701 = vmatpush.msra.mxu0 0.0
    %702 = vmatpush.msra.mxu0 0.0
    %703 = vmatpush.msra.mxu0 0.0
    %704 = vmatpush.msra.mxu0 0.0
    %705 = vmatpush.msra.mxu0 0.0
    %706 = vmatpush.msra.mxu0 0.0
    %707 = vmatpush.msra.mxu0 0.0
    %708 = vmatpush.msra.mxu0 0.0
    %709 = vmatpush.msra.mxu0 0.0
    %710 = vmatpush.msra.mxu0 0.0
    %711 = vmatpush.msra.mxu0 0.0
    %712 = vmatpush.msra.mxu0 0.0
    %713 = vmatpush.msra.mxu0 0.0
    %714 = vmatpush.msra.mxu0 0.0
    %715 = vmatpush.msra.mxu0 %v573
    %716 = vmatmul.f32.gmra.mxu0 %v578
    %v717 = vpop.f32.mrf.mxu0
    %v718 = vadd.f32 0.0, %v717
    %719 = vdwg.mxu0
    %720 = vmatpush.msra.mxu0 0.0
    %721 = vmatpush.msra.mxu0 0.0
    %722 = vmatpush.msra.mxu0 0.0
    %723 = vmatpush.msra.mxu0 0.0
    %724 = vmatpush.msra.mxu0 0.0
    %725 = vmatpush.msra.mxu0 0.0
    %726 = vmatpush.msra.mxu0 0.0
    %727 = vmatpush.msra.mxu0 0.0
    %728 = vmatpush.msra.mxu0 0.0
    %729 = vmatpush.msra.mxu0 0.0
    %730 = vmatpush.msra.mxu0 0.0
    %731 = vmatpush.msra.mxu0 0.0
    %732 = vmatpush.msra.mxu0 0.0
    %733 = vmatpush.msra.mxu0 0.0
    %734 = vmatpush.msra.mxu0 0.0
    %735 = vmatpush.msra.mxu0 %v574
    %736 = vmatmul.f32.gmra.mxu0 %v578
    %v737 = vpop.f32.mrf.mxu0
    %v738 = vadd.f32 0.0, %v737
    %739 = vdwg.mxu0
    %v740 = vadd.f32 %v392, %v598
    %v741 = vadd.f32 %v412, %v618
    %v742 = vadd.f32 %v432, %v638
    %v743 = vadd.f32 %v452, %v658
    %v744 = vadd.f32 %v472, %v678
    %v745 = vadd.f32 %v492, %v698
    %v746 = vadd.f32 %v512, %v718
    %v747 = vadd.f32 %v532, %v738
    %748 = vrot.lane.b32.xlu0 %v66, 65
    %v749 = vpop.permute.xlu0 %748
    %750 = vrot.lane.b32.xlu0 %v67, 65
    %v751 = vpop.permute.xlu0 %750
    %752 = vrot.lane.b32.xlu0 %v68, 65
    %v753 = vpop.permute.xlu0 %752
    %754 = vrot.lane.b32.xlu0 %v69, 65
    %v755 = vpop.permute.xlu0 %754
    %756 = vrot.lane.b32.xlu0 %v70, 65
    %v757 = vpop.permute.xlu0 %756
    %758 = vrot.lane.b32.xlu0 %v71, 65
    %v759 = vpop.permute.xlu0 %758
    %760 = vrot.lane.b32.xlu0 %v72, 65
    %v761 = vpop.permute.xlu0 %760
    %762 = vrot.lane.b32.xlu0 %v73, 65
    %v763 = vpop.permute.xlu0 %762
    %vm764 = vcmp.lt.s32.totalorder %v26, 65
    %v765 = vsel %vm764, %v761, %v763
    %v766 = vsel %vm764, %v759, %v761
    %v767 = vsel %vm764, %v757, %v759
    %v768 = vsel %vm764, %v755, %v757
    %v769 = vsel %vm764, %v753, %v755
    %v770 = vsel %vm764, %v751, %v753
    %v771 = vsel %vm764, %v749, %v751
    %v772 = vsel %vm764, %v763, %v749
    %vm773 = vmand %vm74, %vm106
    %vm774 = vmand %vm75, %vm107
    %vm775 = vmand %vm76, %vm108
    %vm776 = vmand %vm77, %vm109
    %vm777 = vmand %vm78, %vm110
    %vm778 = vmand %vm79, %vm111
    %vm779 = vmand %vm80, %vm112
    %vm780 = vmand %vm81, %vm113
    %v781 = vsel %vm773, %v772, 0.0
    %v782 = vsel %vm774, %v771, 0.0
    %v783 = vsel %vm775, %v770, 0.0
    %v784 = vsel %vm776, %v769, 0.0
    %v785 = vsel %vm777, %v768, 0.0
    %v786 = vsel %vm778, %v767, 0.0
    %v787 = vsel %vm779, %v766, 0.0
    %v788 = vsel %vm780, %v765, 0.0
    %s789 = scalar_lea.vmem %s1, 24
    %v790 = vld [vmem:[%s789] sm:$0xff]
    %v792 = vsel %vm207, %v790, 0
    %794 = vmatpush.msra.mxu0 0.0
    %795 = vmatpush.msra.mxu0 0.0
    %796 = vmatpush.msra.mxu0 0.0
    %797 = vmatpush.msra.mxu0 0.0
    %798 = vmatpush.msra.mxu0 0.0
    %799 = vmatpush.msra.mxu0 0.0
    %800 = vmatpush.msra.mxu0 0.0
    %801 = vmatpush.msra.mxu0 0.0
    %802 = vmatpush.msra.mxu0 0.0
    %803 = vmatpush.msra.mxu0 0.0
    %804 = vmatpush.msra.mxu0 0.0
    %805 = vmatpush.msra.mxu0 0.0
    %806 = vmatpush.msra.mxu0 0.0
    %807 = vmatpush.msra.mxu0 0.0
    %808 = vmatpush.msra.mxu0 0.0
    %809 = vmatpush.msra.mxu0 %v781
    %810 = vmatmul.f32.gmra.mxu0 %v792
    %v811 = vpop.f32.mrf.mxu0
    %v812 = vadd.f32 0.0, %v811
    %813 = vdwg.mxu0
    %814 = vmatpush.msra.mxu0 0.0
    %815 = vmatpush.msra.mxu0 0.0
    %816 = vmatpush.msra.mxu0 0.0
    %817 = vmatpush.msra.mxu0 0.0
    %818 = vmatpush.msra.mxu0 0.0
    %819 = vmatpush.msra.mxu0 0.0
    %820 = vmatpush.msra.mxu0 0.0
    %821 = vmatpush.msra.mxu0 0.0
    %822 = vmatpush.msra.mxu0 0.0
    %823 = vmatpush.msra.mxu0 0.0
    %824 = vmatpush.msra.mxu0 0.0
    %825 = vmatpush.msra.mxu0 0.0
    %826 = vmatpush.msra.mxu0 0.0
    %827 = vmatpush.msra.mxu0 0.0
    %828 = vmatpush.msra.mxu0 0.0
    %829 = vmatpush.msra.mxu0 %v782
    %830 = vmatmul.f32.gmra.mxu0 %v792
    %v831 = vpop.f32.mrf.mxu0
    %v832 = vadd.f32 0.0, %v831
    %833 = vdwg.mxu0
    %834 = vmatpush.msra.mxu0 0.0
    %835 = vmatpush.msra.mxu0 0.0
    %836 = vmatpush.msra.mxu0 0.0
    %837 = vmatpush.msra.mxu0 0.0
    %838 = vmatpush.msra.mxu0 0.0
    %839 = vmatpush.msra.mxu0 0.0
    %840 = vmatpush.msra.mxu0 0.0
    %841 = vmatpush.msra.mxu0 0.0
    %842 = vmatpush.msra.mxu0 0.0
    %843 = vmatpush.msra.mxu0 0.0
    %844 = vmatpush.msra.mxu0 0.0
    %845 = vmatpush.msra.mxu0 0.0
    %846 = vmatpush.msra.mxu0 0.0
    %847 = vmatpush.msra.mxu0 0.0
    %848 = vmatpush.msra.mxu0 0.0
    %849 = vmatpush.msra.mxu0 %v783
    %850 = vmatmul.f32.gmra.mxu0 %v792
    %v851 = vpop.f32.mrf.mxu0
    %v852 = vadd.f32 0.0, %v851
    %853 = vdwg.mxu0
    %854 = vmatpush.msra.mxu0 0.0
    %855 = vmatpush.msra.mxu0 0.0
    %856 = vmatpush.msra.mxu0 0.0
    %857 = vmatpush.msra.mxu0 0.0
    %858 = vmatpush.msra.mxu0 0.0
    %859 = vmatpush.msra.mxu0 0.0
    %860 = vmatpush.msra.mxu0 0.0
    %861 = vmatpush.msra.mxu0 0.0
    %862 = vmatpush.msra.mxu0 0.0
    %863 = vmatpush.msra.mxu0 0.0
    %864 = vmatpush.msra.mxu0 0.0
    %865 = vmatpush.msra.mxu0 0.0
    %866 = vmatpush.msra.mxu0 0.0
    %867 = vmatpush.msra.mxu0 0.0
    %868 = vmatpush.msra.mxu0 0.0
    %869 = vmatpush.msra.mxu0 %v784
    %870 = vmatmul.f32.gmra.mxu0 %v792
    %v871 = vpop.f32.mrf.mxu0
    %v872 = vadd.f32 0.0, %v871
    %873 = vdwg.mxu0
    %874 = vmatpush.msra.mxu0 0.0
    %875 = vmatpush.msra.mxu0 0.0
    %876 = vmatpush.msra.mxu0 0.0
    %877 = vmatpush.msra.mxu0 0.0
    %878 = vmatpush.msra.mxu0 0.0
    %879 = vmatpush.msra.mxu0 0.0
    %880 = vmatpush.msra.mxu0 0.0
    %881 = vmatpush.msra.mxu0 0.0
    %882 = vmatpush.msra.mxu0 0.0
    %883 = vmatpush.msra.mxu0 0.0
    %884 = vmatpush.msra.mxu0 0.0
    %885 = vmatpush.msra.mxu0 0.0
    %886 = vmatpush.msra.mxu0 0.0
    %887 = vmatpush.msra.mxu0 0.0
    %888 = vmatpush.msra.mxu0 0.0
    %889 = vmatpush.msra.mxu0 %v785
    %890 = vmatmul.f32.gmra.mxu0 %v792
    %v891 = vpop.f32.mrf.mxu0
    %v892 = vadd.f32 0.0, %v891
    %893 = vdwg.mxu0
    %894 = vmatpush.msra.mxu0 0.0
    %895 = vmatpush.msra.mxu0 0.0
    %896 = vmatpush.msra.mxu0 0.0
    %897 = vmatpush.msra.mxu0 0.0
    %898 = vmatpush.msra.mxu0 0.0
    %899 = vmatpush.msra.mxu0 0.0
    %900 = vmatpush.msra.mxu0 0.0
    %901 = vmatpush.msra.mxu0 0.0
    %902 = vmatpush.msra.mxu0 0.0
    %903 = vmatpush.msra.mxu0 0.0
    %904 = vmatpush.msra.mxu0 0.0
    %905 = vmatpush.msra.mxu0 0.0
    %906 = vmatpush.msra.mxu0 0.0
    %907 = vmatpush.msra.mxu0 0.0
    %908 = vmatpush.msra.mxu0 0.0
    %909 = vmatpush.msra.mxu0 %v786
    %910 = vmatmul.f32.gmra.mxu0 %v792
    %v911 = vpop.f32.mrf.mxu0
    %v912 = vadd.f32 0.0, %v911
    %913 = vdwg.mxu0
    %914 = vmatpush.msra.mxu0 0.0
    %915 = vmatpush.msra.mxu0 0.0
    %916 = vmatpush.msra.mxu0 0.0
    %917 = vmatpush.msra.mxu0 0.0
    %918 = vmatpush.msra.mxu0 0.0
    %919 = vmatpush.msra.mxu0 0.0
    %920 = vmatpush.msra.mxu0 0.0
    %921 = vmatpush.msra.mxu0 0.0
    %922 = vmatpush.msra.mxu0 0.0
    %923 = vmatpush.msra.mxu0 0.0
    %924 = vmatpush.msra.mxu0 0.0
    %925 = vmatpush.msra.mxu0 0.0
    %926 = vmatpush.msra.mxu0 0.0
    %927 = vmatpush.msra.mxu0 0.0
    %928 = vmatpush.msra.mxu0 0.0
    %929 = vmatpush.msra.mxu0 %v787
    %930 = vmatmul.f32.gmra.mxu0 %v792
    %v931 = vpop.f32.mrf.mxu0
    %v932 = vadd.f32 0.0, %v931
    %933 = vdwg.mxu0
    %934 = vmatpush.msra.mxu0 0.0
    %935 = vmatpush.msra.mxu0 0.0
    %936 = vmatpush.msra.mxu0 0.0
    %937 = vmatpush.msra.mxu0 0.0
    %938 = vmatpush.msra.mxu0 0.0
    %939 = vmatpush.msra.mxu0 0.0
    %940 = vmatpush.msra.mxu0 0.0
    %941 = vmatpush.msra.mxu0 0.0
    %942 = vmatpush.msra.mxu0 0.0
    %943 = vmatpush.msra.mxu0 0.0
    %944 = vmatpush.msra.mxu0 0.0
    %945 = vmatpush.msra.mxu0 0.0
    %946 = vmatpush.msra.mxu0 0.0
    %947 = vmatpush.msra.mxu0 0.0
    %948 = vmatpush.msra.mxu0 0.0
    %949 = vmatpush.msra.mxu0 %v788
    %950 = vmatmul.f32.gmra.mxu0 %v792
    %v951 = vpop.f32.mrf.mxu0
    %v952 = vadd.f32 0.0, %v951
    %953 = vdwg.mxu0
    %v954 = vadd.f32 %v740, %v812
    %v955 = vadd.f32 %v741, %v832
    %v956 = vadd.f32 %v742, %v852
    %v957 = vadd.f32 %v743, %v872
    %v958 = vadd.f32 %v744, %v892
    %v959 = vadd.f32 %v745, %v912
    %v960 = vadd.f32 %v746, %v932
    %v961 = vadd.f32 %v747, %v952
    %962 = vrot.lane.b32.xlu0 %v66, 64
    %v963 = vpop.permute.xlu0 %962
    %964 = vrot.lane.b32.xlu0 %v67, 64
    %v965 = vpop.permute.xlu0 %964
    %966 = vrot.lane.b32.xlu0 %v68, 64
    %v967 = vpop.permute.xlu0 %966
    %968 = vrot.lane.b32.xlu0 %v69, 64
    %v969 = vpop.permute.xlu0 %968
    %970 = vrot.lane.b32.xlu0 %v70, 64
    %v971 = vpop.permute.xlu0 %970
    %972 = vrot.lane.b32.xlu0 %v71, 64
    %v973 = vpop.permute.xlu0 %972
    %974 = vrot.lane.b32.xlu0 %v72, 64
    %v975 = vpop.permute.xlu0 %974
    %976 = vrot.lane.b32.xlu0 %v73, 64
    %v977 = vpop.permute.xlu0 %976
    %vm978 = vcmp.lt.s32.totalorder %v26, 64
    %v979 = vsel %vm978, %v975, %v977
    %v980 = vsel %vm978, %v973, %v975
    %v981 = vsel %vm978, %v971, %v973
    %v982 = vsel %vm978, %v969, %v971
    %v983 = vsel %vm978, %v967, %v969
    %v984 = vsel %vm978, %v965, %v967
    %v985 = vsel %vm978, %v963, %v965
    %v986 = vsel %vm978, %v977, %v963
    %v987 = vsel %vm74, %v986, 0.0
    %v988 = vsel %vm75, %v985, 0.0
    %v989 = vsel %vm76, %v984, 0.0
    %v990 = vsel %vm77, %v983, 0.0
    %v991 = vsel %vm78, %v982, 0.0
    %v992 = vsel %vm79, %v981, 0.0
    %v993 = vsel %vm80, %v980, 0.0
    %v994 = vsel %vm81, %v979, 0.0
    %s995 = scalar_lea.vmem %s1, 32
    %v996 = vld [vmem:[%s995] sm:$0xff]
    %v998 = vsel %vm207, %v996, 0
    %1000 = vmatpush.msra.mxu0 0.0
    %1001 = vmatpush.msra.mxu0 0.0
    %1002 = vmatpush.msra.mxu0 0.0
    %1003 = vmatpush.msra.mxu0 0.0
    %1004 = vmatpush.msra.mxu0 0.0
    %1005 = vmatpush.msra.mxu0 0.0
    %1006 = vmatpush.msra.mxu0 0.0
    %1007 = vmatpush.msra.mxu0 0.0
    %1008 = vmatpush.msra.mxu0 0.0
    %1009 = vmatpush.msra.mxu0 0.0
    %1010 = vmatpush.msra.mxu0 0.0
    %1011 = vmatpush.msra.mxu0 0.0
    %1012 = vmatpush.msra.mxu0 0.0
    %1013 = vmatpush.msra.mxu0 0.0
    %1014 = vmatpush.msra.mxu0 0.0
    %1015 = vmatpush.msra.mxu0 %v987
    %1016 = vmatmul.f32.gmra.mxu0 %v998
    %v1017 = vpop.f32.mrf.mxu0
    %v1018 = vadd.f32 0.0, %v1017
    %1019 = vdwg.mxu0
    %1020 = vmatpush.msra.mxu0 0.0
    %1021 = vmatpush.msra.mxu0 0.0
    %1022 = vmatpush.msra.mxu0 0.0
    %1023 = vmatpush.msra.mxu0 0.0
    %1024 = vmatpush.msra.mxu0 0.0
    %1025 = vmatpush.msra.mxu0 0.0
    %1026 = vmatpush.msra.mxu0 0.0
    %1027 = vmatpush.msra.mxu0 0.0
    %1028 = vmatpush.msra.mxu0 0.0
    %1029 = vmatpush.msra.mxu0 0.0
    %1030 = vmatpush.msra.mxu0 0.0
    %1031 = vmatpush.msra.mxu0 0.0
    %1032 = vmatpush.msra.mxu0 0.0
    %1033 = vmatpush.msra.mxu0 0.0
    %1034 = vmatpush.msra.mxu0 0.0
    %1035 = vmatpush.msra.mxu0 %v988
    %1036 = vmatmul.f32.gmra.mxu0 %v998
    %v1037 = vpop.f32.mrf.mxu0
    %v1038 = vadd.f32 0.0, %v1037
    %1039 = vdwg.mxu0
    %1040 = vmatpush.msra.mxu0 0.0
    %1041 = vmatpush.msra.mxu0 0.0
    %1042 = vmatpush.msra.mxu0 0.0
    %1043 = vmatpush.msra.mxu0 0.0
    %1044 = vmatpush.msra.mxu0 0.0
    %1045 = vmatpush.msra.mxu0 0.0
    %1046 = vmatpush.msra.mxu0 0.0
    %1047 = vmatpush.msra.mxu0 0.0
    %1048 = vmatpush.msra.mxu0 0.0
    %1049 = vmatpush.msra.mxu0 0.0
    %1050 = vmatpush.msra.mxu0 0.0
    %1051 = vmatpush.msra.mxu0 0.0
    %1052 = vmatpush.msra.mxu0 0.0
    %1053 = vmatpush.msra.mxu0 0.0
    %1054 = vmatpush.msra.mxu0 0.0
    %1055 = vmatpush.msra.mxu0 %v989
    %1056 = vmatmul.f32.gmra.mxu0 %v998
    %v1057 = vpop.f32.mrf.mxu0
    %v1058 = vadd.f32 0.0, %v1057
    %1059 = vdwg.mxu0
    %1060 = vmatpush.msra.mxu0 0.0
    %1061 = vmatpush.msra.mxu0 0.0
    %1062 = vmatpush.msra.mxu0 0.0
    %1063 = vmatpush.msra.mxu0 0.0
    %1064 = vmatpush.msra.mxu0 0.0
    %1065 = vmatpush.msra.mxu0 0.0
    %1066 = vmatpush.msra.mxu0 0.0
    %1067 = vmatpush.msra.mxu0 0.0
    %1068 = vmatpush.msra.mxu0 0.0
    %1069 = vmatpush.msra.mxu0 0.0
    %1070 = vmatpush.msra.mxu0 0.0
    %1071 = vmatpush.msra.mxu0 0.0
    %1072 = vmatpush.msra.mxu0 0.0
    %1073 = vmatpush.msra.mxu0 0.0
    %1074 = vmatpush.msra.mxu0 0.0
    %1075 = vmatpush.msra.mxu0 %v990
    %1076 = vmatmul.f32.gmra.mxu0 %v998
    %v1077 = vpop.f32.mrf.mxu0
    %v1078 = vadd.f32 0.0, %v1077
    %1079 = vdwg.mxu0
    %1080 = vmatpush.msra.mxu0 0.0
    %1081 = vmatpush.msra.mxu0 0.0
    %1082 = vmatpush.msra.mxu0 0.0
    %1083 = vmatpush.msra.mxu0 0.0
    %1084 = vmatpush.msra.mxu0 0.0
    %1085 = vmatpush.msra.mxu0 0.0
    %1086 = vmatpush.msra.mxu0 0.0
    %1087 = vmatpush.msra.mxu0 0.0
    %1088 = vmatpush.msra.mxu0 0.0
    %1089 = vmatpush.msra.mxu0 0.0
    %1090 = vmatpush.msra.mxu0 0.0
    %1091 = vmatpush.msra.mxu0 0.0
    %1092 = vmatpush.msra.mxu0 0.0
    %1093 = vmatpush.msra.mxu0 0.0
    %1094 = vmatpush.msra.mxu0 0.0
    %1095 = vmatpush.msra.mxu0 %v991
    %1096 = vmatmul.f32.gmra.mxu0 %v998
    %v1097 = vpop.f32.mrf.mxu0
    %v1098 = vadd.f32 0.0, %v1097
    %1099 = vdwg.mxu0
    %1100 = vmatpush.msra.mxu0 0.0
    %1101 = vmatpush.msra.mxu0 0.0
    %1102 = vmatpush.msra.mxu0 0.0
    %1103 = vmatpush.msra.mxu0 0.0
    %1104 = vmatpush.msra.mxu0 0.0
    %1105 = vmatpush.msra.mxu0 0.0
    %1106 = vmatpush.msra.mxu0 0.0
    %1107 = vmatpush.msra.mxu0 0.0
    %1108 = vmatpush.msra.mxu0 0.0
    %1109 = vmatpush.msra.mxu0 0.0
    %1110 = vmatpush.msra.mxu0 0.0
    %1111 = vmatpush.msra.mxu0 0.0
    %1112 = vmatpush.msra.mxu0 0.0
    %1113 = vmatpush.msra.mxu0 0.0
    %1114 = vmatpush.msra.mxu0 0.0
    %1115 = vmatpush.msra.mxu0 %v992
    %1116 = vmatmul.f32.gmra.mxu0 %v998
    %v1117 = vpop.f32.mrf.mxu0
    %v1118 = vadd.f32 0.0, %v1117
    %1119 = vdwg.mxu0
    %1120 = vmatpush.msra.mxu0 0.0
    %1121 = vmatpush.msra.mxu0 0.0
    %1122 = vmatpush.msra.mxu0 0.0
    %1123 = vmatpush.msra.mxu0 0.0
    %1124 = vmatpush.msra.mxu0 0.0
    %1125 = vmatpush.msra.mxu0 0.0
    %1126 = vmatpush.msra.mxu0 0.0
    %1127 = vmatpush.msra.mxu0 0.0
    %1128 = vmatpush.msra.mxu0 0.0
    %1129 = vmatpush.msra.mxu0 0.0
    %1130 = vmatpush.msra.mxu0 0.0
    %1131 = vmatpush.msra.mxu0 0.0
    %1132 = vmatpush.msra.mxu0 0.0
    %1133 = vmatpush.msra.mxu0 0.0
    %1134 = vmatpush.msra.mxu0 0.0
    %1135 = vmatpush.msra.mxu0 %v993
    %1136 = vmatmul.f32.gmra.mxu0 %v998
    %v1137 = vpop.f32.mrf.mxu0
    %v1138 = vadd.f32 0.0, %v1137
    %1139 = vdwg.mxu0
    %1140 = vmatpush.msra.mxu0 0.0
    %1141 = vmatpush.msra.mxu0 0.0
    %1142 = vmatpush.msra.mxu0 0.0
    %1143 = vmatpush.msra.mxu0 0.0
    %1144 = vmatpush.msra.mxu0 0.0
    %1145 = vmatpush.msra.mxu0 0.0
    %1146 = vmatpush.msra.mxu0 0.0
    %1147 = vmatpush.msra.mxu0 0.0
    %1148 = vmatpush.msra.mxu0 0.0
    %1149 = vmatpush.msra.mxu0 0.0
    %1150 = vmatpush.msra.mxu0 0.0
    %1151 = vmatpush.msra.mxu0 0.0
    %1152 = vmatpush.msra.mxu0 0.0
    %1153 = vmatpush.msra.mxu0 0.0
    %1154 = vmatpush.msra.mxu0 0.0
    %1155 = vmatpush.msra.mxu0 %v994
    %1156 = vmatmul.f32.gmra.mxu0 %v998
    %v1157 = vpop.f32.mrf.mxu0
    %v1158 = vadd.f32 0.0, %v1157
    %1159 = vdwg.mxu0
    %v1160 = vadd.f32 %v954, %v1018
    %v1161 = vadd.f32 %v955, %v1038
    %v1162 = vadd.f32 %v956, %v1058
    %v1163 = vadd.f32 %v957, %v1078
    %v1164 = vadd.f32 %v958, %v1098
    %v1165 = vadd.f32 %v959, %v1118
    %v1166 = vadd.f32 %v960, %v1138
    %v1167 = vadd.f32 %v961, %v1158
    %1168 = vrot.lane.b32.xlu0 %v66, 63
    %v1169 = vpop.permute.xlu0 %1168
    %1170 = vrot.lane.b32.xlu0 %v67, 63
    %v1171 = vpop.permute.xlu0 %1170
    %1172 = vrot.lane.b32.xlu0 %v68, 63
    %v1173 = vpop.permute.xlu0 %1172
    %1174 = vrot.lane.b32.xlu0 %v69, 63
    %v1175 = vpop.permute.xlu0 %1174
    %1176 = vrot.lane.b32.xlu0 %v70, 63
    %v1177 = vpop.permute.xlu0 %1176
    %1178 = vrot.lane.b32.xlu0 %v71, 63
    %v1179 = vpop.permute.xlu0 %1178
    %1180 = vrot.lane.b32.xlu0 %v72, 63
    %v1181 = vpop.permute.xlu0 %1180
    %1182 = vrot.lane.b32.xlu0 %v73, 63
    %v1183 = vpop.permute.xlu0 %1182
    %vm1184 = vcmp.lt.s32.totalorder %v26, 63
    %v1185 = vsel %vm1184, %v1181, %v1183
    %v1186 = vsel %vm1184, %v1179, %v1181
    %v1187 = vsel %vm1184, %v1177, %v1179
    %v1188 = vsel %vm1184, %v1175, %v1177
    %v1189 = vsel %vm1184, %v1173, %v1175
    %v1190 = vsel %vm1184, %v1171, %v1173
    %v1191 = vsel %vm1184, %v1169, %v1171
    %v1192 = vsel %vm1184, %v1183, %v1169
    %vm1193 = vmand %vm74, %vm114
    %vm1194 = vmand %vm75, %vm115
    %vm1195 = vmand %vm76, %vm116
    %vm1196 = vmand %vm77, %vm117
    %vm1197 = vmand %vm78, %vm118
    %vm1198 = vmand %vm79, %vm119
    %vm1199 = vmand %vm80, %vm120
    %vm1200 = vmand %vm81, %vm121
    %v1201 = vsel %vm1193, %v1192, 0.0
    %v1202 = vsel %vm1194, %v1191, 0.0
    %v1203 = vsel %vm1195, %v1190, 0.0
    %v1204 = vsel %vm1196, %v1189, 0.0
    %v1205 = vsel %vm1197, %v1188, 0.0
    %v1206 = vsel %vm1198, %v1187, 0.0
    %v1207 = vsel %vm1199, %v1186, 0.0
    %v1208 = vsel %vm1200, %v1185, 0.0
    %s1209 = scalar_lea.vmem %s1, 40
    %v1210 = vld [vmem:[%s1209] sm:$0xff]
    %v1212 = vsel %vm207, %v1210, 0
    %1214 = vmatpush.msra.mxu0 0.0
    %1215 = vmatpush.msra.mxu0 0.0
    %1216 = vmatpush.msra.mxu0 0.0
    %1217 = vmatpush.msra.mxu0 0.0
    %1218 = vmatpush.msra.mxu0 0.0
    %1219 = vmatpush.msra.mxu0 0.0
    %1220 = vmatpush.msra.mxu0 0.0
    %1221 = vmatpush.msra.mxu0 0.0
    %1222 = vmatpush.msra.mxu0 0.0
    %1223 = vmatpush.msra.mxu0 0.0
    %1224 = vmatpush.msra.mxu0 0.0
    %1225 = vmatpush.msra.mxu0 0.0
    %1226 = vmatpush.msra.mxu0 0.0
    %1227 = vmatpush.msra.mxu0 0.0
    %1228 = vmatpush.msra.mxu0 0.0
    %1229 = vmatpush.msra.mxu0 %v1201
    %1230 = vmatmul.f32.gmra.mxu0 %v1212
    %v1231 = vpop.f32.mrf.mxu0
    %v1232 = vadd.f32 0.0, %v1231
    %1233 = vdwg.mxu0
    %1234 = vmatpush.msra.mxu0 0.0
    %1235 = vmatpush.msra.mxu0 0.0
    %1236 = vmatpush.msra.mxu0 0.0
    %1237 = vmatpush.msra.mxu0 0.0
    %1238 = vmatpush.msra.mxu0 0.0
    %1239 = vmatpush.msra.mxu0 0.0
    %1240 = vmatpush.msra.mxu0 0.0
    %1241 = vmatpush.msra.mxu0 0.0
    %1242 = vmatpush.msra.mxu0 0.0
    %1243 = vmatpush.msra.mxu0 0.0
    %1244 = vmatpush.msra.mxu0 0.0
    %1245 = vmatpush.msra.mxu0 0.0
    %1246 = vmatpush.msra.mxu0 0.0
    %1247 = vmatpush.msra.mxu0 0.0
    %1248 = vmatpush.msra.mxu0 0.0
    %1249 = vmatpush.msra.mxu0 %v1202
    %1250 = vmatmul.f32.gmra.mxu0 %v1212
    %v1251 = vpop.f32.mrf.mxu0
    %v1252 = vadd.f32 0.0, %v1251
    %1253 = vdwg.mxu0
    %1254 = vmatpush.msra.mxu0 0.0
    %1255 = vmatpush.msra.mxu0 0.0
    %1256 = vmatpush.msra.mxu0 0.0
    %1257 = vmatpush.msra.mxu0 0.0
    %1258 = vmatpush.msra.mxu0 0.0
    %1259 = vmatpush.msra.mxu0 0.0
    %1260 = vmatpush.msra.mxu0 0.0
    %1261 = vmatpush.msra.mxu0 0.0
    %1262 = vmatpush.msra.mxu0 0.0
    %1263 = vmatpush.msra.mxu0 0.0
    %1264 = vmatpush.msra.mxu0 0.0
    %1265 = vmatpush.msra.mxu0 0.0
    %1266 = vmatpush.msra.mxu0 0.0
    %1267 = vmatpush.msra.mxu0 0.0
    %1268 = vmatpush.msra.mxu0 0.0
    %1269 = vmatpush.msra.mxu0 %v1203
    %1270 = vmatmul.f32.gmra.mxu0 %v1212
    %v1271 = vpop.f32.mrf.mxu0
    %v1272 = vadd.f32 0.0, %v1271
    %1273 = vdwg.mxu0
    %1274 = vmatpush.msra.mxu0 0.0
    %1275 = vmatpush.msra.mxu0 0.0
    %1276 = vmatpush.msra.mxu0 0.0
    %1277 = vmatpush.msra.mxu0 0.0
    %1278 = vmatpush.msra.mxu0 0.0
    %1279 = vmatpush.msra.mxu0 0.0
    %1280 = vmatpush.msra.mxu0 0.0
    %1281 = vmatpush.msra.mxu0 0.0
    %1282 = vmatpush.msra.mxu0 0.0
    %1283 = vmatpush.msra.mxu0 0.0
    %1284 = vmatpush.msra.mxu0 0.0
    %1285 = vmatpush.msra.mxu0 0.0
    %1286 = vmatpush.msra.mxu0 0.0
    %1287 = vmatpush.msra.mxu0 0.0
    %1288 = vmatpush.msra.mxu0 0.0
    %1289 = vmatpush.msra.mxu0 %v1204
    %1290 = vmatmul.f32.gmra.mxu0 %v1212
    %v1291 = vpop.f32.mrf.mxu0
    %v1292 = vadd.f32 0.0, %v1291
    %1293 = vdwg.mxu0
    %1294 = vmatpush.msra.mxu0 0.0
    %1295 = vmatpush.msra.mxu0 0.0
    %1296 = vmatpush.msra.mxu0 0.0
    %1297 = vmatpush.msra.mxu0 0.0
    %1298 = vmatpush.msra.mxu0 0.0
    %1299 = vmatpush.msra.mxu0 0.0
    %1300 = vmatpush.msra.mxu0 0.0
    %1301 = vmatpush.msra.mxu0 0.0
    %1302 = vmatpush.msra.mxu0 0.0
    %1303 = vmatpush.msra.mxu0 0.0
    %1304 = vmatpush.msra.mxu0 0.0
    %1305 = vmatpush.msra.mxu0 0.0
    %1306 = vmatpush.msra.mxu0 0.0
    %1307 = vmatpush.msra.mxu0 0.0
    %1308 = vmatpush.msra.mxu0 0.0
    %1309 = vmatpush.msra.mxu0 %v1205
    %1310 = vmatmul.f32.gmra.mxu0 %v1212
    %v1311 = vpop.f32.mrf.mxu0
    %v1312 = vadd.f32 0.0, %v1311
    %1313 = vdwg.mxu0
    %1314 = vmatpush.msra.mxu0 0.0
    %1315 = vmatpush.msra.mxu0 0.0
    %1316 = vmatpush.msra.mxu0 0.0
    %1317 = vmatpush.msra.mxu0 0.0
    %1318 = vmatpush.msra.mxu0 0.0
    %1319 = vmatpush.msra.mxu0 0.0
    %1320 = vmatpush.msra.mxu0 0.0
    %1321 = vmatpush.msra.mxu0 0.0
    %1322 = vmatpush.msra.mxu0 0.0
    %1323 = vmatpush.msra.mxu0 0.0
    %1324 = vmatpush.msra.mxu0 0.0
    %1325 = vmatpush.msra.mxu0 0.0
    %1326 = vmatpush.msra.mxu0 0.0
    %1327 = vmatpush.msra.mxu0 0.0
    %1328 = vmatpush.msra.mxu0 0.0
    %1329 = vmatpush.msra.mxu0 %v1206
    %1330 = vmatmul.f32.gmra.mxu0 %v1212
    %v1331 = vpop.f32.mrf.mxu0
    %v1332 = vadd.f32 0.0, %v1331
    %1333 = vdwg.mxu0
    %1334 = vmatpush.msra.mxu0 0.0
    %1335 = vmatpush.msra.mxu0 0.0
    %1336 = vmatpush.msra.mxu0 0.0
    %1337 = vmatpush.msra.mxu0 0.0
    %1338 = vmatpush.msra.mxu0 0.0
    %1339 = vmatpush.msra.mxu0 0.0
    %1340 = vmatpush.msra.mxu0 0.0
    %1341 = vmatpush.msra.mxu0 0.0
    %1342 = vmatpush.msra.mxu0 0.0
    %1343 = vmatpush.msra.mxu0 0.0
    %1344 = vmatpush.msra.mxu0 0.0
    %1345 = vmatpush.msra.mxu0 0.0
    %1346 = vmatpush.msra.mxu0 0.0
    %1347 = vmatpush.msra.mxu0 0.0
    %1348 = vmatpush.msra.mxu0 0.0
    %1349 = vmatpush.msra.mxu0 %v1207
    %1350 = vmatmul.f32.gmra.mxu0 %v1212
    %v1351 = vpop.f32.mrf.mxu0
    %v1352 = vadd.f32 0.0, %v1351
    %1353 = vdwg.mxu0
    %1354 = vmatpush.msra.mxu0 0.0
    %1355 = vmatpush.msra.mxu0 0.0
    %1356 = vmatpush.msra.mxu0 0.0
    %1357 = vmatpush.msra.mxu0 0.0
    %1358 = vmatpush.msra.mxu0 0.0
    %1359 = vmatpush.msra.mxu0 0.0
    %1360 = vmatpush.msra.mxu0 0.0
    %1361 = vmatpush.msra.mxu0 0.0
    %1362 = vmatpush.msra.mxu0 0.0
    %1363 = vmatpush.msra.mxu0 0.0
    %1364 = vmatpush.msra.mxu0 0.0
    %1365 = vmatpush.msra.mxu0 0.0
    %1366 = vmatpush.msra.mxu0 0.0
    %1367 = vmatpush.msra.mxu0 0.0
    %1368 = vmatpush.msra.mxu0 0.0
    %1369 = vmatpush.msra.mxu0 %v1208
    %1370 = vmatmul.f32.gmra.mxu0 %v1212
    %v1371 = vpop.f32.mrf.mxu0
    %v1372 = vadd.f32 0.0, %v1371
    %1373 = vdwg.mxu0
    %v1374 = vadd.f32 %v1160, %v1232
    %v1375 = vadd.f32 %v1161, %v1252
    %v1376 = vadd.f32 %v1162, %v1272
    %v1377 = vadd.f32 %v1163, %v1292
    %v1378 = vadd.f32 %v1164, %v1312
    %v1379 = vadd.f32 %v1165, %v1332
    %v1380 = vadd.f32 %v1166, %v1352
    %v1381 = vadd.f32 %v1167, %v1372
    %vm1382 = vmand %vm74, %vm98
    %vm1383 = vmand %vm75, %vm99
    %vm1384 = vmand %vm76, %vm100
    %vm1385 = vmand %vm77, %vm101
    %vm1386 = vmand %vm78, %vm102
    %vm1387 = vmand %vm79, %vm103
    %vm1388 = vmand %vm80, %vm104
    %vm1389 = vmand %vm81, %vm105
    %1390 = vrot.lane.b32.xlu0 %v66, 57
    %v1391 = vpop.permute.xlu0 %1390
    %1392 = vrot.lane.b32.xlu0 %v67, 57
    %v1393 = vpop.permute.xlu0 %1392
    %1394 = vrot.lane.b32.xlu0 %v68, 57
    %v1395 = vpop.permute.xlu0 %1394
    %1396 = vrot.lane.b32.xlu0 %v69, 57
    %v1397 = vpop.permute.xlu0 %1396
    %1398 = vrot.lane.b32.xlu0 %v70, 57
    %v1399 = vpop.permute.xlu0 %1398
    %1400 = vrot.lane.b32.xlu0 %v71, 57
    %v1401 = vpop.permute.xlu0 %1400
    %1402 = vrot.lane.b32.xlu0 %v72, 57
    %v1403 = vpop.permute.xlu0 %1402
    %1404 = vrot.lane.b32.xlu0 %v73, 57
    %v1405 = vpop.permute.xlu0 %1404
    %vm1406 = vcmp.lt.s32.totalorder %v26, 57
    %v1407 = vsel %vm1406, %v1403, %v1405
    %v1408 = vsel %vm1406, %v1401, %v1403
    %v1409 = vsel %vm1406, %v1399, %v1401
    %v1410 = vsel %vm1406, %v1397, %v1399
    %v1411 = vsel %vm1406, %v1395, %v1397
    %v1412 = vsel %vm1406, %v1393, %v1395
    %v1413 = vsel %vm1406, %v1391, %v1393
    %v1414 = vsel %vm1406, %v1405, %v1391
    %vm1415 = vmand %vm1382, %vm106
    %vm1416 = vmand %vm1383, %vm107
    %vm1417 = vmand %vm1384, %vm108
    %vm1418 = vmand %vm1385, %vm109
    %vm1419 = vmand %vm1386, %vm110
    %vm1420 = vmand %vm1387, %vm111
    %vm1421 = vmand %vm1388, %vm112
    %vm1422 = vmand %vm1389, %vm113
    %v1423 = vsel %vm1415, %v1414, 0.0
    %v1424 = vsel %vm1416, %v1413, 0.0
    %v1425 = vsel %vm1417, %v1412, 0.0
    %v1426 = vsel %vm1418, %v1411, 0.0
    %v1427 = vsel %vm1419, %v1410, 0.0
    %v1428 = vsel %vm1420, %v1409, 0.0
    %v1429 = vsel %vm1421, %v1408, 0.0
    %v1430 = vsel %vm1422, %v1407, 0.0
    %s1431 = scalar_lea.vmem %s1, 48
    %v1432 = vld [vmem:[%s1431] sm:$0xff]
    %v1434 = vsel %vm207, %v1432, 0
    %1436 = vmatpush.msra.mxu0 0.0
    %1437 = vmatpush.msra.mxu0 0.0
    %1438 = vmatpush.msra.mxu0 0.0
    %1439 = vmatpush.msra.mxu0 0.0
    %1440 = vmatpush.msra.mxu0 0.0
    %1441 = vmatpush.msra.mxu0 0.0
    %1442 = vmatpush.msra.mxu0 0.0
    %1443 = vmatpush.msra.mxu0 0.0
    %1444 = vmatpush.msra.mxu0 0.0
    %1445 = vmatpush.msra.mxu0 0.0
    %1446 = vmatpush.msra.mxu0 0.0
    %1447 = vmatpush.msra.mxu0 0.0
    %1448 = vmatpush.msra.mxu0 0.0
    %1449 = vmatpush.msra.mxu0 0.0
    %1450 = vmatpush.msra.mxu0 0.0
    %1451 = vmatpush.msra.mxu0 %v1423
    %1452 = vmatmul.f32.gmra.mxu0 %v1434
    %v1453 = vpop.f32.mrf.mxu0
    %v1454 = vadd.f32 0.0, %v1453
    %1455 = vdwg.mxu0
    %1456 = vmatpush.msra.mxu0 0.0
    %1457 = vmatpush.msra.mxu0 0.0
    %1458 = vmatpush.msra.mxu0 0.0
    %1459 = vmatpush.msra.mxu0 0.0
    %1460 = vmatpush.msra.mxu0 0.0
    %1461 = vmatpush.msra.mxu0 0.0
    %1462 = vmatpush.msra.mxu0 0.0
    %1463 = vmatpush.msra.mxu0 0.0
    %1464 = vmatpush.msra.mxu0 0.0
    %1465 = vmatpush.msra.mxu0 0.0
    %1466 = vmatpush.msra.mxu0 0.0
    %1467 = vmatpush.msra.mxu0 0.0
    %1468 = vmatpush.msra.mxu0 0.0
    %1469 = vmatpush.msra.mxu0 0.0
    %1470 = vmatpush.msra.mxu0 0.0
    %1471 = vmatpush.msra.mxu0 %v1424
    %1472 = vmatmul.f32.gmra.mxu0 %v1434
    %v1473 = vpop.f32.mrf.mxu0
    %v1474 = vadd.f32 0.0, %v1473
    %1475 = vdwg.mxu0
    %1476 = vmatpush.msra.mxu0 0.0
    %1477 = vmatpush.msra.mxu0 0.0
    %1478 = vmatpush.msra.mxu0 0.0
    %1479 = vmatpush.msra.mxu0 0.0
    %1480 = vmatpush.msra.mxu0 0.0
    %1481 = vmatpush.msra.mxu0 0.0
    %1482 = vmatpush.msra.mxu0 0.0
    %1483 = vmatpush.msra.mxu0 0.0
    %1484 = vmatpush.msra.mxu0 0.0
    %1485 = vmatpush.msra.mxu0 0.0
    %1486 = vmatpush.msra.mxu0 0.0
    %1487 = vmatpush.msra.mxu0 0.0
    %1488 = vmatpush.msra.mxu0 0.0
    %1489 = vmatpush.msra.mxu0 0.0
    %1490 = vmatpush.msra.mxu0 0.0
    %1491 = vmatpush.msra.mxu0 %v1425
    %1492 = vmatmul.f32.gmra.mxu0 %v1434
    %v1493 = vpop.f32.mrf.mxu0
    %v1494 = vadd.f32 0.0, %v1493
    %1495 = vdwg.mxu0
    %1496 = vmatpush.msra.mxu0 0.0
    %1497 = vmatpush.msra.mxu0 0.0
    %1498 = vmatpush.msra.mxu0 0.0
    %1499 = vmatpush.msra.mxu0 0.0
    %1500 = vmatpush.msra.mxu0 0.0
    %1501 = vmatpush.msra.mxu0 0.0
    %1502 = vmatpush.msra.mxu0 0.0
    %1503 = vmatpush.msra.mxu0 0.0
    %1504 = vmatpush.msra.mxu0 0.0
    %1505 = vmatpush.msra.mxu0 0.0
    %1506 = vmatpush.msra.mxu0 0.0
    %1507 = vmatpush.msra.mxu0 0.0
    %1508 = vmatpush.msra.mxu0 0.0
    %1509 = vmatpush.msra.mxu0 0.0
    %1510 = vmatpush.msra.mxu0 0.0
    %1511 = vmatpush.msra.mxu0 %v1426
    %1512 = vmatmul.f32.gmra.mxu0 %v1434
    %v1513 = vpop.f32.mrf.mxu0
    %v1514 = vadd.f32 0.0, %v1513
    %1515 = vdwg.mxu0
    %1516 = vmatpush.msra.mxu0 0.0
    %1517 = vmatpush.msra.mxu0 0.0
    %1518 = vmatpush.msra.mxu0 0.0
    %1519 = vmatpush.msra.mxu0 0.0
    %1520 = vmatpush.msra.mxu0 0.0
    %1521 = vmatpush.msra.mxu0 0.0
    %1522 = vmatpush.msra.mxu0 0.0
    %1523 = vmatpush.msra.mxu0 0.0
    %1524 = vmatpush.msra.mxu0 0.0
    %1525 = vmatpush.msra.mxu0 0.0
    %1526 = vmatpush.msra.mxu0 0.0
    %1527 = vmatpush.msra.mxu0 0.0
    %1528 = vmatpush.msra.mxu0 0.0
    %1529 = vmatpush.msra.mxu0 0.0
    %1530 = vmatpush.msra.mxu0 0.0
    %1531 = vmatpush.msra.mxu0 %v1427
    %1532 = vmatmul.f32.gmra.mxu0 %v1434
    %v1533 = vpop.f32.mrf.mxu0
    %v1534 = vadd.f32 0.0, %v1533
    %1535 = vdwg.mxu0
    %1536 = vmatpush.msra.mxu0 0.0
    %1537 = vmatpush.msra.mxu0 0.0
    %1538 = vmatpush.msra.mxu0 0.0
    %1539 = vmatpush.msra.mxu0 0.0
    %1540 = vmatpush.msra.mxu0 0.0
    %1541 = vmatpush.msra.mxu0 0.0
    %1542 = vmatpush.msra.mxu0 0.0
    %1543 = vmatpush.msra.mxu0 0.0
    %1544 = vmatpush.msra.mxu0 0.0
    %1545 = vmatpush.msra.mxu0 0.0
    %1546 = vmatpush.msra.mxu0 0.0
    %1547 = vmatpush.msra.mxu0 0.0
    %1548 = vmatpush.msra.mxu0 0.0
    %1549 = vmatpush.msra.mxu0 0.0
    %1550 = vmatpush.msra.mxu0 0.0
    %1551 = vmatpush.msra.mxu0 %v1428
    %1552 = vmatmul.f32.gmra.mxu0 %v1434
    %v1553 = vpop.f32.mrf.mxu0
    %v1554 = vadd.f32 0.0, %v1553
    %1555 = vdwg.mxu0
    %1556 = vmatpush.msra.mxu0 0.0
    %1557 = vmatpush.msra.mxu0 0.0
    %1558 = vmatpush.msra.mxu0 0.0
    %1559 = vmatpush.msra.mxu0 0.0
    %1560 = vmatpush.msra.mxu0 0.0
    %1561 = vmatpush.msra.mxu0 0.0
    %1562 = vmatpush.msra.mxu0 0.0
    %1563 = vmatpush.msra.mxu0 0.0
    %1564 = vmatpush.msra.mxu0 0.0
    %1565 = vmatpush.msra.mxu0 0.0
    %1566 = vmatpush.msra.mxu0 0.0
    %1567 = vmatpush.msra.mxu0 0.0
    %1568 = vmatpush.msra.mxu0 0.0
    %1569 = vmatpush.msra.mxu0 0.0
    %1570 = vmatpush.msra.mxu0 0.0
    %1571 = vmatpush.msra.mxu0 %v1429
    %1572 = vmatmul.f32.gmra.mxu0 %v1434
    %v1573 = vpop.f32.mrf.mxu0
    %v1574 = vadd.f32 0.0, %v1573
    %1575 = vdwg.mxu0
    %1576 = vmatpush.msra.mxu0 0.0
    %1577 = vmatpush.msra.mxu0 0.0
    %1578 = vmatpush.msra.mxu0 0.0
    %1579 = vmatpush.msra.mxu0 0.0
    %1580 = vmatpush.msra.mxu0 0.0
    %1581 = vmatpush.msra.mxu0 0.0
    %1582 = vmatpush.msra.mxu0 0.0
    %1583 = vmatpush.msra.mxu0 0.0
    %1584 = vmatpush.msra.mxu0 0.0
    %1585 = vmatpush.msra.mxu0 0.0
    %1586 = vmatpush.msra.mxu0 0.0
    %1587 = vmatpush.msra.mxu0 0.0
    %1588 = vmatpush.msra.mxu0 0.0
    %1589 = vmatpush.msra.mxu0 0.0
    %1590 = vmatpush.msra.mxu0 0.0
    %1591 = vmatpush.msra.mxu0 %v1430
    %1592 = vmatmul.f32.gmra.mxu0 %v1434
    %v1593 = vpop.f32.mrf.mxu0
    %v1594 = vadd.f32 0.0, %v1593
    %1595 = vdwg.mxu0
    %v1596 = vadd.f32 %v1374, %v1454
    %v1597 = vadd.f32 %v1375, %v1474
    %v1598 = vadd.f32 %v1376, %v1494
    %v1599 = vadd.f32 %v1377, %v1514
    %v1600 = vadd.f32 %v1378, %v1534
    %v1601 = vadd.f32 %v1379, %v1554
    %v1602 = vadd.f32 %v1380, %v1574
    %v1603 = vadd.f32 %v1381, %v1594
    %1604 = vrot.lane.b32.xlu0 %v66, 56
    %v1605 = vpop.permute.xlu0 %1604
    %1606 = vrot.lane.b32.xlu0 %v67, 56
    %v1607 = vpop.permute.xlu0 %1606
    %1608 = vrot.lane.b32.xlu0 %v68, 56
    %v1609 = vpop.permute.xlu0 %1608
    %1610 = vrot.lane.b32.xlu0 %v69, 56
    %v1611 = vpop.permute.xlu0 %1610
    %1612 = vrot.lane.b32.xlu0 %v70, 56
    %v1613 = vpop.permute.xlu0 %1612
    %1614 = vrot.lane.b32.xlu0 %v71, 56
    %v1615 = vpop.permute.xlu0 %1614
    %1616 = vrot.lane.b32.xlu0 %v72, 56
    %v1617 = vpop.permute.xlu0 %1616
    %1618 = vrot.lane.b32.xlu0 %v73, 56
    %v1619 = vpop.permute.xlu0 %1618
    %vm1620 = vcmp.lt.s32.totalorder %v26, 56
    %v1621 = vsel %vm1620, %v1617, %v1619
    %v1622 = vsel %vm1620, %v1615, %v1617
    %v1623 = vsel %vm1620, %v1613, %v1615
    %v1624 = vsel %vm1620, %v1611, %v1613
    %v1625 = vsel %vm1620, %v1609, %v1611
    %v1626 = vsel %vm1620, %v1607, %v1609
    %v1627 = vsel %vm1620, %v1605, %v1607
    %v1628 = vsel %vm1620, %v1619, %v1605
    %v1629 = vsel %vm1382, %v1628, 0.0
    %v1630 = vsel %vm1383, %v1627, 0.0
    %v1631 = vsel %vm1384, %v1626, 0.0
    %v1632 = vsel %vm1385, %v1625, 0.0
    %v1633 = vsel %vm1386, %v1624, 0.0
    %v1634 = vsel %vm1387, %v1623, 0.0
    %v1635 = vsel %vm1388, %v1622, 0.0
    %v1636 = vsel %vm1389, %v1621, 0.0
    %s1637 = scalar_lea.vmem %s1, 56
    %v1638 = vld [vmem:[%s1637] sm:$0xff]
    %v1640 = vsel %vm207, %v1638, 0
    %1642 = vmatpush.msra.mxu0 0.0
    %1643 = vmatpush.msra.mxu0 0.0
    %1644 = vmatpush.msra.mxu0 0.0
    %1645 = vmatpush.msra.mxu0 0.0
    %1646 = vmatpush.msra.mxu0 0.0
    %1647 = vmatpush.msra.mxu0 0.0
    %1648 = vmatpush.msra.mxu0 0.0
    %1649 = vmatpush.msra.mxu0 0.0
    %1650 = vmatpush.msra.mxu0 0.0
    %1651 = vmatpush.msra.mxu0 0.0
    %1652 = vmatpush.msra.mxu0 0.0
    %1653 = vmatpush.msra.mxu0 0.0
    %1654 = vmatpush.msra.mxu0 0.0
    %1655 = vmatpush.msra.mxu0 0.0
    %1656 = vmatpush.msra.mxu0 0.0
    %1657 = vmatpush.msra.mxu0 %v1629
    %1658 = vmatmul.f32.gmra.mxu0 %v1640
    %v1659 = vpop.f32.mrf.mxu0
    %v1660 = vadd.f32 0.0, %v1659
    %1661 = vdwg.mxu0
    %1662 = vmatpush.msra.mxu0 0.0
    %1663 = vmatpush.msra.mxu0 0.0
    %1664 = vmatpush.msra.mxu0 0.0
    %1665 = vmatpush.msra.mxu0 0.0
    %1666 = vmatpush.msra.mxu0 0.0
    %1667 = vmatpush.msra.mxu0 0.0
    %1668 = vmatpush.msra.mxu0 0.0
    %1669 = vmatpush.msra.mxu0 0.0
    %1670 = vmatpush.msra.mxu0 0.0
    %1671 = vmatpush.msra.mxu0 0.0
    %1672 = vmatpush.msra.mxu0 0.0
    %1673 = vmatpush.msra.mxu0 0.0
    %1674 = vmatpush.msra.mxu0 0.0
    %1675 = vmatpush.msra.mxu0 0.0
    %1676 = vmatpush.msra.mxu0 0.0
    %1677 = vmatpush.msra.mxu0 %v1630
    %1678 = vmatmul.f32.gmra.mxu0 %v1640
    %v1679 = vpop.f32.mrf.mxu0
    %v1680 = vadd.f32 0.0, %v1679
    %1681 = vdwg.mxu0
    %1682 = vmatpush.msra.mxu0 0.0
    %1683 = vmatpush.msra.mxu0 0.0
    %1684 = vmatpush.msra.mxu0 0.0
    %1685 = vmatpush.msra.mxu0 0.0
    %1686 = vmatpush.msra.mxu0 0.0
    %1687 = vmatpush.msra.mxu0 0.0
    %1688 = vmatpush.msra.mxu0 0.0
    %1689 = vmatpush.msra.mxu0 0.0
    %1690 = vmatpush.msra.mxu0 0.0
    %1691 = vmatpush.msra.mxu0 0.0
    %1692 = vmatpush.msra.mxu0 0.0
    %1693 = vmatpush.msra.mxu0 0.0
    %1694 = vmatpush.msra.mxu0 0.0
    %1695 = vmatpush.msra.mxu0 0.0
    %1696 = vmatpush.msra.mxu0 0.0
    %1697 = vmatpush.msra.mxu0 %v1631
    %1698 = vmatmul.f32.gmra.mxu0 %v1640
    %v1699 = vpop.f32.mrf.mxu0
    %v1700 = vadd.f32 0.0, %v1699
    %1701 = vdwg.mxu0
    %1702 = vmatpush.msra.mxu0 0.0
    %1703 = vmatpush.msra.mxu0 0.0
    %1704 = vmatpush.msra.mxu0 0.0
    %1705 = vmatpush.msra.mxu0 0.0
    %1706 = vmatpush.msra.mxu0 0.0
    %1707 = vmatpush.msra.mxu0 0.0
    %1708 = vmatpush.msra.mxu0 0.0
    %1709 = vmatpush.msra.mxu0 0.0
    %1710 = vmatpush.msra.mxu0 0.0
    %1711 = vmatpush.msra.mxu0 0.0
    %1712 = vmatpush.msra.mxu0 0.0
    %1713 = vmatpush.msra.mxu0 0.0
    %1714 = vmatpush.msra.mxu0 0.0
    %1715 = vmatpush.msra.mxu0 0.0
    %1716 = vmatpush.msra.mxu0 0.0
    %1717 = vmatpush.msra.mxu0 %v1632
    %1718 = vmatmul.f32.gmra.mxu0 %v1640
    %v1719 = vpop.f32.mrf.mxu0
    %v1720 = vadd.f32 0.0, %v1719
    %1721 = vdwg.mxu0
    %1722 = vmatpush.msra.mxu0 0.0
    %1723 = vmatpush.msra.mxu0 0.0
    %1724 = vmatpush.msra.mxu0 0.0
    %1725 = vmatpush.msra.mxu0 0.0
    %1726 = vmatpush.msra.mxu0 0.0
    %1727 = vmatpush.msra.mxu0 0.0
    %1728 = vmatpush.msra.mxu0 0.0
    %1729 = vmatpush.msra.mxu0 0.0
    %1730 = vmatpush.msra.mxu0 0.0
    %1731 = vmatpush.msra.mxu0 0.0
    %1732 = vmatpush.msra.mxu0 0.0
    %1733 = vmatpush.msra.mxu0 0.0
    %1734 = vmatpush.msra.mxu0 0.0
    %1735 = vmatpush.msra.mxu0 0.0
    %1736 = vmatpush.msra.mxu0 0.0
    %1737 = vmatpush.msra.mxu0 %v1633
    %1738 = vmatmul.f32.gmra.mxu0 %v1640
    %v1739 = vpop.f32.mrf.mxu0
    %v1740 = vadd.f32 0.0, %v1739
    %1741 = vdwg.mxu0
    %1742 = vmatpush.msra.mxu0 0.0
    %1743 = vmatpush.msra.mxu0 0.0
    %1744 = vmatpush.msra.mxu0 0.0
    %1745 = vmatpush.msra.mxu0 0.0
    %1746 = vmatpush.msra.mxu0 0.0
    %1747 = vmatpush.msra.mxu0 0.0
    %1748 = vmatpush.msra.mxu0 0.0
    %1749 = vmatpush.msra.mxu0 0.0
    %1750 = vmatpush.msra.mxu0 0.0
    %1751 = vmatpush.msra.mxu0 0.0
    %1752 = vmatpush.msra.mxu0 0.0
    %1753 = vmatpush.msra.mxu0 0.0
    %1754 = vmatpush.msra.mxu0 0.0
    %1755 = vmatpush.msra.mxu0 0.0
    %1756 = vmatpush.msra.mxu0 0.0
    %1757 = vmatpush.msra.mxu0 %v1634
    %1758 = vmatmul.f32.gmra.mxu0 %v1640
    %v1759 = vpop.f32.mrf.mxu0
    %v1760 = vadd.f32 0.0, %v1759
    %1761 = vdwg.mxu0
    %1762 = vmatpush.msra.mxu0 0.0
    %1763 = vmatpush.msra.mxu0 0.0
    %1764 = vmatpush.msra.mxu0 0.0
    %1765 = vmatpush.msra.mxu0 0.0
    %1766 = vmatpush.msra.mxu0 0.0
    %1767 = vmatpush.msra.mxu0 0.0
    %1768 = vmatpush.msra.mxu0 0.0
    %1769 = vmatpush.msra.mxu0 0.0
    %1770 = vmatpush.msra.mxu0 0.0
    %1771 = vmatpush.msra.mxu0 0.0
    %1772 = vmatpush.msra.mxu0 0.0
    %1773 = vmatpush.msra.mxu0 0.0
    %1774 = vmatpush.msra.mxu0 0.0
    %1775 = vmatpush.msra.mxu0 0.0
    %1776 = vmatpush.msra.mxu0 0.0
    %1777 = vmatpush.msra.mxu0 %v1635
    %1778 = vmatmul.f32.gmra.mxu0 %v1640
    %v1779 = vpop.f32.mrf.mxu0
    %v1780 = vadd.f32 0.0, %v1779
    %1781 = vdwg.mxu0
    %1782 = vmatpush.msra.mxu0 0.0
    %1783 = vmatpush.msra.mxu0 0.0
    %1784 = vmatpush.msra.mxu0 0.0
    %1785 = vmatpush.msra.mxu0 0.0
    %1786 = vmatpush.msra.mxu0 0.0
    %1787 = vmatpush.msra.mxu0 0.0
    %1788 = vmatpush.msra.mxu0 0.0
    %1789 = vmatpush.msra.mxu0 0.0
    %1790 = vmatpush.msra.mxu0 0.0
    %1791 = vmatpush.msra.mxu0 0.0
    %1792 = vmatpush.msra.mxu0 0.0
    %1793 = vmatpush.msra.mxu0 0.0
    %1794 = vmatpush.msra.mxu0 0.0
    %1795 = vmatpush.msra.mxu0 0.0
    %1796 = vmatpush.msra.mxu0 0.0
    %1797 = vmatpush.msra.mxu0 %v1636
    %1798 = vmatmul.f32.gmra.mxu0 %v1640
    %v1799 = vpop.f32.mrf.mxu0
    %v1800 = vadd.f32 0.0, %v1799
    %1801 = vdwg.mxu0
    %v1802 = vadd.f32 %v1596, %v1660
    %v1803 = vadd.f32 %v1597, %v1680
    %v1804 = vadd.f32 %v1598, %v1700
    %v1805 = vadd.f32 %v1599, %v1720
    %v1806 = vadd.f32 %v1600, %v1740
    %v1807 = vadd.f32 %v1601, %v1760
    %v1808 = vadd.f32 %v1602, %v1780
    %v1809 = vadd.f32 %v1603, %v1800
    %1810 = vrot.lane.b32.xlu0 %v66, 55
    %v1811 = vpop.permute.xlu0 %1810
    %1812 = vrot.lane.b32.xlu0 %v67, 55
    %v1813 = vpop.permute.xlu0 %1812
    %1814 = vrot.lane.b32.xlu0 %v68, 55
    %v1815 = vpop.permute.xlu0 %1814
    %1816 = vrot.lane.b32.xlu0 %v69, 55
    %v1817 = vpop.permute.xlu0 %1816
    %1818 = vrot.lane.b32.xlu0 %v70, 55
    %v1819 = vpop.permute.xlu0 %1818
    %1820 = vrot.lane.b32.xlu0 %v71, 55
    %v1821 = vpop.permute.xlu0 %1820
    %1822 = vrot.lane.b32.xlu0 %v72, 55
    %v1823 = vpop.permute.xlu0 %1822
    %1824 = vrot.lane.b32.xlu0 %v73, 55
    %v1825 = vpop.permute.xlu0 %1824
    %vm1826 = vcmp.lt.s32.totalorder %v26, 55
    %v1827 = vsel %vm1826, %v1823, %v1825
    %v1828 = vsel %vm1826, %v1821, %v1823
    %v1829 = vsel %vm1826, %v1819, %v1821
    %v1830 = vsel %vm1826, %v1817, %v1819
    %v1831 = vsel %vm1826, %v1815, %v1817
    %v1832 = vsel %vm1826, %v1813, %v1815
    %v1833 = vsel %vm1826, %v1811, %v1813
    %v1834 = vsel %vm1826, %v1825, %v1811
    %vm1835 = vmand %vm1382, %vm114
    %vm1836 = vmand %vm1383, %vm115
    %vm1837 = vmand %vm1384, %vm116
    %vm1838 = vmand %vm1385, %vm117
    %vm1839 = vmand %vm1386, %vm118
    %vm1840 = vmand %vm1387, %vm119
    %vm1841 = vmand %vm1388, %vm120
    %vm1842 = vmand %vm1389, %vm121
    %v1843 = vsel %vm1835, %v1834, 0.0
    %v1844 = vsel %vm1836, %v1833, 0.0
    %v1845 = vsel %vm1837, %v1832, 0.0
    %v1846 = vsel %vm1838, %v1831, 0.0
    %v1847 = vsel %vm1839, %v1830, 0.0
    %v1848 = vsel %vm1840, %v1829, 0.0
    %v1849 = vsel %vm1841, %v1828, 0.0
    %v1850 = vsel %vm1842, %v1827, 0.0
    %s1851 = scalar_lea.vmem %s1, 64
    %v1852 = vld [vmem:[%s1851] sm:$0xff]
    %v1854 = vsel %vm207, %v1852, 0
    %1856 = vmatpush.msra.mxu0 0.0
    %1857 = vmatpush.msra.mxu0 0.0
    %1858 = vmatpush.msra.mxu0 0.0
    %1859 = vmatpush.msra.mxu0 0.0
    %1860 = vmatpush.msra.mxu0 0.0
    %1861 = vmatpush.msra.mxu0 0.0
    %1862 = vmatpush.msra.mxu0 0.0
    %1863 = vmatpush.msra.mxu0 0.0
    %1864 = vmatpush.msra.mxu0 0.0
    %1865 = vmatpush.msra.mxu0 0.0
    %1866 = vmatpush.msra.mxu0 0.0
    %1867 = vmatpush.msra.mxu0 0.0
    %1868 = vmatpush.msra.mxu0 0.0
    %1869 = vmatpush.msra.mxu0 0.0
    %1870 = vmatpush.msra.mxu0 0.0
    %1871 = vmatpush.msra.mxu0 %v1843
    %1872 = vmatmul.f32.gmra.mxu0 %v1854
    %v1873 = vpop.f32.mrf.mxu0
    %v1874 = vadd.f32 0.0, %v1873
    %1875 = vdwg.mxu0
    %1876 = vmatpush.msra.mxu0 0.0
    %1877 = vmatpush.msra.mxu0 0.0
    %1878 = vmatpush.msra.mxu0 0.0
    %1879 = vmatpush.msra.mxu0 0.0
    %1880 = vmatpush.msra.mxu0 0.0
    %1881 = vmatpush.msra.mxu0 0.0
    %1882 = vmatpush.msra.mxu0 0.0
    %1883 = vmatpush.msra.mxu0 0.0
    %1884 = vmatpush.msra.mxu0 0.0
    %1885 = vmatpush.msra.mxu0 0.0
    %1886 = vmatpush.msra.mxu0 0.0
    %1887 = vmatpush.msra.mxu0 0.0
    %1888 = vmatpush.msra.mxu0 0.0
    %1889 = vmatpush.msra.mxu0 0.0
    %1890 = vmatpush.msra.mxu0 0.0
    %1891 = vmatpush.msra.mxu0 %v1844
    %1892 = vmatmul.f32.gmra.mxu0 %v1854
    %v1893 = vpop.f32.mrf.mxu0
    %v1894 = vadd.f32 0.0, %v1893
    %1895 = vdwg.mxu0
    %1896 = vmatpush.msra.mxu0 0.0
    %1897 = vmatpush.msra.mxu0 0.0
    %1898 = vmatpush.msra.mxu0 0.0
    %1899 = vmatpush.msra.mxu0 0.0
    %1900 = vmatpush.msra.mxu0 0.0
    %1901 = vmatpush.msra.mxu0 0.0
    %1902 = vmatpush.msra.mxu0 0.0
    %1903 = vmatpush.msra.mxu0 0.0
    %1904 = vmatpush.msra.mxu0 0.0
    %1905 = vmatpush.msra.mxu0 0.0
    %1906 = vmatpush.msra.mxu0 0.0
    %1907 = vmatpush.msra.mxu0 0.0
    %1908 = vmatpush.msra.mxu0 0.0
    %1909 = vmatpush.msra.mxu0 0.0
    %1910 = vmatpush.msra.mxu0 0.0
    %1911 = vmatpush.msra.mxu0 %v1845
    %1912 = vmatmul.f32.gmra.mxu0 %v1854
    %v1913 = vpop.f32.mrf.mxu0
    %v1914 = vadd.f32 0.0, %v1913
    %1915 = vdwg.mxu0
    %1916 = vmatpush.msra.mxu0 0.0
    %1917 = vmatpush.msra.mxu0 0.0
    %1918 = vmatpush.msra.mxu0 0.0
    %1919 = vmatpush.msra.mxu0 0.0
    %1920 = vmatpush.msra.mxu0 0.0
    %1921 = vmatpush.msra.mxu0 0.0
    %1922 = vmatpush.msra.mxu0 0.0
    %1923 = vmatpush.msra.mxu0 0.0
    %1924 = vmatpush.msra.mxu0 0.0
    %1925 = vmatpush.msra.mxu0 0.0
    %1926 = vmatpush.msra.mxu0 0.0
    %1927 = vmatpush.msra.mxu0 0.0
    %1928 = vmatpush.msra.mxu0 0.0
    %1929 = vmatpush.msra.mxu0 0.0
    %1930 = vmatpush.msra.mxu0 0.0
    %1931 = vmatpush.msra.mxu0 %v1846
    %1932 = vmatmul.f32.gmra.mxu0 %v1854
    %v1933 = vpop.f32.mrf.mxu0
    %v1934 = vadd.f32 0.0, %v1933
    %1935 = vdwg.mxu0
    %1936 = vmatpush.msra.mxu0 0.0
    %1937 = vmatpush.msra.mxu0 0.0
    %1938 = vmatpush.msra.mxu0 0.0
    %1939 = vmatpush.msra.mxu0 0.0
    %1940 = vmatpush.msra.mxu0 0.0
    %1941 = vmatpush.msra.mxu0 0.0
    %1942 = vmatpush.msra.mxu0 0.0
    %1943 = vmatpush.msra.mxu0 0.0
    %1944 = vmatpush.msra.mxu0 0.0
    %1945 = vmatpush.msra.mxu0 0.0
    %1946 = vmatpush.msra.mxu0 0.0
    %1947 = vmatpush.msra.mxu0 0.0
    %1948 = vmatpush.msra.mxu0 0.0
    %1949 = vmatpush.msra.mxu0 0.0
    %1950 = vmatpush.msra.mxu0 0.0
    %1951 = vmatpush.msra.mxu0 %v1847
    %1952 = vmatmul.f32.gmra.mxu0 %v1854
    %v1953 = vpop.f32.mrf.mxu0
    %v1954 = vadd.f32 0.0, %v1953
    %1955 = vdwg.mxu0
    %1956 = vmatpush.msra.mxu0 0.0
    %1957 = vmatpush.msra.mxu0 0.0
    %1958 = vmatpush.msra.mxu0 0.0
    %1959 = vmatpush.msra.mxu0 0.0
    %1960 = vmatpush.msra.mxu0 0.0
    %1961 = vmatpush.msra.mxu0 0.0
    %1962 = vmatpush.msra.mxu0 0.0
    %1963 = vmatpush.msra.mxu0 0.0
    %1964 = vmatpush.msra.mxu0 0.0
    %1965 = vmatpush.msra.mxu0 0.0
    %1966 = vmatpush.msra.mxu0 0.0
    %1967 = vmatpush.msra.mxu0 0.0
    %1968 = vmatpush.msra.mxu0 0.0
    %1969 = vmatpush.msra.mxu0 0.0
    %1970 = vmatpush.msra.mxu0 0.0
    %1971 = vmatpush.msra.mxu0 %v1848
    %1972 = vmatmul.f32.gmra.mxu0 %v1854
    %v1973 = vpop.f32.mrf.mxu0
    %v1974 = vadd.f32 0.0, %v1973
    %1975 = vdwg.mxu0
    %1976 = vmatpush.msra.mxu0 0.0
    %1977 = vmatpush.msra.mxu0 0.0
    %1978 = vmatpush.msra.mxu0 0.0
    %1979 = vmatpush.msra.mxu0 0.0
    %1980 = vmatpush.msra.mxu0 0.0
    %1981 = vmatpush.msra.mxu0 0.0
    %1982 = vmatpush.msra.mxu0 0.0
    %1983 = vmatpush.msra.mxu0 0.0
    %1984 = vmatpush.msra.mxu0 0.0
    %1985 = vmatpush.msra.mxu0 0.0
    %1986 = vmatpush.msra.mxu0 0.0
    %1987 = vmatpush.msra.mxu0 0.0
    %1988 = vmatpush.msra.mxu0 0.0
    %1989 = vmatpush.msra.mxu0 0.0
    %1990 = vmatpush.msra.mxu0 0.0
    %1991 = vmatpush.msra.mxu0 %v1849
    %1992 = vmatmul.f32.gmra.mxu0 %v1854
    %v1993 = vpop.f32.mrf.mxu0
    %v1994 = vadd.f32 0.0, %v1993
    %1995 = vdwg.mxu0
    %1996 = vmatpush.msra.mxu0 0.0
    %1997 = vmatpush.msra.mxu0 0.0
    %1998 = vmatpush.msra.mxu0 0.0
    %1999 = vmatpush.msra.mxu0 0.0
    %2000 = vmatpush.msra.mxu0 0.0
    %2001 = vmatpush.msra.mxu0 0.0
    %2002 = vmatpush.msra.mxu0 0.0
    %2003 = vmatpush.msra.mxu0 0.0
    %2004 = vmatpush.msra.mxu0 0.0
    %2005 = vmatpush.msra.mxu0 0.0
    %2006 = vmatpush.msra.mxu0 0.0
    %2007 = vmatpush.msra.mxu0 0.0
    %2008 = vmatpush.msra.mxu0 0.0
    %2009 = vmatpush.msra.mxu0 0.0
    %2010 = vmatpush.msra.mxu0 0.0
    %2011 = vmatpush.msra.mxu0 %v1850
    %2012 = vmatmul.f32.gmra.mxu0 %v1854
    %v2013 = vpop.f32.mrf.mxu0
    %v2014 = vadd.f32 0.0, %v2013
    %2015 = vdwg.mxu0
    %v2016 = vadd.f32 %v1802, %v1874
    %v2017 = vadd.f32 %v1803, %v1894
    %v2018 = vadd.f32 %v1804, %v1914
    %v2019 = vadd.f32 %v1805, %v1934
    %v2020 = vadd.f32 %v1806, %v1954
    %v2021 = vadd.f32 %v1807, %v1974
    %v2022 = vadd.f32 %v1808, %v1994
    %v2023 = vadd.f32 %v1809, %v2014
    %2024 = vrot.lane.b32.xlu0 %v66, 9
    %v2025 = vpop.permute.xlu0 %2024
    %2026 = vrot.lane.b32.xlu0 %v67, 9
    %v2027 = vpop.permute.xlu0 %2026
    %2028 = vrot.lane.b32.xlu0 %v68, 9
    %v2029 = vpop.permute.xlu0 %2028
    %2030 = vrot.lane.b32.xlu0 %v69, 9
    %v2031 = vpop.permute.xlu0 %2030
    %2032 = vrot.lane.b32.xlu0 %v70, 9
    %v2033 = vpop.permute.xlu0 %2032
    %2034 = vrot.lane.b32.xlu0 %v71, 9
    %v2035 = vpop.permute.xlu0 %2034
    %2036 = vrot.lane.b32.xlu0 %v72, 9
    %v2037 = vpop.permute.xlu0 %2036
    %2038 = vrot.lane.b32.xlu0 %v73, 9
    %v2039 = vpop.permute.xlu0 %2038
    %vm2040 = vcmp.lt.s32.totalorder %v26, 9
    %v2041 = vsel %vm2040, %v2037, %v2039
    %v2042 = vsel %vm2040, %v2035, %v2037
    %v2043 = vsel %vm2040, %v2033, %v2035
    %v2044 = vsel %vm2040, %v2031, %v2033
    %v2045 = vsel %vm2040, %v2029, %v2031
    %v2046 = vsel %vm2040, %v2027, %v2029
    %v2047 = vsel %vm2040, %v2025, %v2027
    %v2048 = vsel %vm2040, %v2039, %v2025
    %vm2049 = vmand %vm90, %vm106
    %vm2050 = vmand %vm91, %vm107
    %vm2051 = vmand %vm92, %vm108
    %vm2052 = vmand %vm93, %vm109
    %vm2053 = vmand %vm94, %vm110
    %vm2054 = vmand %vm95, %vm111
    %vm2055 = vmand %vm96, %vm112
    %vm2056 = vmand %vm97, %vm113
    %v2057 = vsel %vm2049, %v2048, 0.0
    %v2058 = vsel %vm2050, %v2047, 0.0
    %v2059 = vsel %vm2051, %v2046, 0.0
    %v2060 = vsel %vm2052, %v2045, 0.0
    %v2061 = vsel %vm2053, %v2044, 0.0
    %v2062 = vsel %vm2054, %v2043, 0.0
    %v2063 = vsel %vm2055, %v2042, 0.0
    %v2064 = vsel %vm2056, %v2041, 0.0
    %s2065 = scalar_lea.vmem %s1, 72
    %v2066 = vld [vmem:[%s2065] sm:$0xff]
    %v2068 = vsel %vm207, %v2066, 0
    %2070 = vmatpush.msra.mxu0 0.0
    %2071 = vmatpush.msra.mxu0 0.0
    %2072 = vmatpush.msra.mxu0 0.0
    %2073 = vmatpush.msra.mxu0 0.0
    %2074 = vmatpush.msra.mxu0 0.0
    %2075 = vmatpush.msra.mxu0 0.0
    %2076 = vmatpush.msra.mxu0 0.0
    %2077 = vmatpush.msra.mxu0 0.0
    %2078 = vmatpush.msra.mxu0 0.0
    %2079 = vmatpush.msra.mxu0 0.0
    %2080 = vmatpush.msra.mxu0 0.0
    %2081 = vmatpush.msra.mxu0 0.0
    %2082 = vmatpush.msra.mxu0 0.0
    %2083 = vmatpush.msra.mxu0 0.0
    %2084 = vmatpush.msra.mxu0 0.0
    %2085 = vmatpush.msra.mxu0 %v2057
    %2086 = vmatmul.f32.gmra.mxu0 %v2068
    %v2087 = vpop.f32.mrf.mxu0
    %v2088 = vadd.f32 0.0, %v2087
    %2089 = vdwg.mxu0
    %2090 = vmatpush.msra.mxu0 0.0
    %2091 = vmatpush.msra.mxu0 0.0
    %2092 = vmatpush.msra.mxu0 0.0
    %2093 = vmatpush.msra.mxu0 0.0
    %2094 = vmatpush.msra.mxu0 0.0
    %2095 = vmatpush.msra.mxu0 0.0
    %2096 = vmatpush.msra.mxu0 0.0
    %2097 = vmatpush.msra.mxu0 0.0
    %2098 = vmatpush.msra.mxu0 0.0
    %2099 = vmatpush.msra.mxu0 0.0
    %2100 = vmatpush.msra.mxu0 0.0
    %2101 = vmatpush.msra.mxu0 0.0
    %2102 = vmatpush.msra.mxu0 0.0
    %2103 = vmatpush.msra.mxu0 0.0
    %2104 = vmatpush.msra.mxu0 0.0
    %2105 = vmatpush.msra.mxu0 %v2058
    %2106 = vmatmul.f32.gmra.mxu0 %v2068
    %v2107 = vpop.f32.mrf.mxu0
    %v2108 = vadd.f32 0.0, %v2107
    %2109 = vdwg.mxu0
    %2110 = vmatpush.msra.mxu0 0.0
    %2111 = vmatpush.msra.mxu0 0.0
    %2112 = vmatpush.msra.mxu0 0.0
    %2113 = vmatpush.msra.mxu0 0.0
    %2114 = vmatpush.msra.mxu0 0.0
    %2115 = vmatpush.msra.mxu0 0.0
    %2116 = vmatpush.msra.mxu0 0.0
    %2117 = vmatpush.msra.mxu0 0.0
    %2118 = vmatpush.msra.mxu0 0.0
    %2119 = vmatpush.msra.mxu0 0.0
    %2120 = vmatpush.msra.mxu0 0.0
    %2121 = vmatpush.msra.mxu0 0.0
    %2122 = vmatpush.msra.mxu0 0.0
    %2123 = vmatpush.msra.mxu0 0.0
    %2124 = vmatpush.msra.mxu0 0.0
    %2125 = vmatpush.msra.mxu0 %v2059
    %2126 = vmatmul.f32.gmra.mxu0 %v2068
    %v2127 = vpop.f32.mrf.mxu0
    %v2128 = vadd.f32 0.0, %v2127
    %2129 = vdwg.mxu0
    %2130 = vmatpush.msra.mxu0 0.0
    %2131 = vmatpush.msra.mxu0 0.0
    %2132 = vmatpush.msra.mxu0 0.0
    %2133 = vmatpush.msra.mxu0 0.0
    %2134 = vmatpush.msra.mxu0 0.0
    %2135 = vmatpush.msra.mxu0 0.0
    %2136 = vmatpush.msra.mxu0 0.0
    %2137 = vmatpush.msra.mxu0 0.0
    %2138 = vmatpush.msra.mxu0 0.0
    %2139 = vmatpush.msra.mxu0 0.0
    %2140 = vmatpush.msra.mxu0 0.0
    %2141 = vmatpush.msra.mxu0 0.0
    %2142 = vmatpush.msra.mxu0 0.0
    %2143 = vmatpush.msra.mxu0 0.0
    %2144 = vmatpush.msra.mxu0 0.0
    %2145 = vmatpush.msra.mxu0 %v2060
    %2146 = vmatmul.f32.gmra.mxu0 %v2068
    %v2147 = vpop.f32.mrf.mxu0
    %v2148 = vadd.f32 0.0, %v2147
    %2149 = vdwg.mxu0
    %2150 = vmatpush.msra.mxu0 0.0
    %2151 = vmatpush.msra.mxu0 0.0
    %2152 = vmatpush.msra.mxu0 0.0
    %2153 = vmatpush.msra.mxu0 0.0
    %2154 = vmatpush.msra.mxu0 0.0
    %2155 = vmatpush.msra.mxu0 0.0
    %2156 = vmatpush.msra.mxu0 0.0
    %2157 = vmatpush.msra.mxu0 0.0
    %2158 = vmatpush.msra.mxu0 0.0
    %2159 = vmatpush.msra.mxu0 0.0
    %2160 = vmatpush.msra.mxu0 0.0
    %2161 = vmatpush.msra.mxu0 0.0
    %2162 = vmatpush.msra.mxu0 0.0
    %2163 = vmatpush.msra.mxu0 0.0
    %2164 = vmatpush.msra.mxu0 0.0
    %2165 = vmatpush.msra.mxu0 %v2061
    %2166 = vmatmul.f32.gmra.mxu0 %v2068
    %v2167 = vpop.f32.mrf.mxu0
    %v2168 = vadd.f32 0.0, %v2167
    %2169 = vdwg.mxu0
    %2170 = vmatpush.msra.mxu0 0.0
    %2171 = vmatpush.msra.mxu0 0.0
    %2172 = vmatpush.msra.mxu0 0.0
    %2173 = vmatpush.msra.mxu0 0.0
    %2174 = vmatpush.msra.mxu0 0.0
    %2175 = vmatpush.msra.mxu0 0.0
    %2176 = vmatpush.msra.mxu0 0.0
    %2177 = vmatpush.msra.mxu0 0.0
    %2178 = vmatpush.msra.mxu0 0.0
    %2179 = vmatpush.msra.mxu0 0.0
    %2180 = vmatpush.msra.mxu0 0.0
    %2181 = vmatpush.msra.mxu0 0.0
    %2182 = vmatpush.msra.mxu0 0.0
    %2183 = vmatpush.msra.mxu0 0.0
    %2184 = vmatpush.msra.mxu0 0.0
    %2185 = vmatpush.msra.mxu0 %v2062
    %2186 = vmatmul.f32.gmra.mxu0 %v2068
    %v2187 = vpop.f32.mrf.mxu0
    %v2188 = vadd.f32 0.0, %v2187
    %2189 = vdwg.mxu0
    %2190 = vmatpush.msra.mxu0 0.0
    %2191 = vmatpush.msra.mxu0 0.0
    %2192 = vmatpush.msra.mxu0 0.0
    %2193 = vmatpush.msra.mxu0 0.0
    %2194 = vmatpush.msra.mxu0 0.0
    %2195 = vmatpush.msra.mxu0 0.0
    %2196 = vmatpush.msra.mxu0 0.0
    %2197 = vmatpush.msra.mxu0 0.0
    %2198 = vmatpush.msra.mxu0 0.0
    %2199 = vmatpush.msra.mxu0 0.0
    %2200 = vmatpush.msra.mxu0 0.0
    %2201 = vmatpush.msra.mxu0 0.0
    %2202 = vmatpush.msra.mxu0 0.0
    %2203 = vmatpush.msra.mxu0 0.0
    %2204 = vmatpush.msra.mxu0 0.0
    %2205 = vmatpush.msra.mxu0 %v2063
    %2206 = vmatmul.f32.gmra.mxu0 %v2068
    %v2207 = vpop.f32.mrf.mxu0
    %v2208 = vadd.f32 0.0, %v2207
    %2209 = vdwg.mxu0
    %2210 = vmatpush.msra.mxu0 0.0
    %2211 = vmatpush.msra.mxu0 0.0
    %2212 = vmatpush.msra.mxu0 0.0
    %2213 = vmatpush.msra.mxu0 0.0
    %2214 = vmatpush.msra.mxu0 0.0
    %2215 = vmatpush.msra.mxu0 0.0
    %2216 = vmatpush.msra.mxu0 0.0
    %2217 = vmatpush.msra.mxu0 0.0
    %2218 = vmatpush.msra.mxu0 0.0
    %2219 = vmatpush.msra.mxu0 0.0
    %2220 = vmatpush.msra.mxu0 0.0
    %2221 = vmatpush.msra.mxu0 0.0
    %2222 = vmatpush.msra.mxu0 0.0
    %2223 = vmatpush.msra.mxu0 0.0
    %2224 = vmatpush.msra.mxu0 0.0
    %2225 = vmatpush.msra.mxu0 %v2064
    %2226 = vmatmul.f32.gmra.mxu0 %v2068
    %v2227 = vpop.f32.mrf.mxu0
    %v2228 = vadd.f32 0.0, %v2227
    %2229 = vdwg.mxu0
    %v2230 = vadd.f32 %v2016, %v2088
    %v2231 = vadd.f32 %v2017, %v2108
    %v2232 = vadd.f32 %v2018, %v2128
    %v2233 = vadd.f32 %v2019, %v2148
    %v2234 = vadd.f32 %v2020, %v2168
    %v2235 = vadd.f32 %v2021, %v2188
    %v2236 = vadd.f32 %v2022, %v2208
    %v2237 = vadd.f32 %v2023, %v2228
    %2238 = vrot.lane.b32.xlu0 %v66, 8
    %v2239 = vpop.permute.xlu0 %2238
    %2240 = vrot.lane.b32.xlu0 %v67, 8
    %v2241 = vpop.permute.xlu0 %2240
    %2242 = vrot.lane.b32.xlu0 %v68, 8
    %v2243 = vpop.permute.xlu0 %2242
    %2244 = vrot.lane.b32.xlu0 %v69, 8
    %v2245 = vpop.permute.xlu0 %2244
    %2246 = vrot.lane.b32.xlu0 %v70, 8
    %v2247 = vpop.permute.xlu0 %2246
    %2248 = vrot.lane.b32.xlu0 %v71, 8
    %v2249 = vpop.permute.xlu0 %2248
    %2250 = vrot.lane.b32.xlu0 %v72, 8
    %v2251 = vpop.permute.xlu0 %2250
    %2252 = vrot.lane.b32.xlu0 %v73, 8
    %v2253 = vpop.permute.xlu0 %2252
    %vm2254 = vcmp.lt.s32.totalorder %v26, 8
    %v2255 = vsel %vm2254, %v2251, %v2253
    %v2256 = vsel %vm2254, %v2249, %v2251
    %v2257 = vsel %vm2254, %v2247, %v2249
    %v2258 = vsel %vm2254, %v2245, %v2247
    %v2259 = vsel %vm2254, %v2243, %v2245
    %v2260 = vsel %vm2254, %v2241, %v2243
    %v2261 = vsel %vm2254, %v2239, %v2241
    %v2262 = vsel %vm2254, %v2253, %v2239
    %v2263 = vsel %vm90, %v2262, 0.0
    %v2264 = vsel %vm91, %v2261, 0.0
    %v2265 = vsel %vm92, %v2260, 0.0
    %v2266 = vsel %vm93, %v2259, 0.0
    %v2267 = vsel %vm94, %v2258, 0.0
    %v2268 = vsel %vm95, %v2257, 0.0
    %v2269 = vsel %vm96, %v2256, 0.0
    %v2270 = vsel %vm97, %v2255, 0.0
    %s2271 = scalar_lea.vmem %s1, 80
    %v2272 = vld [vmem:[%s2271] sm:$0xff]
    %v2274 = vsel %vm207, %v2272, 0
    %2276 = vmatpush.msra.mxu0 0.0
    %2277 = vmatpush.msra.mxu0 0.0
    %2278 = vmatpush.msra.mxu0 0.0
    %2279 = vmatpush.msra.mxu0 0.0
    %2280 = vmatpush.msra.mxu0 0.0
    %2281 = vmatpush.msra.mxu0 0.0
    %2282 = vmatpush.msra.mxu0 0.0
    %2283 = vmatpush.msra.mxu0 0.0
    %2284 = vmatpush.msra.mxu0 0.0
    %2285 = vmatpush.msra.mxu0 0.0
    %2286 = vmatpush.msra.mxu0 0.0
    %2287 = vmatpush.msra.mxu0 0.0
    %2288 = vmatpush.msra.mxu0 0.0
    %2289 = vmatpush.msra.mxu0 0.0
    %2290 = vmatpush.msra.mxu0 0.0
    %2291 = vmatpush.msra.mxu0 %v2263
    %2292 = vmatmul.f32.gmra.mxu0 %v2274
    %v2293 = vpop.f32.mrf.mxu0
    %v2294 = vadd.f32 0.0, %v2293
    %2295 = vdwg.mxu0
    %2296 = vmatpush.msra.mxu0 0.0
    %2297 = vmatpush.msra.mxu0 0.0
    %2298 = vmatpush.msra.mxu0 0.0
    %2299 = vmatpush.msra.mxu0 0.0
    %2300 = vmatpush.msra.mxu0 0.0
    %2301 = vmatpush.msra.mxu0 0.0
    %2302 = vmatpush.msra.mxu0 0.0
    %2303 = vmatpush.msra.mxu0 0.0
    %2304 = vmatpush.msra.mxu0 0.0
    %2305 = vmatpush.msra.mxu0 0.0
    %2306 = vmatpush.msra.mxu0 0.0
    %2307 = vmatpush.msra.mxu0 0.0
    %2308 = vmatpush.msra.mxu0 0.0
    %2309 = vmatpush.msra.mxu0 0.0
    %2310 = vmatpush.msra.mxu0 0.0
    %2311 = vmatpush.msra.mxu0 %v2264
    %2312 = vmatmul.f32.gmra.mxu0 %v2274
    %v2313 = vpop.f32.mrf.mxu0
    %v2314 = vadd.f32 0.0, %v2313
    %2315 = vdwg.mxu0
    %2316 = vmatpush.msra.mxu0 0.0
    %2317 = vmatpush.msra.mxu0 0.0
    %2318 = vmatpush.msra.mxu0 0.0
    %2319 = vmatpush.msra.mxu0 0.0
    %2320 = vmatpush.msra.mxu0 0.0
    %2321 = vmatpush.msra.mxu0 0.0
    %2322 = vmatpush.msra.mxu0 0.0
    %2323 = vmatpush.msra.mxu0 0.0
    %2324 = vmatpush.msra.mxu0 0.0
    %2325 = vmatpush.msra.mxu0 0.0
    %2326 = vmatpush.msra.mxu0 0.0
    %2327 = vmatpush.msra.mxu0 0.0
    %2328 = vmatpush.msra.mxu0 0.0
    %2329 = vmatpush.msra.mxu0 0.0
    %2330 = vmatpush.msra.mxu0 0.0
    %2331 = vmatpush.msra.mxu0 %v2265
    %2332 = vmatmul.f32.gmra.mxu0 %v2274
    %v2333 = vpop.f32.mrf.mxu0
    %v2334 = vadd.f32 0.0, %v2333
    %2335 = vdwg.mxu0
    %2336 = vmatpush.msra.mxu0 0.0
    %2337 = vmatpush.msra.mxu0 0.0
    %2338 = vmatpush.msra.mxu0 0.0
    %2339 = vmatpush.msra.mxu0 0.0
    %2340 = vmatpush.msra.mxu0 0.0
    %2341 = vmatpush.msra.mxu0 0.0
    %2342 = vmatpush.msra.mxu0 0.0
    %2343 = vmatpush.msra.mxu0 0.0
    %2344 = vmatpush.msra.mxu0 0.0
    %2345 = vmatpush.msra.mxu0 0.0
    %2346 = vmatpush.msra.mxu0 0.0
    %2347 = vmatpush.msra.mxu0 0.0
    %2348 = vmatpush.msra.mxu0 0.0
    %2349 = vmatpush.msra.mxu0 0.0
    %2350 = vmatpush.msra.mxu0 0.0
    %2351 = vmatpush.msra.mxu0 %v2266
    %2352 = vmatmul.f32.gmra.mxu0 %v2274
    %v2353 = vpop.f32.mrf.mxu0
    %v2354 = vadd.f32 0.0, %v2353
    %2355 = vdwg.mxu0
    %2356 = vmatpush.msra.mxu0 0.0
    %2357 = vmatpush.msra.mxu0 0.0
    %2358 = vmatpush.msra.mxu0 0.0
    %2359 = vmatpush.msra.mxu0 0.0
    %2360 = vmatpush.msra.mxu0 0.0
    %2361 = vmatpush.msra.mxu0 0.0
    %2362 = vmatpush.msra.mxu0 0.0
    %2363 = vmatpush.msra.mxu0 0.0
    %2364 = vmatpush.msra.mxu0 0.0
    %2365 = vmatpush.msra.mxu0 0.0
    %2366 = vmatpush.msra.mxu0 0.0
    %2367 = vmatpush.msra.mxu0 0.0
    %2368 = vmatpush.msra.mxu0 0.0
    %2369 = vmatpush.msra.mxu0 0.0
    %2370 = vmatpush.msra.mxu0 0.0
    %2371 = vmatpush.msra.mxu0 %v2267
    %2372 = vmatmul.f32.gmra.mxu0 %v2274
    %v2373 = vpop.f32.mrf.mxu0
    %v2374 = vadd.f32 0.0, %v2373
    %2375 = vdwg.mxu0
    %2376 = vmatpush.msra.mxu0 0.0
    %2377 = vmatpush.msra.mxu0 0.0
    %2378 = vmatpush.msra.mxu0 0.0
    %2379 = vmatpush.msra.mxu0 0.0
    %2380 = vmatpush.msra.mxu0 0.0
    %2381 = vmatpush.msra.mxu0 0.0
    %2382 = vmatpush.msra.mxu0 0.0
    %2383 = vmatpush.msra.mxu0 0.0
    %2384 = vmatpush.msra.mxu0 0.0
    %2385 = vmatpush.msra.mxu0 0.0
    %2386 = vmatpush.msra.mxu0 0.0
    %2387 = vmatpush.msra.mxu0 0.0
    %2388 = vmatpush.msra.mxu0 0.0
    %2389 = vmatpush.msra.mxu0 0.0
    %2390 = vmatpush.msra.mxu0 0.0
    %2391 = vmatpush.msra.mxu0 %v2268
    %2392 = vmatmul.f32.gmra.mxu0 %v2274
    %v2393 = vpop.f32.mrf.mxu0
    %v2394 = vadd.f32 0.0, %v2393
    %2395 = vdwg.mxu0
    %2396 = vmatpush.msra.mxu0 0.0
    %2397 = vmatpush.msra.mxu0 0.0
    %2398 = vmatpush.msra.mxu0 0.0
    %2399 = vmatpush.msra.mxu0 0.0
    %2400 = vmatpush.msra.mxu0 0.0
    %2401 = vmatpush.msra.mxu0 0.0
    %2402 = vmatpush.msra.mxu0 0.0
    %2403 = vmatpush.msra.mxu0 0.0
    %2404 = vmatpush.msra.mxu0 0.0
    %2405 = vmatpush.msra.mxu0 0.0
    %2406 = vmatpush.msra.mxu0 0.0
    %2407 = vmatpush.msra.mxu0 0.0
    %2408 = vmatpush.msra.mxu0 0.0
    %2409 = vmatpush.msra.mxu0 0.0
    %2410 = vmatpush.msra.mxu0 0.0
    %2411 = vmatpush.msra.mxu0 %v2269
    %2412 = vmatmul.f32.gmra.mxu0 %v2274
    %v2413 = vpop.f32.mrf.mxu0
    %v2414 = vadd.f32 0.0, %v2413
    %2415 = vdwg.mxu0
    %2416 = vmatpush.msra.mxu0 0.0
    %2417 = vmatpush.msra.mxu0 0.0
    %2418 = vmatpush.msra.mxu0 0.0
    %2419 = vmatpush.msra.mxu0 0.0
    %2420 = vmatpush.msra.mxu0 0.0
    %2421 = vmatpush.msra.mxu0 0.0
    %2422 = vmatpush.msra.mxu0 0.0
    %2423 = vmatpush.msra.mxu0 0.0
    %2424 = vmatpush.msra.mxu0 0.0
    %2425 = vmatpush.msra.mxu0 0.0
    %2426 = vmatpush.msra.mxu0 0.0
    %2427 = vmatpush.msra.mxu0 0.0
    %2428 = vmatpush.msra.mxu0 0.0
    %2429 = vmatpush.msra.mxu0 0.0
    %2430 = vmatpush.msra.mxu0 0.0
    %2431 = vmatpush.msra.mxu0 %v2270
    %2432 = vmatmul.f32.gmra.mxu0 %v2274
    %v2433 = vpop.f32.mrf.mxu0
    %v2434 = vadd.f32 0.0, %v2433
    %2435 = vdwg.mxu0
    %v2436 = vadd.f32 %v2230, %v2294
    %v2437 = vadd.f32 %v2231, %v2314
    %v2438 = vadd.f32 %v2232, %v2334
    %v2439 = vadd.f32 %v2233, %v2354
    %v2440 = vadd.f32 %v2234, %v2374
    %v2441 = vadd.f32 %v2235, %v2394
    %v2442 = vadd.f32 %v2236, %v2414
    %v2443 = vadd.f32 %v2237, %v2434
    %2444 = vrot.lane.b32.xlu0 %v66, 7
    %v2445 = vpop.permute.xlu0 %2444
    %2446 = vrot.lane.b32.xlu0 %v67, 7
    %v2447 = vpop.permute.xlu0 %2446
    %2448 = vrot.lane.b32.xlu0 %v68, 7
    %v2449 = vpop.permute.xlu0 %2448
    %2450 = vrot.lane.b32.xlu0 %v69, 7
    %v2451 = vpop.permute.xlu0 %2450
    %2452 = vrot.lane.b32.xlu0 %v70, 7
    %v2453 = vpop.permute.xlu0 %2452
    %2454 = vrot.lane.b32.xlu0 %v71, 7
    %v2455 = vpop.permute.xlu0 %2454
    %2456 = vrot.lane.b32.xlu0 %v72, 7
    %v2457 = vpop.permute.xlu0 %2456
    %2458 = vrot.lane.b32.xlu0 %v73, 7
    %v2459 = vpop.permute.xlu0 %2458
    %vm2460 = vcmp.lt.s32.totalorder %v26, 7
    %v2461 = vsel %vm2460, %v2457, %v2459
    %v2462 = vsel %vm2460, %v2455, %v2457
    %v2463 = vsel %vm2460, %v2453, %v2455
    %v2464 = vsel %vm2460, %v2451, %v2453
    %v2465 = vsel %vm2460, %v2449, %v2451
    %v2466 = vsel %vm2460, %v2447, %v2449
    %v2467 = vsel %vm2460, %v2445, %v2447
    %v2468 = vsel %vm2460, %v2459, %v2445
    %vm2469 = vmand %vm90, %vm114
    %vm2470 = vmand %vm91, %vm115
    %vm2471 = vmand %vm92, %vm116
    %vm2472 = vmand %vm93, %vm117
    %vm2473 = vmand %vm94, %vm118
    %vm2474 = vmand %vm95, %vm119
    %vm2475 = vmand %vm96, %vm120
    %vm2476 = vmand %vm97, %vm121
    %v2477 = vsel %vm2469, %v2468, 0.0
    %v2478 = vsel %vm2470, %v2467, 0.0
    %v2479 = vsel %vm2471, %v2466, 0.0
    %v2480 = vsel %vm2472, %v2465, 0.0
    %v2481 = vsel %vm2473, %v2464, 0.0
    %v2482 = vsel %vm2474, %v2463, 0.0
    %v2483 = vsel %vm2475, %v2462, 0.0
    %v2484 = vsel %vm2476, %v2461, 0.0
    %s2485 = scalar_lea.vmem %s1, 88
    %v2486 = vld [vmem:[%s2485] sm:$0xff]
    %v2488 = vsel %vm207, %v2486, 0
    %2490 = vmatpush.msra.mxu0 0.0
    %2491 = vmatpush.msra.mxu0 0.0
    %2492 = vmatpush.msra.mxu0 0.0
    %2493 = vmatpush.msra.mxu0 0.0
    %2494 = vmatpush.msra.mxu0 0.0
    %2495 = vmatpush.msra.mxu0 0.0
    %2496 = vmatpush.msra.mxu0 0.0
    %2497 = vmatpush.msra.mxu0 0.0
    %2498 = vmatpush.msra.mxu0 0.0
    %2499 = vmatpush.msra.mxu0 0.0
    %2500 = vmatpush.msra.mxu0 0.0
    %2501 = vmatpush.msra.mxu0 0.0
    %2502 = vmatpush.msra.mxu0 0.0
    %2503 = vmatpush.msra.mxu0 0.0
    %2504 = vmatpush.msra.mxu0 0.0
    %2505 = vmatpush.msra.mxu0 %v2477
    %2506 = vmatmul.f32.gmra.mxu0 %v2488
    %v2507 = vpop.f32.mrf.mxu0
    %v2508 = vadd.f32 0.0, %v2507
    %2509 = vdwg.mxu0
    %2510 = vmatpush.msra.mxu0 0.0
    %2511 = vmatpush.msra.mxu0 0.0
    %2512 = vmatpush.msra.mxu0 0.0
    %2513 = vmatpush.msra.mxu0 0.0
    %2514 = vmatpush.msra.mxu0 0.0
    %2515 = vmatpush.msra.mxu0 0.0
    %2516 = vmatpush.msra.mxu0 0.0
    %2517 = vmatpush.msra.mxu0 0.0
    %2518 = vmatpush.msra.mxu0 0.0
    %2519 = vmatpush.msra.mxu0 0.0
    %2520 = vmatpush.msra.mxu0 0.0
    %2521 = vmatpush.msra.mxu0 0.0
    %2522 = vmatpush.msra.mxu0 0.0
    %2523 = vmatpush.msra.mxu0 0.0
    %2524 = vmatpush.msra.mxu0 0.0
    %2525 = vmatpush.msra.mxu0 %v2478
    %2526 = vmatmul.f32.gmra.mxu0 %v2488
    %v2527 = vpop.f32.mrf.mxu0
    %v2528 = vadd.f32 0.0, %v2527
    %2529 = vdwg.mxu0
    %2530 = vmatpush.msra.mxu0 0.0
    %2531 = vmatpush.msra.mxu0 0.0
    %2532 = vmatpush.msra.mxu0 0.0
    %2533 = vmatpush.msra.mxu0 0.0
    %2534 = vmatpush.msra.mxu0 0.0
    %2535 = vmatpush.msra.mxu0 0.0
    %2536 = vmatpush.msra.mxu0 0.0
    %2537 = vmatpush.msra.mxu0 0.0
    %2538 = vmatpush.msra.mxu0 0.0
    %2539 = vmatpush.msra.mxu0 0.0
    %2540 = vmatpush.msra.mxu0 0.0
    %2541 = vmatpush.msra.mxu0 0.0
    %2542 = vmatpush.msra.mxu0 0.0
    %2543 = vmatpush.msra.mxu0 0.0
    %2544 = vmatpush.msra.mxu0 0.0
    %2545 = vmatpush.msra.mxu0 %v2479
    %2546 = vmatmul.f32.gmra.mxu0 %v2488
    %v2547 = vpop.f32.mrf.mxu0
    %v2548 = vadd.f32 0.0, %v2547
    %2549 = vdwg.mxu0
    %2550 = vmatpush.msra.mxu0 0.0
    %2551 = vmatpush.msra.mxu0 0.0
    %2552 = vmatpush.msra.mxu0 0.0
    %2553 = vmatpush.msra.mxu0 0.0
    %2554 = vmatpush.msra.mxu0 0.0
    %2555 = vmatpush.msra.mxu0 0.0
    %2556 = vmatpush.msra.mxu0 0.0
    %2557 = vmatpush.msra.mxu0 0.0
    %2558 = vmatpush.msra.mxu0 0.0
    %2559 = vmatpush.msra.mxu0 0.0
    %2560 = vmatpush.msra.mxu0 0.0
    %2561 = vmatpush.msra.mxu0 0.0
    %2562 = vmatpush.msra.mxu0 0.0
    %2563 = vmatpush.msra.mxu0 0.0
    %2564 = vmatpush.msra.mxu0 0.0
    %2565 = vmatpush.msra.mxu0 %v2480
    %2566 = vmatmul.f32.gmra.mxu0 %v2488
    %v2567 = vpop.f32.mrf.mxu0
    %v2568 = vadd.f32 0.0, %v2567
    %2569 = vdwg.mxu0
    %2570 = vmatpush.msra.mxu0 0.0
    %2571 = vmatpush.msra.mxu0 0.0
    %2572 = vmatpush.msra.mxu0 0.0
    %2573 = vmatpush.msra.mxu0 0.0
    %2574 = vmatpush.msra.mxu0 0.0
    %2575 = vmatpush.msra.mxu0 0.0
    %2576 = vmatpush.msra.mxu0 0.0
    %2577 = vmatpush.msra.mxu0 0.0
    %2578 = vmatpush.msra.mxu0 0.0
    %2579 = vmatpush.msra.mxu0 0.0
    %2580 = vmatpush.msra.mxu0 0.0
    %2581 = vmatpush.msra.mxu0 0.0
    %2582 = vmatpush.msra.mxu0 0.0
    %2583 = vmatpush.msra.mxu0 0.0
    %2584 = vmatpush.msra.mxu0 0.0
    %2585 = vmatpush.msra.mxu0 %v2481
    %2586 = vmatmul.f32.gmra.mxu0 %v2488
    %v2587 = vpop.f32.mrf.mxu0
    %v2588 = vadd.f32 0.0, %v2587
    %2589 = vdwg.mxu0
    %2590 = vmatpush.msra.mxu0 0.0
    %2591 = vmatpush.msra.mxu0 0.0
    %2592 = vmatpush.msra.mxu0 0.0
    %2593 = vmatpush.msra.mxu0 0.0
    %2594 = vmatpush.msra.mxu0 0.0
    %2595 = vmatpush.msra.mxu0 0.0
    %2596 = vmatpush.msra.mxu0 0.0
    %2597 = vmatpush.msra.mxu0 0.0
    %2598 = vmatpush.msra.mxu0 0.0
    %2599 = vmatpush.msra.mxu0 0.0
    %2600 = vmatpush.msra.mxu0 0.0
    %2601 = vmatpush.msra.mxu0 0.0
    %2602 = vmatpush.msra.mxu0 0.0
    %2603 = vmatpush.msra.mxu0 0.0
    %2604 = vmatpush.msra.mxu0 0.0
    %2605 = vmatpush.msra.mxu0 %v2482
    %2606 = vmatmul.f32.gmra.mxu0 %v2488
    %v2607 = vpop.f32.mrf.mxu0
    %v2608 = vadd.f32 0.0, %v2607
    %2609 = vdwg.mxu0
    %2610 = vmatpush.msra.mxu0 0.0
    %2611 = vmatpush.msra.mxu0 0.0
    %2612 = vmatpush.msra.mxu0 0.0
    %2613 = vmatpush.msra.mxu0 0.0
    %2614 = vmatpush.msra.mxu0 0.0
    %2615 = vmatpush.msra.mxu0 0.0
    %2616 = vmatpush.msra.mxu0 0.0
    %2617 = vmatpush.msra.mxu0 0.0
    %2618 = vmatpush.msra.mxu0 0.0
    %2619 = vmatpush.msra.mxu0 0.0
    %2620 = vmatpush.msra.mxu0 0.0
    %2621 = vmatpush.msra.mxu0 0.0
    %2622 = vmatpush.msra.mxu0 0.0
    %2623 = vmatpush.msra.mxu0 0.0
    %2624 = vmatpush.msra.mxu0 0.0
    %2625 = vmatpush.msra.mxu0 %v2483
    %2626 = vmatmul.f32.gmra.mxu0 %v2488
    %v2627 = vpop.f32.mrf.mxu0
    %v2628 = vadd.f32 0.0, %v2627
    %2629 = vdwg.mxu0
    %2630 = vmatpush.msra.mxu0 0.0
    %2631 = vmatpush.msra.mxu0 0.0
    %2632 = vmatpush.msra.mxu0 0.0
    %2633 = vmatpush.msra.mxu0 0.0
    %2634 = vmatpush.msra.mxu0 0.0
    %2635 = vmatpush.msra.mxu0 0.0
    %2636 = vmatpush.msra.mxu0 0.0
    %2637 = vmatpush.msra.mxu0 0.0
    %2638 = vmatpush.msra.mxu0 0.0
    %2639 = vmatpush.msra.mxu0 0.0
    %2640 = vmatpush.msra.mxu0 0.0
    %2641 = vmatpush.msra.mxu0 0.0
    %2642 = vmatpush.msra.mxu0 0.0
    %2643 = vmatpush.msra.mxu0 0.0
    %2644 = vmatpush.msra.mxu0 0.0
    %2645 = vmatpush.msra.mxu0 %v2484
    %2646 = vmatmul.f32.gmra.mxu0 %v2488
    %v2647 = vpop.f32.mrf.mxu0
    %v2648 = vadd.f32 0.0, %v2647
    %2649 = vdwg.mxu0
    %v2650 = vadd.f32 %v2436, %v2508
    %v2651 = vadd.f32 %v2437, %v2528
    %v2652 = vadd.f32 %v2438, %v2548
    %v2653 = vadd.f32 %v2439, %v2568
    %v2654 = vadd.f32 %v2440, %v2588
    %v2655 = vadd.f32 %v2441, %v2608
    %v2656 = vadd.f32 %v2442, %v2628
    %v2657 = vadd.f32 %v2443, %v2648
    %2658 = vrot.lane.b32.xlu0 %v66, 1
    %v2659 = vpop.permute.xlu0 %2658
    %2660 = vrot.lane.b32.xlu0 %v67, 1
    %v2661 = vpop.permute.xlu0 %2660
    %2662 = vrot.lane.b32.xlu0 %v68, 1
    %v2663 = vpop.permute.xlu0 %2662
    %2664 = vrot.lane.b32.xlu0 %v69, 1
    %v2665 = vpop.permute.xlu0 %2664
    %2666 = vrot.lane.b32.xlu0 %v70, 1
    %v2667 = vpop.permute.xlu0 %2666
    %2668 = vrot.lane.b32.xlu0 %v71, 1
    %v2669 = vpop.permute.xlu0 %2668
    %2670 = vrot.lane.b32.xlu0 %v72, 1
    %v2671 = vpop.permute.xlu0 %2670
    %2672 = vrot.lane.b32.xlu0 %v73, 1
    %v2673 = vpop.permute.xlu0 %2672
    %vm2674 = vcmp.lt.s32.totalorder %v26, 1
    %v2675 = vsel %vm2674, %v2671, %v2673
    %v2676 = vsel %vm2674, %v2669, %v2671
    %v2677 = vsel %vm2674, %v2667, %v2669
    %v2678 = vsel %vm2674, %v2665, %v2667
    %v2679 = vsel %vm2674, %v2663, %v2665
    %v2680 = vsel %vm2674, %v2661, %v2663
    %v2681 = vsel %vm2674, %v2659, %v2661
    %v2682 = vsel %vm2674, %v2673, %v2659
    %v2683 = vsel %vm106, %v2682, 0.0
    %v2684 = vsel %vm107, %v2681, 0.0
    %v2685 = vsel %vm108, %v2680, 0.0
    %v2686 = vsel %vm109, %v2679, 0.0
    %v2687 = vsel %vm110, %v2678, 0.0
    %v2688 = vsel %vm111, %v2677, 0.0
    %v2689 = vsel %vm112, %v2676, 0.0
    %v2690 = vsel %vm113, %v2675, 0.0
    %s2691 = scalar_lea.vmem %s1, 96
    %v2692 = vld [vmem:[%s2691] sm:$0xff]
    %v2694 = vsel %vm207, %v2692, 0
    %2696 = vmatpush.msra.mxu0 0.0
    %2697 = vmatpush.msra.mxu0 0.0
    %2698 = vmatpush.msra.mxu0 0.0
    %2699 = vmatpush.msra.mxu0 0.0
    %2700 = vmatpush.msra.mxu0 0.0
    %2701 = vmatpush.msra.mxu0 0.0
    %2702 = vmatpush.msra.mxu0 0.0
    %2703 = vmatpush.msra.mxu0 0.0
    %2704 = vmatpush.msra.mxu0 0.0
    %2705 = vmatpush.msra.mxu0 0.0
    %2706 = vmatpush.msra.mxu0 0.0
    %2707 = vmatpush.msra.mxu0 0.0
    %2708 = vmatpush.msra.mxu0 0.0
    %2709 = vmatpush.msra.mxu0 0.0
    %2710 = vmatpush.msra.mxu0 0.0
    %2711 = vmatpush.msra.mxu0 %v2683
    %2712 = vmatmul.f32.gmra.mxu0 %v2694
    %v2713 = vpop.f32.mrf.mxu0
    %v2714 = vadd.f32 0.0, %v2713
    %2715 = vdwg.mxu0
    %2716 = vmatpush.msra.mxu0 0.0
    %2717 = vmatpush.msra.mxu0 0.0
    %2718 = vmatpush.msra.mxu0 0.0
    %2719 = vmatpush.msra.mxu0 0.0
    %2720 = vmatpush.msra.mxu0 0.0
    %2721 = vmatpush.msra.mxu0 0.0
    %2722 = vmatpush.msra.mxu0 0.0
    %2723 = vmatpush.msra.mxu0 0.0
    %2724 = vmatpush.msra.mxu0 0.0
    %2725 = vmatpush.msra.mxu0 0.0
    %2726 = vmatpush.msra.mxu0 0.0
    %2727 = vmatpush.msra.mxu0 0.0
    %2728 = vmatpush.msra.mxu0 0.0
    %2729 = vmatpush.msra.mxu0 0.0
    %2730 = vmatpush.msra.mxu0 0.0
    %2731 = vmatpush.msra.mxu0 %v2684
    %2732 = vmatmul.f32.gmra.mxu0 %v2694
    %v2733 = vpop.f32.mrf.mxu0
    %v2734 = vadd.f32 0.0, %v2733
    %2735 = vdwg.mxu0
    %2736 = vmatpush.msra.mxu0 0.0
    %2737 = vmatpush.msra.mxu0 0.0
    %2738 = vmatpush.msra.mxu0 0.0
    %2739 = vmatpush.msra.mxu0 0.0
    %2740 = vmatpush.msra.mxu0 0.0
    %2741 = vmatpush.msra.mxu0 0.0
    %2742 = vmatpush.msra.mxu0 0.0
    %2743 = vmatpush.msra.mxu0 0.0
    %2744 = vmatpush.msra.mxu0 0.0
    %2745 = vmatpush.msra.mxu0 0.0
    %2746 = vmatpush.msra.mxu0 0.0
    %2747 = vmatpush.msra.mxu0 0.0
    %2748 = vmatpush.msra.mxu0 0.0
    %2749 = vmatpush.msra.mxu0 0.0
    %2750 = vmatpush.msra.mxu0 0.0
    %2751 = vmatpush.msra.mxu0 %v2685
    %2752 = vmatmul.f32.gmra.mxu0 %v2694
    %v2753 = vpop.f32.mrf.mxu0
    %v2754 = vadd.f32 0.0, %v2753
    %2755 = vdwg.mxu0
    %2756 = vmatpush.msra.mxu0 0.0
    %2757 = vmatpush.msra.mxu0 0.0
    %2758 = vmatpush.msra.mxu0 0.0
    %2759 = vmatpush.msra.mxu0 0.0
    %2760 = vmatpush.msra.mxu0 0.0
    %2761 = vmatpush.msra.mxu0 0.0
    %2762 = vmatpush.msra.mxu0 0.0
    %2763 = vmatpush.msra.mxu0 0.0
    %2764 = vmatpush.msra.mxu0 0.0
    %2765 = vmatpush.msra.mxu0 0.0
    %2766 = vmatpush.msra.mxu0 0.0
    %2767 = vmatpush.msra.mxu0 0.0
    %2768 = vmatpush.msra.mxu0 0.0
    %2769 = vmatpush.msra.mxu0 0.0
    %2770 = vmatpush.msra.mxu0 0.0
    %2771 = vmatpush.msra.mxu0 %v2686
    %2772 = vmatmul.f32.gmra.mxu0 %v2694
    %v2773 = vpop.f32.mrf.mxu0
    %v2774 = vadd.f32 0.0, %v2773
    %2775 = vdwg.mxu0
    %2776 = vmatpush.msra.mxu0 0.0
    %2777 = vmatpush.msra.mxu0 0.0
    %2778 = vmatpush.msra.mxu0 0.0
    %2779 = vmatpush.msra.mxu0 0.0
    %2780 = vmatpush.msra.mxu0 0.0
    %2781 = vmatpush.msra.mxu0 0.0
    %2782 = vmatpush.msra.mxu0 0.0
    %2783 = vmatpush.msra.mxu0 0.0
    %2784 = vmatpush.msra.mxu0 0.0
    %2785 = vmatpush.msra.mxu0 0.0
    %2786 = vmatpush.msra.mxu0 0.0
    %2787 = vmatpush.msra.mxu0 0.0
    %2788 = vmatpush.msra.mxu0 0.0
    %2789 = vmatpush.msra.mxu0 0.0
    %2790 = vmatpush.msra.mxu0 0.0
    %2791 = vmatpush.msra.mxu0 %v2687
    %2792 = vmatmul.f32.gmra.mxu0 %v2694
    %v2793 = vpop.f32.mrf.mxu0
    %v2794 = vadd.f32 0.0, %v2793
    %2795 = vdwg.mxu0
    %2796 = vmatpush.msra.mxu0 0.0
    %2797 = vmatpush.msra.mxu0 0.0
    %2798 = vmatpush.msra.mxu0 0.0
    %2799 = vmatpush.msra.mxu0 0.0
    %2800 = vmatpush.msra.mxu0 0.0
    %2801 = vmatpush.msra.mxu0 0.0
    %2802 = vmatpush.msra.mxu0 0.0
    %2803 = vmatpush.msra.mxu0 0.0
    %2804 = vmatpush.msra.mxu0 0.0
    %2805 = vmatpush.msra.mxu0 0.0
    %2806 = vmatpush.msra.mxu0 0.0
    %2807 = vmatpush.msra.mxu0 0.0
    %2808 = vmatpush.msra.mxu0 0.0
    %2809 = vmatpush.msra.mxu0 0.0
    %2810 = vmatpush.msra.mxu0 0.0
    %2811 = vmatpush.msra.mxu0 %v2688
    %2812 = vmatmul.f32.gmra.mxu0 %v2694
    %v2813 = vpop.f32.mrf.mxu0
    %v2814 = vadd.f32 0.0, %v2813
    %2815 = vdwg.mxu0
    %2816 = vmatpush.msra.mxu0 0.0
    %2817 = vmatpush.msra.mxu0 0.0
    %2818 = vmatpush.msra.mxu0 0.0
    %2819 = vmatpush.msra.mxu0 0.0
    %2820 = vmatpush.msra.mxu0 0.0
    %2821 = vmatpush.msra.mxu0 0.0
    %2822 = vmatpush.msra.mxu0 0.0
    %2823 = vmatpush.msra.mxu0 0.0
    %2824 = vmatpush.msra.mxu0 0.0
    %2825 = vmatpush.msra.mxu0 0.0
    %2826 = vmatpush.msra.mxu0 0.0
    %2827 = vmatpush.msra.mxu0 0.0
    %2828 = vmatpush.msra.mxu0 0.0
    %2829 = vmatpush.msra.mxu0 0.0
    %2830 = vmatpush.msra.mxu0 0.0
    %2831 = vmatpush.msra.mxu0 %v2689
    %2832 = vmatmul.f32.gmra.mxu0 %v2694
    %v2833 = vpop.f32.mrf.mxu0
    %v2834 = vadd.f32 0.0, %v2833
    %2835 = vdwg.mxu0
    %2836 = vmatpush.msra.mxu0 0.0
    %2837 = vmatpush.msra.mxu0 0.0
    %2838 = vmatpush.msra.mxu0 0.0
    %2839 = vmatpush.msra.mxu0 0.0
    %2840 = vmatpush.msra.mxu0 0.0
    %2841 = vmatpush.msra.mxu0 0.0
    %2842 = vmatpush.msra.mxu0 0.0
    %2843 = vmatpush.msra.mxu0 0.0
    %2844 = vmatpush.msra.mxu0 0.0
    %2845 = vmatpush.msra.mxu0 0.0
    %2846 = vmatpush.msra.mxu0 0.0
    %2847 = vmatpush.msra.mxu0 0.0
    %2848 = vmatpush.msra.mxu0 0.0
    %2849 = vmatpush.msra.mxu0 0.0
    %2850 = vmatpush.msra.mxu0 0.0
    %2851 = vmatpush.msra.mxu0 %v2690
    %2852 = vmatmul.f32.gmra.mxu0 %v2694
    %v2853 = vpop.f32.mrf.mxu0
    %v2854 = vadd.f32 0.0, %v2853
    %2855 = vdwg.mxu0
    %v2856 = vadd.f32 %v2650, %v2714
    %v2857 = vadd.f32 %v2651, %v2734
    %v2858 = vadd.f32 %v2652, %v2754
    %v2859 = vadd.f32 %v2653, %v2774
    %v2860 = vadd.f32 %v2654, %v2794
    %v2861 = vadd.f32 %v2655, %v2814
    %v2862 = vadd.f32 %v2656, %v2834
    %v2863 = vadd.f32 %v2657, %v2854
    %s2864 = scalar_lea.vmem %s1, 104
    %v2865 = vld [vmem:[%s2864] sm:$0xff]
    %v2867 = vsel %vm207, %v2865, 0
    %2869 = vmatpush.msra.mxu0 0.0
    %2870 = vmatpush.msra.mxu0 0.0
    %2871 = vmatpush.msra.mxu0 0.0
    %2872 = vmatpush.msra.mxu0 0.0
    %2873 = vmatpush.msra.mxu0 0.0
    %2874 = vmatpush.msra.mxu0 0.0
    %2875 = vmatpush.msra.mxu0 0.0
    %2876 = vmatpush.msra.mxu0 0.0
    %2877 = vmatpush.msra.mxu0 0.0
    %2878 = vmatpush.msra.mxu0 0.0
    %2879 = vmatpush.msra.mxu0 0.0
    %2880 = vmatpush.msra.mxu0 0.0
    %2881 = vmatpush.msra.mxu0 0.0
    %2882 = vmatpush.msra.mxu0 0.0
    %2883 = vmatpush.msra.mxu0 0.0
    %2884 = vmatpush.msra.mxu0 %v66
    %2885 = vmatmul.f32.gmra.mxu0 %v2867
    %v2886 = vpop.f32.mrf.mxu0
    %v2887 = vadd.f32 0.0, %v2886
    %2888 = vdwg.mxu0
    %2889 = vmatpush.msra.mxu0 0.0
    %2890 = vmatpush.msra.mxu0 0.0
    %2891 = vmatpush.msra.mxu0 0.0
    %2892 = vmatpush.msra.mxu0 0.0
    %2893 = vmatpush.msra.mxu0 0.0
    %2894 = vmatpush.msra.mxu0 0.0
    %2895 = vmatpush.msra.mxu0 0.0
    %2896 = vmatpush.msra.mxu0 0.0
    %2897 = vmatpush.msra.mxu0 0.0
    %2898 = vmatpush.msra.mxu0 0.0
    %2899 = vmatpush.msra.mxu0 0.0
    %2900 = vmatpush.msra.mxu0 0.0
    %2901 = vmatpush.msra.mxu0 0.0
    %2902 = vmatpush.msra.mxu0 0.0
    %2903 = vmatpush.msra.mxu0 0.0
    %2904 = vmatpush.msra.mxu0 %v67
    %2905 = vmatmul.f32.gmra.mxu0 %v2867
    %v2906 = vpop.f32.mrf.mxu0
    %v2907 = vadd.f32 0.0, %v2906
    %2908 = vdwg.mxu0
    %2909 = vmatpush.msra.mxu0 0.0
    %2910 = vmatpush.msra.mxu0 0.0
    %2911 = vmatpush.msra.mxu0 0.0
    %2912 = vmatpush.msra.mxu0 0.0
    %2913 = vmatpush.msra.mxu0 0.0
    %2914 = vmatpush.msra.mxu0 0.0
    %2915 = vmatpush.msra.mxu0 0.0
    %2916 = vmatpush.msra.mxu0 0.0
    %2917 = vmatpush.msra.mxu0 0.0
    %2918 = vmatpush.msra.mxu0 0.0
    %2919 = vmatpush.msra.mxu0 0.0
    %2920 = vmatpush.msra.mxu0 0.0
    %2921 = vmatpush.msra.mxu0 0.0
    %2922 = vmatpush.msra.mxu0 0.0
    %2923 = vmatpush.msra.mxu0 0.0
    %2924 = vmatpush.msra.mxu0 %v68
    %2925 = vmatmul.f32.gmra.mxu0 %v2867
    %v2926 = vpop.f32.mrf.mxu0
    %v2927 = vadd.f32 0.0, %v2926
    %2928 = vdwg.mxu0
    %2929 = vmatpush.msra.mxu0 0.0
    %2930 = vmatpush.msra.mxu0 0.0
    %2931 = vmatpush.msra.mxu0 0.0
    %2932 = vmatpush.msra.mxu0 0.0
    %2933 = vmatpush.msra.mxu0 0.0
    %2934 = vmatpush.msra.mxu0 0.0
    %2935 = vmatpush.msra.mxu0 0.0
    %2936 = vmatpush.msra.mxu0 0.0
    %2937 = vmatpush.msra.mxu0 0.0
    %2938 = vmatpush.msra.mxu0 0.0
    %2939 = vmatpush.msra.mxu0 0.0
    %2940 = vmatpush.msra.mxu0 0.0
    %2941 = vmatpush.msra.mxu0 0.0
    %2942 = vmatpush.msra.mxu0 0.0
    %2943 = vmatpush.msra.mxu0 0.0
    %2944 = vmatpush.msra.mxu0 %v69
    %2945 = vmatmul.f32.gmra.mxu0 %v2867
    %v2946 = vpop.f32.mrf.mxu0
    %v2947 = vadd.f32 0.0, %v2946
    %2948 = vdwg.mxu0
    %2949 = vmatpush.msra.mxu0 0.0
    %2950 = vmatpush.msra.mxu0 0.0
    %2951 = vmatpush.msra.mxu0 0.0
    %2952 = vmatpush.msra.mxu0 0.0
    %2953 = vmatpush.msra.mxu0 0.0
    %2954 = vmatpush.msra.mxu0 0.0
    %2955 = vmatpush.msra.mxu0 0.0
    %2956 = vmatpush.msra.mxu0 0.0
    %2957 = vmatpush.msra.mxu0 0.0
    %2958 = vmatpush.msra.mxu0 0.0
    %2959 = vmatpush.msra.mxu0 0.0
    %2960 = vmatpush.msra.mxu0 0.0
    %2961 = vmatpush.msra.mxu0 0.0
    %2962 = vmatpush.msra.mxu0 0.0
    %2963 = vmatpush.msra.mxu0 0.0
    %2964 = vmatpush.msra.mxu0 %v70
    %2965 = vmatmul.f32.gmra.mxu0 %v2867
    %v2966 = vpop.f32.mrf.mxu0
    %v2967 = vadd.f32 0.0, %v2966
    %2968 = vdwg.mxu0
    %2969 = vmatpush.msra.mxu0 0.0
    %2970 = vmatpush.msra.mxu0 0.0
    %2971 = vmatpush.msra.mxu0 0.0
    %2972 = vmatpush.msra.mxu0 0.0
    %2973 = vmatpush.msra.mxu0 0.0
    %2974 = vmatpush.msra.mxu0 0.0
    %2975 = vmatpush.msra.mxu0 0.0
    %2976 = vmatpush.msra.mxu0 0.0
    %2977 = vmatpush.msra.mxu0 0.0
    %2978 = vmatpush.msra.mxu0 0.0
    %2979 = vmatpush.msra.mxu0 0.0
    %2980 = vmatpush.msra.mxu0 0.0
    %2981 = vmatpush.msra.mxu0 0.0
    %2982 = vmatpush.msra.mxu0 0.0
    %2983 = vmatpush.msra.mxu0 0.0
    %2984 = vmatpush.msra.mxu0 %v71
    %2985 = vmatmul.f32.gmra.mxu0 %v2867
    %v2986 = vpop.f32.mrf.mxu0
    %v2987 = vadd.f32 0.0, %v2986
    %2988 = vdwg.mxu0
    %2989 = vmatpush.msra.mxu0 0.0
    %2990 = vmatpush.msra.mxu0 0.0
    %2991 = vmatpush.msra.mxu0 0.0
    %2992 = vmatpush.msra.mxu0 0.0
    %2993 = vmatpush.msra.mxu0 0.0
    %2994 = vmatpush.msra.mxu0 0.0
    %2995 = vmatpush.msra.mxu0 0.0
    %2996 = vmatpush.msra.mxu0 0.0
    %2997 = vmatpush.msra.mxu0 0.0
    %2998 = vmatpush.msra.mxu0 0.0
    %2999 = vmatpush.msra.mxu0 0.0
    %3000 = vmatpush.msra.mxu0 0.0
    %3001 = vmatpush.msra.mxu0 0.0
    %3002 = vmatpush.msra.mxu0 0.0
    %3003 = vmatpush.msra.mxu0 0.0
    %3004 = vmatpush.msra.mxu0 %v72
    %3005 = vmatmul.f32.gmra.mxu0 %v2867
    %v3006 = vpop.f32.mrf.mxu0
    %v3007 = vadd.f32 0.0, %v3006
    %3008 = vdwg.mxu0
    %3009 = vmatpush.msra.mxu0 0.0
    %3010 = vmatpush.msra.mxu0 0.0
    %3011 = vmatpush.msra.mxu0 0.0
    %3012 = vmatpush.msra.mxu0 0.0
    %3013 = vmatpush.msra.mxu0 0.0
    %3014 = vmatpush.msra.mxu0 0.0
    %3015 = vmatpush.msra.mxu0 0.0
    %3016 = vmatpush.msra.mxu0 0.0
    %3017 = vmatpush.msra.mxu0 0.0
    %3018 = vmatpush.msra.mxu0 0.0
    %3019 = vmatpush.msra.mxu0 0.0
    %3020 = vmatpush.msra.mxu0 0.0
    %3021 = vmatpush.msra.mxu0 0.0
    %3022 = vmatpush.msra.mxu0 0.0
    %3023 = vmatpush.msra.mxu0 0.0
    %3024 = vmatpush.msra.mxu0 %v73
    %3025 = vmatmul.f32.gmra.mxu0 %v2867
    %v3026 = vpop.f32.mrf.mxu0
    %v3027 = vadd.f32 0.0, %v3026
    %3028 = vdwg.mxu0
    %v3029 = vadd.f32 %v2856, %v2887
    %v3030 = vadd.f32 %v2857, %v2907
    %v3031 = vadd.f32 %v2858, %v2927
    %v3032 = vadd.f32 %v2859, %v2947
    %v3033 = vadd.f32 %v2860, %v2967
    %v3034 = vadd.f32 %v2861, %v2987
    %v3035 = vadd.f32 %v2862, %v3007
    %v3036 = vadd.f32 %v2863, %v3027
    %3037 = vrot.lane.b32.xlu0 %v66, 127
    %v3038 = vpop.permute.xlu0 %3037
    %3039 = vrot.lane.b32.xlu0 %v67, 127
    %v3040 = vpop.permute.xlu0 %3039
    %3041 = vrot.lane.b32.xlu0 %v68, 127
    %v3042 = vpop.permute.xlu0 %3041
    %3043 = vrot.lane.b32.xlu0 %v69, 127
    %v3044 = vpop.permute.xlu0 %3043
    %3045 = vrot.lane.b32.xlu0 %v70, 127
    %v3046 = vpop.permute.xlu0 %3045
    %3047 = vrot.lane.b32.xlu0 %v71, 127
    %v3048 = vpop.permute.xlu0 %3047
    %3049 = vrot.lane.b32.xlu0 %v72, 127
    %v3050 = vpop.permute.xlu0 %3049
    %3051 = vrot.lane.b32.xlu0 %v73, 127
    %v3052 = vpop.permute.xlu0 %3051
    %vm3053 = vcmp.lt.s32.totalorder %v26, 127
    %v3054 = vsel %vm3053, %v3050, %v3052
    %v3055 = vsel %vm3053, %v3048, %v3050
    %v3056 = vsel %vm3053, %v3046, %v3048
    %v3057 = vsel %vm3053, %v3044, %v3046
    %v3058 = vsel %vm3053, %v3042, %v3044
    %v3059 = vsel %vm3053, %v3040, %v3042
    %v3060 = vsel %vm3053, %v3038, %v3040
    %v3061 = vsel %vm3053, %v3052, %v3038
    %v3062 = vsel %vm114, %v3060, 0.0
    %v3063 = vsel %vm115, %v3059, 0.0
    %v3064 = vsel %vm116, %v3058, 0.0
    %v3065 = vsel %vm117, %v3057, 0.0
    %v3066 = vsel %vm118, %v3056, 0.0
    %v3067 = vsel %vm119, %v3055, 0.0
    %v3068 = vsel %vm120, %v3054, 0.0
    %v3069 = vsel %vm121, %v3061, 0.0
    %s3070 = scalar_lea.vmem %s1, 112
    %v3071 = vld [vmem:[%s3070] sm:$0xff]
    %v3073 = vsel %vm207, %v3071, 0
    %3075 = vmatpush.msra.mxu0 0.0
    %3076 = vmatpush.msra.mxu0 0.0
    %3077 = vmatpush.msra.mxu0 0.0
    %3078 = vmatpush.msra.mxu0 0.0
    %3079 = vmatpush.msra.mxu0 0.0
    %3080 = vmatpush.msra.mxu0 0.0
    %3081 = vmatpush.msra.mxu0 0.0
    %3082 = vmatpush.msra.mxu0 0.0
    %3083 = vmatpush.msra.mxu0 0.0
    %3084 = vmatpush.msra.mxu0 0.0
    %3085 = vmatpush.msra.mxu0 0.0
    %3086 = vmatpush.msra.mxu0 0.0
    %3087 = vmatpush.msra.mxu0 0.0
    %3088 = vmatpush.msra.mxu0 0.0
    %3089 = vmatpush.msra.mxu0 0.0
    %3090 = vmatpush.msra.mxu0 %v3062
    %3091 = vmatmul.f32.gmra.mxu0 %v3073
    %v3092 = vpop.f32.mrf.mxu0
    %v3093 = vadd.f32 0.0, %v3092
    %3094 = vdwg.mxu0
    %3095 = vmatpush.msra.mxu0 0.0
    %3096 = vmatpush.msra.mxu0 0.0
    %3097 = vmatpush.msra.mxu0 0.0
    %3098 = vmatpush.msra.mxu0 0.0
    %3099 = vmatpush.msra.mxu0 0.0
    %3100 = vmatpush.msra.mxu0 0.0
    %3101 = vmatpush.msra.mxu0 0.0
    %3102 = vmatpush.msra.mxu0 0.0
    %3103 = vmatpush.msra.mxu0 0.0
    %3104 = vmatpush.msra.mxu0 0.0
    %3105 = vmatpush.msra.mxu0 0.0
    %3106 = vmatpush.msra.mxu0 0.0
    %3107 = vmatpush.msra.mxu0 0.0
    %3108 = vmatpush.msra.mxu0 0.0
    %3109 = vmatpush.msra.mxu0 0.0
    %3110 = vmatpush.msra.mxu0 %v3063
    %3111 = vmatmul.f32.gmra.mxu0 %v3073
    %v3112 = vpop.f32.mrf.mxu0
    %v3113 = vadd.f32 0.0, %v3112
    %3114 = vdwg.mxu0
    %3115 = vmatpush.msra.mxu0 0.0
    %3116 = vmatpush.msra.mxu0 0.0
    %3117 = vmatpush.msra.mxu0 0.0
    %3118 = vmatpush.msra.mxu0 0.0
    %3119 = vmatpush.msra.mxu0 0.0
    %3120 = vmatpush.msra.mxu0 0.0
    %3121 = vmatpush.msra.mxu0 0.0
    %3122 = vmatpush.msra.mxu0 0.0
    %3123 = vmatpush.msra.mxu0 0.0
    %3124 = vmatpush.msra.mxu0 0.0
    %3125 = vmatpush.msra.mxu0 0.0
    %3126 = vmatpush.msra.mxu0 0.0
    %3127 = vmatpush.msra.mxu0 0.0
    %3128 = vmatpush.msra.mxu0 0.0
    %3129 = vmatpush.msra.mxu0 0.0
    %3130 = vmatpush.msra.mxu0 %v3064
    %3131 = vmatmul.f32.gmra.mxu0 %v3073
    %v3132 = vpop.f32.mrf.mxu0
    %v3133 = vadd.f32 0.0, %v3132
    %3134 = vdwg.mxu0
    %3135 = vmatpush.msra.mxu0 0.0
    %3136 = vmatpush.msra.mxu0 0.0
    %3137 = vmatpush.msra.mxu0 0.0
    %3138 = vmatpush.msra.mxu0 0.0
    %3139 = vmatpush.msra.mxu0 0.0
    %3140 = vmatpush.msra.mxu0 0.0
    %3141 = vmatpush.msra.mxu0 0.0
    %3142 = vmatpush.msra.mxu0 0.0
    %3143 = vmatpush.msra.mxu0 0.0
    %3144 = vmatpush.msra.mxu0 0.0
    %3145 = vmatpush.msra.mxu0 0.0
    %3146 = vmatpush.msra.mxu0 0.0
    %3147 = vmatpush.msra.mxu0 0.0
    %3148 = vmatpush.msra.mxu0 0.0
    %3149 = vmatpush.msra.mxu0 0.0
    %3150 = vmatpush.msra.mxu0 %v3065
    %3151 = vmatmul.f32.gmra.mxu0 %v3073
    %v3152 = vpop.f32.mrf.mxu0
    %v3153 = vadd.f32 0.0, %v3152
    %3154 = vdwg.mxu0
    %3155 = vmatpush.msra.mxu0 0.0
    %3156 = vmatpush.msra.mxu0 0.0
    %3157 = vmatpush.msra.mxu0 0.0
    %3158 = vmatpush.msra.mxu0 0.0
    %3159 = vmatpush.msra.mxu0 0.0
    %3160 = vmatpush.msra.mxu0 0.0
    %3161 = vmatpush.msra.mxu0 0.0
    %3162 = vmatpush.msra.mxu0 0.0
    %3163 = vmatpush.msra.mxu0 0.0
    %3164 = vmatpush.msra.mxu0 0.0
    %3165 = vmatpush.msra.mxu0 0.0
    %3166 = vmatpush.msra.mxu0 0.0
    %3167 = vmatpush.msra.mxu0 0.0
    %3168 = vmatpush.msra.mxu0 0.0
    %3169 = vmatpush.msra.mxu0 0.0
    %3170 = vmatpush.msra.mxu0 %v3066
    %3171 = vmatmul.f32.gmra.mxu0 %v3073
    %v3172 = vpop.f32.mrf.mxu0
    %v3173 = vadd.f32 0.0, %v3172
    %3174 = vdwg.mxu0
    %3175 = vmatpush.msra.mxu0 0.0
    %3176 = vmatpush.msra.mxu0 0.0
    %3177 = vmatpush.msra.mxu0 0.0
    %3178 = vmatpush.msra.mxu0 0.0
    %3179 = vmatpush.msra.mxu0 0.0
    %3180 = vmatpush.msra.mxu0 0.0
    %3181 = vmatpush.msra.mxu0 0.0
    %3182 = vmatpush.msra.mxu0 0.0
    %3183 = vmatpush.msra.mxu0 0.0
    %3184 = vmatpush.msra.mxu0 0.0
    %3185 = vmatpush.msra.mxu0 0.0
    %3186 = vmatpush.msra.mxu0 0.0
    %3187 = vmatpush.msra.mxu0 0.0
    %3188 = vmatpush.msra.mxu0 0.0
    %3189 = vmatpush.msra.mxu0 0.0
    %3190 = vmatpush.msra.mxu0 %v3067
    %3191 = vmatmul.f32.gmra.mxu0 %v3073
    %v3192 = vpop.f32.mrf.mxu0
    %v3193 = vadd.f32 0.0, %v3192
    %3194 = vdwg.mxu0
    %3195 = vmatpush.msra.mxu0 0.0
    %3196 = vmatpush.msra.mxu0 0.0
    %3197 = vmatpush.msra.mxu0 0.0
    %3198 = vmatpush.msra.mxu0 0.0
    %3199 = vmatpush.msra.mxu0 0.0
    %3200 = vmatpush.msra.mxu0 0.0
    %3201 = vmatpush.msra.mxu0 0.0
    %3202 = vmatpush.msra.mxu0 0.0
    %3203 = vmatpush.msra.mxu0 0.0
    %3204 = vmatpush.msra.mxu0 0.0
    %3205 = vmatpush.msra.mxu0 0.0
    %3206 = vmatpush.msra.mxu0 0.0
    %3207 = vmatpush.msra.mxu0 0.0
    %3208 = vmatpush.msra.mxu0 0.0
    %3209 = vmatpush.msra.mxu0 0.0
    %3210 = vmatpush.msra.mxu0 %v3068
    %3211 = vmatmul.f32.gmra.mxu0 %v3073
    %v3212 = vpop.f32.mrf.mxu0
    %v3213 = vadd.f32 0.0, %v3212
    %3214 = vdwg.mxu0
    %3215 = vmatpush.msra.mxu0 0.0
    %3216 = vmatpush.msra.mxu0 0.0
    %3217 = vmatpush.msra.mxu0 0.0
    %3218 = vmatpush.msra.mxu0 0.0
    %3219 = vmatpush.msra.mxu0 0.0
    %3220 = vmatpush.msra.mxu0 0.0
    %3221 = vmatpush.msra.mxu0 0.0
    %3222 = vmatpush.msra.mxu0 0.0
    %3223 = vmatpush.msra.mxu0 0.0
    %3224 = vmatpush.msra.mxu0 0.0
    %3225 = vmatpush.msra.mxu0 0.0
    %3226 = vmatpush.msra.mxu0 0.0
    %3227 = vmatpush.msra.mxu0 0.0
    %3228 = vmatpush.msra.mxu0 0.0
    %3229 = vmatpush.msra.mxu0 0.0
    %3230 = vmatpush.msra.mxu0 %v3069
    %3231 = vmatmul.f32.gmra.mxu0 %v3073
    %v3232 = vpop.f32.mrf.mxu0
    %v3233 = vadd.f32 0.0, %v3232
    %3234 = vdwg.mxu0
    %v3235 = vadd.f32 %v3029, %v3093
    %v3236 = vadd.f32 %v3030, %v3113
    %v3237 = vadd.f32 %v3031, %v3133
    %v3238 = vadd.f32 %v3032, %v3153
    %v3239 = vadd.f32 %v3033, %v3173
    %v3240 = vadd.f32 %v3034, %v3193
    %v3241 = vadd.f32 %v3035, %v3213
    %v3242 = vadd.f32 %v3036, %v3233
    %3243 = vrot.lane.b32.xlu0 %v66, 121
    %v3244 = vpop.permute.xlu0 %3243
    %3245 = vrot.lane.b32.xlu0 %v67, 121
    %v3246 = vpop.permute.xlu0 %3245
    %3247 = vrot.lane.b32.xlu0 %v68, 121
    %v3248 = vpop.permute.xlu0 %3247
    %3249 = vrot.lane.b32.xlu0 %v69, 121
    %v3250 = vpop.permute.xlu0 %3249
    %3251 = vrot.lane.b32.xlu0 %v70, 121
    %v3252 = vpop.permute.xlu0 %3251
    %3253 = vrot.lane.b32.xlu0 %v71, 121
    %v3254 = vpop.permute.xlu0 %3253
    %3255 = vrot.lane.b32.xlu0 %v72, 121
    %v3256 = vpop.permute.xlu0 %3255
    %3257 = vrot.lane.b32.xlu0 %v73, 121
    %v3258 = vpop.permute.xlu0 %3257
    %vm3259 = vcmp.lt.s32.totalorder %v26, 121
    %v3260 = vsel %vm3259, %v3256, %v3258
    %v3261 = vsel %vm3259, %v3254, %v3256
    %v3262 = vsel %vm3259, %v3252, %v3254
    %v3263 = vsel %vm3259, %v3250, %v3252
    %v3264 = vsel %vm3259, %v3248, %v3250
    %v3265 = vsel %vm3259, %v3246, %v3248
    %v3266 = vsel %vm3259, %v3244, %v3246
    %v3267 = vsel %vm3259, %v3258, %v3244
    %vm3268 = vmand %vm98, %vm106
    %vm3269 = vmand %vm99, %vm107
    %vm3270 = vmand %vm100, %vm108
    %vm3271 = vmand %vm101, %vm109
    %vm3272 = vmand %vm102, %vm110
    %vm3273 = vmand %vm103, %vm111
    %vm3274 = vmand %vm104, %vm112
    %vm3275 = vmand %vm105, %vm113
    %v3276 = vsel %vm3268, %v3266, 0.0
    %v3277 = vsel %vm3269, %v3265, 0.0
    %v3278 = vsel %vm3270, %v3264, 0.0
    %v3279 = vsel %vm3271, %v3263, 0.0
    %v3280 = vsel %vm3272, %v3262, 0.0
    %v3281 = vsel %vm3273, %v3261, 0.0
    %v3282 = vsel %vm3274, %v3260, 0.0
    %v3283 = vsel %vm3275, %v3267, 0.0
    %s3284 = scalar_lea.vmem %s1, 120
    %v3285 = vld [vmem:[%s3284] sm:$0xff]
    %v3287 = vsel %vm207, %v3285, 0
    %3289 = vmatpush.msra.mxu0 0.0
    %3290 = vmatpush.msra.mxu0 0.0
    %3291 = vmatpush.msra.mxu0 0.0
    %3292 = vmatpush.msra.mxu0 0.0
    %3293 = vmatpush.msra.mxu0 0.0
    %3294 = vmatpush.msra.mxu0 0.0
    %3295 = vmatpush.msra.mxu0 0.0
    %3296 = vmatpush.msra.mxu0 0.0
    %3297 = vmatpush.msra.mxu0 0.0
    %3298 = vmatpush.msra.mxu0 0.0
    %3299 = vmatpush.msra.mxu0 0.0
    %3300 = vmatpush.msra.mxu0 0.0
    %3301 = vmatpush.msra.mxu0 0.0
    %3302 = vmatpush.msra.mxu0 0.0
    %3303 = vmatpush.msra.mxu0 0.0
    %3304 = vmatpush.msra.mxu0 %v3276
    %3305 = vmatmul.f32.gmra.mxu0 %v3287
    %v3306 = vpop.f32.mrf.mxu0
    %v3307 = vadd.f32 0.0, %v3306
    %3308 = vdwg.mxu0
    %3309 = vmatpush.msra.mxu0 0.0
    %3310 = vmatpush.msra.mxu0 0.0
    %3311 = vmatpush.msra.mxu0 0.0
    %3312 = vmatpush.msra.mxu0 0.0
    %3313 = vmatpush.msra.mxu0 0.0
    %3314 = vmatpush.msra.mxu0 0.0
    %3315 = vmatpush.msra.mxu0 0.0
    %3316 = vmatpush.msra.mxu0 0.0
    %3317 = vmatpush.msra.mxu0 0.0
    %3318 = vmatpush.msra.mxu0 0.0
    %3319 = vmatpush.msra.mxu0 0.0
    %3320 = vmatpush.msra.mxu0 0.0
    %3321 = vmatpush.msra.mxu0 0.0
    %3322 = vmatpush.msra.mxu0 0.0
    %3323 = vmatpush.msra.mxu0 0.0
    %3324 = vmatpush.msra.mxu0 %v3277
    %3325 = vmatmul.f32.gmra.mxu0 %v3287
    %v3326 = vpop.f32.mrf.mxu0
    %v3327 = vadd.f32 0.0, %v3326
    %3328 = vdwg.mxu0
    %3329 = vmatpush.msra.mxu0 0.0
    %3330 = vmatpush.msra.mxu0 0.0
    %3331 = vmatpush.msra.mxu0 0.0
    %3332 = vmatpush.msra.mxu0 0.0
    %3333 = vmatpush.msra.mxu0 0.0
    %3334 = vmatpush.msra.mxu0 0.0
    %3335 = vmatpush.msra.mxu0 0.0
    %3336 = vmatpush.msra.mxu0 0.0
    %3337 = vmatpush.msra.mxu0 0.0
    %3338 = vmatpush.msra.mxu0 0.0
    %3339 = vmatpush.msra.mxu0 0.0
    %3340 = vmatpush.msra.mxu0 0.0
    %3341 = vmatpush.msra.mxu0 0.0
    %3342 = vmatpush.msra.mxu0 0.0
    %3343 = vmatpush.msra.mxu0 0.0
    %3344 = vmatpush.msra.mxu0 %v3278
    %3345 = vmatmul.f32.gmra.mxu0 %v3287
    %v3346 = vpop.f32.mrf.mxu0
    %v3347 = vadd.f32 0.0, %v3346
    %3348 = vdwg.mxu0
    %3349 = vmatpush.msra.mxu0 0.0
    %3350 = vmatpush.msra.mxu0 0.0
    %3351 = vmatpush.msra.mxu0 0.0
    %3352 = vmatpush.msra.mxu0 0.0
    %3353 = vmatpush.msra.mxu0 0.0
    %3354 = vmatpush.msra.mxu0 0.0
    %3355 = vmatpush.msra.mxu0 0.0
    %3356 = vmatpush.msra.mxu0 0.0
    %3357 = vmatpush.msra.mxu0 0.0
    %3358 = vmatpush.msra.mxu0 0.0
    %3359 = vmatpush.msra.mxu0 0.0
    %3360 = vmatpush.msra.mxu0 0.0
    %3361 = vmatpush.msra.mxu0 0.0
    %3362 = vmatpush.msra.mxu0 0.0
    %3363 = vmatpush.msra.mxu0 0.0
    %3364 = vmatpush.msra.mxu0 %v3279
    %3365 = vmatmul.f32.gmra.mxu0 %v3287
    %v3366 = vpop.f32.mrf.mxu0
    %v3367 = vadd.f32 0.0, %v3366
    %3368 = vdwg.mxu0
    %3369 = vmatpush.msra.mxu0 0.0
    %3370 = vmatpush.msra.mxu0 0.0
    %3371 = vmatpush.msra.mxu0 0.0
    %3372 = vmatpush.msra.mxu0 0.0
    %3373 = vmatpush.msra.mxu0 0.0
    %3374 = vmatpush.msra.mxu0 0.0
    %3375 = vmatpush.msra.mxu0 0.0
    %3376 = vmatpush.msra.mxu0 0.0
    %3377 = vmatpush.msra.mxu0 0.0
    %3378 = vmatpush.msra.mxu0 0.0
    %3379 = vmatpush.msra.mxu0 0.0
    %3380 = vmatpush.msra.mxu0 0.0
    %3381 = vmatpush.msra.mxu0 0.0
    %3382 = vmatpush.msra.mxu0 0.0
    %3383 = vmatpush.msra.mxu0 0.0
    %3384 = vmatpush.msra.mxu0 %v3280
    %3385 = vmatmul.f32.gmra.mxu0 %v3287
    %v3386 = vpop.f32.mrf.mxu0
    %v3387 = vadd.f32 0.0, %v3386
    %3388 = vdwg.mxu0
    %3389 = vmatpush.msra.mxu0 0.0
    %3390 = vmatpush.msra.mxu0 0.0
    %3391 = vmatpush.msra.mxu0 0.0
    %3392 = vmatpush.msra.mxu0 0.0
    %3393 = vmatpush.msra.mxu0 0.0
    %3394 = vmatpush.msra.mxu0 0.0
    %3395 = vmatpush.msra.mxu0 0.0
    %3396 = vmatpush.msra.mxu0 0.0
    %3397 = vmatpush.msra.mxu0 0.0
    %3398 = vmatpush.msra.mxu0 0.0
    %3399 = vmatpush.msra.mxu0 0.0
    %3400 = vmatpush.msra.mxu0 0.0
    %3401 = vmatpush.msra.mxu0 0.0
    %3402 = vmatpush.msra.mxu0 0.0
    %3403 = vmatpush.msra.mxu0 0.0
    %3404 = vmatpush.msra.mxu0 %v3281
    %3405 = vmatmul.f32.gmra.mxu0 %v3287
    %v3406 = vpop.f32.mrf.mxu0
    %v3407 = vadd.f32 0.0, %v3406
    %3408 = vdwg.mxu0
    %3409 = vmatpush.msra.mxu0 0.0
    %3410 = vmatpush.msra.mxu0 0.0
    %3411 = vmatpush.msra.mxu0 0.0
    %3412 = vmatpush.msra.mxu0 0.0
    %3413 = vmatpush.msra.mxu0 0.0
    %3414 = vmatpush.msra.mxu0 0.0
    %3415 = vmatpush.msra.mxu0 0.0
    %3416 = vmatpush.msra.mxu0 0.0
    %3417 = vmatpush.msra.mxu0 0.0
    %3418 = vmatpush.msra.mxu0 0.0
    %3419 = vmatpush.msra.mxu0 0.0
    %3420 = vmatpush.msra.mxu0 0.0
    %3421 = vmatpush.msra.mxu0 0.0
    %3422 = vmatpush.msra.mxu0 0.0
    %3423 = vmatpush.msra.mxu0 0.0
    %3424 = vmatpush.msra.mxu0 %v3282
    %3425 = vmatmul.f32.gmra.mxu0 %v3287
    %v3426 = vpop.f32.mrf.mxu0
    %v3427 = vadd.f32 0.0, %v3426
    %3428 = vdwg.mxu0
    %3429 = vmatpush.msra.mxu0 0.0
    %3430 = vmatpush.msra.mxu0 0.0
    %3431 = vmatpush.msra.mxu0 0.0
    %3432 = vmatpush.msra.mxu0 0.0
    %3433 = vmatpush.msra.mxu0 0.0
    %3434 = vmatpush.msra.mxu0 0.0
    %3435 = vmatpush.msra.mxu0 0.0
    %3436 = vmatpush.msra.mxu0 0.0
    %3437 = vmatpush.msra.mxu0 0.0
    %3438 = vmatpush.msra.mxu0 0.0
    %3439 = vmatpush.msra.mxu0 0.0
    %3440 = vmatpush.msra.mxu0 0.0
    %3441 = vmatpush.msra.mxu0 0.0
    %3442 = vmatpush.msra.mxu0 0.0
    %3443 = vmatpush.msra.mxu0 0.0
    %3444 = vmatpush.msra.mxu0 %v3283
    %3445 = vmatmul.f32.gmra.mxu0 %v3287
    %v3446 = vpop.f32.mrf.mxu0
    %v3447 = vadd.f32 0.0, %v3446
    %3448 = vdwg.mxu0
    %v3449 = vadd.f32 %v3235, %v3307
    %v3450 = vadd.f32 %v3236, %v3327
    %v3451 = vadd.f32 %v3237, %v3347
    %v3452 = vadd.f32 %v3238, %v3367
    %v3453 = vadd.f32 %v3239, %v3387
    %v3454 = vadd.f32 %v3240, %v3407
    %v3455 = vadd.f32 %v3241, %v3427
    %v3456 = vadd.f32 %v3242, %v3447
    %3457 = vrot.lane.b32.xlu0 %v66, 120
    %v3458 = vpop.permute.xlu0 %3457
    %3459 = vrot.lane.b32.xlu0 %v67, 120
    %v3460 = vpop.permute.xlu0 %3459
    %3461 = vrot.lane.b32.xlu0 %v68, 120
    %v3462 = vpop.permute.xlu0 %3461
    %3463 = vrot.lane.b32.xlu0 %v69, 120
    %v3464 = vpop.permute.xlu0 %3463
    %3465 = vrot.lane.b32.xlu0 %v70, 120
    %v3466 = vpop.permute.xlu0 %3465
    %3467 = vrot.lane.b32.xlu0 %v71, 120
    %v3468 = vpop.permute.xlu0 %3467
    %3469 = vrot.lane.b32.xlu0 %v72, 120
    %v3470 = vpop.permute.xlu0 %3469
    %3471 = vrot.lane.b32.xlu0 %v73, 120
    %v3472 = vpop.permute.xlu0 %3471
    %vm3473 = vcmp.lt.s32.totalorder %v26, 120
    %v3474 = vsel %vm3473, %v3470, %v3472
    %v3475 = vsel %vm3473, %v3468, %v3470
    %v3476 = vsel %vm3473, %v3466, %v3468
    %v3477 = vsel %vm3473, %v3464, %v3466
    %v3478 = vsel %vm3473, %v3462, %v3464
    %v3479 = vsel %vm3473, %v3460, %v3462
    %v3480 = vsel %vm3473, %v3458, %v3460
    %v3481 = vsel %vm3473, %v3472, %v3458
    %v3482 = vsel %vm98, %v3480, 0.0
    %v3483 = vsel %vm99, %v3479, 0.0
    %v3484 = vsel %vm100, %v3478, 0.0
    %v3485 = vsel %vm101, %v3477, 0.0
    %v3486 = vsel %vm102, %v3476, 0.0
    %v3487 = vsel %vm103, %v3475, 0.0
    %v3488 = vsel %vm104, %v3474, 0.0
    %v3489 = vsel %vm105, %v3481, 0.0
    %s3490 = scalar_lea.vmem %s1, 128
    %v3491 = vld [vmem:[%s3490] sm:$0xff]
    %v3493 = vsel %vm207, %v3491, 0
    %3495 = vmatpush.msra.mxu0 0.0
    %3496 = vmatpush.msra.mxu0 0.0
    %3497 = vmatpush.msra.mxu0 0.0
    %3498 = vmatpush.msra.mxu0 0.0
    %3499 = vmatpush.msra.mxu0 0.0
    %3500 = vmatpush.msra.mxu0 0.0
    %3501 = vmatpush.msra.mxu0 0.0
    %3502 = vmatpush.msra.mxu0 0.0
    %3503 = vmatpush.msra.mxu0 0.0
    %3504 = vmatpush.msra.mxu0 0.0
    %3505 = vmatpush.msra.mxu0 0.0
    %3506 = vmatpush.msra.mxu0 0.0
    %3507 = vmatpush.msra.mxu0 0.0
    %3508 = vmatpush.msra.mxu0 0.0
    %3509 = vmatpush.msra.mxu0 0.0
    %3510 = vmatpush.msra.mxu0 %v3482
    %3511 = vmatmul.f32.gmra.mxu0 %v3493
    %v3512 = vpop.f32.mrf.mxu0
    %v3513 = vadd.f32 0.0, %v3512
    %3514 = vdwg.mxu0
    %3515 = vmatpush.msra.mxu0 0.0
    %3516 = vmatpush.msra.mxu0 0.0
    %3517 = vmatpush.msra.mxu0 0.0
    %3518 = vmatpush.msra.mxu0 0.0
    %3519 = vmatpush.msra.mxu0 0.0
    %3520 = vmatpush.msra.mxu0 0.0
    %3521 = vmatpush.msra.mxu0 0.0
    %3522 = vmatpush.msra.mxu0 0.0
    %3523 = vmatpush.msra.mxu0 0.0
    %3524 = vmatpush.msra.mxu0 0.0
    %3525 = vmatpush.msra.mxu0 0.0
    %3526 = vmatpush.msra.mxu0 0.0
    %3527 = vmatpush.msra.mxu0 0.0
    %3528 = vmatpush.msra.mxu0 0.0
    %3529 = vmatpush.msra.mxu0 0.0
    %3530 = vmatpush.msra.mxu0 %v3483
    %3531 = vmatmul.f32.gmra.mxu0 %v3493
    %v3532 = vpop.f32.mrf.mxu0
    %v3533 = vadd.f32 0.0, %v3532
    %3534 = vdwg.mxu0
    %3535 = vmatpush.msra.mxu0 0.0
    %3536 = vmatpush.msra.mxu0 0.0
    %3537 = vmatpush.msra.mxu0 0.0
    %3538 = vmatpush.msra.mxu0 0.0
    %3539 = vmatpush.msra.mxu0 0.0
    %3540 = vmatpush.msra.mxu0 0.0
    %3541 = vmatpush.msra.mxu0 0.0
    %3542 = vmatpush.msra.mxu0 0.0
    %3543 = vmatpush.msra.mxu0 0.0
    %3544 = vmatpush.msra.mxu0 0.0
    %3545 = vmatpush.msra.mxu0 0.0
    %3546 = vmatpush.msra.mxu0 0.0
    %3547 = vmatpush.msra.mxu0 0.0
    %3548 = vmatpush.msra.mxu0 0.0
    %3549 = vmatpush.msra.mxu0 0.0
    %3550 = vmatpush.msra.mxu0 %v3484
    %3551 = vmatmul.f32.gmra.mxu0 %v3493
    %v3552 = vpop.f32.mrf.mxu0
    %v3553 = vadd.f32 0.0, %v3552
    %3554 = vdwg.mxu0
    %3555 = vmatpush.msra.mxu0 0.0
    %3556 = vmatpush.msra.mxu0 0.0
    %3557 = vmatpush.msra.mxu0 0.0
    %3558 = vmatpush.msra.mxu0 0.0
    %3559 = vmatpush.msra.mxu0 0.0
    %3560 = vmatpush.msra.mxu0 0.0
    %3561 = vmatpush.msra.mxu0 0.0
    %3562 = vmatpush.msra.mxu0 0.0
    %3563 = vmatpush.msra.mxu0 0.0
    %3564 = vmatpush.msra.mxu0 0.0
    %3565 = vmatpush.msra.mxu0 0.0
    %3566 = vmatpush.msra.mxu0 0.0
    %3567 = vmatpush.msra.mxu0 0.0
    %3568 = vmatpush.msra.mxu0 0.0
    %3569 = vmatpush.msra.mxu0 0.0
    %3570 = vmatpush.msra.mxu0 %v3485
    %3571 = vmatmul.f32.gmra.mxu0 %v3493
    %v3572 = vpop.f32.mrf.mxu0
    %v3573 = vadd.f32 0.0, %v3572
    %3574 = vdwg.mxu0
    %3575 = vmatpush.msra.mxu0 0.0
    %3576 = vmatpush.msra.mxu0 0.0
    %3577 = vmatpush.msra.mxu0 0.0
    %3578 = vmatpush.msra.mxu0 0.0
    %3579 = vmatpush.msra.mxu0 0.0
    %3580 = vmatpush.msra.mxu0 0.0
    %3581 = vmatpush.msra.mxu0 0.0
    %3582 = vmatpush.msra.mxu0 0.0
    %3583 = vmatpush.msra.mxu0 0.0
    %3584 = vmatpush.msra.mxu0 0.0
    %3585 = vmatpush.msra.mxu0 0.0
    %3586 = vmatpush.msra.mxu0 0.0
    %3587 = vmatpush.msra.mxu0 0.0
    %3588 = vmatpush.msra.mxu0 0.0
    %3589 = vmatpush.msra.mxu0 0.0
    %3590 = vmatpush.msra.mxu0 %v3486
    %3591 = vmatmul.f32.gmra.mxu0 %v3493
    %v3592 = vpop.f32.mrf.mxu0
    %v3593 = vadd.f32 0.0, %v3592
    %3594 = vdwg.mxu0
    %3595 = vmatpush.msra.mxu0 0.0
    %3596 = vmatpush.msra.mxu0 0.0
    %3597 = vmatpush.msra.mxu0 0.0
    %3598 = vmatpush.msra.mxu0 0.0
    %3599 = vmatpush.msra.mxu0 0.0
    %3600 = vmatpush.msra.mxu0 0.0
    %3601 = vmatpush.msra.mxu0 0.0
    %3602 = vmatpush.msra.mxu0 0.0
    %3603 = vmatpush.msra.mxu0 0.0
    %3604 = vmatpush.msra.mxu0 0.0
    %3605 = vmatpush.msra.mxu0 0.0
    %3606 = vmatpush.msra.mxu0 0.0
    %3607 = vmatpush.msra.mxu0 0.0
    %3608 = vmatpush.msra.mxu0 0.0
    %3609 = vmatpush.msra.mxu0 0.0
    %3610 = vmatpush.msra.mxu0 %v3487
    %3611 = vmatmul.f32.gmra.mxu0 %v3493
    %v3612 = vpop.f32.mrf.mxu0
    %v3613 = vadd.f32 0.0, %v3612
    %3614 = vdwg.mxu0
    %3615 = vmatpush.msra.mxu0 0.0
    %3616 = vmatpush.msra.mxu0 0.0
    %3617 = vmatpush.msra.mxu0 0.0
    %3618 = vmatpush.msra.mxu0 0.0
    %3619 = vmatpush.msra.mxu0 0.0
    %3620 = vmatpush.msra.mxu0 0.0
    %3621 = vmatpush.msra.mxu0 0.0
    %3622 = vmatpush.msra.mxu0 0.0
    %3623 = vmatpush.msra.mxu0 0.0
    %3624 = vmatpush.msra.mxu0 0.0
    %3625 = vmatpush.msra.mxu0 0.0
    %3626 = vmatpush.msra.mxu0 0.0
    %3627 = vmatpush.msra.mxu0 0.0
    %3628 = vmatpush.msra.mxu0 0.0
    %3629 = vmatpush.msra.mxu0 0.0
    %3630 = vmatpush.msra.mxu0 %v3488
    %3631 = vmatmul.f32.gmra.mxu0 %v3493
    %v3632 = vpop.f32.mrf.mxu0
    %v3633 = vadd.f32 0.0, %v3632
    %3634 = vdwg.mxu0
    %3635 = vmatpush.msra.mxu0 0.0
    %3636 = vmatpush.msra.mxu0 0.0
    %3637 = vmatpush.msra.mxu0 0.0
    %3638 = vmatpush.msra.mxu0 0.0
    %3639 = vmatpush.msra.mxu0 0.0
    %3640 = vmatpush.msra.mxu0 0.0
    %3641 = vmatpush.msra.mxu0 0.0
    %3642 = vmatpush.msra.mxu0 0.0
    %3643 = vmatpush.msra.mxu0 0.0
    %3644 = vmatpush.msra.mxu0 0.0
    %3645 = vmatpush.msra.mxu0 0.0
    %3646 = vmatpush.msra.mxu0 0.0
    %3647 = vmatpush.msra.mxu0 0.0
    %3648 = vmatpush.msra.mxu0 0.0
    %3649 = vmatpush.msra.mxu0 0.0
    %3650 = vmatpush.msra.mxu0 %v3489
    %3651 = vmatmul.f32.gmra.mxu0 %v3493
    %v3652 = vpop.f32.mrf.mxu0
    %v3653 = vadd.f32 0.0, %v3652
    %3654 = vdwg.mxu0
    %v3655 = vadd.f32 %v3449, %v3513
    %v3656 = vadd.f32 %v3450, %v3533
    %v3657 = vadd.f32 %v3451, %v3553
    %v3658 = vadd.f32 %v3452, %v3573
    %v3659 = vadd.f32 %v3453, %v3593
    %v3660 = vadd.f32 %v3454, %v3613
    %v3661 = vadd.f32 %v3455, %v3633
    %v3662 = vadd.f32 %v3456, %v3653
    %3663 = vrot.lane.b32.xlu0 %v66, 119
    %v3664 = vpop.permute.xlu0 %3663
    %3665 = vrot.lane.b32.xlu0 %v67, 119
    %v3666 = vpop.permute.xlu0 %3665
    %3667 = vrot.lane.b32.xlu0 %v68, 119
    %v3668 = vpop.permute.xlu0 %3667
    %3669 = vrot.lane.b32.xlu0 %v69, 119
    %v3670 = vpop.permute.xlu0 %3669
    %3671 = vrot.lane.b32.xlu0 %v70, 119
    %v3672 = vpop.permute.xlu0 %3671
    %3673 = vrot.lane.b32.xlu0 %v71, 119
    %v3674 = vpop.permute.xlu0 %3673
    %3675 = vrot.lane.b32.xlu0 %v72, 119
    %v3676 = vpop.permute.xlu0 %3675
    %3677 = vrot.lane.b32.xlu0 %v73, 119
    %v3678 = vpop.permute.xlu0 %3677
    %vm3679 = vcmp.lt.s32.totalorder %v26, 119
    %v3680 = vsel %vm3679, %v3676, %v3678
    %v3681 = vsel %vm3679, %v3674, %v3676
    %v3682 = vsel %vm3679, %v3672, %v3674
    %v3683 = vsel %vm3679, %v3670, %v3672
    %v3684 = vsel %vm3679, %v3668, %v3670
    %v3685 = vsel %vm3679, %v3666, %v3668
    %v3686 = vsel %vm3679, %v3664, %v3666
    %v3687 = vsel %vm3679, %v3678, %v3664
    %vm3688 = vmand %vm98, %vm114
    %vm3689 = vmand %vm99, %vm115
    %vm3690 = vmand %vm100, %vm116
    %vm3691 = vmand %vm101, %vm117
    %vm3692 = vmand %vm102, %vm118
    %vm3693 = vmand %vm103, %vm119
    %vm3694 = vmand %vm104, %vm120
    %vm3695 = vmand %vm105, %vm121
    %v3696 = vsel %vm3688, %v3686, 0.0
    %v3697 = vsel %vm3689, %v3685, 0.0
    %v3698 = vsel %vm3690, %v3684, 0.0
    %v3699 = vsel %vm3691, %v3683, 0.0
    %v3700 = vsel %vm3692, %v3682, 0.0
    %v3701 = vsel %vm3693, %v3681, 0.0
    %v3702 = vsel %vm3694, %v3680, 0.0
    %v3703 = vsel %vm3695, %v3687, 0.0
    %s3704 = scalar_lea.vmem %s1, 136
    %v3705 = vld [vmem:[%s3704] sm:$0xff]
    %v3707 = vsel %vm207, %v3705, 0
    %3709 = vmatpush.msra.mxu0 0.0
    %3710 = vmatpush.msra.mxu0 0.0
    %3711 = vmatpush.msra.mxu0 0.0
    %3712 = vmatpush.msra.mxu0 0.0
    %3713 = vmatpush.msra.mxu0 0.0
    %3714 = vmatpush.msra.mxu0 0.0
    %3715 = vmatpush.msra.mxu0 0.0
    %3716 = vmatpush.msra.mxu0 0.0
    %3717 = vmatpush.msra.mxu0 0.0
    %3718 = vmatpush.msra.mxu0 0.0
    %3719 = vmatpush.msra.mxu0 0.0
    %3720 = vmatpush.msra.mxu0 0.0
    %3721 = vmatpush.msra.mxu0 0.0
    %3722 = vmatpush.msra.mxu0 0.0
    %3723 = vmatpush.msra.mxu0 0.0
    %3724 = vmatpush.msra.mxu0 %v3696
    %3725 = vmatmul.f32.gmra.mxu0 %v3707
    %v3726 = vpop.f32.mrf.mxu0
    %v3727 = vadd.f32 0.0, %v3726
    %3728 = vdwg.mxu0
    %3729 = vmatpush.msra.mxu0 0.0
    %3730 = vmatpush.msra.mxu0 0.0
    %3731 = vmatpush.msra.mxu0 0.0
    %3732 = vmatpush.msra.mxu0 0.0
    %3733 = vmatpush.msra.mxu0 0.0
    %3734 = vmatpush.msra.mxu0 0.0
    %3735 = vmatpush.msra.mxu0 0.0
    %3736 = vmatpush.msra.mxu0 0.0
    %3737 = vmatpush.msra.mxu0 0.0
    %3738 = vmatpush.msra.mxu0 0.0
    %3739 = vmatpush.msra.mxu0 0.0
    %3740 = vmatpush.msra.mxu0 0.0
    %3741 = vmatpush.msra.mxu0 0.0
    %3742 = vmatpush.msra.mxu0 0.0
    %3743 = vmatpush.msra.mxu0 0.0
    %3744 = vmatpush.msra.mxu0 %v3697
    %3745 = vmatmul.f32.gmra.mxu0 %v3707
    %v3746 = vpop.f32.mrf.mxu0
    %v3747 = vadd.f32 0.0, %v3746
    %3748 = vdwg.mxu0
    %3749 = vmatpush.msra.mxu0 0.0
    %3750 = vmatpush.msra.mxu0 0.0
    %3751 = vmatpush.msra.mxu0 0.0
    %3752 = vmatpush.msra.mxu0 0.0
    %3753 = vmatpush.msra.mxu0 0.0
    %3754 = vmatpush.msra.mxu0 0.0
    %3755 = vmatpush.msra.mxu0 0.0
    %3756 = vmatpush.msra.mxu0 0.0
    %3757 = vmatpush.msra.mxu0 0.0
    %3758 = vmatpush.msra.mxu0 0.0
    %3759 = vmatpush.msra.mxu0 0.0
    %3760 = vmatpush.msra.mxu0 0.0
    %3761 = vmatpush.msra.mxu0 0.0
    %3762 = vmatpush.msra.mxu0 0.0
    %3763 = vmatpush.msra.mxu0 0.0
    %3764 = vmatpush.msra.mxu0 %v3698
    %3765 = vmatmul.f32.gmra.mxu0 %v3707
    %v3766 = vpop.f32.mrf.mxu0
    %v3767 = vadd.f32 0.0, %v3766
    %3768 = vdwg.mxu0
    %3769 = vmatpush.msra.mxu0 0.0
    %3770 = vmatpush.msra.mxu0 0.0
    %3771 = vmatpush.msra.mxu0 0.0
    %3772 = vmatpush.msra.mxu0 0.0
    %3773 = vmatpush.msra.mxu0 0.0
    %3774 = vmatpush.msra.mxu0 0.0
    %3775 = vmatpush.msra.mxu0 0.0
    %3776 = vmatpush.msra.mxu0 0.0
    %3777 = vmatpush.msra.mxu0 0.0
    %3778 = vmatpush.msra.mxu0 0.0
    %3779 = vmatpush.msra.mxu0 0.0
    %3780 = vmatpush.msra.mxu0 0.0
    %3781 = vmatpush.msra.mxu0 0.0
    %3782 = vmatpush.msra.mxu0 0.0
    %3783 = vmatpush.msra.mxu0 0.0
    %3784 = vmatpush.msra.mxu0 %v3699
    %3785 = vmatmul.f32.gmra.mxu0 %v3707
    %v3786 = vpop.f32.mrf.mxu0
    %v3787 = vadd.f32 0.0, %v3786
    %3788 = vdwg.mxu0
    %3789 = vmatpush.msra.mxu0 0.0
    %3790 = vmatpush.msra.mxu0 0.0
    %3791 = vmatpush.msra.mxu0 0.0
    %3792 = vmatpush.msra.mxu0 0.0
    %3793 = vmatpush.msra.mxu0 0.0
    %3794 = vmatpush.msra.mxu0 0.0
    %3795 = vmatpush.msra.mxu0 0.0
    %3796 = vmatpush.msra.mxu0 0.0
    %3797 = vmatpush.msra.mxu0 0.0
    %3798 = vmatpush.msra.mxu0 0.0
    %3799 = vmatpush.msra.mxu0 0.0
    %3800 = vmatpush.msra.mxu0 0.0
    %3801 = vmatpush.msra.mxu0 0.0
    %3802 = vmatpush.msra.mxu0 0.0
    %3803 = vmatpush.msra.mxu0 0.0
    %3804 = vmatpush.msra.mxu0 %v3700
    %3805 = vmatmul.f32.gmra.mxu0 %v3707
    %v3806 = vpop.f32.mrf.mxu0
    %v3807 = vadd.f32 0.0, %v3806
    %3808 = vdwg.mxu0
    %3809 = vmatpush.msra.mxu0 0.0
    %3810 = vmatpush.msra.mxu0 0.0
    %3811 = vmatpush.msra.mxu0 0.0
    %3812 = vmatpush.msra.mxu0 0.0
    %3813 = vmatpush.msra.mxu0 0.0
    %3814 = vmatpush.msra.mxu0 0.0
    %3815 = vmatpush.msra.mxu0 0.0
    %3816 = vmatpush.msra.mxu0 0.0
    %3817 = vmatpush.msra.mxu0 0.0
    %3818 = vmatpush.msra.mxu0 0.0
    %3819 = vmatpush.msra.mxu0 0.0
    %3820 = vmatpush.msra.mxu0 0.0
    %3821 = vmatpush.msra.mxu0 0.0
    %3822 = vmatpush.msra.mxu0 0.0
    %3823 = vmatpush.msra.mxu0 0.0
    %3824 = vmatpush.msra.mxu0 %v3701
    %3825 = vmatmul.f32.gmra.mxu0 %v3707
    %v3826 = vpop.f32.mrf.mxu0
    %v3827 = vadd.f32 0.0, %v3826
    %3828 = vdwg.mxu0
    %3829 = vmatpush.msra.mxu0 0.0
    %3830 = vmatpush.msra.mxu0 0.0
    %3831 = vmatpush.msra.mxu0 0.0
    %3832 = vmatpush.msra.mxu0 0.0
    %3833 = vmatpush.msra.mxu0 0.0
    %3834 = vmatpush.msra.mxu0 0.0
    %3835 = vmatpush.msra.mxu0 0.0
    %3836 = vmatpush.msra.mxu0 0.0
    %3837 = vmatpush.msra.mxu0 0.0
    %3838 = vmatpush.msra.mxu0 0.0
    %3839 = vmatpush.msra.mxu0 0.0
    %3840 = vmatpush.msra.mxu0 0.0
    %3841 = vmatpush.msra.mxu0 0.0
    %3842 = vmatpush.msra.mxu0 0.0
    %3843 = vmatpush.msra.mxu0 0.0
    %3844 = vmatpush.msra.mxu0 %v3702
    %3845 = vmatmul.f32.gmra.mxu0 %v3707
    %v3846 = vpop.f32.mrf.mxu0
    %v3847 = vadd.f32 0.0, %v3846
    %3848 = vdwg.mxu0
    %3849 = vmatpush.msra.mxu0 0.0
    %3850 = vmatpush.msra.mxu0 0.0
    %3851 = vmatpush.msra.mxu0 0.0
    %3852 = vmatpush.msra.mxu0 0.0
    %3853 = vmatpush.msra.mxu0 0.0
    %3854 = vmatpush.msra.mxu0 0.0
    %3855 = vmatpush.msra.mxu0 0.0
    %3856 = vmatpush.msra.mxu0 0.0
    %3857 = vmatpush.msra.mxu0 0.0
    %3858 = vmatpush.msra.mxu0 0.0
    %3859 = vmatpush.msra.mxu0 0.0
    %3860 = vmatpush.msra.mxu0 0.0
    %3861 = vmatpush.msra.mxu0 0.0
    %3862 = vmatpush.msra.mxu0 0.0
    %3863 = vmatpush.msra.mxu0 0.0
    %3864 = vmatpush.msra.mxu0 %v3703
    %3865 = vmatmul.f32.gmra.mxu0 %v3707
    %v3866 = vpop.f32.mrf.mxu0
    %v3867 = vadd.f32 0.0, %v3866
    %3868 = vdwg.mxu0
    %v3869 = vadd.f32 %v3655, %v3727
    %v3870 = vadd.f32 %v3656, %v3747
    %v3871 = vadd.f32 %v3657, %v3767
    %v3872 = vadd.f32 %v3658, %v3787
    %v3873 = vadd.f32 %v3659, %v3807
    %v3874 = vadd.f32 %v3660, %v3827
    %v3875 = vadd.f32 %v3661, %v3847
    %v3876 = vadd.f32 %v3662, %v3867
    %vm3877 = vmand %vm82, %vm90
    %vm3878 = vmand %vm83, %vm91
    %vm3879 = vmand %vm84, %vm92
    %vm3880 = vmand %vm85, %vm93
    %vm3881 = vmand %vm86, %vm94
    %vm3882 = vmand %vm87, %vm95
    %vm3883 = vmand %vm88, %vm96
    %vm3884 = vmand %vm89, %vm97
    %vm3885 = vmand %vm3877, %vm106
    %vm3886 = vmand %vm3878, %vm107
    %vm3887 = vmand %vm3879, %vm108
    %vm3888 = vmand %vm3880, %vm109
    %vm3889 = vmand %vm3881, %vm110
    %vm3890 = vmand %vm3882, %vm111
    %vm3891 = vmand %vm3883, %vm112
    %vm3892 = vmand %vm3884, %vm113
    %v3893 = vsel %vm3885, %v153, 0.0
    %v3894 = vsel %vm3886, %v152, 0.0
    %v3895 = vsel %vm3887, %v151, 0.0
    %v3896 = vsel %vm3888, %v150, 0.0
    %v3897 = vsel %vm3889, %v149, 0.0
    %v3898 = vsel %vm3890, %v148, 0.0
    %v3899 = vsel %vm3891, %v147, 0.0
    %v3900 = vsel %vm3892, %v154, 0.0
    %s3901 = scalar_lea.vmem %s1, 144
    %v3902 = vld [vmem:[%s3901] sm:$0xff]
    %v3904 = vsel %vm207, %v3902, 0
    %3906 = vmatpush.msra.mxu0 0.0
    %3907 = vmatpush.msra.mxu0 0.0
    %3908 = vmatpush.msra.mxu0 0.0
    %3909 = vmatpush.msra.mxu0 0.0
    %3910 = vmatpush.msra.mxu0 0.0
    %3911 = vmatpush.msra.mxu0 0.0
    %3912 = vmatpush.msra.mxu0 0.0
    %3913 = vmatpush.msra.mxu0 0.0
    %3914 = vmatpush.msra.mxu0 0.0
    %3915 = vmatpush.msra.mxu0 0.0
    %3916 = vmatpush.msra.mxu0 0.0
    %3917 = vmatpush.msra.mxu0 0.0
    %3918 = vmatpush.msra.mxu0 0.0
    %3919 = vmatpush.msra.mxu0 0.0
    %3920 = vmatpush.msra.mxu0 0.0
    %3921 = vmatpush.msra.mxu0 %v3893
    %3922 = vmatmul.f32.gmra.mxu0 %v3904
    %v3923 = vpop.f32.mrf.mxu0
    %v3924 = vadd.f32 0.0, %v3923
    %3925 = vdwg.mxu0
    %3926 = vmatpush.msra.mxu0 0.0
    %3927 = vmatpush.msra.mxu0 0.0
    %3928 = vmatpush.msra.mxu0 0.0
    %3929 = vmatpush.msra.mxu0 0.0
    %3930 = vmatpush.msra.mxu0 0.0
    %3931 = vmatpush.msra.mxu0 0.0
    %3932 = vmatpush.msra.mxu0 0.0
    %3933 = vmatpush.msra.mxu0 0.0
    %3934 = vmatpush.msra.mxu0 0.0
    %3935 = vmatpush.msra.mxu0 0.0
    %3936 = vmatpush.msra.mxu0 0.0
    %3937 = vmatpush.msra.mxu0 0.0
    %3938 = vmatpush.msra.mxu0 0.0
    %3939 = vmatpush.msra.mxu0 0.0
    %3940 = vmatpush.msra.mxu0 0.0
    %3941 = vmatpush.msra.mxu0 %v3894
    %3942 = vmatmul.f32.gmra.mxu0 %v3904
    %v3943 = vpop.f32.mrf.mxu0
    %v3944 = vadd.f32 0.0, %v3943
    %3945 = vdwg.mxu0
    %3946 = vmatpush.msra.mxu0 0.0
    %3947 = vmatpush.msra.mxu0 0.0
    %3948 = vmatpush.msra.mxu0 0.0
    %3949 = vmatpush.msra.mxu0 0.0
    %3950 = vmatpush.msra.mxu0 0.0
    %3951 = vmatpush.msra.mxu0 0.0
    %3952 = vmatpush.msra.mxu0 0.0
    %3953 = vmatpush.msra.mxu0 0.0
    %3954 = vmatpush.msra.mxu0 0.0
    %3955 = vmatpush.msra.mxu0 0.0
    %3956 = vmatpush.msra.mxu0 0.0
    %3957 = vmatpush.msra.mxu0 0.0
    %3958 = vmatpush.msra.mxu0 0.0
    %3959 = vmatpush.msra.mxu0 0.0
    %3960 = vmatpush.msra.mxu0 0.0
    %3961 = vmatpush.msra.mxu0 %v3895
    %3962 = vmatmul.f32.gmra.mxu0 %v3904
    %v3963 = vpop.f32.mrf.mxu0
    %v3964 = vadd.f32 0.0, %v3963
    %3965 = vdwg.mxu0
    %3966 = vmatpush.msra.mxu0 0.0
    %3967 = vmatpush.msra.mxu0 0.0
    %3968 = vmatpush.msra.mxu0 0.0
    %3969 = vmatpush.msra.mxu0 0.0
    %3970 = vmatpush.msra.mxu0 0.0
    %3971 = vmatpush.msra.mxu0 0.0
    %3972 = vmatpush.msra.mxu0 0.0
    %3973 = vmatpush.msra.mxu0 0.0
    %3974 = vmatpush.msra.mxu0 0.0
    %3975 = vmatpush.msra.mxu0 0.0
    %3976 = vmatpush.msra.mxu0 0.0
    %3977 = vmatpush.msra.mxu0 0.0
    %3978 = vmatpush.msra.mxu0 0.0
    %3979 = vmatpush.msra.mxu0 0.0
    %3980 = vmatpush.msra.mxu0 0.0
    %3981 = vmatpush.msra.mxu0 %v3896
    %3982 = vmatmul.f32.gmra.mxu0 %v3904
    %v3983 = vpop.f32.mrf.mxu0
    %v3984 = vadd.f32 0.0, %v3983
    %3985 = vdwg.mxu0
    %3986 = vmatpush.msra.mxu0 0.0
    %3987 = vmatpush.msra.mxu0 0.0
    %3988 = vmatpush.msra.mxu0 0.0
    %3989 = vmatpush.msra.mxu0 0.0
    %3990 = vmatpush.msra.mxu0 0.0
    %3991 = vmatpush.msra.mxu0 0.0
    %3992 = vmatpush.msra.mxu0 0.0
    %3993 = vmatpush.msra.mxu0 0.0
    %3994 = vmatpush.msra.mxu0 0.0
    %3995 = vmatpush.msra.mxu0 0.0
    %3996 = vmatpush.msra.mxu0 0.0
    %3997 = vmatpush.msra.mxu0 0.0
    %3998 = vmatpush.msra.mxu0 0.0
    %3999 = vmatpush.msra.mxu0 0.0
    %4000 = vmatpush.msra.mxu0 0.0
    %4001 = vmatpush.msra.mxu0 %v3897
    %4002 = vmatmul.f32.gmra.mxu0 %v3904
    %v4003 = vpop.f32.mrf.mxu0
    %v4004 = vadd.f32 0.0, %v4003
    %4005 = vdwg.mxu0
    %4006 = vmatpush.msra.mxu0 0.0
    %4007 = vmatpush.msra.mxu0 0.0
    %4008 = vmatpush.msra.mxu0 0.0
    %4009 = vmatpush.msra.mxu0 0.0
    %4010 = vmatpush.msra.mxu0 0.0
    %4011 = vmatpush.msra.mxu0 0.0
    %4012 = vmatpush.msra.mxu0 0.0
    %4013 = vmatpush.msra.mxu0 0.0
    %4014 = vmatpush.msra.mxu0 0.0
    %4015 = vmatpush.msra.mxu0 0.0
    %4016 = vmatpush.msra.mxu0 0.0
    %4017 = vmatpush.msra.mxu0 0.0
    %4018 = vmatpush.msra.mxu0 0.0
    %4019 = vmatpush.msra.mxu0 0.0
    %4020 = vmatpush.msra.mxu0 0.0
    %4021 = vmatpush.msra.mxu0 %v3898
    %4022 = vmatmul.f32.gmra.mxu0 %v3904
    %v4023 = vpop.f32.mrf.mxu0
    %v4024 = vadd.f32 0.0, %v4023
    %4025 = vdwg.mxu0
    %4026 = vmatpush.msra.mxu0 0.0
    %4027 = vmatpush.msra.mxu0 0.0
    %4028 = vmatpush.msra.mxu0 0.0
    %4029 = vmatpush.msra.mxu0 0.0
    %4030 = vmatpush.msra.mxu0 0.0
    %4031 = vmatpush.msra.mxu0 0.0
    %4032 = vmatpush.msra.mxu0 0.0
    %4033 = vmatpush.msra.mxu0 0.0
    %4034 = vmatpush.msra.mxu0 0.0
    %4035 = vmatpush.msra.mxu0 0.0
    %4036 = vmatpush.msra.mxu0 0.0
    %4037 = vmatpush.msra.mxu0 0.0
    %4038 = vmatpush.msra.mxu0 0.0
    %4039 = vmatpush.msra.mxu0 0.0
    %4040 = vmatpush.msra.mxu0 0.0
    %4041 = vmatpush.msra.mxu0 %v3899
    %4042 = vmatmul.f32.gmra.mxu0 %v3904
    %v4043 = vpop.f32.mrf.mxu0
    %v4044 = vadd.f32 0.0, %v4043
    %4045 = vdwg.mxu0
    %4046 = vmatpush.msra.mxu0 0.0
    %4047 = vmatpush.msra.mxu0 0.0
    %4048 = vmatpush.msra.mxu0 0.0
    %4049 = vmatpush.msra.mxu0 0.0
    %4050 = vmatpush.msra.mxu0 0.0
    %4051 = vmatpush.msra.mxu0 0.0
    %4052 = vmatpush.msra.mxu0 0.0
    %4053 = vmatpush.msra.mxu0 0.0
    %4054 = vmatpush.msra.mxu0 0.0
    %4055 = vmatpush.msra.mxu0 0.0
    %4056 = vmatpush.msra.mxu0 0.0
    %4057 = vmatpush.msra.mxu0 0.0
    %4058 = vmatpush.msra.mxu0 0.0
    %4059 = vmatpush.msra.mxu0 0.0
    %4060 = vmatpush.msra.mxu0 0.0
    %4061 = vmatpush.msra.mxu0 %v3900
    %4062 = vmatmul.f32.gmra.mxu0 %v3904
    %v4063 = vpop.f32.mrf.mxu0
    %v4064 = vadd.f32 0.0, %v4063
    %4065 = vdwg.mxu0
    %v4066 = vadd.f32 %v3869, %v3924
    %v4067 = vadd.f32 %v3870, %v3944
    %v4068 = vadd.f32 %v3871, %v3964
    %v4069 = vadd.f32 %v3872, %v3984
    %v4070 = vadd.f32 %v3873, %v4004
    %v4071 = vadd.f32 %v3874, %v4024
    %v4072 = vadd.f32 %v3875, %v4044
    %v4073 = vadd.f32 %v3876, %v4064
    %v4074 = vsel %vm3877, %v195, 0.0
    %v4075 = vsel %vm3878, %v194, 0.0
    %v4076 = vsel %vm3879, %v193, 0.0
    %v4077 = vsel %vm3880, %v192, 0.0
    %v4078 = vsel %vm3881, %v191, 0.0
    %v4079 = vsel %vm3882, %v190, 0.0
    %v4080 = vsel %vm3883, %v189, 0.0
    %v4081 = vsel %vm3884, %v196, 0.0
    %s4082 = scalar_lea.vmem %s1, 152
    %v4083 = vld [vmem:[%s4082] sm:$0xff]
    %v4085 = vsel %vm207, %v4083, 0
    %4087 = vmatpush.msra.mxu0 0.0
    %4088 = vmatpush.msra.mxu0 0.0
    %4089 = vmatpush.msra.mxu0 0.0
    %4090 = vmatpush.msra.mxu0 0.0
    %4091 = vmatpush.msra.mxu0 0.0
    %4092 = vmatpush.msra.mxu0 0.0
    %4093 = vmatpush.msra.mxu0 0.0
    %4094 = vmatpush.msra.mxu0 0.0
    %4095 = vmatpush.msra.mxu0 0.0
    %4096 = vmatpush.msra.mxu0 0.0
    %4097 = vmatpush.msra.mxu0 0.0
    %4098 = vmatpush.msra.mxu0 0.0
    %4099 = vmatpush.msra.mxu0 0.0
    %4100 = vmatpush.msra.mxu0 0.0
    %4101 = vmatpush.msra.mxu0 0.0
    %4102 = vmatpush.msra.mxu0 %v4074
    %4103 = vmatmul.f32.gmra.mxu0 %v4085
    %v4104 = vpop.f32.mrf.mxu0
    %v4105 = vadd.f32 0.0, %v4104
    %4106 = vdwg.mxu0
    %4107 = vmatpush.msra.mxu0 0.0
    %4108 = vmatpush.msra.mxu0 0.0
    %4109 = vmatpush.msra.mxu0 0.0
    %4110 = vmatpush.msra.mxu0 0.0
    %4111 = vmatpush.msra.mxu0 0.0
    %4112 = vmatpush.msra.mxu0 0.0
    %4113 = vmatpush.msra.mxu0 0.0
    %4114 = vmatpush.msra.mxu0 0.0
    %4115 = vmatpush.msra.mxu0 0.0
    %4116 = vmatpush.msra.mxu0 0.0
    %4117 = vmatpush.msra.mxu0 0.0
    %4118 = vmatpush.msra.mxu0 0.0
    %4119 = vmatpush.msra.mxu0 0.0
    %4120 = vmatpush.msra.mxu0 0.0
    %4121 = vmatpush.msra.mxu0 0.0
    %4122 = vmatpush.msra.mxu0 %v4075
    %4123 = vmatmul.f32.gmra.mxu0 %v4085
    %v4124 = vpop.f32.mrf.mxu0
    %v4125 = vadd.f32 0.0, %v4124
    %4126 = vdwg.mxu0
    %4127 = vmatpush.msra.mxu0 0.0
    %4128 = vmatpush.msra.mxu0 0.0
    %4129 = vmatpush.msra.mxu0 0.0
    %4130 = vmatpush.msra.mxu0 0.0
    %4131 = vmatpush.msra.mxu0 0.0
    %4132 = vmatpush.msra.mxu0 0.0
    %4133 = vmatpush.msra.mxu0 0.0
    %4134 = vmatpush.msra.mxu0 0.0
    %4135 = vmatpush.msra.mxu0 0.0
    %4136 = vmatpush.msra.mxu0 0.0
    %4137 = vmatpush.msra.mxu0 0.0
    %4138 = vmatpush.msra.mxu0 0.0
    %4139 = vmatpush.msra.mxu0 0.0
    %4140 = vmatpush.msra.mxu0 0.0
    %4141 = vmatpush.msra.mxu0 0.0
    %4142 = vmatpush.msra.mxu0 %v4076
    %4143 = vmatmul.f32.gmra.mxu0 %v4085
    %v4144 = vpop.f32.mrf.mxu0
    %v4145 = vadd.f32 0.0, %v4144
    %4146 = vdwg.mxu0
    %4147 = vmatpush.msra.mxu0 0.0
    %4148 = vmatpush.msra.mxu0 0.0
    %4149 = vmatpush.msra.mxu0 0.0
    %4150 = vmatpush.msra.mxu0 0.0
    %4151 = vmatpush.msra.mxu0 0.0
    %4152 = vmatpush.msra.mxu0 0.0
    %4153 = vmatpush.msra.mxu0 0.0
    %4154 = vmatpush.msra.mxu0 0.0
    %4155 = vmatpush.msra.mxu0 0.0
    %4156 = vmatpush.msra.mxu0 0.0
    %4157 = vmatpush.msra.mxu0 0.0
    %4158 = vmatpush.msra.mxu0 0.0
    %4159 = vmatpush.msra.mxu0 0.0
    %4160 = vmatpush.msra.mxu0 0.0
    %4161 = vmatpush.msra.mxu0 0.0
    %4162 = vmatpush.msra.mxu0 %v4077
    %4163 = vmatmul.f32.gmra.mxu0 %v4085
    %v4164 = vpop.f32.mrf.mxu0
    %v4165 = vadd.f32 0.0, %v4164
    %4166 = vdwg.mxu0
    %4167 = vmatpush.msra.mxu0 0.0
    %4168 = vmatpush.msra.mxu0 0.0
    %4169 = vmatpush.msra.mxu0 0.0
    %4170 = vmatpush.msra.mxu0 0.0
    %4171 = vmatpush.msra.mxu0 0.0
    %4172 = vmatpush.msra.mxu0 0.0
    %4173 = vmatpush.msra.mxu0 0.0
    %4174 = vmatpush.msra.mxu0 0.0
    %4175 = vmatpush.msra.mxu0 0.0
    %4176 = vmatpush.msra.mxu0 0.0
    %4177 = vmatpush.msra.mxu0 0.0
    %4178 = vmatpush.msra.mxu0 0.0
    %4179 = vmatpush.msra.mxu0 0.0
    %4180 = vmatpush.msra.mxu0 0.0
    %4181 = vmatpush.msra.mxu0 0.0
    %4182 = vmatpush.msra.mxu0 %v4078
    %4183 = vmatmul.f32.gmra.mxu0 %v4085
    %v4184 = vpop.f32.mrf.mxu0
    %v4185 = vadd.f32 0.0, %v4184
    %4186 = vdwg.mxu0
    %4187 = vmatpush.msra.mxu0 0.0
    %4188 = vmatpush.msra.mxu0 0.0
    %4189 = vmatpush.msra.mxu0 0.0
    %4190 = vmatpush.msra.mxu0 0.0
    %4191 = vmatpush.msra.mxu0 0.0
    %4192 = vmatpush.msra.mxu0 0.0
    %4193 = vmatpush.msra.mxu0 0.0
    %4194 = vmatpush.msra.mxu0 0.0
    %4195 = vmatpush.msra.mxu0 0.0
    %4196 = vmatpush.msra.mxu0 0.0
    %4197 = vmatpush.msra.mxu0 0.0
    %4198 = vmatpush.msra.mxu0 0.0
    %4199 = vmatpush.msra.mxu0 0.0
    %4200 = vmatpush.msra.mxu0 0.0
    %4201 = vmatpush.msra.mxu0 0.0
    %4202 = vmatpush.msra.mxu0 %v4079
    %4203 = vmatmul.f32.gmra.mxu0 %v4085
    %v4204 = vpop.f32.mrf.mxu0
    %v4205 = vadd.f32 0.0, %v4204
    %4206 = vdwg.mxu0
    %4207 = vmatpush.msra.mxu0 0.0
    %4208 = vmatpush.msra.mxu0 0.0
    %4209 = vmatpush.msra.mxu0 0.0
    %4210 = vmatpush.msra.mxu0 0.0
    %4211 = vmatpush.msra.mxu0 0.0
    %4212 = vmatpush.msra.mxu0 0.0
    %4213 = vmatpush.msra.mxu0 0.0
    %4214 = vmatpush.msra.mxu0 0.0
    %4215 = vmatpush.msra.mxu0 0.0
    %4216 = vmatpush.msra.mxu0 0.0
    %4217 = vmatpush.msra.mxu0 0.0
    %4218 = vmatpush.msra.mxu0 0.0
    %4219 = vmatpush.msra.mxu0 0.0
    %4220 = vmatpush.msra.mxu0 0.0
    %4221 = vmatpush.msra.mxu0 0.0
    %4222 = vmatpush.msra.mxu0 %v4080
    %4223 = vmatmul.f32.gmra.mxu0 %v4085
    %v4224 = vpop.f32.mrf.mxu0
    %v4225 = vadd.f32 0.0, %v4224
    %4226 = vdwg.mxu0
    %4227 = vmatpush.msra.mxu0 0.0
    %4228 = vmatpush.msra.mxu0 0.0
    %4229 = vmatpush.msra.mxu0 0.0
    %4230 = vmatpush.msra.mxu0 0.0
    %4231 = vmatpush.msra.mxu0 0.0
    %4232 = vmatpush.msra.mxu0 0.0
    %4233 = vmatpush.msra.mxu0 0.0
    %4234 = vmatpush.msra.mxu0 0.0
    %4235 = vmatpush.msra.mxu0 0.0
    %4236 = vmatpush.msra.mxu0 0.0
    %4237 = vmatpush.msra.mxu0 0.0
    %4238 = vmatpush.msra.mxu0 0.0
    %4239 = vmatpush.msra.mxu0 0.0
    %4240 = vmatpush.msra.mxu0 0.0
    %4241 = vmatpush.msra.mxu0 0.0
    %4242 = vmatpush.msra.mxu0 %v4081
    %4243 = vmatmul.f32.gmra.mxu0 %v4085
    %v4244 = vpop.f32.mrf.mxu0
    %v4245 = vadd.f32 0.0, %v4244
    %4246 = vdwg.mxu0
    %v4247 = vadd.f32 %v4066, %v4105
    %v4248 = vadd.f32 %v4067, %v4125
    %v4249 = vadd.f32 %v4068, %v4145
    %v4250 = vadd.f32 %v4069, %v4165
    %v4251 = vadd.f32 %v4070, %v4185
    %v4252 = vadd.f32 %v4071, %v4205
    %v4253 = vadd.f32 %v4072, %v4225
    %v4254 = vadd.f32 %v4073, %v4245
    %vm4255 = vmand %vm3877, %vm114
    %vm4256 = vmand %vm3878, %vm115
    %vm4257 = vmand %vm3879, %vm116
    %vm4258 = vmand %vm3880, %vm117
    %vm4259 = vmand %vm3881, %vm118
    %vm4260 = vmand %vm3882, %vm119
    %vm4261 = vmand %vm3883, %vm120
    %vm4262 = vmand %vm3884, %vm121
    %v4263 = vsel %vm4255, %v557, 0.0
    %v4264 = vsel %vm4256, %v556, 0.0
    %v4265 = vsel %vm4257, %v555, 0.0
    %v4266 = vsel %vm4258, %v554, 0.0
    %v4267 = vsel %vm4259, %v553, 0.0
    %v4268 = vsel %vm4260, %v552, 0.0
    %v4269 = vsel %vm4261, %v551, 0.0
    %v4270 = vsel %vm4262, %v558, 0.0
    %s4271 = scalar_lea.vmem %s1, 160
    %v4272 = vld [vmem:[%s4271] sm:$0xff]
    %v4274 = vsel %vm207, %v4272, 0
    %4276 = vmatpush.msra.mxu0 0.0
    %4277 = vmatpush.msra.mxu0 0.0
    %4278 = vmatpush.msra.mxu0 0.0
    %4279 = vmatpush.msra.mxu0 0.0
    %4280 = vmatpush.msra.mxu0 0.0
    %4281 = vmatpush.msra.mxu0 0.0
    %4282 = vmatpush.msra.mxu0 0.0
    %4283 = vmatpush.msra.mxu0 0.0
    %4284 = vmatpush.msra.mxu0 0.0
    %4285 = vmatpush.msra.mxu0 0.0
    %4286 = vmatpush.msra.mxu0 0.0
    %4287 = vmatpush.msra.mxu0 0.0
    %4288 = vmatpush.msra.mxu0 0.0
    %4289 = vmatpush.msra.mxu0 0.0
    %4290 = vmatpush.msra.mxu0 0.0
    %4291 = vmatpush.msra.mxu0 %v4263
    %4292 = vmatmul.f32.gmra.mxu0 %v4274
    %v4293 = vpop.f32.mrf.mxu0
    %v4294 = vadd.f32 0.0, %v4293
    %4295 = vdwg.mxu0
    %4296 = vmatpush.msra.mxu0 0.0
    %4297 = vmatpush.msra.mxu0 0.0
    %4298 = vmatpush.msra.mxu0 0.0
    %4299 = vmatpush.msra.mxu0 0.0
    %4300 = vmatpush.msra.mxu0 0.0
    %4301 = vmatpush.msra.mxu0 0.0
    %4302 = vmatpush.msra.mxu0 0.0
    %4303 = vmatpush.msra.mxu0 0.0
    %4304 = vmatpush.msra.mxu0 0.0
    %4305 = vmatpush.msra.mxu0 0.0
    %4306 = vmatpush.msra.mxu0 0.0
    %4307 = vmatpush.msra.mxu0 0.0
    %4308 = vmatpush.msra.mxu0 0.0
    %4309 = vmatpush.msra.mxu0 0.0
    %4310 = vmatpush.msra.mxu0 0.0
    %4311 = vmatpush.msra.mxu0 %v4264
    %4312 = vmatmul.f32.gmra.mxu0 %v4274
    %v4313 = vpop.f32.mrf.mxu0
    %v4314 = vadd.f32 0.0, %v4313
    %4315 = vdwg.mxu0
    %4316 = vmatpush.msra.mxu0 0.0
    %4317 = vmatpush.msra.mxu0 0.0
    %4318 = vmatpush.msra.mxu0 0.0
    %4319 = vmatpush.msra.mxu0 0.0
    %4320 = vmatpush.msra.mxu0 0.0
    %4321 = vmatpush.msra.mxu0 0.0
    %4322 = vmatpush.msra.mxu0 0.0
    %4323 = vmatpush.msra.mxu0 0.0
    %4324 = vmatpush.msra.mxu0 0.0
    %4325 = vmatpush.msra.mxu0 0.0
    %4326 = vmatpush.msra.mxu0 0.0
    %4327 = vmatpush.msra.mxu0 0.0
    %4328 = vmatpush.msra.mxu0 0.0
    %4329 = vmatpush.msra.mxu0 0.0
    %4330 = vmatpush.msra.mxu0 0.0
    %4331 = vmatpush.msra.mxu0 %v4265
    %4332 = vmatmul.f32.gmra.mxu0 %v4274
    %v4333 = vpop.f32.mrf.mxu0
    %v4334 = vadd.f32 0.0, %v4333
    %4335 = vdwg.mxu0
    %4336 = vmatpush.msra.mxu0 0.0
    %4337 = vmatpush.msra.mxu0 0.0
    %4338 = vmatpush.msra.mxu0 0.0
    %4339 = vmatpush.msra.mxu0 0.0
    %4340 = vmatpush.msra.mxu0 0.0
    %4341 = vmatpush.msra.mxu0 0.0
    %4342 = vmatpush.msra.mxu0 0.0
    %4343 = vmatpush.msra.mxu0 0.0
    %4344 = vmatpush.msra.mxu0 0.0
    %4345 = vmatpush.msra.mxu0 0.0
    %4346 = vmatpush.msra.mxu0 0.0
    %4347 = vmatpush.msra.mxu0 0.0
    %4348 = vmatpush.msra.mxu0 0.0
    %4349 = vmatpush.msra.mxu0 0.0
    %4350 = vmatpush.msra.mxu0 0.0
    %4351 = vmatpush.msra.mxu0 %v4266
    %4352 = vmatmul.f32.gmra.mxu0 %v4274
    %v4353 = vpop.f32.mrf.mxu0
    %v4354 = vadd.f32 0.0, %v4353
    %4355 = vdwg.mxu0
    %4356 = vmatpush.msra.mxu0 0.0
    %4357 = vmatpush.msra.mxu0 0.0
    %4358 = vmatpush.msra.mxu0 0.0
    %4359 = vmatpush.msra.mxu0 0.0
    %4360 = vmatpush.msra.mxu0 0.0
    %4361 = vmatpush.msra.mxu0 0.0
    %4362 = vmatpush.msra.mxu0 0.0
    %4363 = vmatpush.msra.mxu0 0.0
    %4364 = vmatpush.msra.mxu0 0.0
    %4365 = vmatpush.msra.mxu0 0.0
    %4366 = vmatpush.msra.mxu0 0.0
    %4367 = vmatpush.msra.mxu0 0.0
    %4368 = vmatpush.msra.mxu0 0.0
    %4369 = vmatpush.msra.mxu0 0.0
    %4370 = vmatpush.msra.mxu0 0.0
    %4371 = vmatpush.msra.mxu0 %v4267
    %4372 = vmatmul.f32.gmra.mxu0 %v4274
    %v4373 = vpop.f32.mrf.mxu0
    %v4374 = vadd.f32 0.0, %v4373
    %4375 = vdwg.mxu0
    %4376 = vmatpush.msra.mxu0 0.0
    %4377 = vmatpush.msra.mxu0 0.0
    %4378 = vmatpush.msra.mxu0 0.0
    %4379 = vmatpush.msra.mxu0 0.0
    %4380 = vmatpush.msra.mxu0 0.0
    %4381 = vmatpush.msra.mxu0 0.0
    %4382 = vmatpush.msra.mxu0 0.0
    %4383 = vmatpush.msra.mxu0 0.0
    %4384 = vmatpush.msra.mxu0 0.0
    %4385 = vmatpush.msra.mxu0 0.0
    %4386 = vmatpush.msra.mxu0 0.0
    %4387 = vmatpush.msra.mxu0 0.0
    %4388 = vmatpush.msra.mxu0 0.0
    %4389 = vmatpush.msra.mxu0 0.0
    %4390 = vmatpush.msra.mxu0 0.0
    %4391 = vmatpush.msra.mxu0 %v4268
    %4392 = vmatmul.f32.gmra.mxu0 %v4274
    %v4393 = vpop.f32.mrf.mxu0
    %v4394 = vadd.f32 0.0, %v4393
    %4395 = vdwg.mxu0
    %4396 = vmatpush.msra.mxu0 0.0
    %4397 = vmatpush.msra.mxu0 0.0
    %4398 = vmatpush.msra.mxu0 0.0
    %4399 = vmatpush.msra.mxu0 0.0
    %4400 = vmatpush.msra.mxu0 0.0
    %4401 = vmatpush.msra.mxu0 0.0
    %4402 = vmatpush.msra.mxu0 0.0
    %4403 = vmatpush.msra.mxu0 0.0
    %4404 = vmatpush.msra.mxu0 0.0
    %4405 = vmatpush.msra.mxu0 0.0
    %4406 = vmatpush.msra.mxu0 0.0
    %4407 = vmatpush.msra.mxu0 0.0
    %4408 = vmatpush.msra.mxu0 0.0
    %4409 = vmatpush.msra.mxu0 0.0
    %4410 = vmatpush.msra.mxu0 0.0
    %4411 = vmatpush.msra.mxu0 %v4269
    %4412 = vmatmul.f32.gmra.mxu0 %v4274
    %v4413 = vpop.f32.mrf.mxu0
    %v4414 = vadd.f32 0.0, %v4413
    %4415 = vdwg.mxu0
    %4416 = vmatpush.msra.mxu0 0.0
    %4417 = vmatpush.msra.mxu0 0.0
    %4418 = vmatpush.msra.mxu0 0.0
    %4419 = vmatpush.msra.mxu0 0.0
    %4420 = vmatpush.msra.mxu0 0.0
    %4421 = vmatpush.msra.mxu0 0.0
    %4422 = vmatpush.msra.mxu0 0.0
    %4423 = vmatpush.msra.mxu0 0.0
    %4424 = vmatpush.msra.mxu0 0.0
    %4425 = vmatpush.msra.mxu0 0.0
    %4426 = vmatpush.msra.mxu0 0.0
    %4427 = vmatpush.msra.mxu0 0.0
    %4428 = vmatpush.msra.mxu0 0.0
    %4429 = vmatpush.msra.mxu0 0.0
    %4430 = vmatpush.msra.mxu0 0.0
    %4431 = vmatpush.msra.mxu0 %v4270
    %4432 = vmatmul.f32.gmra.mxu0 %v4274
    %v4433 = vpop.f32.mrf.mxu0
    %v4434 = vadd.f32 0.0, %v4433
    %4435 = vdwg.mxu0
    %v4436 = vadd.f32 %v4247, %v4294
    %v4437 = vadd.f32 %v4248, %v4314
    %v4438 = vadd.f32 %v4249, %v4334
    %v4439 = vadd.f32 %v4250, %v4354
    %v4440 = vadd.f32 %v4251, %v4374
    %v4441 = vadd.f32 %v4252, %v4394
    %v4442 = vadd.f32 %v4253, %v4414
    %v4443 = vadd.f32 %v4254, %v4434
    %vm4444 = vmand %vm82, %vm106
    %vm4445 = vmand %vm83, %vm107
    %vm4446 = vmand %vm84, %vm108
    %vm4447 = vmand %vm85, %vm109
    %vm4448 = vmand %vm86, %vm110
    %vm4449 = vmand %vm87, %vm111
    %vm4450 = vmand %vm88, %vm112
    %vm4451 = vmand %vm89, %vm113
    %v4452 = vsel %vm4444, %v771, 0.0
    %v4453 = vsel %vm4445, %v770, 0.0
    %v4454 = vsel %vm4446, %v769, 0.0
    %v4455 = vsel %vm4447, %v768, 0.0
    %v4456 = vsel %vm4448, %v767, 0.0
    %v4457 = vsel %vm4449, %v766, 0.0
    %v4458 = vsel %vm4450, %v765, 0.0
    %v4459 = vsel %vm4451, %v772, 0.0
    %s4460 = scalar_lea.vmem %s1, 168
    %v4461 = vld [vmem:[%s4460] sm:$0xff]
    %v4463 = vsel %vm207, %v4461, 0
    %4465 = vmatpush.msra.mxu0 0.0
    %4466 = vmatpush.msra.mxu0 0.0
    %4467 = vmatpush.msra.mxu0 0.0
    %4468 = vmatpush.msra.mxu0 0.0
    %4469 = vmatpush.msra.mxu0 0.0
    %4470 = vmatpush.msra.mxu0 0.0
    %4471 = vmatpush.msra.mxu0 0.0
    %4472 = vmatpush.msra.mxu0 0.0
    %4473 = vmatpush.msra.mxu0 0.0
    %4474 = vmatpush.msra.mxu0 0.0
    %4475 = vmatpush.msra.mxu0 0.0
    %4476 = vmatpush.msra.mxu0 0.0
    %4477 = vmatpush.msra.mxu0 0.0
    %4478 = vmatpush.msra.mxu0 0.0
    %4479 = vmatpush.msra.mxu0 0.0
    %4480 = vmatpush.msra.mxu0 %v4452
    %4481 = vmatmul.f32.gmra.mxu0 %v4463
    %v4482 = vpop.f32.mrf.mxu0
    %v4483 = vadd.f32 0.0, %v4482
    %4484 = vdwg.mxu0
    %4485 = vmatpush.msra.mxu0 0.0
    %4486 = vmatpush.msra.mxu0 0.0
    %4487 = vmatpush.msra.mxu0 0.0
    %4488 = vmatpush.msra.mxu0 0.0
    %4489 = vmatpush.msra.mxu0 0.0
    %4490 = vmatpush.msra.mxu0 0.0
    %4491 = vmatpush.msra.mxu0 0.0
    %4492 = vmatpush.msra.mxu0 0.0
    %4493 = vmatpush.msra.mxu0 0.0
    %4494 = vmatpush.msra.mxu0 0.0
    %4495 = vmatpush.msra.mxu0 0.0
    %4496 = vmatpush.msra.mxu0 0.0
    %4497 = vmatpush.msra.mxu0 0.0
    %4498 = vmatpush.msra.mxu0 0.0
    %4499 = vmatpush.msra.mxu0 0.0
    %4500 = vmatpush.msra.mxu0 %v4453
    %4501 = vmatmul.f32.gmra.mxu0 %v4463
    %v4502 = vpop.f32.mrf.mxu0
    %v4503 = vadd.f32 0.0, %v4502
    %4504 = vdwg.mxu0
    %4505 = vmatpush.msra.mxu0 0.0
    %4506 = vmatpush.msra.mxu0 0.0
    %4507 = vmatpush.msra.mxu0 0.0
    %4508 = vmatpush.msra.mxu0 0.0
    %4509 = vmatpush.msra.mxu0 0.0
    %4510 = vmatpush.msra.mxu0 0.0
    %4511 = vmatpush.msra.mxu0 0.0
    %4512 = vmatpush.msra.mxu0 0.0
    %4513 = vmatpush.msra.mxu0 0.0
    %4514 = vmatpush.msra.mxu0 0.0
    %4515 = vmatpush.msra.mxu0 0.0
    %4516 = vmatpush.msra.mxu0 0.0
    %4517 = vmatpush.msra.mxu0 0.0
    %4518 = vmatpush.msra.mxu0 0.0
    %4519 = vmatpush.msra.mxu0 0.0
    %4520 = vmatpush.msra.mxu0 %v4454
    %4521 = vmatmul.f32.gmra.mxu0 %v4463
    %v4522 = vpop.f32.mrf.mxu0
    %v4523 = vadd.f32 0.0, %v4522
    %4524 = vdwg.mxu0
    %4525 = vmatpush.msra.mxu0 0.0
    %4526 = vmatpush.msra.mxu0 0.0
    %4527 = vmatpush.msra.mxu0 0.0
    %4528 = vmatpush.msra.mxu0 0.0
    %4529 = vmatpush.msra.mxu0 0.0
    %4530 = vmatpush.msra.mxu0 0.0
    %4531 = vmatpush.msra.mxu0 0.0
    %4532 = vmatpush.msra.mxu0 0.0
    %4533 = vmatpush.msra.mxu0 0.0
    %4534 = vmatpush.msra.mxu0 0.0
    %4535 = vmatpush.msra.mxu0 0.0
    %4536 = vmatpush.msra.mxu0 0.0
    %4537 = vmatpush.msra.mxu0 0.0
    %4538 = vmatpush.msra.mxu0 0.0
    %4539 = vmatpush.msra.mxu0 0.0
    %4540 = vmatpush.msra.mxu0 %v4455
    %4541 = vmatmul.f32.gmra.mxu0 %v4463
    %v4542 = vpop.f32.mrf.mxu0
    %v4543 = vadd.f32 0.0, %v4542
    %4544 = vdwg.mxu0
    %4545 = vmatpush.msra.mxu0 0.0
    %4546 = vmatpush.msra.mxu0 0.0
    %4547 = vmatpush.msra.mxu0 0.0
    %4548 = vmatpush.msra.mxu0 0.0
    %4549 = vmatpush.msra.mxu0 0.0
    %4550 = vmatpush.msra.mxu0 0.0
    %4551 = vmatpush.msra.mxu0 0.0
    %4552 = vmatpush.msra.mxu0 0.0
    %4553 = vmatpush.msra.mxu0 0.0
    %4554 = vmatpush.msra.mxu0 0.0
    %4555 = vmatpush.msra.mxu0 0.0
    %4556 = vmatpush.msra.mxu0 0.0
    %4557 = vmatpush.msra.mxu0 0.0
    %4558 = vmatpush.msra.mxu0 0.0
    %4559 = vmatpush.msra.mxu0 0.0
    %4560 = vmatpush.msra.mxu0 %v4456
    %4561 = vmatmul.f32.gmra.mxu0 %v4463
    %v4562 = vpop.f32.mrf.mxu0
    %v4563 = vadd.f32 0.0, %v4562
    %4564 = vdwg.mxu0
    %4565 = vmatpush.msra.mxu0 0.0
    %4566 = vmatpush.msra.mxu0 0.0
    %4567 = vmatpush.msra.mxu0 0.0
    %4568 = vmatpush.msra.mxu0 0.0
    %4569 = vmatpush.msra.mxu0 0.0
    %4570 = vmatpush.msra.mxu0 0.0
    %4571 = vmatpush.msra.mxu0 0.0
    %4572 = vmatpush.msra.mxu0 0.0
    %4573 = vmatpush.msra.mxu0 0.0
    %4574 = vmatpush.msra.mxu0 0.0
    %4575 = vmatpush.msra.mxu0 0.0
    %4576 = vmatpush.msra.mxu0 0.0
    %4577 = vmatpush.msra.mxu0 0.0
    %4578 = vmatpush.msra.mxu0 0.0
    %4579 = vmatpush.msra.mxu0 0.0
    %4580 = vmatpush.msra.mxu0 %v4457
    %4581 = vmatmul.f32.gmra.mxu0 %v4463
    %v4582 = vpop.f32.mrf.mxu0
    %v4583 = vadd.f32 0.0, %v4582
    %4584 = vdwg.mxu0
    %4585 = vmatpush.msra.mxu0 0.0
    %4586 = vmatpush.msra.mxu0 0.0
    %4587 = vmatpush.msra.mxu0 0.0
    %4588 = vmatpush.msra.mxu0 0.0
    %4589 = vmatpush.msra.mxu0 0.0
    %4590 = vmatpush.msra.mxu0 0.0
    %4591 = vmatpush.msra.mxu0 0.0
    %4592 = vmatpush.msra.mxu0 0.0
    %4593 = vmatpush.msra.mxu0 0.0
    %4594 = vmatpush.msra.mxu0 0.0
    %4595 = vmatpush.msra.mxu0 0.0
    %4596 = vmatpush.msra.mxu0 0.0
    %4597 = vmatpush.msra.mxu0 0.0
    %4598 = vmatpush.msra.mxu0 0.0
    %4599 = vmatpush.msra.mxu0 0.0
    %4600 = vmatpush.msra.mxu0 %v4458
    %4601 = vmatmul.f32.gmra.mxu0 %v4463
    %v4602 = vpop.f32.mrf.mxu0
    %v4603 = vadd.f32 0.0, %v4602
    %4604 = vdwg.mxu0
    %4605 = vmatpush.msra.mxu0 0.0
    %4606 = vmatpush.msra.mxu0 0.0
    %4607 = vmatpush.msra.mxu0 0.0
    %4608 = vmatpush.msra.mxu0 0.0
    %4609 = vmatpush.msra.mxu0 0.0
    %4610 = vmatpush.msra.mxu0 0.0
    %4611 = vmatpush.msra.mxu0 0.0
    %4612 = vmatpush.msra.mxu0 0.0
    %4613 = vmatpush.msra.mxu0 0.0
    %4614 = vmatpush.msra.mxu0 0.0
    %4615 = vmatpush.msra.mxu0 0.0
    %4616 = vmatpush.msra.mxu0 0.0
    %4617 = vmatpush.msra.mxu0 0.0
    %4618 = vmatpush.msra.mxu0 0.0
    %4619 = vmatpush.msra.mxu0 0.0
    %4620 = vmatpush.msra.mxu0 %v4459
    %4621 = vmatmul.f32.gmra.mxu0 %v4463
    %v4622 = vpop.f32.mrf.mxu0
    %v4623 = vadd.f32 0.0, %v4622
    %4624 = vdwg.mxu0
    %v4625 = vadd.f32 %v4436, %v4483
    %v4626 = vadd.f32 %v4437, %v4503
    %v4627 = vadd.f32 %v4438, %v4523
    %v4628 = vadd.f32 %v4439, %v4543
    %v4629 = vadd.f32 %v4440, %v4563
    %v4630 = vadd.f32 %v4441, %v4583
    %v4631 = vadd.f32 %v4442, %v4603
    %v4632 = vadd.f32 %v4443, %v4623
    %v4633 = vsel %vm82, %v985, 0.0
    %v4634 = vsel %vm83, %v984, 0.0
    %v4635 = vsel %vm84, %v983, 0.0
    %v4636 = vsel %vm85, %v982, 0.0
    %v4637 = vsel %vm86, %v981, 0.0
    %v4638 = vsel %vm87, %v980, 0.0
    %v4639 = vsel %vm88, %v979, 0.0
    %v4640 = vsel %vm89, %v986, 0.0
    %s4641 = scalar_lea.vmem %s1, 176
    %v4642 = vld [vmem:[%s4641] sm:$0xff]
    %v4644 = vsel %vm207, %v4642, 0
    %4646 = vmatpush.msra.mxu0 0.0
    %4647 = vmatpush.msra.mxu0 0.0
    %4648 = vmatpush.msra.mxu0 0.0
    %4649 = vmatpush.msra.mxu0 0.0
    %4650 = vmatpush.msra.mxu0 0.0
    %4651 = vmatpush.msra.mxu0 0.0
    %4652 = vmatpush.msra.mxu0 0.0
    %4653 = vmatpush.msra.mxu0 0.0
    %4654 = vmatpush.msra.mxu0 0.0
    %4655 = vmatpush.msra.mxu0 0.0
    %4656 = vmatpush.msra.mxu0 0.0
    %4657 = vmatpush.msra.mxu0 0.0
    %4658 = vmatpush.msra.mxu0 0.0
    %4659 = vmatpush.msra.mxu0 0.0
    %4660 = vmatpush.msra.mxu0 0.0
    %4661 = vmatpush.msra.mxu0 %v4633
    %4662 = vmatmul.f32.gmra.mxu0 %v4644
    %v4663 = vpop.f32.mrf.mxu0
    %v4664 = vadd.f32 0.0, %v4663
    %4665 = vdwg.mxu0
    %4666 = vmatpush.msra.mxu0 0.0
    %4667 = vmatpush.msra.mxu0 0.0
    %4668 = vmatpush.msra.mxu0 0.0
    %4669 = vmatpush.msra.mxu0 0.0
    %4670 = vmatpush.msra.mxu0 0.0
    %4671 = vmatpush.msra.mxu0 0.0
    %4672 = vmatpush.msra.mxu0 0.0
    %4673 = vmatpush.msra.mxu0 0.0
    %4674 = vmatpush.msra.mxu0 0.0
    %4675 = vmatpush.msra.mxu0 0.0
    %4676 = vmatpush.msra.mxu0 0.0
    %4677 = vmatpush.msra.mxu0 0.0
    %4678 = vmatpush.msra.mxu0 0.0
    %4679 = vmatpush.msra.mxu0 0.0
    %4680 = vmatpush.msra.mxu0 0.0
    %4681 = vmatpush.msra.mxu0 %v4634
    %4682 = vmatmul.f32.gmra.mxu0 %v4644
    %v4683 = vpop.f32.mrf.mxu0
    %v4684 = vadd.f32 0.0, %v4683
    %4685 = vdwg.mxu0
    %4686 = vmatpush.msra.mxu0 0.0
    %4687 = vmatpush.msra.mxu0 0.0
    %4688 = vmatpush.msra.mxu0 0.0
    %4689 = vmatpush.msra.mxu0 0.0
    %4690 = vmatpush.msra.mxu0 0.0
    %4691 = vmatpush.msra.mxu0 0.0
    %4692 = vmatpush.msra.mxu0 0.0
    %4693 = vmatpush.msra.mxu0 0.0
    %4694 = vmatpush.msra.mxu0 0.0
    %4695 = vmatpush.msra.mxu0 0.0
    %4696 = vmatpush.msra.mxu0 0.0
    %4697 = vmatpush.msra.mxu0 0.0
    %4698 = vmatpush.msra.mxu0 0.0
    %4699 = vmatpush.msra.mxu0 0.0
    %4700 = vmatpush.msra.mxu0 0.0
    %4701 = vmatpush.msra.mxu0 %v4635
    %4702 = vmatmul.f32.gmra.mxu0 %v4644
    %v4703 = vpop.f32.mrf.mxu0
    %v4704 = vadd.f32 0.0, %v4703
    %4705 = vdwg.mxu0
    %4706 = vmatpush.msra.mxu0 0.0
    %4707 = vmatpush.msra.mxu0 0.0
    %4708 = vmatpush.msra.mxu0 0.0
    %4709 = vmatpush.msra.mxu0 0.0
    %4710 = vmatpush.msra.mxu0 0.0
    %4711 = vmatpush.msra.mxu0 0.0
    %4712 = vmatpush.msra.mxu0 0.0
    %4713 = vmatpush.msra.mxu0 0.0
    %4714 = vmatpush.msra.mxu0 0.0
    %4715 = vmatpush.msra.mxu0 0.0
    %4716 = vmatpush.msra.mxu0 0.0
    %4717 = vmatpush.msra.mxu0 0.0
    %4718 = vmatpush.msra.mxu0 0.0
    %4719 = vmatpush.msra.mxu0 0.0
    %4720 = vmatpush.msra.mxu0 0.0
    %4721 = vmatpush.msra.mxu0 %v4636
    %4722 = vmatmul.f32.gmra.mxu0 %v4644
    %v4723 = vpop.f32.mrf.mxu0
    %v4724 = vadd.f32 0.0, %v4723
    %4725 = vdwg.mxu0
    %4726 = vmatpush.msra.mxu0 0.0
    %4727 = vmatpush.msra.mxu0 0.0
    %4728 = vmatpush.msra.mxu0 0.0
    %4729 = vmatpush.msra.mxu0 0.0
    %4730 = vmatpush.msra.mxu0 0.0
    %4731 = vmatpush.msra.mxu0 0.0
    %4732 = vmatpush.msra.mxu0 0.0
    %4733 = vmatpush.msra.mxu0 0.0
    %4734 = vmatpush.msra.mxu0 0.0
    %4735 = vmatpush.msra.mxu0 0.0
    %4736 = vmatpush.msra.mxu0 0.0
    %4737 = vmatpush.msra.mxu0 0.0
    %4738 = vmatpush.msra.mxu0 0.0
    %4739 = vmatpush.msra.mxu0 0.0
    %4740 = vmatpush.msra.mxu0 0.0
    %4741 = vmatpush.msra.mxu0 %v4637
    %4742 = vmatmul.f32.gmra.mxu0 %v4644
    %v4743 = vpop.f32.mrf.mxu0
    %v4744 = vadd.f32 0.0, %v4743
    %4745 = vdwg.mxu0
    %4746 = vmatpush.msra.mxu0 0.0
    %4747 = vmatpush.msra.mxu0 0.0
    %4748 = vmatpush.msra.mxu0 0.0
    %4749 = vmatpush.msra.mxu0 0.0
    %4750 = vmatpush.msra.mxu0 0.0
    %4751 = vmatpush.msra.mxu0 0.0
    %4752 = vmatpush.msra.mxu0 0.0
    %4753 = vmatpush.msra.mxu0 0.0
    %4754 = vmatpush.msra.mxu0 0.0
    %4755 = vmatpush.msra.mxu0 0.0
    %4756 = vmatpush.msra.mxu0 0.0
    %4757 = vmatpush.msra.mxu0 0.0
    %4758 = vmatpush.msra.mxu0 0.0
    %4759 = vmatpush.msra.mxu0 0.0
    %4760 = vmatpush.msra.mxu0 0.0
    %4761 = vmatpush.msra.mxu0 %v4638
    %4762 = vmatmul.f32.gmra.mxu0 %v4644
    %v4763 = vpop.f32.mrf.mxu0
    %v4764 = vadd.f32 0.0, %v4763
    %4765 = vdwg.mxu0
    %4766 = vmatpush.msra.mxu0 0.0
    %4767 = vmatpush.msra.mxu0 0.0
    %4768 = vmatpush.msra.mxu0 0.0
    %4769 = vmatpush.msra.mxu0 0.0
    %4770 = vmatpush.msra.mxu0 0.0
    %4771 = vmatpush.msra.mxu0 0.0
    %4772 = vmatpush.msra.mxu0 0.0
    %4773 = vmatpush.msra.mxu0 0.0
    %4774 = vmatpush.msra.mxu0 0.0
    %4775 = vmatpush.msra.mxu0 0.0
    %4776 = vmatpush.msra.mxu0 0.0
    %4777 = vmatpush.msra.mxu0 0.0
    %4778 = vmatpush.msra.mxu0 0.0
    %4779 = vmatpush.msra.mxu0 0.0
    %4780 = vmatpush.msra.mxu0 0.0
    %4781 = vmatpush.msra.mxu0 %v4639
    %4782 = vmatmul.f32.gmra.mxu0 %v4644
    %v4783 = vpop.f32.mrf.mxu0
    %v4784 = vadd.f32 0.0, %v4783
    %4785 = vdwg.mxu0
    %4786 = vmatpush.msra.mxu0 0.0
    %4787 = vmatpush.msra.mxu0 0.0
    %4788 = vmatpush.msra.mxu0 0.0
    %4789 = vmatpush.msra.mxu0 0.0
    %4790 = vmatpush.msra.mxu0 0.0
    %4791 = vmatpush.msra.mxu0 0.0
    %4792 = vmatpush.msra.mxu0 0.0
    %4793 = vmatpush.msra.mxu0 0.0
    %4794 = vmatpush.msra.mxu0 0.0
    %4795 = vmatpush.msra.mxu0 0.0
    %4796 = vmatpush.msra.mxu0 0.0
    %4797 = vmatpush.msra.mxu0 0.0
    %4798 = vmatpush.msra.mxu0 0.0
    %4799 = vmatpush.msra.mxu0 0.0
    %4800 = vmatpush.msra.mxu0 0.0
    %4801 = vmatpush.msra.mxu0 %v4640
    %4802 = vmatmul.f32.gmra.mxu0 %v4644
    %v4803 = vpop.f32.mrf.mxu0
    %v4804 = vadd.f32 0.0, %v4803
    %4805 = vdwg.mxu0
    %v4806 = vadd.f32 %v4625, %v4664
    %v4807 = vadd.f32 %v4626, %v4684
    %v4808 = vadd.f32 %v4627, %v4704
    %v4809 = vadd.f32 %v4628, %v4724
    %v4810 = vadd.f32 %v4629, %v4744
    %v4811 = vadd.f32 %v4630, %v4764
    %v4812 = vadd.f32 %v4631, %v4784
    %v4813 = vadd.f32 %v4632, %v4804
    %vm4814 = vmand %vm82, %vm114
    %vm4815 = vmand %vm83, %vm115
    %vm4816 = vmand %vm84, %vm116
    %vm4817 = vmand %vm85, %vm117
    %vm4818 = vmand %vm86, %vm118
    %vm4819 = vmand %vm87, %vm119
    %vm4820 = vmand %vm88, %vm120
    %vm4821 = vmand %vm89, %vm121
    %v4822 = vsel %vm4814, %v1191, 0.0
    %v4823 = vsel %vm4815, %v1190, 0.0
    %v4824 = vsel %vm4816, %v1189, 0.0
    %v4825 = vsel %vm4817, %v1188, 0.0
    %v4826 = vsel %vm4818, %v1187, 0.0
    %v4827 = vsel %vm4819, %v1186, 0.0
    %v4828 = vsel %vm4820, %v1185, 0.0
    %v4829 = vsel %vm4821, %v1192, 0.0
    %s4830 = scalar_lea.vmem %s1, 184
    %v4831 = vld [vmem:[%s4830] sm:$0xff]
    %v4833 = vsel %vm207, %v4831, 0
    %4835 = vmatpush.msra.mxu0 0.0
    %4836 = vmatpush.msra.mxu0 0.0
    %4837 = vmatpush.msra.mxu0 0.0
    %4838 = vmatpush.msra.mxu0 0.0
    %4839 = vmatpush.msra.mxu0 0.0
    %4840 = vmatpush.msra.mxu0 0.0
    %4841 = vmatpush.msra.mxu0 0.0
    %4842 = vmatpush.msra.mxu0 0.0
    %4843 = vmatpush.msra.mxu0 0.0
    %4844 = vmatpush.msra.mxu0 0.0
    %4845 = vmatpush.msra.mxu0 0.0
    %4846 = vmatpush.msra.mxu0 0.0
    %4847 = vmatpush.msra.mxu0 0.0
    %4848 = vmatpush.msra.mxu0 0.0
    %4849 = vmatpush.msra.mxu0 0.0
    %4850 = vmatpush.msra.mxu0 %v4822
    %4851 = vmatmul.f32.gmra.mxu0 %v4833
    %v4852 = vpop.f32.mrf.mxu0
    %v4853 = vadd.f32 0.0, %v4852
    %4854 = vdwg.mxu0
    %4855 = vmatpush.msra.mxu0 0.0
    %4856 = vmatpush.msra.mxu0 0.0
    %4857 = vmatpush.msra.mxu0 0.0
    %4858 = vmatpush.msra.mxu0 0.0
    %4859 = vmatpush.msra.mxu0 0.0
    %4860 = vmatpush.msra.mxu0 0.0
    %4861 = vmatpush.msra.mxu0 0.0
    %4862 = vmatpush.msra.mxu0 0.0
    %4863 = vmatpush.msra.mxu0 0.0
    %4864 = vmatpush.msra.mxu0 0.0
    %4865 = vmatpush.msra.mxu0 0.0
    %4866 = vmatpush.msra.mxu0 0.0
    %4867 = vmatpush.msra.mxu0 0.0
    %4868 = vmatpush.msra.mxu0 0.0
    %4869 = vmatpush.msra.mxu0 0.0
    %4870 = vmatpush.msra.mxu0 %v4823
    %4871 = vmatmul.f32.gmra.mxu0 %v4833
    %v4872 = vpop.f32.mrf.mxu0
    %v4873 = vadd.f32 0.0, %v4872
    %4874 = vdwg.mxu0
    %4875 = vmatpush.msra.mxu0 0.0
    %4876 = vmatpush.msra.mxu0 0.0
    %4877 = vmatpush.msra.mxu0 0.0
    %4878 = vmatpush.msra.mxu0 0.0
    %4879 = vmatpush.msra.mxu0 0.0
    %4880 = vmatpush.msra.mxu0 0.0
    %4881 = vmatpush.msra.mxu0 0.0
    %4882 = vmatpush.msra.mxu0 0.0
    %4883 = vmatpush.msra.mxu0 0.0
    %4884 = vmatpush.msra.mxu0 0.0
    %4885 = vmatpush.msra.mxu0 0.0
    %4886 = vmatpush.msra.mxu0 0.0
    %4887 = vmatpush.msra.mxu0 0.0
    %4888 = vmatpush.msra.mxu0 0.0
    %4889 = vmatpush.msra.mxu0 0.0
    %4890 = vmatpush.msra.mxu0 %v4824
    %4891 = vmatmul.f32.gmra.mxu0 %v4833
    %v4892 = vpop.f32.mrf.mxu0
    %v4893 = vadd.f32 0.0, %v4892
    %4894 = vdwg.mxu0
    %4895 = vmatpush.msra.mxu0 0.0
    %4896 = vmatpush.msra.mxu0 0.0
    %4897 = vmatpush.msra.mxu0 0.0
    %4898 = vmatpush.msra.mxu0 0.0
    %4899 = vmatpush.msra.mxu0 0.0
    %4900 = vmatpush.msra.mxu0 0.0
    %4901 = vmatpush.msra.mxu0 0.0
    %4902 = vmatpush.msra.mxu0 0.0
    %4903 = vmatpush.msra.mxu0 0.0
    %4904 = vmatpush.msra.mxu0 0.0
    %4905 = vmatpush.msra.mxu0 0.0
    %4906 = vmatpush.msra.mxu0 0.0
    %4907 = vmatpush.msra.mxu0 0.0
    %4908 = vmatpush.msra.mxu0 0.0
    %4909 = vmatpush.msra.mxu0 0.0
    %4910 = vmatpush.msra.mxu0 %v4825
    %4911 = vmatmul.f32.gmra.mxu0 %v4833
    %v4912 = vpop.f32.mrf.mxu0
    %v4913 = vadd.f32 0.0, %v4912
    %4914 = vdwg.mxu0
    %4915 = vmatpush.msra.mxu0 0.0
    %4916 = vmatpush.msra.mxu0 0.0
    %4917 = vmatpush.msra.mxu0 0.0
    %4918 = vmatpush.msra.mxu0 0.0
    %4919 = vmatpush.msra.mxu0 0.0
    %4920 = vmatpush.msra.mxu0 0.0
    %4921 = vmatpush.msra.mxu0 0.0
    %4922 = vmatpush.msra.mxu0 0.0
    %4923 = vmatpush.msra.mxu0 0.0
    %4924 = vmatpush.msra.mxu0 0.0
    %4925 = vmatpush.msra.mxu0 0.0
    %4926 = vmatpush.msra.mxu0 0.0
    %4927 = vmatpush.msra.mxu0 0.0
    %4928 = vmatpush.msra.mxu0 0.0
    %4929 = vmatpush.msra.mxu0 0.0
    %4930 = vmatpush.msra.mxu0 %v4826
    %4931 = vmatmul.f32.gmra.mxu0 %v4833
    %v4932 = vpop.f32.mrf.mxu0
    %v4933 = vadd.f32 0.0, %v4932
    %4934 = vdwg.mxu0
    %4935 = vmatpush.msra.mxu0 0.0
    %4936 = vmatpush.msra.mxu0 0.0
    %4937 = vmatpush.msra.mxu0 0.0
    %4938 = vmatpush.msra.mxu0 0.0
    %4939 = vmatpush.msra.mxu0 0.0
    %4940 = vmatpush.msra.mxu0 0.0
    %4941 = vmatpush.msra.mxu0 0.0
    %4942 = vmatpush.msra.mxu0 0.0
    %4943 = vmatpush.msra.mxu0 0.0
    %4944 = vmatpush.msra.mxu0 0.0
    %4945 = vmatpush.msra.mxu0 0.0
    %4946 = vmatpush.msra.mxu0 0.0
    %4947 = vmatpush.msra.mxu0 0.0
    %4948 = vmatpush.msra.mxu0 0.0
    %4949 = vmatpush.msra.mxu0 0.0
    %4950 = vmatpush.msra.mxu0 %v4827
    %4951 = vmatmul.f32.gmra.mxu0 %v4833
    %v4952 = vpop.f32.mrf.mxu0
    %v4953 = vadd.f32 0.0, %v4952
    %4954 = vdwg.mxu0
    %4955 = vmatpush.msra.mxu0 0.0
    %4956 = vmatpush.msra.mxu0 0.0
    %4957 = vmatpush.msra.mxu0 0.0
    %4958 = vmatpush.msra.mxu0 0.0
    %4959 = vmatpush.msra.mxu0 0.0
    %4960 = vmatpush.msra.mxu0 0.0
    %4961 = vmatpush.msra.mxu0 0.0
    %4962 = vmatpush.msra.mxu0 0.0
    %4963 = vmatpush.msra.mxu0 0.0
    %4964 = vmatpush.msra.mxu0 0.0
    %4965 = vmatpush.msra.mxu0 0.0
    %4966 = vmatpush.msra.mxu0 0.0
    %4967 = vmatpush.msra.mxu0 0.0
    %4968 = vmatpush.msra.mxu0 0.0
    %4969 = vmatpush.msra.mxu0 0.0
    %4970 = vmatpush.msra.mxu0 %v4828
    %4971 = vmatmul.f32.gmra.mxu0 %v4833
    %v4972 = vpop.f32.mrf.mxu0
    %v4973 = vadd.f32 0.0, %v4972
    %4974 = vdwg.mxu0
    %4975 = vmatpush.msra.mxu0 0.0
    %4976 = vmatpush.msra.mxu0 0.0
    %4977 = vmatpush.msra.mxu0 0.0
    %4978 = vmatpush.msra.mxu0 0.0
    %4979 = vmatpush.msra.mxu0 0.0
    %4980 = vmatpush.msra.mxu0 0.0
    %4981 = vmatpush.msra.mxu0 0.0
    %4982 = vmatpush.msra.mxu0 0.0
    %4983 = vmatpush.msra.mxu0 0.0
    %4984 = vmatpush.msra.mxu0 0.0
    %4985 = vmatpush.msra.mxu0 0.0
    %4986 = vmatpush.msra.mxu0 0.0
    %4987 = vmatpush.msra.mxu0 0.0
    %4988 = vmatpush.msra.mxu0 0.0
    %4989 = vmatpush.msra.mxu0 0.0
    %4990 = vmatpush.msra.mxu0 %v4829
    %4991 = vmatmul.f32.gmra.mxu0 %v4833
    %v4992 = vpop.f32.mrf.mxu0
    %v4993 = vadd.f32 0.0, %v4992
    %4994 = vdwg.mxu0
    %v4995 = vadd.f32 %v4806, %v4853
    %v4996 = vadd.f32 %v4807, %v4873
    %v4997 = vadd.f32 %v4808, %v4893
    %v4998 = vadd.f32 %v4809, %v4913
    %v4999 = vadd.f32 %v4810, %v4933
    %v5000 = vadd.f32 %v4811, %v4953
    %v5001 = vadd.f32 %v4812, %v4973
    %v5002 = vadd.f32 %v4813, %v4993
    %vm5003 = vmand %vm82, %vm98
    %vm5004 = vmand %vm83, %vm99
    %vm5005 = vmand %vm84, %vm100
    %vm5006 = vmand %vm85, %vm101
    %vm5007 = vmand %vm86, %vm102
    %vm5008 = vmand %vm87, %vm103
    %vm5009 = vmand %vm88, %vm104
    %vm5010 = vmand %vm89, %vm105
    %vm5011 = vmand %vm5003, %vm106
    %vm5012 = vmand %vm5004, %vm107
    %vm5013 = vmand %vm5005, %vm108
    %vm5014 = vmand %vm5006, %vm109
    %vm5015 = vmand %vm5007, %vm110
    %vm5016 = vmand %vm5008, %vm111
    %vm5017 = vmand %vm5009, %vm112
    %vm5018 = vmand %vm5010, %vm113
    %v5019 = vsel %vm5011, %v1413, 0.0
    %v5020 = vsel %vm5012, %v1412, 0.0
    %v5021 = vsel %vm5013, %v1411, 0.0
    %v5022 = vsel %vm5014, %v1410, 0.0
    %v5023 = vsel %vm5015, %v1409, 0.0
    %v5024 = vsel %vm5016, %v1408, 0.0
    %v5025 = vsel %vm5017, %v1407, 0.0
    %v5026 = vsel %vm5018, %v1414, 0.0
    %s5027 = scalar_lea.vmem %s1, 192
    %v5028 = vld [vmem:[%s5027] sm:$0xff]
    %v5030 = vsel %vm207, %v5028, 0
    %5032 = vmatpush.msra.mxu0 0.0
    %5033 = vmatpush.msra.mxu0 0.0
    %5034 = vmatpush.msra.mxu0 0.0
    %5035 = vmatpush.msra.mxu0 0.0
    %5036 = vmatpush.msra.mxu0 0.0
    %5037 = vmatpush.msra.mxu0 0.0
    %5038 = vmatpush.msra.mxu0 0.0
    %5039 = vmatpush.msra.mxu0 0.0
    %5040 = vmatpush.msra.mxu0 0.0
    %5041 = vmatpush.msra.mxu0 0.0
    %5042 = vmatpush.msra.mxu0 0.0
    %5043 = vmatpush.msra.mxu0 0.0
    %5044 = vmatpush.msra.mxu0 0.0
    %5045 = vmatpush.msra.mxu0 0.0
    %5046 = vmatpush.msra.mxu0 0.0
    %5047 = vmatpush.msra.mxu0 %v5019
    %5048 = vmatmul.f32.gmra.mxu0 %v5030
    %v5049 = vpop.f32.mrf.mxu0
    %v5050 = vadd.f32 0.0, %v5049
    %5051 = vdwg.mxu0
    %5052 = vmatpush.msra.mxu0 0.0
    %5053 = vmatpush.msra.mxu0 0.0
    %5054 = vmatpush.msra.mxu0 0.0
    %5055 = vmatpush.msra.mxu0 0.0
    %5056 = vmatpush.msra.mxu0 0.0
    %5057 = vmatpush.msra.mxu0 0.0
    %5058 = vmatpush.msra.mxu0 0.0
    %5059 = vmatpush.msra.mxu0 0.0
    %5060 = vmatpush.msra.mxu0 0.0
    %5061 = vmatpush.msra.mxu0 0.0
    %5062 = vmatpush.msra.mxu0 0.0
    %5063 = vmatpush.msra.mxu0 0.0
    %5064 = vmatpush.msra.mxu0 0.0
    %5065 = vmatpush.msra.mxu0 0.0
    %5066 = vmatpush.msra.mxu0 0.0
    %5067 = vmatpush.msra.mxu0 %v5020
    %5068 = vmatmul.f32.gmra.mxu0 %v5030
    %v5069 = vpop.f32.mrf.mxu0
    %v5070 = vadd.f32 0.0, %v5069
    %5071 = vdwg.mxu0
    %5072 = vmatpush.msra.mxu0 0.0
    %5073 = vmatpush.msra.mxu0 0.0
    %5074 = vmatpush.msra.mxu0 0.0
    %5075 = vmatpush.msra.mxu0 0.0
    %5076 = vmatpush.msra.mxu0 0.0
    %5077 = vmatpush.msra.mxu0 0.0
    %5078 = vmatpush.msra.mxu0 0.0
    %5079 = vmatpush.msra.mxu0 0.0
    %5080 = vmatpush.msra.mxu0 0.0
    %5081 = vmatpush.msra.mxu0 0.0
    %5082 = vmatpush.msra.mxu0 0.0
    %5083 = vmatpush.msra.mxu0 0.0
    %5084 = vmatpush.msra.mxu0 0.0
    %5085 = vmatpush.msra.mxu0 0.0
    %5086 = vmatpush.msra.mxu0 0.0
    %5087 = vmatpush.msra.mxu0 %v5021
    %5088 = vmatmul.f32.gmra.mxu0 %v5030
    %v5089 = vpop.f32.mrf.mxu0
    %v5090 = vadd.f32 0.0, %v5089
    %5091 = vdwg.mxu0
    %5092 = vmatpush.msra.mxu0 0.0
    %5093 = vmatpush.msra.mxu0 0.0
    %5094 = vmatpush.msra.mxu0 0.0
    %5095 = vmatpush.msra.mxu0 0.0
    %5096 = vmatpush.msra.mxu0 0.0
    %5097 = vmatpush.msra.mxu0 0.0
    %5098 = vmatpush.msra.mxu0 0.0
    %5099 = vmatpush.msra.mxu0 0.0
    %5100 = vmatpush.msra.mxu0 0.0
    %5101 = vmatpush.msra.mxu0 0.0
    %5102 = vmatpush.msra.mxu0 0.0
    %5103 = vmatpush.msra.mxu0 0.0
    %5104 = vmatpush.msra.mxu0 0.0
    %5105 = vmatpush.msra.mxu0 0.0
    %5106 = vmatpush.msra.mxu0 0.0
    %5107 = vmatpush.msra.mxu0 %v5022
    %5108 = vmatmul.f32.gmra.mxu0 %v5030
    %v5109 = vpop.f32.mrf.mxu0
    %v5110 = vadd.f32 0.0, %v5109
    %5111 = vdwg.mxu0
    %5112 = vmatpush.msra.mxu0 0.0
    %5113 = vmatpush.msra.mxu0 0.0
    %5114 = vmatpush.msra.mxu0 0.0
    %5115 = vmatpush.msra.mxu0 0.0
    %5116 = vmatpush.msra.mxu0 0.0
    %5117 = vmatpush.msra.mxu0 0.0
    %5118 = vmatpush.msra.mxu0 0.0
    %5119 = vmatpush.msra.mxu0 0.0
    %5120 = vmatpush.msra.mxu0 0.0
    %5121 = vmatpush.msra.mxu0 0.0
    %5122 = vmatpush.msra.mxu0 0.0
    %5123 = vmatpush.msra.mxu0 0.0
    %5124 = vmatpush.msra.mxu0 0.0
    %5125 = vmatpush.msra.mxu0 0.0
    %5126 = vmatpush.msra.mxu0 0.0
    %5127 = vmatpush.msra.mxu0 %v5023
    %5128 = vmatmul.f32.gmra.mxu0 %v5030
    %v5129 = vpop.f32.mrf.mxu0
    %v5130 = vadd.f32 0.0, %v5129
    %5131 = vdwg.mxu0
    %5132 = vmatpush.msra.mxu0 0.0
    %5133 = vmatpush.msra.mxu0 0.0
    %5134 = vmatpush.msra.mxu0 0.0
    %5135 = vmatpush.msra.mxu0 0.0
    %5136 = vmatpush.msra.mxu0 0.0
    %5137 = vmatpush.msra.mxu0 0.0
    %5138 = vmatpush.msra.mxu0 0.0
    %5139 = vmatpush.msra.mxu0 0.0
    %5140 = vmatpush.msra.mxu0 0.0
    %5141 = vmatpush.msra.mxu0 0.0
    %5142 = vmatpush.msra.mxu0 0.0
    %5143 = vmatpush.msra.mxu0 0.0
    %5144 = vmatpush.msra.mxu0 0.0
    %5145 = vmatpush.msra.mxu0 0.0
    %5146 = vmatpush.msra.mxu0 0.0
    %5147 = vmatpush.msra.mxu0 %v5024
    %5148 = vmatmul.f32.gmra.mxu0 %v5030
    %v5149 = vpop.f32.mrf.mxu0
    %v5150 = vadd.f32 0.0, %v5149
    %5151 = vdwg.mxu0
    %5152 = vmatpush.msra.mxu0 0.0
    %5153 = vmatpush.msra.mxu0 0.0
    %5154 = vmatpush.msra.mxu0 0.0
    %5155 = vmatpush.msra.mxu0 0.0
    %5156 = vmatpush.msra.mxu0 0.0
    %5157 = vmatpush.msra.mxu0 0.0
    %5158 = vmatpush.msra.mxu0 0.0
    %5159 = vmatpush.msra.mxu0 0.0
    %5160 = vmatpush.msra.mxu0 0.0
    %5161 = vmatpush.msra.mxu0 0.0
    %5162 = vmatpush.msra.mxu0 0.0
    %5163 = vmatpush.msra.mxu0 0.0
    %5164 = vmatpush.msra.mxu0 0.0
    %5165 = vmatpush.msra.mxu0 0.0
    %5166 = vmatpush.msra.mxu0 0.0
    %5167 = vmatpush.msra.mxu0 %v5025
    %5168 = vmatmul.f32.gmra.mxu0 %v5030
    %v5169 = vpop.f32.mrf.mxu0
    %v5170 = vadd.f32 0.0, %v5169
    %5171 = vdwg.mxu0
    %5172 = vmatpush.msra.mxu0 0.0
    %5173 = vmatpush.msra.mxu0 0.0
    %5174 = vmatpush.msra.mxu0 0.0
    %5175 = vmatpush.msra.mxu0 0.0
    %5176 = vmatpush.msra.mxu0 0.0
    %5177 = vmatpush.msra.mxu0 0.0
    %5178 = vmatpush.msra.mxu0 0.0
    %5179 = vmatpush.msra.mxu0 0.0
    %5180 = vmatpush.msra.mxu0 0.0
    %5181 = vmatpush.msra.mxu0 0.0
    %5182 = vmatpush.msra.mxu0 0.0
    %5183 = vmatpush.msra.mxu0 0.0
    %5184 = vmatpush.msra.mxu0 0.0
    %5185 = vmatpush.msra.mxu0 0.0
    %5186 = vmatpush.msra.mxu0 0.0
    %5187 = vmatpush.msra.mxu0 %v5026
    %5188 = vmatmul.f32.gmra.mxu0 %v5030
    %v5189 = vpop.f32.mrf.mxu0
    %v5190 = vadd.f32 0.0, %v5189
    %5191 = vdwg.mxu0
    %v5192 = vadd.f32 %v4995, %v5050
    %v5193 = vadd.f32 %v4996, %v5070
    %v5194 = vadd.f32 %v4997, %v5090
    %v5195 = vadd.f32 %v4998, %v5110
    %v5196 = vadd.f32 %v4999, %v5130
    %v5197 = vadd.f32 %v5000, %v5150
    %v5198 = vadd.f32 %v5001, %v5170
    %v5199 = vadd.f32 %v5002, %v5190
    %v5200 = vsel %vm5003, %v1627, 0.0
    %v5201 = vsel %vm5004, %v1626, 0.0
    %v5202 = vsel %vm5005, %v1625, 0.0
    %v5203 = vsel %vm5006, %v1624, 0.0
    %v5204 = vsel %vm5007, %v1623, 0.0
    %v5205 = vsel %vm5008, %v1622, 0.0
    %v5206 = vsel %vm5009, %v1621, 0.0
    %v5207 = vsel %vm5010, %v1628, 0.0
    %s5208 = scalar_lea.vmem %s1, 200
    %v5209 = vld [vmem:[%s5208] sm:$0xff]
    %v5211 = vsel %vm207, %v5209, 0
    %5213 = vmatpush.msra.mxu0 0.0
    %5214 = vmatpush.msra.mxu0 0.0
    %5215 = vmatpush.msra.mxu0 0.0
    %5216 = vmatpush.msra.mxu0 0.0
    %5217 = vmatpush.msra.mxu0 0.0
    %5218 = vmatpush.msra.mxu0 0.0
    %5219 = vmatpush.msra.mxu0 0.0
    %5220 = vmatpush.msra.mxu0 0.0
    %5221 = vmatpush.msra.mxu0 0.0
    %5222 = vmatpush.msra.mxu0 0.0
    %5223 = vmatpush.msra.mxu0 0.0
    %5224 = vmatpush.msra.mxu0 0.0
    %5225 = vmatpush.msra.mxu0 0.0
    %5226 = vmatpush.msra.mxu0 0.0
    %5227 = vmatpush.msra.mxu0 0.0
    %5228 = vmatpush.msra.mxu0 %v5200
    %5229 = vmatmul.f32.gmra.mxu0 %v5211
    %v5230 = vpop.f32.mrf.mxu0
    %v5231 = vadd.f32 0.0, %v5230
    %5232 = vdwg.mxu0
    %5233 = vmatpush.msra.mxu0 0.0
    %5234 = vmatpush.msra.mxu0 0.0
    %5235 = vmatpush.msra.mxu0 0.0
    %5236 = vmatpush.msra.mxu0 0.0
    %5237 = vmatpush.msra.mxu0 0.0
    %5238 = vmatpush.msra.mxu0 0.0
    %5239 = vmatpush.msra.mxu0 0.0
    %5240 = vmatpush.msra.mxu0 0.0
    %5241 = vmatpush.msra.mxu0 0.0
    %5242 = vmatpush.msra.mxu0 0.0
    %5243 = vmatpush.msra.mxu0 0.0
    %5244 = vmatpush.msra.mxu0 0.0
    %5245 = vmatpush.msra.mxu0 0.0
    %5246 = vmatpush.msra.mxu0 0.0
    %5247 = vmatpush.msra.mxu0 0.0
    %5248 = vmatpush.msra.mxu0 %v5201
    %5249 = vmatmul.f32.gmra.mxu0 %v5211
    %v5250 = vpop.f32.mrf.mxu0
    %v5251 = vadd.f32 0.0, %v5250
    %5252 = vdwg.mxu0
    %5253 = vmatpush.msra.mxu0 0.0
    %5254 = vmatpush.msra.mxu0 0.0
    %5255 = vmatpush.msra.mxu0 0.0
    %5256 = vmatpush.msra.mxu0 0.0
    %5257 = vmatpush.msra.mxu0 0.0
    %5258 = vmatpush.msra.mxu0 0.0
    %5259 = vmatpush.msra.mxu0 0.0
    %5260 = vmatpush.msra.mxu0 0.0
    %5261 = vmatpush.msra.mxu0 0.0
    %5262 = vmatpush.msra.mxu0 0.0
    %5263 = vmatpush.msra.mxu0 0.0
    %5264 = vmatpush.msra.mxu0 0.0
    %5265 = vmatpush.msra.mxu0 0.0
    %5266 = vmatpush.msra.mxu0 0.0
    %5267 = vmatpush.msra.mxu0 0.0
    %5268 = vmatpush.msra.mxu0 %v5202
    %5269 = vmatmul.f32.gmra.mxu0 %v5211
    %v5270 = vpop.f32.mrf.mxu0
    %v5271 = vadd.f32 0.0, %v5270
    %5272 = vdwg.mxu0
    %5273 = vmatpush.msra.mxu0 0.0
    %5274 = vmatpush.msra.mxu0 0.0
    %5275 = vmatpush.msra.mxu0 0.0
    %5276 = vmatpush.msra.mxu0 0.0
    %5277 = vmatpush.msra.mxu0 0.0
    %5278 = vmatpush.msra.mxu0 0.0
    %5279 = vmatpush.msra.mxu0 0.0
    %5280 = vmatpush.msra.mxu0 0.0
    %5281 = vmatpush.msra.mxu0 0.0
    %5282 = vmatpush.msra.mxu0 0.0
    %5283 = vmatpush.msra.mxu0 0.0
    %5284 = vmatpush.msra.mxu0 0.0
    %5285 = vmatpush.msra.mxu0 0.0
    %5286 = vmatpush.msra.mxu0 0.0
    %5287 = vmatpush.msra.mxu0 0.0
    %5288 = vmatpush.msra.mxu0 %v5203
    %5289 = vmatmul.f32.gmra.mxu0 %v5211
    %v5290 = vpop.f32.mrf.mxu0
    %v5291 = vadd.f32 0.0, %v5290
    %5292 = vdwg.mxu0
    %5293 = vmatpush.msra.mxu0 0.0
    %5294 = vmatpush.msra.mxu0 0.0
    %5295 = vmatpush.msra.mxu0 0.0
    %5296 = vmatpush.msra.mxu0 0.0
    %5297 = vmatpush.msra.mxu0 0.0
    %5298 = vmatpush.msra.mxu0 0.0
    %5299 = vmatpush.msra.mxu0 0.0
    %5300 = vmatpush.msra.mxu0 0.0
    %5301 = vmatpush.msra.mxu0 0.0
    %5302 = vmatpush.msra.mxu0 0.0
    %5303 = vmatpush.msra.mxu0 0.0
    %5304 = vmatpush.msra.mxu0 0.0
    %5305 = vmatpush.msra.mxu0 0.0
    %5306 = vmatpush.msra.mxu0 0.0
    %5307 = vmatpush.msra.mxu0 0.0
    %5308 = vmatpush.msra.mxu0 %v5204
    %5309 = vmatmul.f32.gmra.mxu0 %v5211
    %v5310 = vpop.f32.mrf.mxu0
    %v5311 = vadd.f32 0.0, %v5310
    %5312 = vdwg.mxu0
    %5313 = vmatpush.msra.mxu0 0.0
    %5314 = vmatpush.msra.mxu0 0.0
    %5315 = vmatpush.msra.mxu0 0.0
    %5316 = vmatpush.msra.mxu0 0.0
    %5317 = vmatpush.msra.mxu0 0.0
    %5318 = vmatpush.msra.mxu0 0.0
    %5319 = vmatpush.msra.mxu0 0.0
    %5320 = vmatpush.msra.mxu0 0.0
    %5321 = vmatpush.msra.mxu0 0.0
    %5322 = vmatpush.msra.mxu0 0.0
    %5323 = vmatpush.msra.mxu0 0.0
    %5324 = vmatpush.msra.mxu0 0.0
    %5325 = vmatpush.msra.mxu0 0.0
    %5326 = vmatpush.msra.mxu0 0.0
    %5327 = vmatpush.msra.mxu0 0.0
    %5328 = vmatpush.msra.mxu0 %v5205
    %5329 = vmatmul.f32.gmra.mxu0 %v5211
    %v5330 = vpop.f32.mrf.mxu0
    %v5331 = vadd.f32 0.0, %v5330
    %5332 = vdwg.mxu0
    %5333 = vmatpush.msra.mxu0 0.0
    %5334 = vmatpush.msra.mxu0 0.0
    %5335 = vmatpush.msra.mxu0 0.0
    %5336 = vmatpush.msra.mxu0 0.0
    %5337 = vmatpush.msra.mxu0 0.0
    %5338 = vmatpush.msra.mxu0 0.0
    %5339 = vmatpush.msra.mxu0 0.0
    %5340 = vmatpush.msra.mxu0 0.0
    %5341 = vmatpush.msra.mxu0 0.0
    %5342 = vmatpush.msra.mxu0 0.0
    %5343 = vmatpush.msra.mxu0 0.0
    %5344 = vmatpush.msra.mxu0 0.0
    %5345 = vmatpush.msra.mxu0 0.0
    %5346 = vmatpush.msra.mxu0 0.0
    %5347 = vmatpush.msra.mxu0 0.0
    %5348 = vmatpush.msra.mxu0 %v5206
    %5349 = vmatmul.f32.gmra.mxu0 %v5211
    %v5350 = vpop.f32.mrf.mxu0
    %v5351 = vadd.f32 0.0, %v5350
    %5352 = vdwg.mxu0
    %5353 = vmatpush.msra.mxu0 0.0
    %5354 = vmatpush.msra.mxu0 0.0
    %5355 = vmatpush.msra.mxu0 0.0
    %5356 = vmatpush.msra.mxu0 0.0
    %5357 = vmatpush.msra.mxu0 0.0
    %5358 = vmatpush.msra.mxu0 0.0
    %5359 = vmatpush.msra.mxu0 0.0
    %5360 = vmatpush.msra.mxu0 0.0
    %5361 = vmatpush.msra.mxu0 0.0
    %5362 = vmatpush.msra.mxu0 0.0
    %5363 = vmatpush.msra.mxu0 0.0
    %5364 = vmatpush.msra.mxu0 0.0
    %5365 = vmatpush.msra.mxu0 0.0
    %5366 = vmatpush.msra.mxu0 0.0
    %5367 = vmatpush.msra.mxu0 0.0
    %5368 = vmatpush.msra.mxu0 %v5207
    %5369 = vmatmul.f32.gmra.mxu0 %v5211
    %v5370 = vpop.f32.mrf.mxu0
    %v5371 = vadd.f32 0.0, %v5370
    %5372 = vdwg.mxu0
    %v5373 = vadd.f32 %v5192, %v5231
    %v5374 = vadd.f32 %v5193, %v5251
    %v5375 = vadd.f32 %v5194, %v5271
    %v5376 = vadd.f32 %v5195, %v5291
    %v5377 = vadd.f32 %v5196, %v5311
    %v5378 = vadd.f32 %v5197, %v5331
    %v5379 = vadd.f32 %v5198, %v5351
    %v5380 = vadd.f32 %v5199, %v5371
    %vm5381 = vmand %vm5003, %vm114
    %vm5382 = vmand %vm5004, %vm115
    %vm5383 = vmand %vm5005, %vm116
    %vm5384 = vmand %vm5006, %vm117
    %vm5385 = vmand %vm5007, %vm118
    %vm5386 = vmand %vm5008, %vm119
    %vm5387 = vmand %vm5009, %vm120
    %vm5388 = vmand %vm5010, %vm121
    %v5389 = vsel %vm5381, %v1833, 0.0
    %v5390 = vsel %vm5382, %v1832, 0.0
    %v5391 = vsel %vm5383, %v1831, 0.0
    %v5392 = vsel %vm5384, %v1830, 0.0
    %v5393 = vsel %vm5385, %v1829, 0.0
    %v5394 = vsel %vm5386, %v1828, 0.0
    %v5395 = vsel %vm5387, %v1827, 0.0
    %v5396 = vsel %vm5388, %v1834, 0.0
    %s5397 = scalar_lea.vmem %s1, 208
    %v5398 = vld [vmem:[%s5397] sm:$0xff]
    %v5400 = vsel %vm207, %v5398, 0
    %5402 = vmatpush.msra.mxu0 0.0
    %5403 = vmatpush.msra.mxu0 0.0
    %5404 = vmatpush.msra.mxu0 0.0
    %5405 = vmatpush.msra.mxu0 0.0
    %5406 = vmatpush.msra.mxu0 0.0
    %5407 = vmatpush.msra.mxu0 0.0
    %5408 = vmatpush.msra.mxu0 0.0
    %5409 = vmatpush.msra.mxu0 0.0
    %5410 = vmatpush.msra.mxu0 0.0
    %5411 = vmatpush.msra.mxu0 0.0
    %5412 = vmatpush.msra.mxu0 0.0
    %5413 = vmatpush.msra.mxu0 0.0
    %5414 = vmatpush.msra.mxu0 0.0
    %5415 = vmatpush.msra.mxu0 0.0
    %5416 = vmatpush.msra.mxu0 0.0
    %5417 = vmatpush.msra.mxu0 %v5389
    %5418 = vmatmul.f32.gmra.mxu0 %v5400
    %v5419 = vpop.f32.mrf.mxu0
    %v5420 = vadd.f32 0.0, %v5419
    %5421 = vdwg.mxu0
    %5422 = vmatpush.msra.mxu0 0.0
    %5423 = vmatpush.msra.mxu0 0.0
    %5424 = vmatpush.msra.mxu0 0.0
    %5425 = vmatpush.msra.mxu0 0.0
    %5426 = vmatpush.msra.mxu0 0.0
    %5427 = vmatpush.msra.mxu0 0.0
    %5428 = vmatpush.msra.mxu0 0.0
    %5429 = vmatpush.msra.mxu0 0.0
    %5430 = vmatpush.msra.mxu0 0.0
    %5431 = vmatpush.msra.mxu0 0.0
    %5432 = vmatpush.msra.mxu0 0.0
    %5433 = vmatpush.msra.mxu0 0.0
    %5434 = vmatpush.msra.mxu0 0.0
    %5435 = vmatpush.msra.mxu0 0.0
    %5436 = vmatpush.msra.mxu0 0.0
    %5437 = vmatpush.msra.mxu0 %v5390
    %5438 = vmatmul.f32.gmra.mxu0 %v5400
    %v5439 = vpop.f32.mrf.mxu0
    %v5440 = vadd.f32 0.0, %v5439
    %5441 = vdwg.mxu0
    %5442 = vmatpush.msra.mxu0 0.0
    %5443 = vmatpush.msra.mxu0 0.0
    %5444 = vmatpush.msra.mxu0 0.0
    %5445 = vmatpush.msra.mxu0 0.0
    %5446 = vmatpush.msra.mxu0 0.0
    %5447 = vmatpush.msra.mxu0 0.0
    %5448 = vmatpush.msra.mxu0 0.0
    %5449 = vmatpush.msra.mxu0 0.0
    %5450 = vmatpush.msra.mxu0 0.0
    %5451 = vmatpush.msra.mxu0 0.0
    %5452 = vmatpush.msra.mxu0 0.0
    %5453 = vmatpush.msra.mxu0 0.0
    %5454 = vmatpush.msra.mxu0 0.0
    %5455 = vmatpush.msra.mxu0 0.0
    %5456 = vmatpush.msra.mxu0 0.0
    %5457 = vmatpush.msra.mxu0 %v5391
    %5458 = vmatmul.f32.gmra.mxu0 %v5400
    %v5459 = vpop.f32.mrf.mxu0
    %v5460 = vadd.f32 0.0, %v5459
    %5461 = vdwg.mxu0
    %5462 = vmatpush.msra.mxu0 0.0
    %5463 = vmatpush.msra.mxu0 0.0
    %5464 = vmatpush.msra.mxu0 0.0
    %5465 = vmatpush.msra.mxu0 0.0
    %5466 = vmatpush.msra.mxu0 0.0
    %5467 = vmatpush.msra.mxu0 0.0
    %5468 = vmatpush.msra.mxu0 0.0
    %5469 = vmatpush.msra.mxu0 0.0
    %5470 = vmatpush.msra.mxu0 0.0
    %5471 = vmatpush.msra.mxu0 0.0
    %5472 = vmatpush.msra.mxu0 0.0
    %5473 = vmatpush.msra.mxu0 0.0
    %5474 = vmatpush.msra.mxu0 0.0
    %5475 = vmatpush.msra.mxu0 0.0
    %5476 = vmatpush.msra.mxu0 0.0
    %5477 = vmatpush.msra.mxu0 %v5392
    %5478 = vmatmul.f32.gmra.mxu0 %v5400
    %v5479 = vpop.f32.mrf.mxu0
    %v5480 = vadd.f32 0.0, %v5479
    %5481 = vdwg.mxu0
    %5482 = vmatpush.msra.mxu0 0.0
    %5483 = vmatpush.msra.mxu0 0.0
    %5484 = vmatpush.msra.mxu0 0.0
    %5485 = vmatpush.msra.mxu0 0.0
    %5486 = vmatpush.msra.mxu0 0.0
    %5487 = vmatpush.msra.mxu0 0.0
    %5488 = vmatpush.msra.mxu0 0.0
    %5489 = vmatpush.msra.mxu0 0.0
    %5490 = vmatpush.msra.mxu0 0.0
    %5491 = vmatpush.msra.mxu0 0.0
    %5492 = vmatpush.msra.mxu0 0.0
    %5493 = vmatpush.msra.mxu0 0.0
    %5494 = vmatpush.msra.mxu0 0.0
    %5495 = vmatpush.msra.mxu0 0.0
    %5496 = vmatpush.msra.mxu0 0.0
    %5497 = vmatpush.msra.mxu0 %v5393
    %5498 = vmatmul.f32.gmra.mxu0 %v5400
    %v5499 = vpop.f32.mrf.mxu0
    %v5500 = vadd.f32 0.0, %v5499
    %5501 = vdwg.mxu0
    %5502 = vmatpush.msra.mxu0 0.0
    %5503 = vmatpush.msra.mxu0 0.0
    %5504 = vmatpush.msra.mxu0 0.0
    %5505 = vmatpush.msra.mxu0 0.0
    %5506 = vmatpush.msra.mxu0 0.0
    %5507 = vmatpush.msra.mxu0 0.0
    %5508 = vmatpush.msra.mxu0 0.0
    %5509 = vmatpush.msra.mxu0 0.0
    %5510 = vmatpush.msra.mxu0 0.0
    %5511 = vmatpush.msra.mxu0 0.0
    %5512 = vmatpush.msra.mxu0 0.0
    %5513 = vmatpush.msra.mxu0 0.0
    %5514 = vmatpush.msra.mxu0 0.0
    %5515 = vmatpush.msra.mxu0 0.0
    %5516 = vmatpush.msra.mxu0 0.0
    %5517 = vmatpush.msra.mxu0 %v5394
    %5518 = vmatmul.f32.gmra.mxu0 %v5400
    %v5519 = vpop.f32.mrf.mxu0
    %v5520 = vadd.f32 0.0, %v5519
    %5521 = vdwg.mxu0
    %5522 = vmatpush.msra.mxu0 0.0
    %5523 = vmatpush.msra.mxu0 0.0
    %5524 = vmatpush.msra.mxu0 0.0
    %5525 = vmatpush.msra.mxu0 0.0
    %5526 = vmatpush.msra.mxu0 0.0
    %5527 = vmatpush.msra.mxu0 0.0
    %5528 = vmatpush.msra.mxu0 0.0
    %5529 = vmatpush.msra.mxu0 0.0
    %5530 = vmatpush.msra.mxu0 0.0
    %5531 = vmatpush.msra.mxu0 0.0
    %5532 = vmatpush.msra.mxu0 0.0
    %5533 = vmatpush.msra.mxu0 0.0
    %5534 = vmatpush.msra.mxu0 0.0
    %5535 = vmatpush.msra.mxu0 0.0
    %5536 = vmatpush.msra.mxu0 0.0
    %5537 = vmatpush.msra.mxu0 %v5395
    %5538 = vmatmul.f32.gmra.mxu0 %v5400
    %v5539 = vpop.f32.mrf.mxu0
    %v5540 = vadd.f32 0.0, %v5539
    %5541 = vdwg.mxu0
    %5542 = vmatpush.msra.mxu0 0.0
    %5543 = vmatpush.msra.mxu0 0.0
    %5544 = vmatpush.msra.mxu0 0.0
    %5545 = vmatpush.msra.mxu0 0.0
    %5546 = vmatpush.msra.mxu0 0.0
    %5547 = vmatpush.msra.mxu0 0.0
    %5548 = vmatpush.msra.mxu0 0.0
    %5549 = vmatpush.msra.mxu0 0.0
    %5550 = vmatpush.msra.mxu0 0.0
    %5551 = vmatpush.msra.mxu0 0.0
    %5552 = vmatpush.msra.mxu0 0.0
    %5553 = vmatpush.msra.mxu0 0.0
    %5554 = vmatpush.msra.mxu0 0.0
    %5555 = vmatpush.msra.mxu0 0.0
    %5556 = vmatpush.msra.mxu0 0.0
    %5557 = vmatpush.msra.mxu0 %v5396
    %5558 = vmatmul.f32.gmra.mxu0 %v5400
    %v5559 = vpop.f32.mrf.mxu0
    %v5560 = vadd.f32 0.0, %v5559
    %5561 = vdwg.mxu0
    %v5562 = vadd.f32 %v5373, %v5420
    %v5563 = vadd.f32 %v5374, %v5440
    %v5564 = vadd.f32 %v5375, %v5460
    %v5565 = vadd.f32 %v5376, %v5480
    %v5566 = vadd.f32 %v5377, %v5500
    %v5567 = vadd.f32 %v5378, %v5520
    %v5568 = vadd.f32 %v5379, %v5540
    %v5569 = vadd.f32 %v5380, %v5560
    %v5570 = vld [vmem:[%s2] sm:$0xff]
    %5572 = vset.pattern.permute.xlu0 0
    %5573 = vperm.xlu0 %5572, %v5570
    %v5574 = vpop.permute.xlu0 %5573
    %v5576 = vadd.f32 %v5562, %v5574
    %v5577 = vadd.f32 %v5563, %v5574
    %v5578 = vadd.f32 %v5564, %v5574
    %v5579 = vadd.f32 %v5565, %v5574
    %v5580 = vadd.f32 %v5566, %v5574
    %v5581 = vadd.f32 %v5567, %v5574
    %v5582 = vadd.f32 %v5568, %v5574
    %v5583 = vadd.f32 %v5569, %v5574
    %v5584 = vmax.f32 %v5576, 0.0
    %v5585 = vmax.f32 %v5577, 0.0
    %v5586 = vmax.f32 %v5578, 0.0
    %v5587 = vmax.f32 %v5579, 0.0
    %v5588 = vmax.f32 %v5580, 0.0
    %v5589 = vmax.f32 %v5581, 0.0
    %v5590 = vmax.f32 %v5582, 0.0
    %v5591 = vmax.f32 %v5583, 0.0
    %5592 = vrot.lane.b32.xlu0 %v5584, 73
    %v5593 = vpop.permute.xlu0 %5592
    %5594 = vrot.lane.b32.xlu0 %v5585, 73
    %v5595 = vpop.permute.xlu0 %5594
    %5596 = vrot.lane.b32.xlu0 %v5586, 73
    %v5597 = vpop.permute.xlu0 %5596
    %5598 = vrot.lane.b32.xlu0 %v5587, 73
    %v5599 = vpop.permute.xlu0 %5598
    %5600 = vrot.lane.b32.xlu0 %v5588, 73
    %v5601 = vpop.permute.xlu0 %5600
    %5602 = vrot.lane.b32.xlu0 %v5589, 73
    %v5603 = vpop.permute.xlu0 %5602
    %5604 = vrot.lane.b32.xlu0 %v5590, 73
    %v5605 = vpop.permute.xlu0 %5604
    %5606 = vrot.lane.b32.xlu0 %v5591, 73
    %v5607 = vpop.permute.xlu0 %5606
    %v5608 = vsel %vm146, %v5605, %v5607
    %v5609 = vsel %vm146, %v5603, %v5605
    %v5610 = vsel %vm146, %v5601, %v5603
    %v5611 = vsel %vm146, %v5599, %v5601
    %v5612 = vsel %vm146, %v5597, %v5599
    %v5613 = vsel %vm146, %v5595, %v5597
    %v5614 = vsel %vm146, %v5593, %v5595
    %v5615 = vsel %vm146, %v5607, %v5593
    %v5616 = vsel %vm155, %v5615, 0.0
    %v5617 = vsel %vm156, %v5614, 0.0
    %v5618 = vsel %vm157, %v5613, 0.0
    %v5619 = vsel %vm158, %v5612, 0.0
    %v5620 = vsel %vm159, %v5611, 0.0
    %v5621 = vsel %vm160, %v5610, 0.0
    %v5622 = vsel %vm161, %v5609, 0.0
    %v5623 = vsel %vm162, %v5608, 0.0
    %v5624 = vld [vmem:[%s3] sm:$0xff]
    %5625 = vrot.lane.b32.xlu0 %v5584, 72
    %v5626 = vpop.permute.xlu0 %5625
    %5627 = vrot.lane.b32.xlu0 %v5585, 72
    %v5628 = vpop.permute.xlu0 %5627
    %5629 = vrot.lane.b32.xlu0 %v5586, 72
    %v5630 = vpop.permute.xlu0 %5629
    %5631 = vrot.lane.b32.xlu0 %v5587, 72
    %v5632 = vpop.permute.xlu0 %5631
    %5633 = vrot.lane.b32.xlu0 %v5588, 72
    %v5634 = vpop.permute.xlu0 %5633
    %5635 = vrot.lane.b32.xlu0 %v5589, 72
    %v5636 = vpop.permute.xlu0 %5635
    %5637 = vrot.lane.b32.xlu0 %v5590, 72
    %v5638 = vpop.permute.xlu0 %5637
    %5639 = vrot.lane.b32.xlu0 %v5591, 72
    %v5640 = vpop.permute.xlu0 %5639
    %v5641 = vsel %vm188, %v5638, %v5640
    %v5642 = vsel %vm188, %v5636, %v5638
    %v5643 = vsel %vm188, %v5634, %v5636
    %v5644 = vsel %vm188, %v5632, %v5634
    %v5645 = vsel %vm188, %v5630, %v5632
    %v5646 = vsel %vm188, %v5628, %v5630
    %v5647 = vsel %vm188, %v5626, %v5628
    %v5648 = vsel %vm188, %v5640, %v5626
    %v5649 = vsel %vm122, %v5648, 0.0
    %v5650 = vsel %vm123, %v5647, 0.0
    %v5651 = vsel %vm124, %v5646, 0.0
    %v5652 = vsel %vm125, %v5645, 0.0
    %v5653 = vsel %vm126, %v5644, 0.0
    %v5654 = vsel %vm127, %v5643, 0.0
    %v5655 = vsel %vm128, %v5642, 0.0
    %v5656 = vsel %vm129, %v5641, 0.0
    %s5657 = scalar_lea.vmem %s3, 8
    %v5658 = vld [vmem:[%s5657] sm:$0xff]
    %v5660 = vsel %vm207, %v5658, 0
    %5662 = vmatpush.msra.mxu0 0.0
    %5663 = vmatpush.msra.mxu0 0.0
    %5664 = vmatpush.msra.mxu0 0.0
    %5665 = vmatpush.msra.mxu0 0.0
    %5666 = vmatpush.msra.mxu0 0.0
    %5667 = vmatpush.msra.mxu0 0.0
    %5668 = vmatpush.msra.mxu0 0.0
    %5669 = vmatpush.msra.mxu0 0.0
    %5670 = vmatpush.msra.mxu0 0.0
    %5671 = vmatpush.msra.mxu0 0.0
    %5672 = vmatpush.msra.mxu0 0.0
    %5673 = vmatpush.msra.mxu0 0.0
    %5674 = vmatpush.msra.mxu0 0.0
    %5675 = vmatpush.msra.mxu0 0.0
    %5676 = vmatpush.msra.mxu0 0.0
    %5677 = vmatpush.msra.mxu0 %v5649
    %5678 = vmatmul.f32.gmra.mxu0 %v5660
    %v5679 = vpop.f32.mrf.mxu0
    %v5680 = vadd.f32 0.0, %v5679
    %5681 = vdwg.mxu0
    %5682 = vmatpush.msra.mxu0 0.0
    %5683 = vmatpush.msra.mxu0 0.0
    %5684 = vmatpush.msra.mxu0 0.0
    %5685 = vmatpush.msra.mxu0 0.0
    %5686 = vmatpush.msra.mxu0 0.0
    %5687 = vmatpush.msra.mxu0 0.0
    %5688 = vmatpush.msra.mxu0 0.0
    %5689 = vmatpush.msra.mxu0 0.0
    %5690 = vmatpush.msra.mxu0 0.0
    %5691 = vmatpush.msra.mxu0 0.0
    %5692 = vmatpush.msra.mxu0 0.0
    %5693 = vmatpush.msra.mxu0 0.0
    %5694 = vmatpush.msra.mxu0 0.0
    %5695 = vmatpush.msra.mxu0 0.0
    %5696 = vmatpush.msra.mxu0 0.0
    %5697 = vmatpush.msra.mxu0 %v5650
    %5698 = vmatmul.f32.gmra.mxu0 %v5660
    %v5699 = vpop.f32.mrf.mxu0
    %v5700 = vadd.f32 0.0, %v5699
    %5701 = vdwg.mxu0
    %5702 = vmatpush.msra.mxu0 0.0
    %5703 = vmatpush.msra.mxu0 0.0
    %5704 = vmatpush.msra.mxu0 0.0
    %5705 = vmatpush.msra.mxu0 0.0
    %5706 = vmatpush.msra.mxu0 0.0
    %5707 = vmatpush.msra.mxu0 0.0
    %5708 = vmatpush.msra.mxu0 0.0
    %5709 = vmatpush.msra.mxu0 0.0
    %5710 = vmatpush.msra.mxu0 0.0
    %5711 = vmatpush.msra.mxu0 0.0
    %5712 = vmatpush.msra.mxu0 0.0
    %5713 = vmatpush.msra.mxu0 0.0
    %5714 = vmatpush.msra.mxu0 0.0
    %5715 = vmatpush.msra.mxu0 0.0
    %5716 = vmatpush.msra.mxu0 0.0
    %5717 = vmatpush.msra.mxu0 %v5651
    %5718 = vmatmul.f32.gmra.mxu0 %v5660
    %v5719 = vpop.f32.mrf.mxu0
    %v5720 = vadd.f32 0.0, %v5719
    %5721 = vdwg.mxu0
    %5722 = vmatpush.msra.mxu0 0.0
    %5723 = vmatpush.msra.mxu0 0.0
    %5724 = vmatpush.msra.mxu0 0.0
    %5725 = vmatpush.msra.mxu0 0.0
    %5726 = vmatpush.msra.mxu0 0.0
    %5727 = vmatpush.msra.mxu0 0.0
    %5728 = vmatpush.msra.mxu0 0.0
    %5729 = vmatpush.msra.mxu0 0.0
    %5730 = vmatpush.msra.mxu0 0.0
    %5731 = vmatpush.msra.mxu0 0.0
    %5732 = vmatpush.msra.mxu0 0.0
    %5733 = vmatpush.msra.mxu0 0.0
    %5734 = vmatpush.msra.mxu0 0.0
    %5735 = vmatpush.msra.mxu0 0.0
    %5736 = vmatpush.msra.mxu0 0.0
    %5737 = vmatpush.msra.mxu0 %v5652
    %5738 = vmatmul.f32.gmra.mxu0 %v5660
    %v5739 = vpop.f32.mrf.mxu0
    %v5740 = vadd.f32 0.0, %v5739
    %5741 = vdwg.mxu0
    %5742 = vmatpush.msra.mxu0 0.0
    %5743 = vmatpush.msra.mxu0 0.0
    %5744 = vmatpush.msra.mxu0 0.0
    %5745 = vmatpush.msra.mxu0 0.0
    %5746 = vmatpush.msra.mxu0 0.0
    %5747 = vmatpush.msra.mxu0 0.0
    %5748 = vmatpush.msra.mxu0 0.0
    %5749 = vmatpush.msra.mxu0 0.0
    %5750 = vmatpush.msra.mxu0 0.0
    %5751 = vmatpush.msra.mxu0 0.0
    %5752 = vmatpush.msra.mxu0 0.0
    %5753 = vmatpush.msra.mxu0 0.0
    %5754 = vmatpush.msra.mxu0 0.0
    %5755 = vmatpush.msra.mxu0 0.0
    %5756 = vmatpush.msra.mxu0 0.0
    %5757 = vmatpush.msra.mxu0 %v5653
    %5758 = vmatmul.f32.gmra.mxu0 %v5660
    %v5759 = vpop.f32.mrf.mxu0
    %v5760 = vadd.f32 0.0, %v5759
    %5761 = vdwg.mxu0
    %5762 = vmatpush.msra.mxu0 0.0
    %5763 = vmatpush.msra.mxu0 0.0
    %5764 = vmatpush.msra.mxu0 0.0
    %5765 = vmatpush.msra.mxu0 0.0
    %5766 = vmatpush.msra.mxu0 0.0
    %5767 = vmatpush.msra.mxu0 0.0
    %5768 = vmatpush.msra.mxu0 0.0
    %5769 = vmatpush.msra.mxu0 0.0
    %5770 = vmatpush.msra.mxu0 0.0
    %5771 = vmatpush.msra.mxu0 0.0
    %5772 = vmatpush.msra.mxu0 0.0
    %5773 = vmatpush.msra.mxu0 0.0
    %5774 = vmatpush.msra.mxu0 0.0
    %5775 = vmatpush.msra.mxu0 0.0
    %5776 = vmatpush.msra.mxu0 0.0
    %5777 = vmatpush.msra.mxu0 %v5654
    %5778 = vmatmul.f32.gmra.mxu0 %v5660
    %v5779 = vpop.f32.mrf.mxu0
    %v5780 = vadd.f32 0.0, %v5779
    %5781 = vdwg.mxu0
    %5782 = vmatpush.msra.mxu0 0.0
    %5783 = vmatpush.msra.mxu0 0.0
    %5784 = vmatpush.msra.mxu0 0.0
    %5785 = vmatpush.msra.mxu0 0.0
    %5786 = vmatpush.msra.mxu0 0.0
    %5787 = vmatpush.msra.mxu0 0.0
    %5788 = vmatpush.msra.mxu0 0.0
    %5789 = vmatpush.msra.mxu0 0.0
    %5790 = vmatpush.msra.mxu0 0.0
    %5791 = vmatpush.msra.mxu0 0.0
    %5792 = vmatpush.msra.mxu0 0.0
    %5793 = vmatpush.msra.mxu0 0.0
    %5794 = vmatpush.msra.mxu0 0.0
    %5795 = vmatpush.msra.mxu0 0.0
    %5796 = vmatpush.msra.mxu0 0.0
    %5797 = vmatpush.msra.mxu0 %v5655
    %5798 = vmatmul.f32.gmra.mxu0 %v5660
    %v5799 = vpop.f32.mrf.mxu0
    %v5800 = vadd.f32 0.0, %v5799
    %5801 = vdwg.mxu0
    %5802 = vmatpush.msra.mxu0 0.0
    %5803 = vmatpush.msra.mxu0 0.0
    %5804 = vmatpush.msra.mxu0 0.0
    %5805 = vmatpush.msra.mxu0 0.0
    %5806 = vmatpush.msra.mxu0 0.0
    %5807 = vmatpush.msra.mxu0 0.0
    %5808 = vmatpush.msra.mxu0 0.0
    %5809 = vmatpush.msra.mxu0 0.0
    %5810 = vmatpush.msra.mxu0 0.0
    %5811 = vmatpush.msra.mxu0 0.0
    %5812 = vmatpush.msra.mxu0 0.0
    %5813 = vmatpush.msra.mxu0 0.0
    %5814 = vmatpush.msra.mxu0 0.0
    %5815 = vmatpush.msra.mxu0 0.0
    %5816 = vmatpush.msra.mxu0 0.0
    %5817 = vmatpush.msra.mxu0 %v5656
    %5818 = vmatmul.f32.gmra.mxu0 %v5660
    %v5819 = vpop.f32.mrf.mxu0
    %v5820 = vadd.f32 0.0, %v5819
    %5821 = vdwg.mxu0
    %v5823 = vsel %vm207, %v5624, 0
    %5825 = vmatpush.msra.mxu0 0.0
    %5826 = vmatpush.msra.mxu0 0.0
    %5827 = vmatpush.msra.mxu0 0.0
    %5828 = vmatpush.msra.mxu0 0.0
    %5829 = vmatpush.msra.mxu0 0.0
    %5830 = vmatpush.msra.mxu0 0.0
    %5831 = vmatpush.msra.mxu0 0.0
    %5832 = vmatpush.msra.mxu0 0.0
    %5833 = vmatpush.msra.mxu0 0.0
    %5834 = vmatpush.msra.mxu0 0.0
    %5835 = vmatpush.msra.mxu0 0.0
    %5836 = vmatpush.msra.mxu0 0.0
    %5837 = vmatpush.msra.mxu0 0.0
    %5838 = vmatpush.msra.mxu0 0.0
    %5839 = vmatpush.msra.mxu0 0.0
    %5840 = vmatpush.msra.mxu0 %v5616
    %5841 = vmatmul.f32.gmra.mxu0 %v5823
    %v5842 = vpop.f32.mrf.mxu0
    %v5843 = vadd.f32 %v5680, %v5842
    %5844 = vdwg.mxu0
    %5845 = vmatpush.msra.mxu0 0.0
    %5846 = vmatpush.msra.mxu0 0.0
    %5847 = vmatpush.msra.mxu0 0.0
    %5848 = vmatpush.msra.mxu0 0.0
    %5849 = vmatpush.msra.mxu0 0.0
    %5850 = vmatpush.msra.mxu0 0.0
    %5851 = vmatpush.msra.mxu0 0.0
    %5852 = vmatpush.msra.mxu0 0.0
    %5853 = vmatpush.msra.mxu0 0.0
    %5854 = vmatpush.msra.mxu0 0.0
    %5855 = vmatpush.msra.mxu0 0.0
    %5856 = vmatpush.msra.mxu0 0.0
    %5857 = vmatpush.msra.mxu0 0.0
    %5858 = vmatpush.msra.mxu0 0.0
    %5859 = vmatpush.msra.mxu0 0.0
    %5860 = vmatpush.msra.mxu0 %v5617
    %5861 = vmatmul.f32.gmra.mxu0 %v5823
    %v5862 = vpop.f32.mrf.mxu0
    %v5863 = vadd.f32 %v5700, %v5862
    %5864 = vdwg.mxu0
    %5865 = vmatpush.msra.mxu0 0.0
    %5866 = vmatpush.msra.mxu0 0.0
    %5867 = vmatpush.msra.mxu0 0.0
    %5868 = vmatpush.msra.mxu0 0.0
    %5869 = vmatpush.msra.mxu0 0.0
    %5870 = vmatpush.msra.mxu0 0.0
    %5871 = vmatpush.msra.mxu0 0.0
    %5872 = vmatpush.msra.mxu0 0.0
    %5873 = vmatpush.msra.mxu0 0.0
    %5874 = vmatpush.msra.mxu0 0.0
    %5875 = vmatpush.msra.mxu0 0.0
    %5876 = vmatpush.msra.mxu0 0.0
    %5877 = vmatpush.msra.mxu0 0.0
    %5878 = vmatpush.msra.mxu0 0.0
    %5879 = vmatpush.msra.mxu0 0.0
    %5880 = vmatpush.msra.mxu0 %v5618
    %5881 = vmatmul.f32.gmra.mxu0 %v5823
    %v5882 = vpop.f32.mrf.mxu0
    %v5883 = vadd.f32 %v5720, %v5882
    %5884 = vdwg.mxu0
    %5885 = vmatpush.msra.mxu0 0.0
    %5886 = vmatpush.msra.mxu0 0.0
    %5887 = vmatpush.msra.mxu0 0.0
    %5888 = vmatpush.msra.mxu0 0.0
    %5889 = vmatpush.msra.mxu0 0.0
    %5890 = vmatpush.msra.mxu0 0.0
    %5891 = vmatpush.msra.mxu0 0.0
    %5892 = vmatpush.msra.mxu0 0.0
    %5893 = vmatpush.msra.mxu0 0.0
    %5894 = vmatpush.msra.mxu0 0.0
    %5895 = vmatpush.msra.mxu0 0.0
    %5896 = vmatpush.msra.mxu0 0.0
    %5897 = vmatpush.msra.mxu0 0.0
    %5898 = vmatpush.msra.mxu0 0.0
    %5899 = vmatpush.msra.mxu0 0.0
    %5900 = vmatpush.msra.mxu0 %v5619
    %5901 = vmatmul.f32.gmra.mxu0 %v5823
    %v5902 = vpop.f32.mrf.mxu0
    %v5903 = vadd.f32 %v5740, %v5902
    %5904 = vdwg.mxu0
    %5905 = vmatpush.msra.mxu0 0.0
    %5906 = vmatpush.msra.mxu0 0.0
    %5907 = vmatpush.msra.mxu0 0.0
    %5908 = vmatpush.msra.mxu0 0.0
    %5909 = vmatpush.msra.mxu0 0.0
    %5910 = vmatpush.msra.mxu0 0.0
    %5911 = vmatpush.msra.mxu0 0.0
    %5912 = vmatpush.msra.mxu0 0.0
    %5913 = vmatpush.msra.mxu0 0.0
    %5914 = vmatpush.msra.mxu0 0.0
    %5915 = vmatpush.msra.mxu0 0.0
    %5916 = vmatpush.msra.mxu0 0.0
    %5917 = vmatpush.msra.mxu0 0.0
    %5918 = vmatpush.msra.mxu0 0.0
    %5919 = vmatpush.msra.mxu0 0.0
    %5920 = vmatpush.msra.mxu0 %v5620
    %5921 = vmatmul.f32.gmra.mxu0 %v5823
    %v5922 = vpop.f32.mrf.mxu0
    %v5923 = vadd.f32 %v5760, %v5922
    %5924 = vdwg.mxu0
    %5925 = vmatpush.msra.mxu0 0.0
    %5926 = vmatpush.msra.mxu0 0.0
    %5927 = vmatpush.msra.mxu0 0.0
    %5928 = vmatpush.msra.mxu0 0.0
    %5929 = vmatpush.msra.mxu0 0.0
    %5930 = vmatpush.msra.mxu0 0.0
    %5931 = vmatpush.msra.mxu0 0.0
    %5932 = vmatpush.msra.mxu0 0.0
    %5933 = vmatpush.msra.mxu0 0.0
    %5934 = vmatpush.msra.mxu0 0.0
    %5935 = vmatpush.msra.mxu0 0.0
    %5936 = vmatpush.msra.mxu0 0.0
    %5937 = vmatpush.msra.mxu0 0.0
    %5938 = vmatpush.msra.mxu0 0.0
    %5939 = vmatpush.msra.mxu0 0.0
    %5940 = vmatpush.msra.mxu0 %v5621
    %5941 = vmatmul.f32.gmra.mxu0 %v5823
    %v5942 = vpop.f32.mrf.mxu0
    %v5943 = vadd.f32 %v5780, %v5942
    %5944 = vdwg.mxu0
    %5945 = vmatpush.msra.mxu0 0.0
    %5946 = vmatpush.msra.mxu0 0.0
    %5947 = vmatpush.msra.mxu0 0.0
    %5948 = vmatpush.msra.mxu0 0.0
    %5949 = vmatpush.msra.mxu0 0.0
    %5950 = vmatpush.msra.mxu0 0.0
    %5951 = vmatpush.msra.mxu0 0.0
    %5952 = vmatpush.msra.mxu0 0.0
    %5953 = vmatpush.msra.mxu0 0.0
    %5954 = vmatpush.msra.mxu0 0.0
    %5955 = vmatpush.msra.mxu0 0.0
    %5956 = vmatpush.msra.mxu0 0.0
    %5957 = vmatpush.msra.mxu0 0.0
    %5958 = vmatpush.msra.mxu0 0.0
    %5959 = vmatpush.msra.mxu0 0.0
    %5960 = vmatpush.msra.mxu0 %v5622
    %5961 = vmatmul.f32.gmra.mxu0 %v5823
    %v5962 = vpop.f32.mrf.mxu0
    %v5963 = vadd.f32 %v5800, %v5962
    %5964 = vdwg.mxu0
    %5965 = vmatpush.msra.mxu0 0.0
    %5966 = vmatpush.msra.mxu0 0.0
    %5967 = vmatpush.msra.mxu0 0.0
    %5968 = vmatpush.msra.mxu0 0.0
    %5969 = vmatpush.msra.mxu0 0.0
    %5970 = vmatpush.msra.mxu0 0.0
    %5971 = vmatpush.msra.mxu0 0.0
    %5972 = vmatpush.msra.mxu0 0.0
    %5973 = vmatpush.msra.mxu0 0.0
    %5974 = vmatpush.msra.mxu0 0.0
    %5975 = vmatpush.msra.mxu0 0.0
    %5976 = vmatpush.msra.mxu0 0.0
    %5977 = vmatpush.msra.mxu0 0.0
    %5978 = vmatpush.msra.mxu0 0.0
    %5979 = vmatpush.msra.mxu0 0.0
    %5980 = vmatpush.msra.mxu0 %v5623
    %5981 = vmatmul.f32.gmra.mxu0 %v5823
    %v5982 = vpop.f32.mrf.mxu0
    %v5983 = vadd.f32 %v5820, %v5982
    %5984 = vdwg.mxu0
    %5985 = vrot.lane.b32.xlu0 %v5584, 71
    %v5986 = vpop.permute.xlu0 %5985
    %5987 = vrot.lane.b32.xlu0 %v5585, 71
    %v5988 = vpop.permute.xlu0 %5987
    %5989 = vrot.lane.b32.xlu0 %v5586, 71
    %v5990 = vpop.permute.xlu0 %5989
    %5991 = vrot.lane.b32.xlu0 %v5587, 71
    %v5992 = vpop.permute.xlu0 %5991
    %5993 = vrot.lane.b32.xlu0 %v5588, 71
    %v5994 = vpop.permute.xlu0 %5993
    %5995 = vrot.lane.b32.xlu0 %v5589, 71
    %v5996 = vpop.permute.xlu0 %5995
    %5997 = vrot.lane.b32.xlu0 %v5590, 71
    %v5998 = vpop.permute.xlu0 %5997
    %5999 = vrot.lane.b32.xlu0 %v5591, 71
    %v6000 = vpop.permute.xlu0 %5999
    %v6001 = vsel %vm550, %v5998, %v6000
    %v6002 = vsel %vm550, %v5996, %v5998
    %v6003 = vsel %vm550, %v5994, %v5996
    %v6004 = vsel %vm550, %v5992, %v5994
    %v6005 = vsel %vm550, %v5990, %v5992
    %v6006 = vsel %vm550, %v5988, %v5990
    %v6007 = vsel %vm550, %v5986, %v5988
    %v6008 = vsel %vm550, %v6000, %v5986
    %v6009 = vsel %vm559, %v6008, 0.0
    %v6010 = vsel %vm560, %v6007, 0.0
    %v6011 = vsel %vm561, %v6006, 0.0
    %v6012 = vsel %vm562, %v6005, 0.0
    %v6013 = vsel %vm563, %v6004, 0.0
    %v6014 = vsel %vm564, %v6003, 0.0
    %v6015 = vsel %vm565, %v6002, 0.0
    %v6016 = vsel %vm566, %v6001, 0.0
    %s6017 = scalar_lea.vmem %s3, 16
    %v6018 = vld [vmem:[%s6017] sm:$0xff]
    %v6020 = vsel %vm207, %v6018, 0
    %6022 = vmatpush.msra.mxu0 0.0
    %6023 = vmatpush.msra.mxu0 0.0
    %6024 = vmatpush.msra.mxu0 0.0
    %6025 = vmatpush.msra.mxu0 0.0
    %6026 = vmatpush.msra.mxu0 0.0
    %6027 = vmatpush.msra.mxu0 0.0
    %6028 = vmatpush.msra.mxu0 0.0
    %6029 = vmatpush.msra.mxu0 0.0
    %6030 = vmatpush.msra.mxu0 0.0
    %6031 = vmatpush.msra.mxu0 0.0
    %6032 = vmatpush.msra.mxu0 0.0
    %6033 = vmatpush.msra.mxu0 0.0
    %6034 = vmatpush.msra.mxu0 0.0
    %6035 = vmatpush.msra.mxu0 0.0
    %6036 = vmatpush.msra.mxu0 0.0
    %6037 = vmatpush.msra.mxu0 %v6009
    %6038 = vmatmul.f32.gmra.mxu0 %v6020
    %v6039 = vpop.f32.mrf.mxu0
    %v6040 = vadd.f32 0.0, %v6039
    %6041 = vdwg.mxu0
    %6042 = vmatpush.msra.mxu0 0.0
    %6043 = vmatpush.msra.mxu0 0.0
    %6044 = vmatpush.msra.mxu0 0.0
    %6045 = vmatpush.msra.mxu0 0.0
    %6046 = vmatpush.msra.mxu0 0.0
    %6047 = vmatpush.msra.mxu0 0.0
    %6048 = vmatpush.msra.mxu0 0.0
    %6049 = vmatpush.msra.mxu0 0.0
    %6050 = vmatpush.msra.mxu0 0.0
    %6051 = vmatpush.msra.mxu0 0.0
    %6052 = vmatpush.msra.mxu0 0.0
    %6053 = vmatpush.msra.mxu0 0.0
    %6054 = vmatpush.msra.mxu0 0.0
    %6055 = vmatpush.msra.mxu0 0.0
    %6056 = vmatpush.msra.mxu0 0.0
    %6057 = vmatpush.msra.mxu0 %v6010
    %6058 = vmatmul.f32.gmra.mxu0 %v6020
    %v6059 = vpop.f32.mrf.mxu0
    %v6060 = vadd.f32 0.0, %v6059
    %6061 = vdwg.mxu0
    %6062 = vmatpush.msra.mxu0 0.0
    %6063 = vmatpush.msra.mxu0 0.0
    %6064 = vmatpush.msra.mxu0 0.0
    %6065 = vmatpush.msra.mxu0 0.0
    %6066 = vmatpush.msra.mxu0 0.0
    %6067 = vmatpush.msra.mxu0 0.0
    %6068 = vmatpush.msra.mxu0 0.0
    %6069 = vmatpush.msra.mxu0 0.0
    %6070 = vmatpush.msra.mxu0 0.0
    %6071 = vmatpush.msra.mxu0 0.0
    %6072 = vmatpush.msra.mxu0 0.0
    %6073 = vmatpush.msra.mxu0 0.0
    %6074 = vmatpush.msra.mxu0 0.0
    %6075 = vmatpush.msra.mxu0 0.0
    %6076 = vmatpush.msra.mxu0 0.0
    %6077 = vmatpush.msra.mxu0 %v6011
    %6078 = vmatmul.f32.gmra.mxu0 %v6020
    %v6079 = vpop.f32.mrf.mxu0
    %v6080 = vadd.f32 0.0, %v6079
    %6081 = vdwg.mxu0
    %6082 = vmatpush.msra.mxu0 0.0
    %6083 = vmatpush.msra.mxu0 0.0
    %6084 = vmatpush.msra.mxu0 0.0
    %6085 = vmatpush.msra.mxu0 0.0
    %6086 = vmatpush.msra.mxu0 0.0
    %6087 = vmatpush.msra.mxu0 0.0
    %6088 = vmatpush.msra.mxu0 0.0
    %6089 = vmatpush.msra.mxu0 0.0
    %6090 = vmatpush.msra.mxu0 0.0
    %6091 = vmatpush.msra.mxu0 0.0
    %6092 = vmatpush.msra.mxu0 0.0
    %6093 = vmatpush.msra.mxu0 0.0
    %6094 = vmatpush.msra.mxu0 0.0
    %6095 = vmatpush.msra.mxu0 0.0
    %6096 = vmatpush.msra.mxu0 0.0
    %6097 = vmatpush.msra.mxu0 %v6012
    %6098 = vmatmul.f32.gmra.mxu0 %v6020
    %v6099 = vpop.f32.mrf.mxu0
    %v6100 = vadd.f32 0.0, %v6099
    %6101 = vdwg.mxu0
    %6102 = vmatpush.msra.mxu0 0.0
    %6103 = vmatpush.msra.mxu0 0.0
    %6104 = vmatpush.msra.mxu0 0.0
    %6105 = vmatpush.msra.mxu0 0.0
    %6106 = vmatpush.msra.mxu0 0.0
    %6107 = vmatpush.msra.mxu0 0.0
    %6108 = vmatpush.msra.mxu0 0.0
    %6109 = vmatpush.msra.mxu0 0.0
    %6110 = vmatpush.msra.mxu0 0.0
    %6111 = vmatpush.msra.mxu0 0.0
    %6112 = vmatpush.msra.mxu0 0.0
    %6113 = vmatpush.msra.mxu0 0.0
    %6114 = vmatpush.msra.mxu0 0.0
    %6115 = vmatpush.msra.mxu0 0.0
    %6116 = vmatpush.msra.mxu0 0.0
    %6117 = vmatpush.msra.mxu0 %v6013
    %6118 = vmatmul.f32.gmra.mxu0 %v6020
    %v6119 = vpop.f32.mrf.mxu0
    %v6120 = vadd.f32 0.0, %v6119
    %6121 = vdwg.mxu0
    %6122 = vmatpush.msra.mxu0 0.0
    %6123 = vmatpush.msra.mxu0 0.0
    %6124 = vmatpush.msra.mxu0 0.0
    %6125 = vmatpush.msra.mxu0 0.0
    %6126 = vmatpush.msra.mxu0 0.0
    %6127 = vmatpush.msra.mxu0 0.0
    %6128 = vmatpush.msra.mxu0 0.0
    %6129 = vmatpush.msra.mxu0 0.0
    %6130 = vmatpush.msra.mxu0 0.0
    %6131 = vmatpush.msra.mxu0 0.0
    %6132 = vmatpush.msra.mxu0 0.0
    %6133 = vmatpush.msra.mxu0 0.0
    %6134 = vmatpush.msra.mxu0 0.0
    %6135 = vmatpush.msra.mxu0 0.0
    %6136 = vmatpush.msra.mxu0 0.0
    %6137 = vmatpush.msra.mxu0 %v6014
    %6138 = vmatmul.f32.gmra.mxu0 %v6020
    %v6139 = vpop.f32.mrf.mxu0
    %v6140 = vadd.f32 0.0, %v6139
    %6141 = vdwg.mxu0
    %6142 = vmatpush.msra.mxu0 0.0
    %6143 = vmatpush.msra.mxu0 0.0
    %6144 = vmatpush.msra.mxu0 0.0
    %6145 = vmatpush.msra.mxu0 0.0
    %6146 = vmatpush.msra.mxu0 0.0
    %6147 = vmatpush.msra.mxu0 0.0
    %6148 = vmatpush.msra.mxu0 0.0
    %6149 = vmatpush.msra.mxu0 0.0
    %6150 = vmatpush.msra.mxu0 0.0
    %6151 = vmatpush.msra.mxu0 0.0
    %6152 = vmatpush.msra.mxu0 0.0
    %6153 = vmatpush.msra.mxu0 0.0
    %6154 = vmatpush.msra.mxu0 0.0
    %6155 = vmatpush.msra.mxu0 0.0
    %6156 = vmatpush.msra.mxu0 0.0
    %6157 = vmatpush.msra.mxu0 %v6015
    %6158 = vmatmul.f32.gmra.mxu0 %v6020
    %v6159 = vpop.f32.mrf.mxu0
    %v6160 = vadd.f32 0.0, %v6159
    %6161 = vdwg.mxu0
    %6162 = vmatpush.msra.mxu0 0.0
    %6163 = vmatpush.msra.mxu0 0.0
    %6164 = vmatpush.msra.mxu0 0.0
    %6165 = vmatpush.msra.mxu0 0.0
    %6166 = vmatpush.msra.mxu0 0.0
    %6167 = vmatpush.msra.mxu0 0.0
    %6168 = vmatpush.msra.mxu0 0.0
    %6169 = vmatpush.msra.mxu0 0.0
    %6170 = vmatpush.msra.mxu0 0.0
    %6171 = vmatpush.msra.mxu0 0.0
    %6172 = vmatpush.msra.mxu0 0.0
    %6173 = vmatpush.msra.mxu0 0.0
    %6174 = vmatpush.msra.mxu0 0.0
    %6175 = vmatpush.msra.mxu0 0.0
    %6176 = vmatpush.msra.mxu0 0.0
    %6177 = vmatpush.msra.mxu0 %v6016
    %6178 = vmatmul.f32.gmra.mxu0 %v6020
    %v6179 = vpop.f32.mrf.mxu0
    %v6180 = vadd.f32 0.0, %v6179
    %6181 = vdwg.mxu0
    %v6182 = vadd.f32 %v5843, %v6040
    %v6183 = vadd.f32 %v5863, %v6060
    %v6184 = vadd.f32 %v5883, %v6080
    %v6185 = vadd.f32 %v5903, %v6100
    %v6186 = vadd.f32 %v5923, %v6120
    %v6187 = vadd.f32 %v5943, %v6140
    %v6188 = vadd.f32 %v5963, %v6160
    %v6189 = vadd.f32 %v5983, %v6180
    %6190 = vrot.lane.b32.xlu0 %v5584, 65
    %v6191 = vpop.permute.xlu0 %6190
    %6192 = vrot.lane.b32.xlu0 %v5585, 65
    %v6193 = vpop.permute.xlu0 %6192
    %6194 = vrot.lane.b32.xlu0 %v5586, 65
    %v6195 = vpop.permute.xlu0 %6194
    %6196 = vrot.lane.b32.xlu0 %v5587, 65
    %v6197 = vpop.permute.xlu0 %6196
    %6198 = vrot.lane.b32.xlu0 %v5588, 65
    %v6199 = vpop.permute.xlu0 %6198
    %6200 = vrot.lane.b32.xlu0 %v5589, 65
    %v6201 = vpop.permute.xlu0 %6200
    %6202 = vrot.lane.b32.xlu0 %v5590, 65
    %v6203 = vpop.permute.xlu0 %6202
    %6204 = vrot.lane.b32.xlu0 %v5591, 65
    %v6205 = vpop.permute.xlu0 %6204
    %v6206 = vsel %vm764, %v6203, %v6205
    %v6207 = vsel %vm764, %v6201, %v6203
    %v6208 = vsel %vm764, %v6199, %v6201
    %v6209 = vsel %vm764, %v6197, %v6199
    %v6210 = vsel %vm764, %v6195, %v6197
    %v6211 = vsel %vm764, %v6193, %v6195
    %v6212 = vsel %vm764, %v6191, %v6193
    %v6213 = vsel %vm764, %v6205, %v6191
    %v6214 = vsel %vm773, %v6213, 0.0
    %v6215 = vsel %vm774, %v6212, 0.0
    %v6216 = vsel %vm775, %v6211, 0.0
    %v6217 = vsel %vm776, %v6210, 0.0
    %v6218 = vsel %vm777, %v6209, 0.0
    %v6219 = vsel %vm778, %v6208, 0.0
    %v6220 = vsel %vm779, %v6207, 0.0
    %v6221 = vsel %vm780, %v6206, 0.0
    %s6222 = scalar_lea.vmem %s3, 24
    %v6223 = vld [vmem:[%s6222] sm:$0xff]
    %v6225 = vsel %vm207, %v6223, 0
    %6227 = vmatpush.msra.mxu0 0.0
    %6228 = vmatpush.msra.mxu0 0.0
    %6229 = vmatpush.msra.mxu0 0.0
    %6230 = vmatpush.msra.mxu0 0.0
    %6231 = vmatpush.msra.mxu0 0.0
    %6232 = vmatpush.msra.mxu0 0.0
    %6233 = vmatpush.msra.mxu0 0.0
    %6234 = vmatpush.msra.mxu0 0.0
    %6235 = vmatpush.msra.mxu0 0.0
    %6236 = vmatpush.msra.mxu0 0.0
    %6237 = vmatpush.msra.mxu0 0.0
    %6238 = vmatpush.msra.mxu0 0.0
    %6239 = vmatpush.msra.mxu0 0.0
    %6240 = vmatpush.msra.mxu0 0.0
    %6241 = vmatpush.msra.mxu0 0.0
    %6242 = vmatpush.msra.mxu0 %v6214
    %6243 = vmatmul.f32.gmra.mxu0 %v6225
    %v6244 = vpop.f32.mrf.mxu0
    %v6245 = vadd.f32 0.0, %v6244
    %6246 = vdwg.mxu0
    %6247 = vmatpush.msra.mxu0 0.0
    %6248 = vmatpush.msra.mxu0 0.0
    %6249 = vmatpush.msra.mxu0 0.0
    %6250 = vmatpush.msra.mxu0 0.0
    %6251 = vmatpush.msra.mxu0 0.0
    %6252 = vmatpush.msra.mxu0 0.0
    %6253 = vmatpush.msra.mxu0 0.0
    %6254 = vmatpush.msra.mxu0 0.0
    %6255 = vmatpush.msra.mxu0 0.0
    %6256 = vmatpush.msra.mxu0 0.0
    %6257 = vmatpush.msra.mxu0 0.0
    %6258 = vmatpush.msra.mxu0 0.0
    %6259 = vmatpush.msra.mxu0 0.0
    %6260 = vmatpush.msra.mxu0 0.0
    %6261 = vmatpush.msra.mxu0 0.0
    %6262 = vmatpush.msra.mxu0 %v6215
    %6263 = vmatmul.f32.gmra.mxu0 %v6225
    %v6264 = vpop.f32.mrf.mxu0
    %v6265 = vadd.f32 0.0, %v6264
    %6266 = vdwg.mxu0
    %6267 = vmatpush.msra.mxu0 0.0
    %6268 = vmatpush.msra.mxu0 0.0
    %6269 = vmatpush.msra.mxu0 0.0
    %6270 = vmatpush.msra.mxu0 0.0
    %6271 = vmatpush.msra.mxu0 0.0
    %6272 = vmatpush.msra.mxu0 0.0
    %6273 = vmatpush.msra.mxu0 0.0
    %6274 = vmatpush.msra.mxu0 0.0
    %6275 = vmatpush.msra.mxu0 0.0
    %6276 = vmatpush.msra.mxu0 0.0
    %6277 = vmatpush.msra.mxu0 0.0
    %6278 = vmatpush.msra.mxu0 0.0
    %6279 = vmatpush.msra.mxu0 0.0
    %6280 = vmatpush.msra.mxu0 0.0
    %6281 = vmatpush.msra.mxu0 0.0
    %6282 = vmatpush.msra.mxu0 %v6216
    %6283 = vmatmul.f32.gmra.mxu0 %v6225
    %v6284 = vpop.f32.mrf.mxu0
    %v6285 = vadd.f32 0.0, %v6284
    %6286 = vdwg.mxu0
    %6287 = vmatpush.msra.mxu0 0.0
    %6288 = vmatpush.msra.mxu0 0.0
    %6289 = vmatpush.msra.mxu0 0.0
    %6290 = vmatpush.msra.mxu0 0.0
    %6291 = vmatpush.msra.mxu0 0.0
    %6292 = vmatpush.msra.mxu0 0.0
    %6293 = vmatpush.msra.mxu0 0.0
    %6294 = vmatpush.msra.mxu0 0.0
    %6295 = vmatpush.msra.mxu0 0.0
    %6296 = vmatpush.msra.mxu0 0.0
    %6297 = vmatpush.msra.mxu0 0.0
    %6298 = vmatpush.msra.mxu0 0.0
    %6299 = vmatpush.msra.mxu0 0.0
    %6300 = vmatpush.msra.mxu0 0.0
    %6301 = vmatpush.msra.mxu0 0.0
    %6302 = vmatpush.msra.mxu0 %v6217
    %6303 = vmatmul.f32.gmra.mxu0 %v6225
    %v6304 = vpop.f32.mrf.mxu0
    %v6305 = vadd.f32 0.0, %v6304
    %6306 = vdwg.mxu0
    %6307 = vmatpush.msra.mxu0 0.0
    %6308 = vmatpush.msra.mxu0 0.0
    %6309 = vmatpush.msra.mxu0 0.0
    %6310 = vmatpush.msra.mxu0 0.0
    %6311 = vmatpush.msra.mxu0 0.0
    %6312 = vmatpush.msra.mxu0 0.0
    %6313 = vmatpush.msra.mxu0 0.0
    %6314 = vmatpush.msra.mxu0 0.0
    %6315 = vmatpush.msra.mxu0 0.0
    %6316 = vmatpush.msra.mxu0 0.0
    %6317 = vmatpush.msra.mxu0 0.0
    %6318 = vmatpush.msra.mxu0 0.0
    %6319 = vmatpush.msra.mxu0 0.0
    %6320 = vmatpush.msra.mxu0 0.0
    %6321 = vmatpush.msra.mxu0 0.0
    %6322 = vmatpush.msra.mxu0 %v6218
    %6323 = vmatmul.f32.gmra.mxu0 %v6225
    %v6324 = vpop.f32.mrf.mxu0
    %v6325 = vadd.f32 0.0, %v6324
    %6326 = vdwg.mxu0
    %6327 = vmatpush.msra.mxu0 0.0
    %6328 = vmatpush.msra.mxu0 0.0
    %6329 = vmatpush.msra.mxu0 0.0
    %6330 = vmatpush.msra.mxu0 0.0
    %6331 = vmatpush.msra.mxu0 0.0
    %6332 = vmatpush.msra.mxu0 0.0
    %6333 = vmatpush.msra.mxu0 0.0
    %6334 = vmatpush.msra.mxu0 0.0
    %6335 = vmatpush.msra.mxu0 0.0
    %6336 = vmatpush.msra.mxu0 0.0
    %6337 = vmatpush.msra.mxu0 0.0
    %6338 = vmatpush.msra.mxu0 0.0
    %6339 = vmatpush.msra.mxu0 0.0
    %6340 = vmatpush.msra.mxu0 0.0
    %6341 = vmatpush.msra.mxu0 0.0
    %6342 = vmatpush.msra.mxu0 %v6219
    %6343 = vmatmul.f32.gmra.mxu0 %v6225
    %v6344 = vpop.f32.mrf.mxu0
    %v6345 = vadd.f32 0.0, %v6344
    %6346 = vdwg.mxu0
    %6347 = vmatpush.msra.mxu0 0.0
    %6348 = vmatpush.msra.mxu0 0.0
    %6349 = vmatpush.msra.mxu0 0.0
    %6350 = vmatpush.msra.mxu0 0.0
    %6351 = vmatpush.msra.mxu0 0.0
    %6352 = vmatpush.msra.mxu0 0.0
    %6353 = vmatpush.msra.mxu0 0.0
    %6354 = vmatpush.msra.mxu0 0.0
    %6355 = vmatpush.msra.mxu0 0.0
    %6356 = vmatpush.msra.mxu0 0.0
    %6357 = vmatpush.msra.mxu0 0.0
    %6358 = vmatpush.msra.mxu0 0.0
    %6359 = vmatpush.msra.mxu0 0.0
    %6360 = vmatpush.msra.mxu0 0.0
    %6361 = vmatpush.msra.mxu0 0.0
    %6362 = vmatpush.msra.mxu0 %v6220
    %6363 = vmatmul.f32.gmra.mxu0 %v6225
    %v6364 = vpop.f32.mrf.mxu0
    %v6365 = vadd.f32 0.0, %v6364
    %6366 = vdwg.mxu0
    %6367 = vmatpush.msra.mxu0 0.0
    %6368 = vmatpush.msra.mxu0 0.0
    %6369 = vmatpush.msra.mxu0 0.0
    %6370 = vmatpush.msra.mxu0 0.0
    %6371 = vmatpush.msra.mxu0 0.0
    %6372 = vmatpush.msra.mxu0 0.0
    %6373 = vmatpush.msra.mxu0 0.0
    %6374 = vmatpush.msra.mxu0 0.0
    %6375 = vmatpush.msra.mxu0 0.0
    %6376 = vmatpush.msra.mxu0 0.0
    %6377 = vmatpush.msra.mxu0 0.0
    %6378 = vmatpush.msra.mxu0 0.0
    %6379 = vmatpush.msra.mxu0 0.0
    %6380 = vmatpush.msra.mxu0 0.0
    %6381 = vmatpush.msra.mxu0 0.0
    %6382 = vmatpush.msra.mxu0 %v6221
    %6383 = vmatmul.f32.gmra.mxu0 %v6225
    %v6384 = vpop.f32.mrf.mxu0
    %v6385 = vadd.f32 0.0, %v6384
    %6386 = vdwg.mxu0
    %v6387 = vadd.f32 %v6182, %v6245
    %v6388 = vadd.f32 %v6183, %v6265
    %v6389 = vadd.f32 %v6184, %v6285
    %v6390 = vadd.f32 %v6185, %v6305
    %v6391 = vadd.f32 %v6186, %v6325
    %v6392 = vadd.f32 %v6187, %v6345
    %v6393 = vadd.f32 %v6188, %v6365
    %v6394 = vadd.f32 %v6189, %v6385
    %6395 = vrot.lane.b32.xlu0 %v5584, 64
    %v6396 = vpop.permute.xlu0 %6395
    %6397 = vrot.lane.b32.xlu0 %v5585, 64
    %v6398 = vpop.permute.xlu0 %6397
    %6399 = vrot.lane.b32.xlu0 %v5586, 64
    %v6400 = vpop.permute.xlu0 %6399
    %6401 = vrot.lane.b32.xlu0 %v5587, 64
    %v6402 = vpop.permute.xlu0 %6401
    %6403 = vrot.lane.b32.xlu0 %v5588, 64
    %v6404 = vpop.permute.xlu0 %6403
    %6405 = vrot.lane.b32.xlu0 %v5589, 64
    %v6406 = vpop.permute.xlu0 %6405
    %6407 = vrot.lane.b32.xlu0 %v5590, 64
    %v6408 = vpop.permute.xlu0 %6407
    %6409 = vrot.lane.b32.xlu0 %v5591, 64
    %v6410 = vpop.permute.xlu0 %6409
    %v6411 = vsel %vm978, %v6408, %v6410
    %v6412 = vsel %vm978, %v6406, %v6408
    %v6413 = vsel %vm978, %v6404, %v6406
    %v6414 = vsel %vm978, %v6402, %v6404
    %v6415 = vsel %vm978, %v6400, %v6402
    %v6416 = vsel %vm978, %v6398, %v6400
    %v6417 = vsel %vm978, %v6396, %v6398
    %v6418 = vsel %vm978, %v6410, %v6396
    %v6419 = vsel %vm74, %v6418, 0.0
    %v6420 = vsel %vm75, %v6417, 0.0
    %v6421 = vsel %vm76, %v6416, 0.0
    %v6422 = vsel %vm77, %v6415, 0.0
    %v6423 = vsel %vm78, %v6414, 0.0
    %v6424 = vsel %vm79, %v6413, 0.0
    %v6425 = vsel %vm80, %v6412, 0.0
    %v6426 = vsel %vm81, %v6411, 0.0
    %s6427 = scalar_lea.vmem %s3, 32
    %v6428 = vld [vmem:[%s6427] sm:$0xff]
    %v6430 = vsel %vm207, %v6428, 0
    %6432 = vmatpush.msra.mxu0 0.0
    %6433 = vmatpush.msra.mxu0 0.0
    %6434 = vmatpush.msra.mxu0 0.0
    %6435 = vmatpush.msra.mxu0 0.0
    %6436 = vmatpush.msra.mxu0 0.0
    %6437 = vmatpush.msra.mxu0 0.0
    %6438 = vmatpush.msra.mxu0 0.0
    %6439 = vmatpush.msra.mxu0 0.0
    %6440 = vmatpush.msra.mxu0 0.0
    %6441 = vmatpush.msra.mxu0 0.0
    %6442 = vmatpush.msra.mxu0 0.0
    %6443 = vmatpush.msra.mxu0 0.0
    %6444 = vmatpush.msra.mxu0 0.0
    %6445 = vmatpush.msra.mxu0 0.0
    %6446 = vmatpush.msra.mxu0 0.0
    %6447 = vmatpush.msra.mxu0 %v6419
    %6448 = vmatmul.f32.gmra.mxu0 %v6430
    %v6449 = vpop.f32.mrf.mxu0
    %v6450 = vadd.f32 0.0, %v6449
    %6451 = vdwg.mxu0
    %6452 = vmatpush.msra.mxu0 0.0
    %6453 = vmatpush.msra.mxu0 0.0
    %6454 = vmatpush.msra.mxu0 0.0
    %6455 = vmatpush.msra.mxu0 0.0
    %6456 = vmatpush.msra.mxu0 0.0
    %6457 = vmatpush.msra.mxu0 0.0
    %6458 = vmatpush.msra.mxu0 0.0
    %6459 = vmatpush.msra.mxu0 0.0
    %6460 = vmatpush.msra.mxu0 0.0
    %6461 = vmatpush.msra.mxu0 0.0
    %6462 = vmatpush.msra.mxu0 0.0
    %6463 = vmatpush.msra.mxu0 0.0
    %6464 = vmatpush.msra.mxu0 0.0
    %6465 = vmatpush.msra.mxu0 0.0
    %6466 = vmatpush.msra.mxu0 0.0
    %6467 = vmatpush.msra.mxu0 %v6420
    %6468 = vmatmul.f32.gmra.mxu0 %v6430
    %v6469 = vpop.f32.mrf.mxu0
    %v6470 = vadd.f32 0.0, %v6469
    %6471 = vdwg.mxu0
    %6472 = vmatpush.msra.mxu0 0.0
    %6473 = vmatpush.msra.mxu0 0.0
    %6474 = vmatpush.msra.mxu0 0.0
    %6475 = vmatpush.msra.mxu0 0.0
    %6476 = vmatpush.msra.mxu0 0.0
    %6477 = vmatpush.msra.mxu0 0.0
    %6478 = vmatpush.msra.mxu0 0.0
    %6479 = vmatpush.msra.mxu0 0.0
    %6480 = vmatpush.msra.mxu0 0.0
    %6481 = vmatpush.msra.mxu0 0.0
    %6482 = vmatpush.msra.mxu0 0.0
    %6483 = vmatpush.msra.mxu0 0.0
    %6484 = vmatpush.msra.mxu0 0.0
    %6485 = vmatpush.msra.mxu0 0.0
    %6486 = vmatpush.msra.mxu0 0.0
    %6487 = vmatpush.msra.mxu0 %v6421
    %6488 = vmatmul.f32.gmra.mxu0 %v6430
    %v6489 = vpop.f32.mrf.mxu0
    %v6490 = vadd.f32 0.0, %v6489
    %6491 = vdwg.mxu0
    %6492 = vmatpush.msra.mxu0 0.0
    %6493 = vmatpush.msra.mxu0 0.0
    %6494 = vmatpush.msra.mxu0 0.0
    %6495 = vmatpush.msra.mxu0 0.0
    %6496 = vmatpush.msra.mxu0 0.0
    %6497 = vmatpush.msra.mxu0 0.0
    %6498 = vmatpush.msra.mxu0 0.0
    %6499 = vmatpush.msra.mxu0 0.0
    %6500 = vmatpush.msra.mxu0 0.0
    %6501 = vmatpush.msra.mxu0 0.0
    %6502 = vmatpush.msra.mxu0 0.0
    %6503 = vmatpush.msra.mxu0 0.0
    %6504 = vmatpush.msra.mxu0 0.0
    %6505 = vmatpush.msra.mxu0 0.0
    %6506 = vmatpush.msra.mxu0 0.0
    %6507 = vmatpush.msra.mxu0 %v6422
    %6508 = vmatmul.f32.gmra.mxu0 %v6430
    %v6509 = vpop.f32.mrf.mxu0
    %v6510 = vadd.f32 0.0, %v6509
    %6511 = vdwg.mxu0
    %6512 = vmatpush.msra.mxu0 0.0
    %6513 = vmatpush.msra.mxu0 0.0
    %6514 = vmatpush.msra.mxu0 0.0
    %6515 = vmatpush.msra.mxu0 0.0
    %6516 = vmatpush.msra.mxu0 0.0
    %6517 = vmatpush.msra.mxu0 0.0
    %6518 = vmatpush.msra.mxu0 0.0
    %6519 = vmatpush.msra.mxu0 0.0
    %6520 = vmatpush.msra.mxu0 0.0
    %6521 = vmatpush.msra.mxu0 0.0
    %6522 = vmatpush.msra.mxu0 0.0
    %6523 = vmatpush.msra.mxu0 0.0
    %6524 = vmatpush.msra.mxu0 0.0
    %6525 = vmatpush.msra.mxu0 0.0
    %6526 = vmatpush.msra.mxu0 0.0
    %6527 = vmatpush.msra.mxu0 %v6423
    %6528 = vmatmul.f32.gmra.mxu0 %v6430
    %v6529 = vpop.f32.mrf.mxu0
    %v6530 = vadd.f32 0.0, %v6529
    %6531 = vdwg.mxu0
    %6532 = vmatpush.msra.mxu0 0.0
    %6533 = vmatpush.msra.mxu0 0.0
    %6534 = vmatpush.msra.mxu0 0.0
    %6535 = vmatpush.msra.mxu0 0.0
    %6536 = vmatpush.msra.mxu0 0.0
    %6537 = vmatpush.msra.mxu0 0.0
    %6538 = vmatpush.msra.mxu0 0.0
    %6539 = vmatpush.msra.mxu0 0.0
    %6540 = vmatpush.msra.mxu0 0.0
    %6541 = vmatpush.msra.mxu0 0.0
    %6542 = vmatpush.msra.mxu0 0.0
    %6543 = vmatpush.msra.mxu0 0.0
    %6544 = vmatpush.msra.mxu0 0.0
    %6545 = vmatpush.msra.mxu0 0.0
    %6546 = vmatpush.msra.mxu0 0.0
    %6547 = vmatpush.msra.mxu0 %v6424
    %6548 = vmatmul.f32.gmra.mxu0 %v6430
    %v6549 = vpop.f32.mrf.mxu0
    %v6550 = vadd.f32 0.0, %v6549
    %6551 = vdwg.mxu0
    %6552 = vmatpush.msra.mxu0 0.0
    %6553 = vmatpush.msra.mxu0 0.0
    %6554 = vmatpush.msra.mxu0 0.0
    %6555 = vmatpush.msra.mxu0 0.0
    %6556 = vmatpush.msra.mxu0 0.0
    %6557 = vmatpush.msra.mxu0 0.0
    %6558 = vmatpush.msra.mxu0 0.0
    %6559 = vmatpush.msra.mxu0 0.0
    %6560 = vmatpush.msra.mxu0 0.0
    %6561 = vmatpush.msra.mxu0 0.0
    %6562 = vmatpush.msra.mxu0 0.0
    %6563 = vmatpush.msra.mxu0 0.0
    %6564 = vmatpush.msra.mxu0 0.0
    %6565 = vmatpush.msra.mxu0 0.0
    %6566 = vmatpush.msra.mxu0 0.0
    %6567 = vmatpush.msra.mxu0 %v6425
    %6568 = vmatmul.f32.gmra.mxu0 %v6430
    %v6569 = vpop.f32.mrf.mxu0
    %v6570 = vadd.f32 0.0, %v6569
    %6571 = vdwg.mxu0
    %6572 = vmatpush.msra.mxu0 0.0
    %6573 = vmatpush.msra.mxu0 0.0
    %6574 = vmatpush.msra.mxu0 0.0
    %6575 = vmatpush.msra.mxu0 0.0
    %6576 = vmatpush.msra.mxu0 0.0
    %6577 = vmatpush.msra.mxu0 0.0
    %6578 = vmatpush.msra.mxu0 0.0
    %6579 = vmatpush.msra.mxu0 0.0
    %6580 = vmatpush.msra.mxu0 0.0
    %6581 = vmatpush.msra.mxu0 0.0
    %6582 = vmatpush.msra.mxu0 0.0
    %6583 = vmatpush.msra.mxu0 0.0
    %6584 = vmatpush.msra.mxu0 0.0
    %6585 = vmatpush.msra.mxu0 0.0
    %6586 = vmatpush.msra.mxu0 0.0
    %6587 = vmatpush.msra.mxu0 %v6426
    %6588 = vmatmul.f32.gmra.mxu0 %v6430
    %v6589 = vpop.f32.mrf.mxu0
    %v6590 = vadd.f32 0.0, %v6589
    %6591 = vdwg.mxu0
    %v6592 = vadd.f32 %v6387, %v6450
    %v6593 = vadd.f32 %v6388, %v6470
    %v6594 = vadd.f32 %v6389, %v6490
    %v6595 = vadd.f32 %v6390, %v6510
    %v6596 = vadd.f32 %v6391, %v6530
    %v6597 = vadd.f32 %v6392, %v6550
    %v6598 = vadd.f32 %v6393, %v6570
    %v6599 = vadd.f32 %v6394, %v6590
    %6600 = vrot.lane.b32.xlu0 %v5584, 63
    %v6601 = vpop.permute.xlu0 %6600
    %6602 = vrot.lane.b32.xlu0 %v5585, 63
    %v6603 = vpop.permute.xlu0 %6602
    %6604 = vrot.lane.b32.xlu0 %v5586, 63
    %v6605 = vpop.permute.xlu0 %6604
    %6606 = vrot.lane.b32.xlu0 %v5587, 63
    %v6607 = vpop.permute.xlu0 %6606
    %6608 = vrot.lane.b32.xlu0 %v5588, 63
    %v6609 = vpop.permute.xlu0 %6608
    %6610 = vrot.lane.b32.xlu0 %v5589, 63
    %v6611 = vpop.permute.xlu0 %6610
    %6612 = vrot.lane.b32.xlu0 %v5590, 63
    %v6613 = vpop.permute.xlu0 %6612
    %6614 = vrot.lane.b32.xlu0 %v5591, 63
    %v6615 = vpop.permute.xlu0 %6614
    %v6616 = vsel %vm1184, %v6613, %v6615
    %v6617 = vsel %vm1184, %v6611, %v6613
    %v6618 = vsel %vm1184, %v6609, %v6611
    %v6619 = vsel %vm1184, %v6607, %v6609
    %v6620 = vsel %vm1184, %v6605, %v6607
    %v6621 = vsel %vm1184, %v6603, %v6605
    %v6622 = vsel %vm1184, %v6601, %v6603
    %v6623 = vsel %vm1184, %v6615, %v6601
    %v6624 = vsel %vm1193, %v6623, 0.0
    %v6625 = vsel %vm1194, %v6622, 0.0
    %v6626 = vsel %vm1195, %v6621, 0.0
    %v6627 = vsel %vm1196, %v6620, 0.0
    %v6628 = vsel %vm1197, %v6619, 0.0
    %v6629 = vsel %vm1198, %v6618, 0.0
    %v6630 = vsel %vm1199, %v6617, 0.0
    %v6631 = vsel %vm1200, %v6616, 0.0
    %s6632 = scalar_lea.vmem %s3, 40
    %v6633 = vld [vmem:[%s6632] sm:$0xff]
    %v6635 = vsel %vm207, %v6633, 0
    %6637 = vmatpush.msra.mxu0 0.0
    %6638 = vmatpush.msra.mxu0 0.0
    %6639 = vmatpush.msra.mxu0 0.0
    %6640 = vmatpush.msra.mxu0 0.0
    %6641 = vmatpush.msra.mxu0 0.0
    %6642 = vmatpush.msra.mxu0 0.0
    %6643 = vmatpush.msra.mxu0 0.0
    %6644 = vmatpush.msra.mxu0 0.0
    %6645 = vmatpush.msra.mxu0 0.0
    %6646 = vmatpush.msra.mxu0 0.0
    %6647 = vmatpush.msra.mxu0 0.0
    %6648 = vmatpush.msra.mxu0 0.0
    %6649 = vmatpush.msra.mxu0 0.0
    %6650 = vmatpush.msra.mxu0 0.0
    %6651 = vmatpush.msra.mxu0 0.0
    %6652 = vmatpush.msra.mxu0 %v6624
    %6653 = vmatmul.f32.gmra.mxu0 %v6635
    %v6654 = vpop.f32.mrf.mxu0
    %v6655 = vadd.f32 0.0, %v6654
    %6656 = vdwg.mxu0
    %6657 = vmatpush.msra.mxu0 0.0
    %6658 = vmatpush.msra.mxu0 0.0
    %6659 = vmatpush.msra.mxu0 0.0
    %6660 = vmatpush.msra.mxu0 0.0
    %6661 = vmatpush.msra.mxu0 0.0
    %6662 = vmatpush.msra.mxu0 0.0
    %6663 = vmatpush.msra.mxu0 0.0
    %6664 = vmatpush.msra.mxu0 0.0
    %6665 = vmatpush.msra.mxu0 0.0
    %6666 = vmatpush.msra.mxu0 0.0
    %6667 = vmatpush.msra.mxu0 0.0
    %6668 = vmatpush.msra.mxu0 0.0
    %6669 = vmatpush.msra.mxu0 0.0
    %6670 = vmatpush.msra.mxu0 0.0
    %6671 = vmatpush.msra.mxu0 0.0
    %6672 = vmatpush.msra.mxu0 %v6625
    %6673 = vmatmul.f32.gmra.mxu0 %v6635
    %v6674 = vpop.f32.mrf.mxu0
    %v6675 = vadd.f32 0.0, %v6674
    %6676 = vdwg.mxu0
    %6677 = vmatpush.msra.mxu0 0.0
    %6678 = vmatpush.msra.mxu0 0.0
    %6679 = vmatpush.msra.mxu0 0.0
    %6680 = vmatpush.msra.mxu0 0.0
    %6681 = vmatpush.msra.mxu0 0.0
    %6682 = vmatpush.msra.mxu0 0.0
    %6683 = vmatpush.msra.mxu0 0.0
    %6684 = vmatpush.msra.mxu0 0.0
    %6685 = vmatpush.msra.mxu0 0.0
    %6686 = vmatpush.msra.mxu0 0.0
    %6687 = vmatpush.msra.mxu0 0.0
    %6688 = vmatpush.msra.mxu0 0.0
    %6689 = vmatpush.msra.mxu0 0.0
    %6690 = vmatpush.msra.mxu0 0.0
    %6691 = vmatpush.msra.mxu0 0.0
    %6692 = vmatpush.msra.mxu0 %v6626
    %6693 = vmatmul.f32.gmra.mxu0 %v6635
    %v6694 = vpop.f32.mrf.mxu0
    %v6695 = vadd.f32 0.0, %v6694
    %6696 = vdwg.mxu0
    %6697 = vmatpush.msra.mxu0 0.0
    %6698 = vmatpush.msra.mxu0 0.0
    %6699 = vmatpush.msra.mxu0 0.0
    %6700 = vmatpush.msra.mxu0 0.0
    %6701 = vmatpush.msra.mxu0 0.0
    %6702 = vmatpush.msra.mxu0 0.0
    %6703 = vmatpush.msra.mxu0 0.0
    %6704 = vmatpush.msra.mxu0 0.0
    %6705 = vmatpush.msra.mxu0 0.0
    %6706 = vmatpush.msra.mxu0 0.0
    %6707 = vmatpush.msra.mxu0 0.0
    %6708 = vmatpush.msra.mxu0 0.0
    %6709 = vmatpush.msra.mxu0 0.0
    %6710 = vmatpush.msra.mxu0 0.0
    %6711 = vmatpush.msra.mxu0 0.0
    %6712 = vmatpush.msra.mxu0 %v6627
    %6713 = vmatmul.f32.gmra.mxu0 %v6635
    %v6714 = vpop.f32.mrf.mxu0
    %v6715 = vadd.f32 0.0, %v6714
    %6716 = vdwg.mxu0
    %6717 = vmatpush.msra.mxu0 0.0
    %6718 = vmatpush.msra.mxu0 0.0
    %6719 = vmatpush.msra.mxu0 0.0
    %6720 = vmatpush.msra.mxu0 0.0
    %6721 = vmatpush.msra.mxu0 0.0
    %6722 = vmatpush.msra.mxu0 0.0
    %6723 = vmatpush.msra.mxu0 0.0
    %6724 = vmatpush.msra.mxu0 0.0
    %6725 = vmatpush.msra.mxu0 0.0
    %6726 = vmatpush.msra.mxu0 0.0
    %6727 = vmatpush.msra.mxu0 0.0
    %6728 = vmatpush.msra.mxu0 0.0
    %6729 = vmatpush.msra.mxu0 0.0
    %6730 = vmatpush.msra.mxu0 0.0
    %6731 = vmatpush.msra.mxu0 0.0
    %6732 = vmatpush.msra.mxu0 %v6628
    %6733 = vmatmul.f32.gmra.mxu0 %v6635
    %v6734 = vpop.f32.mrf.mxu0
    %v6735 = vadd.f32 0.0, %v6734
    %6736 = vdwg.mxu0
    %6737 = vmatpush.msra.mxu0 0.0
    %6738 = vmatpush.msra.mxu0 0.0
    %6739 = vmatpush.msra.mxu0 0.0
    %6740 = vmatpush.msra.mxu0 0.0
    %6741 = vmatpush.msra.mxu0 0.0
    %6742 = vmatpush.msra.mxu0 0.0
    %6743 = vmatpush.msra.mxu0 0.0
    %6744 = vmatpush.msra.mxu0 0.0
    %6745 = vmatpush.msra.mxu0 0.0
    %6746 = vmatpush.msra.mxu0 0.0
    %6747 = vmatpush.msra.mxu0 0.0
    %6748 = vmatpush.msra.mxu0 0.0
    %6749 = vmatpush.msra.mxu0 0.0
    %6750 = vmatpush.msra.mxu0 0.0
    %6751 = vmatpush.msra.mxu0 0.0
    %6752 = vmatpush.msra.mxu0 %v6629
    %6753 = vmatmul.f32.gmra.mxu0 %v6635
    %v6754 = vpop.f32.mrf.mxu0
    %v6755 = vadd.f32 0.0, %v6754
    %6756 = vdwg.mxu0
    %6757 = vmatpush.msra.mxu0 0.0
    %6758 = vmatpush.msra.mxu0 0.0
    %6759 = vmatpush.msra.mxu0 0.0
    %6760 = vmatpush.msra.mxu0 0.0
    %6761 = vmatpush.msra.mxu0 0.0
    %6762 = vmatpush.msra.mxu0 0.0
    %6763 = vmatpush.msra.mxu0 0.0
    %6764 = vmatpush.msra.mxu0 0.0
    %6765 = vmatpush.msra.mxu0 0.0
    %6766 = vmatpush.msra.mxu0 0.0
    %6767 = vmatpush.msra.mxu0 0.0
    %6768 = vmatpush.msra.mxu0 0.0
    %6769 = vmatpush.msra.mxu0 0.0
    %6770 = vmatpush.msra.mxu0 0.0
    %6771 = vmatpush.msra.mxu0 0.0
    %6772 = vmatpush.msra.mxu0 %v6630
    %6773 = vmatmul.f32.gmra.mxu0 %v6635
    %v6774 = vpop.f32.mrf.mxu0
    %v6775 = vadd.f32 0.0, %v6774
    %6776 = vdwg.mxu0
    %6777 = vmatpush.msra.mxu0 0.0
    %6778 = vmatpush.msra.mxu0 0.0
    %6779 = vmatpush.msra.mxu0 0.0
    %6780 = vmatpush.msra.mxu0 0.0
    %6781 = vmatpush.msra.mxu0 0.0
    %6782 = vmatpush.msra.mxu0 0.0
    %6783 = vmatpush.msra.mxu0 0.0
    %6784 = vmatpush.msra.mxu0 0.0
    %6785 = vmatpush.msra.mxu0 0.0
    %6786 = vmatpush.msra.mxu0 0.0
    %6787 = vmatpush.msra.mxu0 0.0
    %6788 = vmatpush.msra.mxu0 0.0
    %6789 = vmatpush.msra.mxu0 0.0
    %6790 = vmatpush.msra.mxu0 0.0
    %6791 = vmatpush.msra.mxu0 0.0
    %6792 = vmatpush.msra.mxu0 %v6631
    %6793 = vmatmul.f32.gmra.mxu0 %v6635
    %v6794 = vpop.f32.mrf.mxu0
    %v6795 = vadd.f32 0.0, %v6794
    %6796 = vdwg.mxu0
    %v6797 = vadd.f32 %v6592, %v6655
    %v6798 = vadd.f32 %v6593, %v6675
    %v6799 = vadd.f32 %v6594, %v6695
    %v6800 = vadd.f32 %v6595, %v6715
    %v6801 = vadd.f32 %v6596, %v6735
    %v6802 = vadd.f32 %v6597, %v6755
    %v6803 = vadd.f32 %v6598, %v6775
    %v6804 = vadd.f32 %v6599, %v6795
    %6805 = vrot.lane.b32.xlu0 %v5584, 57
    %v6806 = vpop.permute.xlu0 %6805
    %6807 = vrot.lane.b32.xlu0 %v5585, 57
    %v6808 = vpop.permute.xlu0 %6807
    %6809 = vrot.lane.b32.xlu0 %v5586, 57
    %v6810 = vpop.permute.xlu0 %6809
    %6811 = vrot.lane.b32.xlu0 %v5587, 57
    %v6812 = vpop.permute.xlu0 %6811
    %6813 = vrot.lane.b32.xlu0 %v5588, 57
    %v6814 = vpop.permute.xlu0 %6813
    %6815 = vrot.lane.b32.xlu0 %v5589, 57
    %v6816 = vpop.permute.xlu0 %6815
    %6817 = vrot.lane.b32.xlu0 %v5590, 57
    %v6818 = vpop.permute.xlu0 %6817
    %6819 = vrot.lane.b32.xlu0 %v5591, 57
    %v6820 = vpop.permute.xlu0 %6819
    %v6821 = vsel %vm1406, %v6818, %v6820
    %v6822 = vsel %vm1406, %v6816, %v6818
    %v6823 = vsel %vm1406, %v6814, %v6816
    %v6824 = vsel %vm1406, %v6812, %v6814
    %v6825 = vsel %vm1406, %v6810, %v6812
    %v6826 = vsel %vm1406, %v6808, %v6810
    %v6827 = vsel %vm1406, %v6806, %v6808
    %v6828 = vsel %vm1406, %v6820, %v6806
    %v6829 = vsel %vm1415, %v6828, 0.0
    %v6830 = vsel %vm1416, %v6827, 0.0
    %v6831 = vsel %vm1417, %v6826, 0.0
    %v6832 = vsel %vm1418, %v6825, 0.0
    %v6833 = vsel %vm1419, %v6824, 0.0
    %v6834 = vsel %vm1420, %v6823, 0.0
    %v6835 = vsel %vm1421, %v6822, 0.0
    %v6836 = vsel %vm1422, %v6821, 0.0
    %s6837 = scalar_lea.vmem %s3, 48
    %v6838 = vld [vmem:[%s6837] sm:$0xff]
    %v6840 = vsel %vm207, %v6838, 0
    %6842 = vmatpush.msra.mxu0 0.0
    %6843 = vmatpush.msra.mxu0 0.0
    %6844 = vmatpush.msra.mxu0 0.0
    %6845 = vmatpush.msra.mxu0 0.0
    %6846 = vmatpush.msra.mxu0 0.0
    %6847 = vmatpush.msra.mxu0 0.0
    %6848 = vmatpush.msra.mxu0 0.0
    %6849 = vmatpush.msra.mxu0 0.0
    %6850 = vmatpush.msra.mxu0 0.0
    %6851 = vmatpush.msra.mxu0 0.0
    %6852 = vmatpush.msra.mxu0 0.0
    %6853 = vmatpush.msra.mxu0 0.0
    %6854 = vmatpush.msra.mxu0 0.0
    %6855 = vmatpush.msra.mxu0 0.0
    %6856 = vmatpush.msra.mxu0 0.0
    %6857 = vmatpush.msra.mxu0 %v6829
    %6858 = vmatmul.f32.gmra.mxu0 %v6840
    %v6859 = vpop.f32.mrf.mxu0
    %v6860 = vadd.f32 0.0, %v6859
    %6861 = vdwg.mxu0
    %6862 = vmatpush.msra.mxu0 0.0
    %6863 = vmatpush.msra.mxu0 0.0
    %6864 = vmatpush.msra.mxu0 0.0
    %6865 = vmatpush.msra.mxu0 0.0
    %6866 = vmatpush.msra.mxu0 0.0
    %6867 = vmatpush.msra.mxu0 0.0
    %6868 = vmatpush.msra.mxu0 0.0
    %6869 = vmatpush.msra.mxu0 0.0
    %6870 = vmatpush.msra.mxu0 0.0
    %6871 = vmatpush.msra.mxu0 0.0
    %6872 = vmatpush.msra.mxu0 0.0
    %6873 = vmatpush.msra.mxu0 0.0
    %6874 = vmatpush.msra.mxu0 0.0
    %6875 = vmatpush.msra.mxu0 0.0
    %6876 = vmatpush.msra.mxu0 0.0
    %6877 = vmatpush.msra.mxu0 %v6830
    %6878 = vmatmul.f32.gmra.mxu0 %v6840
    %v6879 = vpop.f32.mrf.mxu0
    %v6880 = vadd.f32 0.0, %v6879
    %6881 = vdwg.mxu0
    %6882 = vmatpush.msra.mxu0 0.0
    %6883 = vmatpush.msra.mxu0 0.0
    %6884 = vmatpush.msra.mxu0 0.0
    %6885 = vmatpush.msra.mxu0 0.0
    %6886 = vmatpush.msra.mxu0 0.0
    %6887 = vmatpush.msra.mxu0 0.0
    %6888 = vmatpush.msra.mxu0 0.0
    %6889 = vmatpush.msra.mxu0 0.0
    %6890 = vmatpush.msra.mxu0 0.0
    %6891 = vmatpush.msra.mxu0 0.0
    %6892 = vmatpush.msra.mxu0 0.0
    %6893 = vmatpush.msra.mxu0 0.0
    %6894 = vmatpush.msra.mxu0 0.0
    %6895 = vmatpush.msra.mxu0 0.0
    %6896 = vmatpush.msra.mxu0 0.0
    %6897 = vmatpush.msra.mxu0 %v6831
    %6898 = vmatmul.f32.gmra.mxu0 %v6840
    %v6899 = vpop.f32.mrf.mxu0
    %v6900 = vadd.f32 0.0, %v6899
    %6901 = vdwg.mxu0
    %6902 = vmatpush.msra.mxu0 0.0
    %6903 = vmatpush.msra.mxu0 0.0
    %6904 = vmatpush.msra.mxu0 0.0
    %6905 = vmatpush.msra.mxu0 0.0
    %6906 = vmatpush.msra.mxu0 0.0
    %6907 = vmatpush.msra.mxu0 0.0
    %6908 = vmatpush.msra.mxu0 0.0
    %6909 = vmatpush.msra.mxu0 0.0
    %6910 = vmatpush.msra.mxu0 0.0
    %6911 = vmatpush.msra.mxu0 0.0
    %6912 = vmatpush.msra.mxu0 0.0
    %6913 = vmatpush.msra.mxu0 0.0
    %6914 = vmatpush.msra.mxu0 0.0
    %6915 = vmatpush.msra.mxu0 0.0
    %6916 = vmatpush.msra.mxu0 0.0
    %6917 = vmatpush.msra.mxu0 %v6832
    %6918 = vmatmul.f32.gmra.mxu0 %v6840
    %v6919 = vpop.f32.mrf.mxu0
    %v6920 = vadd.f32 0.0, %v6919
    %6921 = vdwg.mxu0
    %6922 = vmatpush.msra.mxu0 0.0
    %6923 = vmatpush.msra.mxu0 0.0
    %6924 = vmatpush.msra.mxu0 0.0
    %6925 = vmatpush.msra.mxu0 0.0
    %6926 = vmatpush.msra.mxu0 0.0
    %6927 = vmatpush.msra.mxu0 0.0
    %6928 = vmatpush.msra.mxu0 0.0
    %6929 = vmatpush.msra.mxu0 0.0
    %6930 = vmatpush.msra.mxu0 0.0
    %6931 = vmatpush.msra.mxu0 0.0
    %6932 = vmatpush.msra.mxu0 0.0
    %6933 = vmatpush.msra.mxu0 0.0
    %6934 = vmatpush.msra.mxu0 0.0
    %6935 = vmatpush.msra.mxu0 0.0
    %6936 = vmatpush.msra.mxu0 0.0
    %6937 = vmatpush.msra.mxu0 %v6833
    %6938 = vmatmul.f32.gmra.mxu0 %v6840
    %v6939 = vpop.f32.mrf.mxu0
    %v6940 = vadd.f32 0.0, %v6939
    %6941 = vdwg.mxu0
    %6942 = vmatpush.msra.mxu0 0.0
    %6943 = vmatpush.msra.mxu0 0.0
    %6944 = vmatpush.msra.mxu0 0.0
    %6945 = vmatpush.msra.mxu0 0.0
    %6946 = vmatpush.msra.mxu0 0.0
    %6947 = vmatpush.msra.mxu0 0.0
    %6948 = vmatpush.msra.mxu0 0.0
    %6949 = vmatpush.msra.mxu0 0.0
    %6950 = vmatpush.msra.mxu0 0.0
    %6951 = vmatpush.msra.mxu0 0.0
    %6952 = vmatpush.msra.mxu0 0.0
    %6953 = vmatpush.msra.mxu0 0.0
    %6954 = vmatpush.msra.mxu0 0.0
    %6955 = vmatpush.msra.mxu0 0.0
    %6956 = vmatpush.msra.mxu0 0.0
    %6957 = vmatpush.msra.mxu0 %v6834
    %6958 = vmatmul.f32.gmra.mxu0 %v6840
    %v6959 = vpop.f32.mrf.mxu0
    %v6960 = vadd.f32 0.0, %v6959
    %6961 = vdwg.mxu0
    %6962 = vmatpush.msra.mxu0 0.0
    %6963 = vmatpush.msra.mxu0 0.0
    %6964 = vmatpush.msra.mxu0 0.0
    %6965 = vmatpush.msra.mxu0 0.0
    %6966 = vmatpush.msra.mxu0 0.0
    %6967 = vmatpush.msra.mxu0 0.0
    %6968 = vmatpush.msra.mxu0 0.0
    %6969 = vmatpush.msra.mxu0 0.0
    %6970 = vmatpush.msra.mxu0 0.0
    %6971 = vmatpush.msra.mxu0 0.0
    %6972 = vmatpush.msra.mxu0 0.0
    %6973 = vmatpush.msra.mxu0 0.0
    %6974 = vmatpush.msra.mxu0 0.0
    %6975 = vmatpush.msra.mxu0 0.0
    %6976 = vmatpush.msra.mxu0 0.0
    %6977 = vmatpush.msra.mxu0 %v6835
    %6978 = vmatmul.f32.gmra.mxu0 %v6840
    %v6979 = vpop.f32.mrf.mxu0
    %v6980 = vadd.f32 0.0, %v6979
    %6981 = vdwg.mxu0
    %6982 = vmatpush.msra.mxu0 0.0
    %6983 = vmatpush.msra.mxu0 0.0
    %6984 = vmatpush.msra.mxu0 0.0
    %6985 = vmatpush.msra.mxu0 0.0
    %6986 = vmatpush.msra.mxu0 0.0
    %6987 = vmatpush.msra.mxu0 0.0
    %6988 = vmatpush.msra.mxu0 0.0
    %6989 = vmatpush.msra.mxu0 0.0
    %6990 = vmatpush.msra.mxu0 0.0
    %6991 = vmatpush.msra.mxu0 0.0
    %6992 = vmatpush.msra.mxu0 0.0
    %6993 = vmatpush.msra.mxu0 0.0
    %6994 = vmatpush.msra.mxu0 0.0
    %6995 = vmatpush.msra.mxu0 0.0
    %6996 = vmatpush.msra.mxu0 0.0
    %6997 = vmatpush.msra.mxu0 %v6836
    %6998 = vmatmul.f32.gmra.mxu0 %v6840
    %v6999 = vpop.f32.mrf.mxu0
    %v7000 = vadd.f32 0.0, %v6999
    %7001 = vdwg.mxu0
    %v7002 = vadd.f32 %v6797, %v6860
    %v7003 = vadd.f32 %v6798, %v6880
    %v7004 = vadd.f32 %v6799, %v6900
    %v7005 = vadd.f32 %v6800, %v6920
    %v7006 = vadd.f32 %v6801, %v6940
    %v7007 = vadd.f32 %v6802, %v6960
    %v7008 = vadd.f32 %v6803, %v6980
    %v7009 = vadd.f32 %v6804, %v7000
    %7010 = vrot.lane.b32.xlu0 %v5584, 56
    %v7011 = vpop.permute.xlu0 %7010
    %7012 = vrot.lane.b32.xlu0 %v5585, 56
    %v7013 = vpop.permute.xlu0 %7012
    %7014 = vrot.lane.b32.xlu0 %v5586, 56
    %v7015 = vpop.permute.xlu0 %7014
    %7016 = vrot.lane.b32.xlu0 %v5587, 56
    %v7017 = vpop.permute.xlu0 %7016
    %7018 = vrot.lane.b32.xlu0 %v5588, 56
    %v7019 = vpop.permute.xlu0 %7018
    %7020 = vrot.lane.b32.xlu0 %v5589, 56
    %v7021 = vpop.permute.xlu0 %7020
    %7022 = vrot.lane.b32.xlu0 %v5590, 56
    %v7023 = vpop.permute.xlu0 %7022
    %7024 = vrot.lane.b32.xlu0 %v5591, 56
    %v7025 = vpop.permute.xlu0 %7024
    %v7026 = vsel %vm1620, %v7023, %v7025
    %v7027 = vsel %vm1620, %v7021, %v7023
    %v7028 = vsel %vm1620, %v7019, %v7021
    %v7029 = vsel %vm1620, %v7017, %v7019
    %v7030 = vsel %vm1620, %v7015, %v7017
    %v7031 = vsel %vm1620, %v7013, %v7015
    %v7032 = vsel %vm1620, %v7011, %v7013
    %v7033 = vsel %vm1620, %v7025, %v7011
    %v7034 = vsel %vm1382, %v7033, 0.0
    %v7035 = vsel %vm1383, %v7032, 0.0
    %v7036 = vsel %vm1384, %v7031, 0.0
    %v7037 = vsel %vm1385, %v7030, 0.0
    %v7038 = vsel %vm1386, %v7029, 0.0
    %v7039 = vsel %vm1387, %v7028, 0.0
    %v7040 = vsel %vm1388, %v7027, 0.0
    %v7041 = vsel %vm1389, %v7026, 0.0
    %s7042 = scalar_lea.vmem %s3, 56
    %v7043 = vld [vmem:[%s7042] sm:$0xff]
    %v7045 = vsel %vm207, %v7043, 0
    %7047 = vmatpush.msra.mxu0 0.0
    %7048 = vmatpush.msra.mxu0 0.0
    %7049 = vmatpush.msra.mxu0 0.0
    %7050 = vmatpush.msra.mxu0 0.0
    %7051 = vmatpush.msra.mxu0 0.0
    %7052 = vmatpush.msra.mxu0 0.0
    %7053 = vmatpush.msra.mxu0 0.0
    %7054 = vmatpush.msra.mxu0 0.0
    %7055 = vmatpush.msra.mxu0 0.0
    %7056 = vmatpush.msra.mxu0 0.0
    %7057 = vmatpush.msra.mxu0 0.0
    %7058 = vmatpush.msra.mxu0 0.0
    %7059 = vmatpush.msra.mxu0 0.0
    %7060 = vmatpush.msra.mxu0 0.0
    %7061 = vmatpush.msra.mxu0 0.0
    %7062 = vmatpush.msra.mxu0 %v7034
    %7063 = vmatmul.f32.gmra.mxu0 %v7045
    %v7064 = vpop.f32.mrf.mxu0
    %v7065 = vadd.f32 0.0, %v7064
    %7066 = vdwg.mxu0
    %7067 = vmatpush.msra.mxu0 0.0
    %7068 = vmatpush.msra.mxu0 0.0
    %7069 = vmatpush.msra.mxu0 0.0
    %7070 = vmatpush.msra.mxu0 0.0
    %7071 = vmatpush.msra.mxu0 0.0
    %7072 = vmatpush.msra.mxu0 0.0
    %7073 = vmatpush.msra.mxu0 0.0
    %7074 = vmatpush.msra.mxu0 0.0
    %7075 = vmatpush.msra.mxu0 0.0
    %7076 = vmatpush.msra.mxu0 0.0
    %7077 = vmatpush.msra.mxu0 0.0
    %7078 = vmatpush.msra.mxu0 0.0
    %7079 = vmatpush.msra.mxu0 0.0
    %7080 = vmatpush.msra.mxu0 0.0
    %7081 = vmatpush.msra.mxu0 0.0
    %7082 = vmatpush.msra.mxu0 %v7035
    %7083 = vmatmul.f32.gmra.mxu0 %v7045
    %v7084 = vpop.f32.mrf.mxu0
    %v7085 = vadd.f32 0.0, %v7084
    %7086 = vdwg.mxu0
    %7087 = vmatpush.msra.mxu0 0.0
    %7088 = vmatpush.msra.mxu0 0.0
    %7089 = vmatpush.msra.mxu0 0.0
    %7090 = vmatpush.msra.mxu0 0.0
    %7091 = vmatpush.msra.mxu0 0.0
    %7092 = vmatpush.msra.mxu0 0.0
    %7093 = vmatpush.msra.mxu0 0.0
    %7094 = vmatpush.msra.mxu0 0.0
    %7095 = vmatpush.msra.mxu0 0.0
    %7096 = vmatpush.msra.mxu0 0.0
    %7097 = vmatpush.msra.mxu0 0.0
    %7098 = vmatpush.msra.mxu0 0.0
    %7099 = vmatpush.msra.mxu0 0.0
    %7100 = vmatpush.msra.mxu0 0.0
    %7101 = vmatpush.msra.mxu0 0.0
    %7102 = vmatpush.msra.mxu0 %v7036
    %7103 = vmatmul.f32.gmra.mxu0 %v7045
    %v7104 = vpop.f32.mrf.mxu0
    %v7105 = vadd.f32 0.0, %v7104
    %7106 = vdwg.mxu0
    %7107 = vmatpush.msra.mxu0 0.0
    %7108 = vmatpush.msra.mxu0 0.0
    %7109 = vmatpush.msra.mxu0 0.0
    %7110 = vmatpush.msra.mxu0 0.0
    %7111 = vmatpush.msra.mxu0 0.0
    %7112 = vmatpush.msra.mxu0 0.0
    %7113 = vmatpush.msra.mxu0 0.0
    %7114 = vmatpush.msra.mxu0 0.0
    %7115 = vmatpush.msra.mxu0 0.0
    %7116 = vmatpush.msra.mxu0 0.0
    %7117 = vmatpush.msra.mxu0 0.0
    %7118 = vmatpush.msra.mxu0 0.0
    %7119 = vmatpush.msra.mxu0 0.0
    %7120 = vmatpush.msra.mxu0 0.0
    %7121 = vmatpush.msra.mxu0 0.0
    %7122 = vmatpush.msra.mxu0 %v7037
    %7123 = vmatmul.f32.gmra.mxu0 %v7045
    %v7124 = vpop.f32.mrf.mxu0
    %v7125 = vadd.f32 0.0, %v7124
    %7126 = vdwg.mxu0
    %7127 = vmatpush.msra.mxu0 0.0
    %7128 = vmatpush.msra.mxu0 0.0
    %7129 = vmatpush.msra.mxu0 0.0
    %7130 = vmatpush.msra.mxu0 0.0
    %7131 = vmatpush.msra.mxu0 0.0
    %7132 = vmatpush.msra.mxu0 0.0
    %7133 = vmatpush.msra.mxu0 0.0
    %7134 = vmatpush.msra.mxu0 0.0
    %7135 = vmatpush.msra.mxu0 0.0
    %7136 = vmatpush.msra.mxu0 0.0
    %7137 = vmatpush.msra.mxu0 0.0
    %7138 = vmatpush.msra.mxu0 0.0
    %7139 = vmatpush.msra.mxu0 0.0
    %7140 = vmatpush.msra.mxu0 0.0
    %7141 = vmatpush.msra.mxu0 0.0
    %7142 = vmatpush.msra.mxu0 %v7038
    %7143 = vmatmul.f32.gmra.mxu0 %v7045
    %v7144 = vpop.f32.mrf.mxu0
    %v7145 = vadd.f32 0.0, %v7144
    %7146 = vdwg.mxu0
    %7147 = vmatpush.msra.mxu0 0.0
    %7148 = vmatpush.msra.mxu0 0.0
    %7149 = vmatpush.msra.mxu0 0.0
    %7150 = vmatpush.msra.mxu0 0.0
    %7151 = vmatpush.msra.mxu0 0.0
    %7152 = vmatpush.msra.mxu0 0.0
    %7153 = vmatpush.msra.mxu0 0.0
    %7154 = vmatpush.msra.mxu0 0.0
    %7155 = vmatpush.msra.mxu0 0.0
    %7156 = vmatpush.msra.mxu0 0.0
    %7157 = vmatpush.msra.mxu0 0.0
    %7158 = vmatpush.msra.mxu0 0.0
    %7159 = vmatpush.msra.mxu0 0.0
    %7160 = vmatpush.msra.mxu0 0.0
    %7161 = vmatpush.msra.mxu0 0.0
    %7162 = vmatpush.msra.mxu0 %v7039
    %7163 = vmatmul.f32.gmra.mxu0 %v7045
    %v7164 = vpop.f32.mrf.mxu0
    %v7165 = vadd.f32 0.0, %v7164
    %7166 = vdwg.mxu0
    %7167 = vmatpush.msra.mxu0 0.0
    %7168 = vmatpush.msra.mxu0 0.0
    %7169 = vmatpush.msra.mxu0 0.0
    %7170 = vmatpush.msra.mxu0 0.0
    %7171 = vmatpush.msra.mxu0 0.0
    %7172 = vmatpush.msra.mxu0 0.0
    %7173 = vmatpush.msra.mxu0 0.0
    %7174 = vmatpush.msra.mxu0 0.0
    %7175 = vmatpush.msra.mxu0 0.0
    %7176 = vmatpush.msra.mxu0 0.0
    %7177 = vmatpush.msra.mxu0 0.0
    %7178 = vmatpush.msra.mxu0 0.0
    %7179 = vmatpush.msra.mxu0 0.0
    %7180 = vmatpush.msra.mxu0 0.0
    %7181 = vmatpush.msra.mxu0 0.0
    %7182 = vmatpush.msra.mxu0 %v7040
    %7183 = vmatmul.f32.gmra.mxu0 %v7045
    %v7184 = vpop.f32.mrf.mxu0
    %v7185 = vadd.f32 0.0, %v7184
    %7186 = vdwg.mxu0
    %7187 = vmatpush.msra.mxu0 0.0
    %7188 = vmatpush.msra.mxu0 0.0
    %7189 = vmatpush.msra.mxu0 0.0
    %7190 = vmatpush.msra.mxu0 0.0
    %7191 = vmatpush.msra.mxu0 0.0
    %7192 = vmatpush.msra.mxu0 0.0
    %7193 = vmatpush.msra.mxu0 0.0
    %7194 = vmatpush.msra.mxu0 0.0
    %7195 = vmatpush.msra.mxu0 0.0
    %7196 = vmatpush.msra.mxu0 0.0
    %7197 = vmatpush.msra.mxu0 0.0
    %7198 = vmatpush.msra.mxu0 0.0
    %7199 = vmatpush.msra.mxu0 0.0
    %7200 = vmatpush.msra.mxu0 0.0
    %7201 = vmatpush.msra.mxu0 0.0
    %7202 = vmatpush.msra.mxu0 %v7041
    %7203 = vmatmul.f32.gmra.mxu0 %v7045
    %v7204 = vpop.f32.mrf.mxu0
    %v7205 = vadd.f32 0.0, %v7204
    %7206 = vdwg.mxu0
    %v7207 = vadd.f32 %v7002, %v7065
    %v7208 = vadd.f32 %v7003, %v7085
    %v7209 = vadd.f32 %v7004, %v7105
    %v7210 = vadd.f32 %v7005, %v7125
    %v7211 = vadd.f32 %v7006, %v7145
    %v7212 = vadd.f32 %v7007, %v7165
    %v7213 = vadd.f32 %v7008, %v7185
    %v7214 = vadd.f32 %v7009, %v7205
    %7215 = vrot.lane.b32.xlu0 %v5584, 55
    %v7216 = vpop.permute.xlu0 %7215
    %7217 = vrot.lane.b32.xlu0 %v5585, 55
    %v7218 = vpop.permute.xlu0 %7217
    %7219 = vrot.lane.b32.xlu0 %v5586, 55
    %v7220 = vpop.permute.xlu0 %7219
    %7221 = vrot.lane.b32.xlu0 %v5587, 55
    %v7222 = vpop.permute.xlu0 %7221
    %7223 = vrot.lane.b32.xlu0 %v5588, 55
    %v7224 = vpop.permute.xlu0 %7223
    %7225 = vrot.lane.b32.xlu0 %v5589, 55
    %v7226 = vpop.permute.xlu0 %7225
    %7227 = vrot.lane.b32.xlu0 %v5590, 55
    %v7228 = vpop.permute.xlu0 %7227
    %7229 = vrot.lane.b32.xlu0 %v5591, 55
    %v7230 = vpop.permute.xlu0 %7229
    %v7231 = vsel %vm1826, %v7228, %v7230
    %v7232 = vsel %vm1826, %v7226, %v7228
    %v7233 = vsel %vm1826, %v7224, %v7226
    %v7234 = vsel %vm1826, %v7222, %v7224
    %v7235 = vsel %vm1826, %v7220, %v7222
    %v7236 = vsel %vm1826, %v7218, %v7220
    %v7237 = vsel %vm1826, %v7216, %v7218
    %v7238 = vsel %vm1826, %v7230, %v7216
    %v7239 = vsel %vm1835, %v7238, 0.0
    %v7240 = vsel %vm1836, %v7237, 0.0
    %v7241 = vsel %vm1837, %v7236, 0.0
    %v7242 = vsel %vm1838, %v7235, 0.0
    %v7243 = vsel %vm1839, %v7234, 0.0
    %v7244 = vsel %vm1840, %v7233, 0.0
    %v7245 = vsel %vm1841, %v7232, 0.0
    %v7246 = vsel %vm1842, %v7231, 0.0
    %s7247 = scalar_lea.vmem %s3, 64
    %v7248 = vld [vmem:[%s7247] sm:$0xff]
    %v7250 = vsel %vm207, %v7248, 0
    %7252 = vmatpush.msra.mxu0 0.0
    %7253 = vmatpush.msra.mxu0 0.0
    %7254 = vmatpush.msra.mxu0 0.0
    %7255 = vmatpush.msra.mxu0 0.0
    %7256 = vmatpush.msra.mxu0 0.0
    %7257 = vmatpush.msra.mxu0 0.0
    %7258 = vmatpush.msra.mxu0 0.0
    %7259 = vmatpush.msra.mxu0 0.0
    %7260 = vmatpush.msra.mxu0 0.0
    %7261 = vmatpush.msra.mxu0 0.0
    %7262 = vmatpush.msra.mxu0 0.0
    %7263 = vmatpush.msra.mxu0 0.0
    %7264 = vmatpush.msra.mxu0 0.0
    %7265 = vmatpush.msra.mxu0 0.0
    %7266 = vmatpush.msra.mxu0 0.0
    %7267 = vmatpush.msra.mxu0 %v7239
    %7268 = vmatmul.f32.gmra.mxu0 %v7250
    %v7269 = vpop.f32.mrf.mxu0
    %v7270 = vadd.f32 0.0, %v7269
    %7271 = vdwg.mxu0
    %7272 = vmatpush.msra.mxu0 0.0
    %7273 = vmatpush.msra.mxu0 0.0
    %7274 = vmatpush.msra.mxu0 0.0
    %7275 = vmatpush.msra.mxu0 0.0
    %7276 = vmatpush.msra.mxu0 0.0
    %7277 = vmatpush.msra.mxu0 0.0
    %7278 = vmatpush.msra.mxu0 0.0
    %7279 = vmatpush.msra.mxu0 0.0
    %7280 = vmatpush.msra.mxu0 0.0
    %7281 = vmatpush.msra.mxu0 0.0
    %7282 = vmatpush.msra.mxu0 0.0
    %7283 = vmatpush.msra.mxu0 0.0
    %7284 = vmatpush.msra.mxu0 0.0
    %7285 = vmatpush.msra.mxu0 0.0
    %7286 = vmatpush.msra.mxu0 0.0
    %7287 = vmatpush.msra.mxu0 %v7240
    %7288 = vmatmul.f32.gmra.mxu0 %v7250
    %v7289 = vpop.f32.mrf.mxu0
    %v7290 = vadd.f32 0.0, %v7289
    %7291 = vdwg.mxu0
    %7292 = vmatpush.msra.mxu0 0.0
    %7293 = vmatpush.msra.mxu0 0.0
    %7294 = vmatpush.msra.mxu0 0.0
    %7295 = vmatpush.msra.mxu0 0.0
    %7296 = vmatpush.msra.mxu0 0.0
    %7297 = vmatpush.msra.mxu0 0.0
    %7298 = vmatpush.msra.mxu0 0.0
    %7299 = vmatpush.msra.mxu0 0.0
    %7300 = vmatpush.msra.mxu0 0.0
    %7301 = vmatpush.msra.mxu0 0.0
    %7302 = vmatpush.msra.mxu0 0.0
    %7303 = vmatpush.msra.mxu0 0.0
    %7304 = vmatpush.msra.mxu0 0.0
    %7305 = vmatpush.msra.mxu0 0.0
    %7306 = vmatpush.msra.mxu0 0.0
    %7307 = vmatpush.msra.mxu0 %v7241
    %7308 = vmatmul.f32.gmra.mxu0 %v7250
    %v7309 = vpop.f32.mrf.mxu0
    %v7310 = vadd.f32 0.0, %v7309
    %7311 = vdwg.mxu0
    %7312 = vmatpush.msra.mxu0 0.0
    %7313 = vmatpush.msra.mxu0 0.0
    %7314 = vmatpush.msra.mxu0 0.0
    %7315 = vmatpush.msra.mxu0 0.0
    %7316 = vmatpush.msra.mxu0 0.0
    %7317 = vmatpush.msra.mxu0 0.0
    %7318 = vmatpush.msra.mxu0 0.0
    %7319 = vmatpush.msra.mxu0 0.0
    %7320 = vmatpush.msra.mxu0 0.0
    %7321 = vmatpush.msra.mxu0 0.0
    %7322 = vmatpush.msra.mxu0 0.0
    %7323 = vmatpush.msra.mxu0 0.0
    %7324 = vmatpush.msra.mxu0 0.0
    %7325 = vmatpush.msra.mxu0 0.0
    %7326 = vmatpush.msra.mxu0 0.0
    %7327 = vmatpush.msra.mxu0 %v7242
    %7328 = vmatmul.f32.gmra.mxu0 %v7250
    %v7329 = vpop.f32.mrf.mxu0
    %v7330 = vadd.f32 0.0, %v7329
    %7331 = vdwg.mxu0
    %7332 = vmatpush.msra.mxu0 0.0
    %7333 = vmatpush.msra.mxu0 0.0
    %7334 = vmatpush.msra.mxu0 0.0
    %7335 = vmatpush.msra.mxu0 0.0
    %7336 = vmatpush.msra.mxu0 0.0
    %7337 = vmatpush.msra.mxu0 0.0
    %7338 = vmatpush.msra.mxu0 0.0
    %7339 = vmatpush.msra.mxu0 0.0
    %7340 = vmatpush.msra.mxu0 0.0
    %7341 = vmatpush.msra.mxu0 0.0
    %7342 = vmatpush.msra.mxu0 0.0
    %7343 = vmatpush.msra.mxu0 0.0
    %7344 = vmatpush.msra.mxu0 0.0
    %7345 = vmatpush.msra.mxu0 0.0
    %7346 = vmatpush.msra.mxu0 0.0
    %7347 = vmatpush.msra.mxu0 %v7243
    %7348 = vmatmul.f32.gmra.mxu0 %v7250
    %v7349 = vpop.f32.mrf.mxu0
    %v7350 = vadd.f32 0.0, %v7349
    %7351 = vdwg.mxu0
    %7352 = vmatpush.msra.mxu0 0.0
    %7353 = vmatpush.msra.mxu0 0.0
    %7354 = vmatpush.msra.mxu0 0.0
    %7355 = vmatpush.msra.mxu0 0.0
    %7356 = vmatpush.msra.mxu0 0.0
    %7357 = vmatpush.msra.mxu0 0.0
    %7358 = vmatpush.msra.mxu0 0.0
    %7359 = vmatpush.msra.mxu0 0.0
    %7360 = vmatpush.msra.mxu0 0.0
    %7361 = vmatpush.msra.mxu0 0.0
    %7362 = vmatpush.msra.mxu0 0.0
    %7363 = vmatpush.msra.mxu0 0.0
    %7364 = vmatpush.msra.mxu0 0.0
    %7365 = vmatpush.msra.mxu0 0.0
    %7366 = vmatpush.msra.mxu0 0.0
    %7367 = vmatpush.msra.mxu0 %v7244
    %7368 = vmatmul.f32.gmra.mxu0 %v7250
    %v7369 = vpop.f32.mrf.mxu0
    %v7370 = vadd.f32 0.0, %v7369
    %7371 = vdwg.mxu0
    %7372 = vmatpush.msra.mxu0 0.0
    %7373 = vmatpush.msra.mxu0 0.0
    %7374 = vmatpush.msra.mxu0 0.0
    %7375 = vmatpush.msra.mxu0 0.0
    %7376 = vmatpush.msra.mxu0 0.0
    %7377 = vmatpush.msra.mxu0 0.0
    %7378 = vmatpush.msra.mxu0 0.0
    %7379 = vmatpush.msra.mxu0 0.0
    %7380 = vmatpush.msra.mxu0 0.0
    %7381 = vmatpush.msra.mxu0 0.0
    %7382 = vmatpush.msra.mxu0 0.0
    %7383 = vmatpush.msra.mxu0 0.0
    %7384 = vmatpush.msra.mxu0 0.0
    %7385 = vmatpush.msra.mxu0 0.0
    %7386 = vmatpush.msra.mxu0 0.0
    %7387 = vmatpush.msra.mxu0 %v7245
    %7388 = vmatmul.f32.gmra.mxu0 %v7250
    %v7389 = vpop.f32.mrf.mxu0
    %v7390 = vadd.f32 0.0, %v7389
    %7391 = vdwg.mxu0
    %7392 = vmatpush.msra.mxu0 0.0
    %7393 = vmatpush.msra.mxu0 0.0
    %7394 = vmatpush.msra.mxu0 0.0
    %7395 = vmatpush.msra.mxu0 0.0
    %7396 = vmatpush.msra.mxu0 0.0
    %7397 = vmatpush.msra.mxu0 0.0
    %7398 = vmatpush.msra.mxu0 0.0
    %7399 = vmatpush.msra.mxu0 0.0
    %7400 = vmatpush.msra.mxu0 0.0
    %7401 = vmatpush.msra.mxu0 0.0
    %7402 = vmatpush.msra.mxu0 0.0
    %7403 = vmatpush.msra.mxu0 0.0
    %7404 = vmatpush.msra.mxu0 0.0
    %7405 = vmatpush.msra.mxu0 0.0
    %7406 = vmatpush.msra.mxu0 0.0
    %7407 = vmatpush.msra.mxu0 %v7246
    %7408 = vmatmul.f32.gmra.mxu0 %v7250
    %v7409 = vpop.f32.mrf.mxu0
    %v7410 = vadd.f32 0.0, %v7409
    %7411 = vdwg.mxu0
    %v7412 = vadd.f32 %v7207, %v7270
    %v7413 = vadd.f32 %v7208, %v7290
    %v7414 = vadd.f32 %v7209, %v7310
    %v7415 = vadd.f32 %v7210, %v7330
    %v7416 = vadd.f32 %v7211, %v7350
    %v7417 = vadd.f32 %v7212, %v7370
    %v7418 = vadd.f32 %v7213, %v7390
    %v7419 = vadd.f32 %v7214, %v7410
    %7420 = vrot.lane.b32.xlu0 %v5584, 9
    %v7421 = vpop.permute.xlu0 %7420
    %7422 = vrot.lane.b32.xlu0 %v5585, 9
    %v7423 = vpop.permute.xlu0 %7422
    %7424 = vrot.lane.b32.xlu0 %v5586, 9
    %v7425 = vpop.permute.xlu0 %7424
    %7426 = vrot.lane.b32.xlu0 %v5587, 9
    %v7427 = vpop.permute.xlu0 %7426
    %7428 = vrot.lane.b32.xlu0 %v5588, 9
    %v7429 = vpop.permute.xlu0 %7428
    %7430 = vrot.lane.b32.xlu0 %v5589, 9
    %v7431 = vpop.permute.xlu0 %7430
    %7432 = vrot.lane.b32.xlu0 %v5590, 9
    %v7433 = vpop.permute.xlu0 %7432
    %7434 = vrot.lane.b32.xlu0 %v5591, 9
    %v7435 = vpop.permute.xlu0 %7434
    %v7436 = vsel %vm2040, %v7433, %v7435
    %v7437 = vsel %vm2040, %v7431, %v7433
    %v7438 = vsel %vm2040, %v7429, %v7431
    %v7439 = vsel %vm2040, %v7427, %v7429
    %v7440 = vsel %vm2040, %v7425, %v7427
    %v7441 = vsel %vm2040, %v7423, %v7425
    %v7442 = vsel %vm2040, %v7421, %v7423
    %v7443 = vsel %vm2040, %v7435, %v7421
    %v7444 = vsel %vm2049, %v7443, 0.0
    %v7445 = vsel %vm2050, %v7442, 0.0
    %v7446 = vsel %vm2051, %v7441, 0.0
    %v7447 = vsel %vm2052, %v7440, 0.0
    %v7448 = vsel %vm2053, %v7439, 0.0
    %v7449 = vsel %vm2054, %v7438, 0.0
    %v7450 = vsel %vm2055, %v7437, 0.0
    %v7451 = vsel %vm2056, %v7436, 0.0
    %s7452 = scalar_lea.vmem %s3, 72
    %v7453 = vld [vmem:[%s7452] sm:$0xff]
    %v7455 = vsel %vm207, %v7453, 0
    %7457 = vmatpush.msra.mxu0 0.0
    %7458 = vmatpush.msra.mxu0 0.0
    %7459 = vmatpush.msra.mxu0 0.0
    %7460 = vmatpush.msra.mxu0 0.0
    %7461 = vmatpush.msra.mxu0 0.0
    %7462 = vmatpush.msra.mxu0 0.0
    %7463 = vmatpush.msra.mxu0 0.0
    %7464 = vmatpush.msra.mxu0 0.0
    %7465 = vmatpush.msra.mxu0 0.0
    %7466 = vmatpush.msra.mxu0 0.0
    %7467 = vmatpush.msra.mxu0 0.0
    %7468 = vmatpush.msra.mxu0 0.0
    %7469 = vmatpush.msra.mxu0 0.0
    %7470 = vmatpush.msra.mxu0 0.0
    %7471 = vmatpush.msra.mxu0 0.0
    %7472 = vmatpush.msra.mxu0 %v7444
    %7473 = vmatmul.f32.gmra.mxu0 %v7455
    %v7474 = vpop.f32.mrf.mxu0
    %v7475 = vadd.f32 0.0, %v7474
    %7476 = vdwg.mxu0
    %7477 = vmatpush.msra.mxu0 0.0
    %7478 = vmatpush.msra.mxu0 0.0
    %7479 = vmatpush.msra.mxu0 0.0
    %7480 = vmatpush.msra.mxu0 0.0
    %7481 = vmatpush.msra.mxu0 0.0
    %7482 = vmatpush.msra.mxu0 0.0
    %7483 = vmatpush.msra.mxu0 0.0
    %7484 = vmatpush.msra.mxu0 0.0
    %7485 = vmatpush.msra.mxu0 0.0
    %7486 = vmatpush.msra.mxu0 0.0
    %7487 = vmatpush.msra.mxu0 0.0
    %7488 = vmatpush.msra.mxu0 0.0
    %7489 = vmatpush.msra.mxu0 0.0
    %7490 = vmatpush.msra.mxu0 0.0
    %7491 = vmatpush.msra.mxu0 0.0
    %7492 = vmatpush.msra.mxu0 %v7445
    %7493 = vmatmul.f32.gmra.mxu0 %v7455
    %v7494 = vpop.f32.mrf.mxu0
    %v7495 = vadd.f32 0.0, %v7494
    %7496 = vdwg.mxu0
    %7497 = vmatpush.msra.mxu0 0.0
    %7498 = vmatpush.msra.mxu0 0.0
    %7499 = vmatpush.msra.mxu0 0.0
    %7500 = vmatpush.msra.mxu0 0.0
    %7501 = vmatpush.msra.mxu0 0.0
    %7502 = vmatpush.msra.mxu0 0.0
    %7503 = vmatpush.msra.mxu0 0.0
    %7504 = vmatpush.msra.mxu0 0.0
    %7505 = vmatpush.msra.mxu0 0.0
    %7506 = vmatpush.msra.mxu0 0.0
    %7507 = vmatpush.msra.mxu0 0.0
    %7508 = vmatpush.msra.mxu0 0.0
    %7509 = vmatpush.msra.mxu0 0.0
    %7510 = vmatpush.msra.mxu0 0.0
    %7511 = vmatpush.msra.mxu0 0.0
    %7512 = vmatpush.msra.mxu0 %v7446
    %7513 = vmatmul.f32.gmra.mxu0 %v7455
    %v7514 = vpop.f32.mrf.mxu0
    %v7515 = vadd.f32 0.0, %v7514
    %7516 = vdwg.mxu0
    %7517 = vmatpush.msra.mxu0 0.0
    %7518 = vmatpush.msra.mxu0 0.0
    %7519 = vmatpush.msra.mxu0 0.0
    %7520 = vmatpush.msra.mxu0 0.0
    %7521 = vmatpush.msra.mxu0 0.0
    %7522 = vmatpush.msra.mxu0 0.0
    %7523 = vmatpush.msra.mxu0 0.0
    %7524 = vmatpush.msra.mxu0 0.0
    %7525 = vmatpush.msra.mxu0 0.0
    %7526 = vmatpush.msra.mxu0 0.0
    %7527 = vmatpush.msra.mxu0 0.0
    %7528 = vmatpush.msra.mxu0 0.0
    %7529 = vmatpush.msra.mxu0 0.0
    %7530 = vmatpush.msra.mxu0 0.0
    %7531 = vmatpush.msra.mxu0 0.0
    %7532 = vmatpush.msra.mxu0 %v7447
    %7533 = vmatmul.f32.gmra.mxu0 %v7455
    %v7534 = vpop.f32.mrf.mxu0
    %v7535 = vadd.f32 0.0, %v7534
    %7536 = vdwg.mxu0
    %7537 = vmatpush.msra.mxu0 0.0
    %7538 = vmatpush.msra.mxu0 0.0
    %7539 = vmatpush.msra.mxu0 0.0
    %7540 = vmatpush.msra.mxu0 0.0
    %7541 = vmatpush.msra.mxu0 0.0
    %7542 = vmatpush.msra.mxu0 0.0
    %7543 = vmatpush.msra.mxu0 0.0
    %7544 = vmatpush.msra.mxu0 0.0
    %7545 = vmatpush.msra.mxu0 0.0
    %7546 = vmatpush.msra.mxu0 0.0
    %7547 = vmatpush.msra.mxu0 0.0
    %7548 = vmatpush.msra.mxu0 0.0
    %7549 = vmatpush.msra.mxu0 0.0
    %7550 = vmatpush.msra.mxu0 0.0
    %7551 = vmatpush.msra.mxu0 0.0
    %7552 = vmatpush.msra.mxu0 %v7448
    %7553 = vmatmul.f32.gmra.mxu0 %v7455
    %v7554 = vpop.f32.mrf.mxu0
    %v7555 = vadd.f32 0.0, %v7554
    %7556 = vdwg.mxu0
    %7557 = vmatpush.msra.mxu0 0.0
    %7558 = vmatpush.msra.mxu0 0.0
    %7559 = vmatpush.msra.mxu0 0.0
    %7560 = vmatpush.msra.mxu0 0.0
    %7561 = vmatpush.msra.mxu0 0.0
    %7562 = vmatpush.msra.mxu0 0.0
    %7563 = vmatpush.msra.mxu0 0.0
    %7564 = vmatpush.msra.mxu0 0.0
    %7565 = vmatpush.msra.mxu0 0.0
    %7566 = vmatpush.msra.mxu0 0.0
    %7567 = vmatpush.msra.mxu0 0.0
    %7568 = vmatpush.msra.mxu0 0.0
    %7569 = vmatpush.msra.mxu0 0.0
    %7570 = vmatpush.msra.mxu0 0.0
    %7571 = vmatpush.msra.mxu0 0.0
    %7572 = vmatpush.msra.mxu0 %v7449
    %7573 = vmatmul.f32.gmra.mxu0 %v7455
    %v7574 = vpop.f32.mrf.mxu0
    %v7575 = vadd.f32 0.0, %v7574
    %7576 = vdwg.mxu0
    %7577 = vmatpush.msra.mxu0 0.0
    %7578 = vmatpush.msra.mxu0 0.0
    %7579 = vmatpush.msra.mxu0 0.0
    %7580 = vmatpush.msra.mxu0 0.0
    %7581 = vmatpush.msra.mxu0 0.0
    %7582 = vmatpush.msra.mxu0 0.0
    %7583 = vmatpush.msra.mxu0 0.0
    %7584 = vmatpush.msra.mxu0 0.0
    %7585 = vmatpush.msra.mxu0 0.0
    %7586 = vmatpush.msra.mxu0 0.0
    %7587 = vmatpush.msra.mxu0 0.0
    %7588 = vmatpush.msra.mxu0 0.0
    %7589 = vmatpush.msra.mxu0 0.0
    %7590 = vmatpush.msra.mxu0 0.0
    %7591 = vmatpush.msra.mxu0 0.0
    %7592 = vmatpush.msra.mxu0 %v7450
    %7593 = vmatmul.f32.gmra.mxu0 %v7455
    %v7594 = vpop.f32.mrf.mxu0
    %v7595 = vadd.f32 0.0, %v7594
    %7596 = vdwg.mxu0
    %7597 = vmatpush.msra.mxu0 0.0
    %7598 = vmatpush.msra.mxu0 0.0
    %7599 = vmatpush.msra.mxu0 0.0
    %7600 = vmatpush.msra.mxu0 0.0
    %7601 = vmatpush.msra.mxu0 0.0
    %7602 = vmatpush.msra.mxu0 0.0
    %7603 = vmatpush.msra.mxu0 0.0
    %7604 = vmatpush.msra.mxu0 0.0
    %7605 = vmatpush.msra.mxu0 0.0
    %7606 = vmatpush.msra.mxu0 0.0
    %7607 = vmatpush.msra.mxu0 0.0
    %7608 = vmatpush.msra.mxu0 0.0
    %7609 = vmatpush.msra.mxu0 0.0
    %7610 = vmatpush.msra.mxu0 0.0
    %7611 = vmatpush.msra.mxu0 0.0
    %7612 = vmatpush.msra.mxu0 %v7451
    %7613 = vmatmul.f32.gmra.mxu0 %v7455
    %v7614 = vpop.f32.mrf.mxu0
    %v7615 = vadd.f32 0.0, %v7614
    %7616 = vdwg.mxu0
    %v7617 = vadd.f32 %v7412, %v7475
    %v7618 = vadd.f32 %v7413, %v7495
    %v7619 = vadd.f32 %v7414, %v7515
    %v7620 = vadd.f32 %v7415, %v7535
    %v7621 = vadd.f32 %v7416, %v7555
    %v7622 = vadd.f32 %v7417, %v7575
    %v7623 = vadd.f32 %v7418, %v7595
    %v7624 = vadd.f32 %v7419, %v7615
    %7625 = vrot.lane.b32.xlu0 %v5584, 8
    %v7626 = vpop.permute.xlu0 %7625
    %7627 = vrot.lane.b32.xlu0 %v5585, 8
    %v7628 = vpop.permute.xlu0 %7627
    %7629 = vrot.lane.b32.xlu0 %v5586, 8
    %v7630 = vpop.permute.xlu0 %7629
    %7631 = vrot.lane.b32.xlu0 %v5587, 8
    %v7632 = vpop.permute.xlu0 %7631
    %7633 = vrot.lane.b32.xlu0 %v5588, 8
    %v7634 = vpop.permute.xlu0 %7633
    %7635 = vrot.lane.b32.xlu0 %v5589, 8
    %v7636 = vpop.permute.xlu0 %7635
    %7637 = vrot.lane.b32.xlu0 %v5590, 8
    %v7638 = vpop.permute.xlu0 %7637
    %7639 = vrot.lane.b32.xlu0 %v5591, 8
    %v7640 = vpop.permute.xlu0 %7639
    %v7641 = vsel %vm2254, %v7638, %v7640
    %v7642 = vsel %vm2254, %v7636, %v7638
    %v7643 = vsel %vm2254, %v7634, %v7636
    %v7644 = vsel %vm2254, %v7632, %v7634
    %v7645 = vsel %vm2254, %v7630, %v7632
    %v7646 = vsel %vm2254, %v7628, %v7630
    %v7647 = vsel %vm2254, %v7626, %v7628
    %v7648 = vsel %vm2254, %v7640, %v7626
    %v7649 = vsel %vm90, %v7648, 0.0
    %v7650 = vsel %vm91, %v7647, 0.0
    %v7651 = vsel %vm92, %v7646, 0.0
    %v7652 = vsel %vm93, %v7645, 0.0
    %v7653 = vsel %vm94, %v7644, 0.0
    %v7654 = vsel %vm95, %v7643, 0.0
    %v7655 = vsel %vm96, %v7642, 0.0
    %v7656 = vsel %vm97, %v7641, 0.0
    %s7657 = scalar_lea.vmem %s3, 80
    %v7658 = vld [vmem:[%s7657] sm:$0xff]
    %v7660 = vsel %vm207, %v7658, 0
    %7662 = vmatpush.msra.mxu0 0.0
    %7663 = vmatpush.msra.mxu0 0.0
    %7664 = vmatpush.msra.mxu0 0.0
    %7665 = vmatpush.msra.mxu0 0.0
    %7666 = vmatpush.msra.mxu0 0.0
    %7667 = vmatpush.msra.mxu0 0.0
    %7668 = vmatpush.msra.mxu0 0.0
    %7669 = vmatpush.msra.mxu0 0.0
    %7670 = vmatpush.msra.mxu0 0.0
    %7671 = vmatpush.msra.mxu0 0.0
    %7672 = vmatpush.msra.mxu0 0.0
    %7673 = vmatpush.msra.mxu0 0.0
    %7674 = vmatpush.msra.mxu0 0.0
    %7675 = vmatpush.msra.mxu0 0.0
    %7676 = vmatpush.msra.mxu0 0.0
    %7677 = vmatpush.msra.mxu0 %v7649
    %7678 = vmatmul.f32.gmra.mxu0 %v7660
    %v7679 = vpop.f32.mrf.mxu0
    %v7680 = vadd.f32 0.0, %v7679
    %7681 = vdwg.mxu0
    %7682 = vmatpush.msra.mxu0 0.0
    %7683 = vmatpush.msra.mxu0 0.0
    %7684 = vmatpush.msra.mxu0 0.0
    %7685 = vmatpush.msra.mxu0 0.0
    %7686 = vmatpush.msra.mxu0 0.0
    %7687 = vmatpush.msra.mxu0 0.0
    %7688 = vmatpush.msra.mxu0 0.0
    %7689 = vmatpush.msra.mxu0 0.0
    %7690 = vmatpush.msra.mxu0 0.0
    %7691 = vmatpush.msra.mxu0 0.0
    %7692 = vmatpush.msra.mxu0 0.0
    %7693 = vmatpush.msra.mxu0 0.0
    %7694 = vmatpush.msra.mxu0 0.0
    %7695 = vmatpush.msra.mxu0 0.0
    %7696 = vmatpush.msra.mxu0 0.0
    %7697 = vmatpush.msra.mxu0 %v7650
    %7698 = vmatmul.f32.gmra.mxu0 %v7660
    %v7699 = vpop.f32.mrf.mxu0
    %v7700 = vadd.f32 0.0, %v7699
    %7701 = vdwg.mxu0
    %7702 = vmatpush.msra.mxu0 0.0
    %7703 = vmatpush.msra.mxu0 0.0
    %7704 = vmatpush.msra.mxu0 0.0
    %7705 = vmatpush.msra.mxu0 0.0
    %7706 = vmatpush.msra.mxu0 0.0
    %7707 = vmatpush.msra.mxu0 0.0
    %7708 = vmatpush.msra.mxu0 0.0
    %7709 = vmatpush.msra.mxu0 0.0
    %7710 = vmatpush.msra.mxu0 0.0
    %7711 = vmatpush.msra.mxu0 0.0
    %7712 = vmatpush.msra.mxu0 0.0
    %7713 = vmatpush.msra.mxu0 0.0
    %7714 = vmatpush.msra.mxu0 0.0
    %7715 = vmatpush.msra.mxu0 0.0
    %7716 = vmatpush.msra.mxu0 0.0
    %7717 = vmatpush.msra.mxu0 %v7651
    %7718 = vmatmul.f32.gmra.mxu0 %v7660
    %v7719 = vpop.f32.mrf.mxu0
    %v7720 = vadd.f32 0.0, %v7719
    %7721 = vdwg.mxu0
    %7722 = vmatpush.msra.mxu0 0.0
    %7723 = vmatpush.msra.mxu0 0.0
    %7724 = vmatpush.msra.mxu0 0.0
    %7725 = vmatpush.msra.mxu0 0.0
    %7726 = vmatpush.msra.mxu0 0.0
    %7727 = vmatpush.msra.mxu0 0.0
    %7728 = vmatpush.msra.mxu0 0.0
    %7729 = vmatpush.msra.mxu0 0.0
    %7730 = vmatpush.msra.mxu0 0.0
    %7731 = vmatpush.msra.mxu0 0.0
    %7732 = vmatpush.msra.mxu0 0.0
    %7733 = vmatpush.msra.mxu0 0.0
    %7734 = vmatpush.msra.mxu0 0.0
    %7735 = vmatpush.msra.mxu0 0.0
    %7736 = vmatpush.msra.mxu0 0.0
    %7737 = vmatpush.msra.mxu0 %v7652
    %7738 = vmatmul.f32.gmra.mxu0 %v7660
    %v7739 = vpop.f32.mrf.mxu0
    %v7740 = vadd.f32 0.0, %v7739
    %7741 = vdwg.mxu0
    %7742 = vmatpush.msra.mxu0 0.0
    %7743 = vmatpush.msra.mxu0 0.0
    %7744 = vmatpush.msra.mxu0 0.0
    %7745 = vmatpush.msra.mxu0 0.0
    %7746 = vmatpush.msra.mxu0 0.0
    %7747 = vmatpush.msra.mxu0 0.0
    %7748 = vmatpush.msra.mxu0 0.0
    %7749 = vmatpush.msra.mxu0 0.0
    %7750 = vmatpush.msra.mxu0 0.0
    %7751 = vmatpush.msra.mxu0 0.0
    %7752 = vmatpush.msra.mxu0 0.0
    %7753 = vmatpush.msra.mxu0 0.0
    %7754 = vmatpush.msra.mxu0 0.0
    %7755 = vmatpush.msra.mxu0 0.0
    %7756 = vmatpush.msra.mxu0 0.0
    %7757 = vmatpush.msra.mxu0 %v7653
    %7758 = vmatmul.f32.gmra.mxu0 %v7660
    %v7759 = vpop.f32.mrf.mxu0
    %v7760 = vadd.f32 0.0, %v7759
    %7761 = vdwg.mxu0
    %7762 = vmatpush.msra.mxu0 0.0
    %7763 = vmatpush.msra.mxu0 0.0
    %7764 = vmatpush.msra.mxu0 0.0
    %7765 = vmatpush.msra.mxu0 0.0
    %7766 = vmatpush.msra.mxu0 0.0
    %7767 = vmatpush.msra.mxu0 0.0
    %7768 = vmatpush.msra.mxu0 0.0
    %7769 = vmatpush.msra.mxu0 0.0
    %7770 = vmatpush.msra.mxu0 0.0
    %7771 = vmatpush.msra.mxu0 0.0
    %7772 = vmatpush.msra.mxu0 0.0
    %7773 = vmatpush.msra.mxu0 0.0
    %7774 = vmatpush.msra.mxu0 0.0
    %7775 = vmatpush.msra.mxu0 0.0
    %7776 = vmatpush.msra.mxu0 0.0
    %7777 = vmatpush.msra.mxu0 %v7654
    %7778 = vmatmul.f32.gmra.mxu0 %v7660
    %v7779 = vpop.f32.mrf.mxu0
    %v7780 = vadd.f32 0.0, %v7779
    %7781 = vdwg.mxu0
    %7782 = vmatpush.msra.mxu0 0.0
    %7783 = vmatpush.msra.mxu0 0.0
    %7784 = vmatpush.msra.mxu0 0.0
    %7785 = vmatpush.msra.mxu0 0.0
    %7786 = vmatpush.msra.mxu0 0.0
    %7787 = vmatpush.msra.mxu0 0.0
    %7788 = vmatpush.msra.mxu0 0.0
    %7789 = vmatpush.msra.mxu0 0.0
    %7790 = vmatpush.msra.mxu0 0.0
    %7791 = vmatpush.msra.mxu0 0.0
    %7792 = vmatpush.msra.mxu0 0.0
    %7793 = vmatpush.msra.mxu0 0.0
    %7794 = vmatpush.msra.mxu0 0.0
    %7795 = vmatpush.msra.mxu0 0.0
    %7796 = vmatpush.msra.mxu0 0.0
    %7797 = vmatpush.msra.mxu0 %v7655
    %7798 = vmatmul.f32.gmra.mxu0 %v7660
    %v7799 = vpop.f32.mrf.mxu0
    %v7800 = vadd.f32 0.0, %v7799
    %7801 = vdwg.mxu0
    %7802 = vmatpush.msra.mxu0 0.0
    %7803 = vmatpush.msra.mxu0 0.0
    %7804 = vmatpush.msra.mxu0 0.0
    %7805 = vmatpush.msra.mxu0 0.0
    %7806 = vmatpush.msra.mxu0 0.0
    %7807 = vmatpush.msra.mxu0 0.0
    %7808 = vmatpush.msra.mxu0 0.0
    %7809 = vmatpush.msra.mxu0 0.0
    %7810 = vmatpush.msra.mxu0 0.0
    %7811 = vmatpush.msra.mxu0 0.0
    %7812 = vmatpush.msra.mxu0 0.0
    %7813 = vmatpush.msra.mxu0 0.0
    %7814 = vmatpush.msra.mxu0 0.0
    %7815 = vmatpush.msra.mxu0 0.0
    %7816 = vmatpush.msra.mxu0 0.0
    %7817 = vmatpush.msra.mxu0 %v7656
    %7818 = vmatmul.f32.gmra.mxu0 %v7660
    %v7819 = vpop.f32.mrf.mxu0
    %v7820 = vadd.f32 0.0, %v7819
    %7821 = vdwg.mxu0
    %v7822 = vadd.f32 %v7617, %v7680
    %v7823 = vadd.f32 %v7618, %v7700
    %v7824 = vadd.f32 %v7619, %v7720
    %v7825 = vadd.f32 %v7620, %v7740
    %v7826 = vadd.f32 %v7621, %v7760
    %v7827 = vadd.f32 %v7622, %v7780
    %v7828 = vadd.f32 %v7623, %v7800
    %v7829 = vadd.f32 %v7624, %v7820
    %7830 = vrot.lane.b32.xlu0 %v5584, 7
    %v7831 = vpop.permute.xlu0 %7830
    %7832 = vrot.lane.b32.xlu0 %v5585, 7
    %v7833 = vpop.permute.xlu0 %7832
    %7834 = vrot.lane.b32.xlu0 %v5586, 7
    %v7835 = vpop.permute.xlu0 %7834
    %7836 = vrot.lane.b32.xlu0 %v5587, 7
    %v7837 = vpop.permute.xlu0 %7836
    %7838 = vrot.lane.b32.xlu0 %v5588, 7
    %v7839 = vpop.permute.xlu0 %7838
    %7840 = vrot.lane.b32.xlu0 %v5589, 7
    %v7841 = vpop.permute.xlu0 %7840
    %7842 = vrot.lane.b32.xlu0 %v5590, 7
    %v7843 = vpop.permute.xlu0 %7842
    %7844 = vrot.lane.b32.xlu0 %v5591, 7
    %v7845 = vpop.permute.xlu0 %7844
    %v7846 = vsel %vm2460, %v7843, %v7845
    %v7847 = vsel %vm2460, %v7841, %v7843
    %v7848 = vsel %vm2460, %v7839, %v7841
    %v7849 = vsel %vm2460, %v7837, %v7839
    %v7850 = vsel %vm2460, %v7835, %v7837
    %v7851 = vsel %vm2460, %v7833, %v7835
    %v7852 = vsel %vm2460, %v7831, %v7833
    %v7853 = vsel %vm2460, %v7845, %v7831
    %v7854 = vsel %vm2469, %v7853, 0.0
    %v7855 = vsel %vm2470, %v7852, 0.0
    %v7856 = vsel %vm2471, %v7851, 0.0
    %v7857 = vsel %vm2472, %v7850, 0.0
    %v7858 = vsel %vm2473, %v7849, 0.0
    %v7859 = vsel %vm2474, %v7848, 0.0
    %v7860 = vsel %vm2475, %v7847, 0.0
    %v7861 = vsel %vm2476, %v7846, 0.0
    %s7862 = scalar_lea.vmem %s3, 88
    %v7863 = vld [vmem:[%s7862] sm:$0xff]
    %v7865 = vsel %vm207, %v7863, 0
    %7867 = vmatpush.msra.mxu0 0.0
    %7868 = vmatpush.msra.mxu0 0.0
    %7869 = vmatpush.msra.mxu0 0.0
    %7870 = vmatpush.msra.mxu0 0.0
    %7871 = vmatpush.msra.mxu0 0.0
    %7872 = vmatpush.msra.mxu0 0.0
    %7873 = vmatpush.msra.mxu0 0.0
    %7874 = vmatpush.msra.mxu0 0.0
    %7875 = vmatpush.msra.mxu0 0.0
    %7876 = vmatpush.msra.mxu0 0.0
    %7877 = vmatpush.msra.mxu0 0.0
    %7878 = vmatpush.msra.mxu0 0.0
    %7879 = vmatpush.msra.mxu0 0.0
    %7880 = vmatpush.msra.mxu0 0.0
    %7881 = vmatpush.msra.mxu0 0.0
    %7882 = vmatpush.msra.mxu0 %v7854
    %7883 = vmatmul.f32.gmra.mxu0 %v7865
    %v7884 = vpop.f32.mrf.mxu0
    %v7885 = vadd.f32 0.0, %v7884
    %7886 = vdwg.mxu0
    %7887 = vmatpush.msra.mxu0 0.0
    %7888 = vmatpush.msra.mxu0 0.0
    %7889 = vmatpush.msra.mxu0 0.0
    %7890 = vmatpush.msra.mxu0 0.0
    %7891 = vmatpush.msra.mxu0 0.0
    %7892 = vmatpush.msra.mxu0 0.0
    %7893 = vmatpush.msra.mxu0 0.0
    %7894 = vmatpush.msra.mxu0 0.0
    %7895 = vmatpush.msra.mxu0 0.0
    %7896 = vmatpush.msra.mxu0 0.0
    %7897 = vmatpush.msra.mxu0 0.0
    %7898 = vmatpush.msra.mxu0 0.0
    %7899 = vmatpush.msra.mxu0 0.0
    %7900 = vmatpush.msra.mxu0 0.0
    %7901 = vmatpush.msra.mxu0 0.0
    %7902 = vmatpush.msra.mxu0 %v7855
    %7903 = vmatmul.f32.gmra.mxu0 %v7865
    %v7904 = vpop.f32.mrf.mxu0
    %v7905 = vadd.f32 0.0, %v7904
    %7906 = vdwg.mxu0
    %7907 = vmatpush.msra.mxu0 0.0
    %7908 = vmatpush.msra.mxu0 0.0
    %7909 = vmatpush.msra.mxu0 0.0
    %7910 = vmatpush.msra.mxu0 0.0
    %7911 = vmatpush.msra.mxu0 0.0
    %7912 = vmatpush.msra.mxu0 0.0
    %7913 = vmatpush.msra.mxu0 0.0
    %7914 = vmatpush.msra.mxu0 0.0
    %7915 = vmatpush.msra.mxu0 0.0
    %7916 = vmatpush.msra.mxu0 0.0
    %7917 = vmatpush.msra.mxu0 0.0
    %7918 = vmatpush.msra.mxu0 0.0
    %7919 = vmatpush.msra.mxu0 0.0
    %7920 = vmatpush.msra.mxu0 0.0
    %7921 = vmatpush.msra.mxu0 0.0
    %7922 = vmatpush.msra.mxu0 %v7856
    %7923 = vmatmul.f32.gmra.mxu0 %v7865
    %v7924 = vpop.f32.mrf.mxu0
    %v7925 = vadd.f32 0.0, %v7924
    %7926 = vdwg.mxu0
    %7927 = vmatpush.msra.mxu0 0.0
    %7928 = vmatpush.msra.mxu0 0.0
    %7929 = vmatpush.msra.mxu0 0.0
    %7930 = vmatpush.msra.mxu0 0.0
    %7931 = vmatpush.msra.mxu0 0.0
    %7932 = vmatpush.msra.mxu0 0.0
    %7933 = vmatpush.msra.mxu0 0.0
    %7934 = vmatpush.msra.mxu0 0.0
    %7935 = vmatpush.msra.mxu0 0.0
    %7936 = vmatpush.msra.mxu0 0.0
    %7937 = vmatpush.msra.mxu0 0.0
    %7938 = vmatpush.msra.mxu0 0.0
    %7939 = vmatpush.msra.mxu0 0.0
    %7940 = vmatpush.msra.mxu0 0.0
    %7941 = vmatpush.msra.mxu0 0.0
    %7942 = vmatpush.msra.mxu0 %v7857
    %7943 = vmatmul.f32.gmra.mxu0 %v7865
    %v7944 = vpop.f32.mrf.mxu0
    %v7945 = vadd.f32 0.0, %v7944
    %7946 = vdwg.mxu0
    %7947 = vmatpush.msra.mxu0 0.0
    %7948 = vmatpush.msra.mxu0 0.0
    %7949 = vmatpush.msra.mxu0 0.0
    %7950 = vmatpush.msra.mxu0 0.0
    %7951 = vmatpush.msra.mxu0 0.0
    %7952 = vmatpush.msra.mxu0 0.0
    %7953 = vmatpush.msra.mxu0 0.0
    %7954 = vmatpush.msra.mxu0 0.0
    %7955 = vmatpush.msra.mxu0 0.0
    %7956 = vmatpush.msra.mxu0 0.0
    %7957 = vmatpush.msra.mxu0 0.0
    %7958 = vmatpush.msra.mxu0 0.0
    %7959 = vmatpush.msra.mxu0 0.0
    %7960 = vmatpush.msra.mxu0 0.0
    %7961 = vmatpush.msra.mxu0 0.0
    %7962 = vmatpush.msra.mxu0 %v7858
    %7963 = vmatmul.f32.gmra.mxu0 %v7865
    %v7964 = vpop.f32.mrf.mxu0
    %v7965 = vadd.f32 0.0, %v7964
    %7966 = vdwg.mxu0
    %7967 = vmatpush.msra.mxu0 0.0
    %7968 = vmatpush.msra.mxu0 0.0
    %7969 = vmatpush.msra.mxu0 0.0
    %7970 = vmatpush.msra.mxu0 0.0
    %7971 = vmatpush.msra.mxu0 0.0
    %7972 = vmatpush.msra.mxu0 0.0
    %7973 = vmatpush.msra.mxu0 0.0
    %7974 = vmatpush.msra.mxu0 0.0
    %7975 = vmatpush.msra.mxu0 0.0
    %7976 = vmatpush.msra.mxu0 0.0
    %7977 = vmatpush.msra.mxu0 0.0
    %7978 = vmatpush.msra.mxu0 0.0
    %7979 = vmatpush.msra.mxu0 0.0
    %7980 = vmatpush.msra.mxu0 0.0
    %7981 = vmatpush.msra.mxu0 0.0
    %7982 = vmatpush.msra.mxu0 %v7859
    %7983 = vmatmul.f32.gmra.mxu0 %v7865
    %v7984 = vpop.f32.mrf.mxu0
    %v7985 = vadd.f32 0.0, %v7984
    %7986 = vdwg.mxu0
    %7987 = vmatpush.msra.mxu0 0.0
    %7988 = vmatpush.msra.mxu0 0.0
    %7989 = vmatpush.msra.mxu0 0.0
    %7990 = vmatpush.msra.mxu0 0.0
    %7991 = vmatpush.msra.mxu0 0.0
    %7992 = vmatpush.msra.mxu0 0.0
    %7993 = vmatpush.msra.mxu0 0.0
    %7994 = vmatpush.msra.mxu0 0.0
    %7995 = vmatpush.msra.mxu0 0.0
    %7996 = vmatpush.msra.mxu0 0.0
    %7997 = vmatpush.msra.mxu0 0.0
    %7998 = vmatpush.msra.mxu0 0.0
    %7999 = vmatpush.msra.mxu0 0.0
    %8000 = vmatpush.msra.mxu0 0.0
    %8001 = vmatpush.msra.mxu0 0.0
    %8002 = vmatpush.msra.mxu0 %v7860
    %8003 = vmatmul.f32.gmra.mxu0 %v7865
    %v8004 = vpop.f32.mrf.mxu0
    %v8005 = vadd.f32 0.0, %v8004
    %8006 = vdwg.mxu0
    %8007 = vmatpush.msra.mxu0 0.0
    %8008 = vmatpush.msra.mxu0 0.0
    %8009 = vmatpush.msra.mxu0 0.0
    %8010 = vmatpush.msra.mxu0 0.0
    %8011 = vmatpush.msra.mxu0 0.0
    %8012 = vmatpush.msra.mxu0 0.0
    %8013 = vmatpush.msra.mxu0 0.0
    %8014 = vmatpush.msra.mxu0 0.0
    %8015 = vmatpush.msra.mxu0 0.0
    %8016 = vmatpush.msra.mxu0 0.0
    %8017 = vmatpush.msra.mxu0 0.0
    %8018 = vmatpush.msra.mxu0 0.0
    %8019 = vmatpush.msra.mxu0 0.0
    %8020 = vmatpush.msra.mxu0 0.0
    %8021 = vmatpush.msra.mxu0 0.0
    %8022 = vmatpush.msra.mxu0 %v7861
    %8023 = vmatmul.f32.gmra.mxu0 %v7865
    %v8024 = vpop.f32.mrf.mxu0
    %v8025 = vadd.f32 0.0, %v8024
    %8026 = vdwg.mxu0
    %v8027 = vadd.f32 %v7822, %v7885
    %v8028 = vadd.f32 %v7823, %v7905
    %v8029 = vadd.f32 %v7824, %v7925
    %v8030 = vadd.f32 %v7825, %v7945
    %v8031 = vadd.f32 %v7826, %v7965
    %v8032 = vadd.f32 %v7827, %v7985
    %v8033 = vadd.f32 %v7828, %v8005
    %v8034 = vadd.f32 %v7829, %v8025
    %8035 = vrot.lane.b32.xlu0 %v5584, 1
    %v8036 = vpop.permute.xlu0 %8035
    %8037 = vrot.lane.b32.xlu0 %v5585, 1
    %v8038 = vpop.permute.xlu0 %8037
    %8039 = vrot.lane.b32.xlu0 %v5586, 1
    %v8040 = vpop.permute.xlu0 %8039
    %8041 = vrot.lane.b32.xlu0 %v5587, 1
    %v8042 = vpop.permute.xlu0 %8041
    %8043 = vrot.lane.b32.xlu0 %v5588, 1
    %v8044 = vpop.permute.xlu0 %8043
    %8045 = vrot.lane.b32.xlu0 %v5589, 1
    %v8046 = vpop.permute.xlu0 %8045
    %8047 = vrot.lane.b32.xlu0 %v5590, 1
    %v8048 = vpop.permute.xlu0 %8047
    %8049 = vrot.lane.b32.xlu0 %v5591, 1
    %v8050 = vpop.permute.xlu0 %8049
    %v8051 = vsel %vm2674, %v8048, %v8050
    %v8052 = vsel %vm2674, %v8046, %v8048
    %v8053 = vsel %vm2674, %v8044, %v8046
    %v8054 = vsel %vm2674, %v8042, %v8044
    %v8055 = vsel %vm2674, %v8040, %v8042
    %v8056 = vsel %vm2674, %v8038, %v8040
    %v8057 = vsel %vm2674, %v8036, %v8038
    %v8058 = vsel %vm2674, %v8050, %v8036
    %v8059 = vsel %vm106, %v8058, 0.0
    %v8060 = vsel %vm107, %v8057, 0.0
    %v8061 = vsel %vm108, %v8056, 0.0
    %v8062 = vsel %vm109, %v8055, 0.0
    %v8063 = vsel %vm110, %v8054, 0.0
    %v8064 = vsel %vm111, %v8053, 0.0
    %v8065 = vsel %vm112, %v8052, 0.0
    %v8066 = vsel %vm113, %v8051, 0.0
    %s8067 = scalar_lea.vmem %s3, 96
    %v8068 = vld [vmem:[%s8067] sm:$0xff]
    %v8070 = vsel %vm207, %v8068, 0
    %8072 = vmatpush.msra.mxu0 0.0
    %8073 = vmatpush.msra.mxu0 0.0
    %8074 = vmatpush.msra.mxu0 0.0
    %8075 = vmatpush.msra.mxu0 0.0
    %8076 = vmatpush.msra.mxu0 0.0
    %8077 = vmatpush.msra.mxu0 0.0
    %8078 = vmatpush.msra.mxu0 0.0
    %8079 = vmatpush.msra.mxu0 0.0
    %8080 = vmatpush.msra.mxu0 0.0
    %8081 = vmatpush.msra.mxu0 0.0
    %8082 = vmatpush.msra.mxu0 0.0
    %8083 = vmatpush.msra.mxu0 0.0
    %8084 = vmatpush.msra.mxu0 0.0
    %8085 = vmatpush.msra.mxu0 0.0
    %8086 = vmatpush.msra.mxu0 0.0
    %8087 = vmatpush.msra.mxu0 %v8059
    %8088 = vmatmul.f32.gmra.mxu0 %v8070
    %v8089 = vpop.f32.mrf.mxu0
    %v8090 = vadd.f32 0.0, %v8089
    %8091 = vdwg.mxu0
    %8092 = vmatpush.msra.mxu0 0.0
    %8093 = vmatpush.msra.mxu0 0.0
    %8094 = vmatpush.msra.mxu0 0.0
    %8095 = vmatpush.msra.mxu0 0.0
    %8096 = vmatpush.msra.mxu0 0.0
    %8097 = vmatpush.msra.mxu0 0.0
    %8098 = vmatpush.msra.mxu0 0.0
    %8099 = vmatpush.msra.mxu0 0.0
    %8100 = vmatpush.msra.mxu0 0.0
    %8101 = vmatpush.msra.mxu0 0.0
    %8102 = vmatpush.msra.mxu0 0.0
    %8103 = vmatpush.msra.mxu0 0.0
    %8104 = vmatpush.msra.mxu0 0.0
    %8105 = vmatpush.msra.mxu0 0.0
    %8106 = vmatpush.msra.mxu0 0.0
    %8107 = vmatpush.msra.mxu0 %v8060
    %8108 = vmatmul.f32.gmra.mxu0 %v8070
    %v8109 = vpop.f32.mrf.mxu0
    %v8110 = vadd.f32 0.0, %v8109
    %8111 = vdwg.mxu0
    %8112 = vmatpush.msra.mxu0 0.0
    %8113 = vmatpush.msra.mxu0 0.0
    %8114 = vmatpush.msra.mxu0 0.0
    %8115 = vmatpush.msra.mxu0 0.0
    %8116 = vmatpush.msra.mxu0 0.0
    %8117 = vmatpush.msra.mxu0 0.0
    %8118 = vmatpush.msra.mxu0 0.0
    %8119 = vmatpush.msra.mxu0 0.0
    %8120 = vmatpush.msra.mxu0 0.0
    %8121 = vmatpush.msra.mxu0 0.0
    %8122 = vmatpush.msra.mxu0 0.0
    %8123 = vmatpush.msra.mxu0 0.0
    %8124 = vmatpush.msra.mxu0 0.0
    %8125 = vmatpush.msra.mxu0 0.0
    %8126 = vmatpush.msra.mxu0 0.0
    %8127 = vmatpush.msra.mxu0 %v8061
    %8128 = vmatmul.f32.gmra.mxu0 %v8070
    %v8129 = vpop.f32.mrf.mxu0
    %v8130 = vadd.f32 0.0, %v8129
    %8131 = vdwg.mxu0
    %8132 = vmatpush.msra.mxu0 0.0
    %8133 = vmatpush.msra.mxu0 0.0
    %8134 = vmatpush.msra.mxu0 0.0
    %8135 = vmatpush.msra.mxu0 0.0
    %8136 = vmatpush.msra.mxu0 0.0
    %8137 = vmatpush.msra.mxu0 0.0
    %8138 = vmatpush.msra.mxu0 0.0
    %8139 = vmatpush.msra.mxu0 0.0
    %8140 = vmatpush.msra.mxu0 0.0
    %8141 = vmatpush.msra.mxu0 0.0
    %8142 = vmatpush.msra.mxu0 0.0
    %8143 = vmatpush.msra.mxu0 0.0
    %8144 = vmatpush.msra.mxu0 0.0
    %8145 = vmatpush.msra.mxu0 0.0
    %8146 = vmatpush.msra.mxu0 0.0
    %8147 = vmatpush.msra.mxu0 %v8062
    %8148 = vmatmul.f32.gmra.mxu0 %v8070
    %v8149 = vpop.f32.mrf.mxu0
    %v8150 = vadd.f32 0.0, %v8149
    %8151 = vdwg.mxu0
    %8152 = vmatpush.msra.mxu0 0.0
    %8153 = vmatpush.msra.mxu0 0.0
    %8154 = vmatpush.msra.mxu0 0.0
    %8155 = vmatpush.msra.mxu0 0.0
    %8156 = vmatpush.msra.mxu0 0.0
    %8157 = vmatpush.msra.mxu0 0.0
    %8158 = vmatpush.msra.mxu0 0.0
    %8159 = vmatpush.msra.mxu0 0.0
    %8160 = vmatpush.msra.mxu0 0.0
    %8161 = vmatpush.msra.mxu0 0.0
    %8162 = vmatpush.msra.mxu0 0.0
    %8163 = vmatpush.msra.mxu0 0.0
    %8164 = vmatpush.msra.mxu0 0.0
    %8165 = vmatpush.msra.mxu0 0.0
    %8166 = vmatpush.msra.mxu0 0.0
    %8167 = vmatpush.msra.mxu0 %v8063
    %8168 = vmatmul.f32.gmra.mxu0 %v8070
    %v8169 = vpop.f32.mrf.mxu0
    %v8170 = vadd.f32 0.0, %v8169
    %8171 = vdwg.mxu0
    %8172 = vmatpush.msra.mxu0 0.0
    %8173 = vmatpush.msra.mxu0 0.0
    %8174 = vmatpush.msra.mxu0 0.0
    %8175 = vmatpush.msra.mxu0 0.0
    %8176 = vmatpush.msra.mxu0 0.0
    %8177 = vmatpush.msra.mxu0 0.0
    %8178 = vmatpush.msra.mxu0 0.0
    %8179 = vmatpush.msra.mxu0 0.0
    %8180 = vmatpush.msra.mxu0 0.0
    %8181 = vmatpush.msra.mxu0 0.0
    %8182 = vmatpush.msra.mxu0 0.0
    %8183 = vmatpush.msra.mxu0 0.0
    %8184 = vmatpush.msra.mxu0 0.0
    %8185 = vmatpush.msra.mxu0 0.0
    %8186 = vmatpush.msra.mxu0 0.0
    %8187 = vmatpush.msra.mxu0 %v8064
    %8188 = vmatmul.f32.gmra.mxu0 %v8070
    %v8189 = vpop.f32.mrf.mxu0
    %v8190 = vadd.f32 0.0, %v8189
    %8191 = vdwg.mxu0
    %8192 = vmatpush.msra.mxu0 0.0
    %8193 = vmatpush.msra.mxu0 0.0
    %8194 = vmatpush.msra.mxu0 0.0
    %8195 = vmatpush.msra.mxu0 0.0
    %8196 = vmatpush.msra.mxu0 0.0
    %8197 = vmatpush.msra.mxu0 0.0
    %8198 = vmatpush.msra.mxu0 0.0
    %8199 = vmatpush.msra.mxu0 0.0
    %8200 = vmatpush.msra.mxu0 0.0
    %8201 = vmatpush.msra.mxu0 0.0
    %8202 = vmatpush.msra.mxu0 0.0
    %8203 = vmatpush.msra.mxu0 0.0
    %8204 = vmatpush.msra.mxu0 0.0
    %8205 = vmatpush.msra.mxu0 0.0
    %8206 = vmatpush.msra.mxu0 0.0
    %8207 = vmatpush.msra.mxu0 %v8065
    %8208 = vmatmul.f32.gmra.mxu0 %v8070
    %v8209 = vpop.f32.mrf.mxu0
    %v8210 = vadd.f32 0.0, %v8209
    %8211 = vdwg.mxu0
    %8212 = vmatpush.msra.mxu0 0.0
    %8213 = vmatpush.msra.mxu0 0.0
    %8214 = vmatpush.msra.mxu0 0.0
    %8215 = vmatpush.msra.mxu0 0.0
    %8216 = vmatpush.msra.mxu0 0.0
    %8217 = vmatpush.msra.mxu0 0.0
    %8218 = vmatpush.msra.mxu0 0.0
    %8219 = vmatpush.msra.mxu0 0.0
    %8220 = vmatpush.msra.mxu0 0.0
    %8221 = vmatpush.msra.mxu0 0.0
    %8222 = vmatpush.msra.mxu0 0.0
    %8223 = vmatpush.msra.mxu0 0.0
    %8224 = vmatpush.msra.mxu0 0.0
    %8225 = vmatpush.msra.mxu0 0.0
    %8226 = vmatpush.msra.mxu0 0.0
    %8227 = vmatpush.msra.mxu0 %v8066
    %8228 = vmatmul.f32.gmra.mxu0 %v8070
    %v8229 = vpop.f32.mrf.mxu0
    %v8230 = vadd.f32 0.0, %v8229
    %8231 = vdwg.mxu0
    %v8232 = vadd.f32 %v8027, %v8090
    %v8233 = vadd.f32 %v8028, %v8110
    %v8234 = vadd.f32 %v8029, %v8130
    %v8235 = vadd.f32 %v8030, %v8150
    %v8236 = vadd.f32 %v8031, %v8170
    %v8237 = vadd.f32 %v8032, %v8190
    %v8238 = vadd.f32 %v8033, %v8210
    %v8239 = vadd.f32 %v8034, %v8230
    %s8240 = scalar_lea.vmem %s3, 104
    %v8241 = vld [vmem:[%s8240] sm:$0xff]
    %v8243 = vsel %vm207, %v8241, 0
    %8245 = vmatpush.msra.mxu0 0.0
    %8246 = vmatpush.msra.mxu0 0.0
    %8247 = vmatpush.msra.mxu0 0.0
    %8248 = vmatpush.msra.mxu0 0.0
    %8249 = vmatpush.msra.mxu0 0.0
    %8250 = vmatpush.msra.mxu0 0.0
    %8251 = vmatpush.msra.mxu0 0.0
    %8252 = vmatpush.msra.mxu0 0.0
    %8253 = vmatpush.msra.mxu0 0.0
    %8254 = vmatpush.msra.mxu0 0.0
    %8255 = vmatpush.msra.mxu0 0.0
    %8256 = vmatpush.msra.mxu0 0.0
    %8257 = vmatpush.msra.mxu0 0.0
    %8258 = vmatpush.msra.mxu0 0.0
    %8259 = vmatpush.msra.mxu0 0.0
    %8260 = vmatpush.msra.mxu0 %v5584
    %8261 = vmatmul.f32.gmra.mxu0 %v8243
    %v8262 = vpop.f32.mrf.mxu0
    %v8263 = vadd.f32 0.0, %v8262
    %8264 = vdwg.mxu0
    %8265 = vmatpush.msra.mxu0 0.0
    %8266 = vmatpush.msra.mxu0 0.0
    %8267 = vmatpush.msra.mxu0 0.0
    %8268 = vmatpush.msra.mxu0 0.0
    %8269 = vmatpush.msra.mxu0 0.0
    %8270 = vmatpush.msra.mxu0 0.0
    %8271 = vmatpush.msra.mxu0 0.0
    %8272 = vmatpush.msra.mxu0 0.0
    %8273 = vmatpush.msra.mxu0 0.0
    %8274 = vmatpush.msra.mxu0 0.0
    %8275 = vmatpush.msra.mxu0 0.0
    %8276 = vmatpush.msra.mxu0 0.0
    %8277 = vmatpush.msra.mxu0 0.0
    %8278 = vmatpush.msra.mxu0 0.0
    %8279 = vmatpush.msra.mxu0 0.0
    %8280 = vmatpush.msra.mxu0 %v5585
    %8281 = vmatmul.f32.gmra.mxu0 %v8243
    %v8282 = vpop.f32.mrf.mxu0
    %v8283 = vadd.f32 0.0, %v8282
    %8284 = vdwg.mxu0
    %8285 = vmatpush.msra.mxu0 0.0
    %8286 = vmatpush.msra.mxu0 0.0
    %8287 = vmatpush.msra.mxu0 0.0
    %8288 = vmatpush.msra.mxu0 0.0
    %8289 = vmatpush.msra.mxu0 0.0
    %8290 = vmatpush.msra.mxu0 0.0
    %8291 = vmatpush.msra.mxu0 0.0
    %8292 = vmatpush.msra.mxu0 0.0
    %8293 = vmatpush.msra.mxu0 0.0
    %8294 = vmatpush.msra.mxu0 0.0
    %8295 = vmatpush.msra.mxu0 0.0
    %8296 = vmatpush.msra.mxu0 0.0
    %8297 = vmatpush.msra.mxu0 0.0
    %8298 = vmatpush.msra.mxu0 0.0
    %8299 = vmatpush.msra.mxu0 0.0
    %8300 = vmatpush.msra.mxu0 %v5586
    %8301 = vmatmul.f32.gmra.mxu0 %v8243
    %v8302 = vpop.f32.mrf.mxu0
    %v8303 = vadd.f32 0.0, %v8302
    %8304 = vdwg.mxu0
    %8305 = vmatpush.msra.mxu0 0.0
    %8306 = vmatpush.msra.mxu0 0.0
    %8307 = vmatpush.msra.mxu0 0.0
    %8308 = vmatpush.msra.mxu0 0.0
    %8309 = vmatpush.msra.mxu0 0.0
    %8310 = vmatpush.msra.mxu0 0.0
    %8311 = vmatpush.msra.mxu0 0.0
    %8312 = vmatpush.msra.mxu0 0.0
    %8313 = vmatpush.msra.mxu0 0.0
    %8314 = vmatpush.msra.mxu0 0.0
    %8315 = vmatpush.msra.mxu0 0.0
    %8316 = vmatpush.msra.mxu0 0.0
    %8317 = vmatpush.msra.mxu0 0.0
    %8318 = vmatpush.msra.mxu0 0.0
    %8319 = vmatpush.msra.mxu0 0.0
    %8320 = vmatpush.msra.mxu0 %v5587
    %8321 = vmatmul.f32.gmra.mxu0 %v8243
    %v8322 = vpop.f32.mrf.mxu0
    %v8323 = vadd.f32 0.0, %v8322
    %8324 = vdwg.mxu0
    %8325 = vmatpush.msra.mxu0 0.0
    %8326 = vmatpush.msra.mxu0 0.0
    %8327 = vmatpush.msra.mxu0 0.0
    %8328 = vmatpush.msra.mxu0 0.0
    %8329 = vmatpush.msra.mxu0 0.0
    %8330 = vmatpush.msra.mxu0 0.0
    %8331 = vmatpush.msra.mxu0 0.0
    %8332 = vmatpush.msra.mxu0 0.0
    %8333 = vmatpush.msra.mxu0 0.0
    %8334 = vmatpush.msra.mxu0 0.0
    %8335 = vmatpush.msra.mxu0 0.0
    %8336 = vmatpush.msra.mxu0 0.0
    %8337 = vmatpush.msra.mxu0 0.0
    %8338 = vmatpush.msra.mxu0 0.0
    %8339 = vmatpush.msra.mxu0 0.0
    %8340 = vmatpush.msra.mxu0 %v5588
    %8341 = vmatmul.f32.gmra.mxu0 %v8243
    %v8342 = vpop.f32.mrf.mxu0
    %v8343 = vadd.f32 0.0, %v8342
    %8344 = vdwg.mxu0
    %8345 = vmatpush.msra.mxu0 0.0
    %8346 = vmatpush.msra.mxu0 0.0
    %8347 = vmatpush.msra.mxu0 0.0
    %8348 = vmatpush.msra.mxu0 0.0
    %8349 = vmatpush.msra.mxu0 0.0
    %8350 = vmatpush.msra.mxu0 0.0
    %8351 = vmatpush.msra.mxu0 0.0
    %8352 = vmatpush.msra.mxu0 0.0
    %8353 = vmatpush.msra.mxu0 0.0
    %8354 = vmatpush.msra.mxu0 0.0
    %8355 = vmatpush.msra.mxu0 0.0
    %8356 = vmatpush.msra.mxu0 0.0
    %8357 = vmatpush.msra.mxu0 0.0
    %8358 = vmatpush.msra.mxu0 0.0
    %8359 = vmatpush.msra.mxu0 0.0
    %8360 = vmatpush.msra.mxu0 %v5589
    %8361 = vmatmul.f32.gmra.mxu0 %v8243
    %v8362 = vpop.f32.mrf.mxu0
    %v8363 = vadd.f32 0.0, %v8362
    %8364 = vdwg.mxu0
    %8365 = vmatpush.msra.mxu0 0.0
    %8366 = vmatpush.msra.mxu0 0.0
    %8367 = vmatpush.msra.mxu0 0.0
    %8368 = vmatpush.msra.mxu0 0.0
    %8369 = vmatpush.msra.mxu0 0.0
    %8370 = vmatpush.msra.mxu0 0.0
    %8371 = vmatpush.msra.mxu0 0.0
    %8372 = vmatpush.msra.mxu0 0.0
    %8373 = vmatpush.msra.mxu0 0.0
    %8374 = vmatpush.msra.mxu0 0.0
    %8375 = vmatpush.msra.mxu0 0.0
    %8376 = vmatpush.msra.mxu0 0.0
    %8377 = vmatpush.msra.mxu0 0.0
    %8378 = vmatpush.msra.mxu0 0.0
    %8379 = vmatpush.msra.mxu0 0.0
    %8380 = vmatpush.msra.mxu0 %v5590
    %8381 = vmatmul.f32.gmra.mxu0 %v8243
    %v8382 = vpop.f32.mrf.mxu0
    %v8383 = vadd.f32 0.0, %v8382
    %8384 = vdwg.mxu0
    %8385 = vmatpush.msra.mxu0 0.0
    %8386 = vmatpush.msra.mxu0 0.0
    %8387 = vmatpush.msra.mxu0 0.0
    %8388 = vmatpush.msra.mxu0 0.0
    %8389 = vmatpush.msra.mxu0 0.0
    %8390 = vmatpush.msra.mxu0 0.0
    %8391 = vmatpush.msra.mxu0 0.0
    %8392 = vmatpush.msra.mxu0 0.0
    %8393 = vmatpush.msra.mxu0 0.0
    %8394 = vmatpush.msra.mxu0 0.0
    %8395 = vmatpush.msra.mxu0 0.0
    %8396 = vmatpush.msra.mxu0 0.0
    %8397 = vmatpush.msra.mxu0 0.0
    %8398 = vmatpush.msra.mxu0 0.0
    %8399 = vmatpush.msra.mxu0 0.0
    %8400 = vmatpush.msra.mxu0 %v5591
    %8401 = vmatmul.f32.gmra.mxu0 %v8243
    %v8402 = vpop.f32.mrf.mxu0
    %v8403 = vadd.f32 0.0, %v8402
    %8404 = vdwg.mxu0
    %v8405 = vadd.f32 %v8232, %v8263
    %v8406 = vadd.f32 %v8233, %v8283
    %v8407 = vadd.f32 %v8234, %v8303
    %v8408 = vadd.f32 %v8235, %v8323
    %v8409 = vadd.f32 %v8236, %v8343
    %v8410 = vadd.f32 %v8237, %v8363
    %v8411 = vadd.f32 %v8238, %v8383
    %v8412 = vadd.f32 %v8239, %v8403
    %8413 = vrot.lane.b32.xlu0 %v5584, 127
    %v8414 = vpop.permute.xlu0 %8413
    %8415 = vrot.lane.b32.xlu0 %v5585, 127
    %v8416 = vpop.permute.xlu0 %8415
    %8417 = vrot.lane.b32.xlu0 %v5586, 127
    %v8418 = vpop.permute.xlu0 %8417
    %8419 = vrot.lane.b32.xlu0 %v5587, 127
    %v8420 = vpop.permute.xlu0 %8419
    %8421 = vrot.lane.b32.xlu0 %v5588, 127
    %v8422 = vpop.permute.xlu0 %8421
    %8423 = vrot.lane.b32.xlu0 %v5589, 127
    %v8424 = vpop.permute.xlu0 %8423
    %8425 = vrot.lane.b32.xlu0 %v5590, 127
    %v8426 = vpop.permute.xlu0 %8425
    %8427 = vrot.lane.b32.xlu0 %v5591, 127
    %v8428 = vpop.permute.xlu0 %8427
    %v8429 = vsel %vm3053, %v8426, %v8428
    %v8430 = vsel %vm3053, %v8424, %v8426
    %v8431 = vsel %vm3053, %v8422, %v8424
    %v8432 = vsel %vm3053, %v8420, %v8422
    %v8433 = vsel %vm3053, %v8418, %v8420
    %v8434 = vsel %vm3053, %v8416, %v8418
    %v8435 = vsel %vm3053, %v8414, %v8416
    %v8436 = vsel %vm3053, %v8428, %v8414
    %v8437 = vsel %vm114, %v8435, 0.0
    %v8438 = vsel %vm115, %v8434, 0.0
    %v8439 = vsel %vm116, %v8433, 0.0
    %v8440 = vsel %vm117, %v8432, 0.0
    %v8441 = vsel %vm118, %v8431, 0.0
    %v8442 = vsel %vm119, %v8430, 0.0
    %v8443 = vsel %vm120, %v8429, 0.0
    %v8444 = vsel %vm121, %v8436, 0.0
    %s8445 = scalar_lea.vmem %s3, 112
    %v8446 = vld [vmem:[%s8445] sm:$0xff]
    %v8448 = vsel %vm207, %v8446, 0
    %8450 = vmatpush.msra.mxu0 0.0
    %8451 = vmatpush.msra.mxu0 0.0
    %8452 = vmatpush.msra.mxu0 0.0
    %8453 = vmatpush.msra.mxu0 0.0
    %8454 = vmatpush.msra.mxu0 0.0
    %8455 = vmatpush.msra.mxu0 0.0
    %8456 = vmatpush.msra.mxu0 0.0
    %8457 = vmatpush.msra.mxu0 0.0
    %8458 = vmatpush.msra.mxu0 0.0
    %8459 = vmatpush.msra.mxu0 0.0
    %8460 = vmatpush.msra.mxu0 0.0
    %8461 = vmatpush.msra.mxu0 0.0
    %8462 = vmatpush.msra.mxu0 0.0
    %8463 = vmatpush.msra.mxu0 0.0
    %8464 = vmatpush.msra.mxu0 0.0
    %8465 = vmatpush.msra.mxu0 %v8437
    %8466 = vmatmul.f32.gmra.mxu0 %v8448
    %v8467 = vpop.f32.mrf.mxu0
    %v8468 = vadd.f32 0.0, %v8467
    %8469 = vdwg.mxu0
    %8470 = vmatpush.msra.mxu0 0.0
    %8471 = vmatpush.msra.mxu0 0.0
    %8472 = vmatpush.msra.mxu0 0.0
    %8473 = vmatpush.msra.mxu0 0.0
    %8474 = vmatpush.msra.mxu0 0.0
    %8475 = vmatpush.msra.mxu0 0.0
    %8476 = vmatpush.msra.mxu0 0.0
    %8477 = vmatpush.msra.mxu0 0.0
    %8478 = vmatpush.msra.mxu0 0.0
    %8479 = vmatpush.msra.mxu0 0.0
    %8480 = vmatpush.msra.mxu0 0.0
    %8481 = vmatpush.msra.mxu0 0.0
    %8482 = vmatpush.msra.mxu0 0.0
    %8483 = vmatpush.msra.mxu0 0.0
    %8484 = vmatpush.msra.mxu0 0.0
    %8485 = vmatpush.msra.mxu0 %v8438
    %8486 = vmatmul.f32.gmra.mxu0 %v8448
    %v8487 = vpop.f32.mrf.mxu0
    %v8488 = vadd.f32 0.0, %v8487
    %8489 = vdwg.mxu0
    %8490 = vmatpush.msra.mxu0 0.0
    %8491 = vmatpush.msra.mxu0 0.0
    %8492 = vmatpush.msra.mxu0 0.0
    %8493 = vmatpush.msra.mxu0 0.0
    %8494 = vmatpush.msra.mxu0 0.0
    %8495 = vmatpush.msra.mxu0 0.0
    %8496 = vmatpush.msra.mxu0 0.0
    %8497 = vmatpush.msra.mxu0 0.0
    %8498 = vmatpush.msra.mxu0 0.0
    %8499 = vmatpush.msra.mxu0 0.0
    %8500 = vmatpush.msra.mxu0 0.0
    %8501 = vmatpush.msra.mxu0 0.0
    %8502 = vmatpush.msra.mxu0 0.0
    %8503 = vmatpush.msra.mxu0 0.0
    %8504 = vmatpush.msra.mxu0 0.0
    %8505 = vmatpush.msra.mxu0 %v8439
    %8506 = vmatmul.f32.gmra.mxu0 %v8448
    %v8507 = vpop.f32.mrf.mxu0
    %v8508 = vadd.f32 0.0, %v8507
    %8509 = vdwg.mxu0
    %8510 = vmatpush.msra.mxu0 0.0
    %8511 = vmatpush.msra.mxu0 0.0
    %8512 = vmatpush.msra.mxu0 0.0
    %8513 = vmatpush.msra.mxu0 0.0
    %8514 = vmatpush.msra.mxu0 0.0
    %8515 = vmatpush.msra.mxu0 0.0
    %8516 = vmatpush.msra.mxu0 0.0
    %8517 = vmatpush.msra.mxu0 0.0
    %8518 = vmatpush.msra.mxu0 0.0
    %8519 = vmatpush.msra.mxu0 0.0
    %8520 = vmatpush.msra.mxu0 0.0
    %8521 = vmatpush.msra.mxu0 0.0
    %8522 = vmatpush.msra.mxu0 0.0
    %8523 = vmatpush.msra.mxu0 0.0
    %8524 = vmatpush.msra.mxu0 0.0
    %8525 = vmatpush.msra.mxu0 %v8440
    %8526 = vmatmul.f32.gmra.mxu0 %v8448
    %v8527 = vpop.f32.mrf.mxu0
    %v8528 = vadd.f32 0.0, %v8527
    %8529 = vdwg.mxu0
    %8530 = vmatpush.msra.mxu0 0.0
    %8531 = vmatpush.msra.mxu0 0.0
    %8532 = vmatpush.msra.mxu0 0.0
    %8533 = vmatpush.msra.mxu0 0.0
    %8534 = vmatpush.msra.mxu0 0.0
    %8535 = vmatpush.msra.mxu0 0.0
    %8536 = vmatpush.msra.mxu0 0.0
    %8537 = vmatpush.msra.mxu0 0.0
    %8538 = vmatpush.msra.mxu0 0.0
    %8539 = vmatpush.msra.mxu0 0.0
    %8540 = vmatpush.msra.mxu0 0.0
    %8541 = vmatpush.msra.mxu0 0.0
    %8542 = vmatpush.msra.mxu0 0.0
    %8543 = vmatpush.msra.mxu0 0.0
    %8544 = vmatpush.msra.mxu0 0.0
    %8545 = vmatpush.msra.mxu0 %v8441
    %8546 = vmatmul.f32.gmra.mxu0 %v8448
    %v8547 = vpop.f32.mrf.mxu0
    %v8548 = vadd.f32 0.0, %v8547
    %8549 = vdwg.mxu0
    %8550 = vmatpush.msra.mxu0 0.0
    %8551 = vmatpush.msra.mxu0 0.0
    %8552 = vmatpush.msra.mxu0 0.0
    %8553 = vmatpush.msra.mxu0 0.0
    %8554 = vmatpush.msra.mxu0 0.0
    %8555 = vmatpush.msra.mxu0 0.0
    %8556 = vmatpush.msra.mxu0 0.0
    %8557 = vmatpush.msra.mxu0 0.0
    %8558 = vmatpush.msra.mxu0 0.0
    %8559 = vmatpush.msra.mxu0 0.0
    %8560 = vmatpush.msra.mxu0 0.0
    %8561 = vmatpush.msra.mxu0 0.0
    %8562 = vmatpush.msra.mxu0 0.0
    %8563 = vmatpush.msra.mxu0 0.0
    %8564 = vmatpush.msra.mxu0 0.0
    %8565 = vmatpush.msra.mxu0 %v8442
    %8566 = vmatmul.f32.gmra.mxu0 %v8448
    %v8567 = vpop.f32.mrf.mxu0
    %v8568 = vadd.f32 0.0, %v8567
    %8569 = vdwg.mxu0
    %8570 = vmatpush.msra.mxu0 0.0
    %8571 = vmatpush.msra.mxu0 0.0
    %8572 = vmatpush.msra.mxu0 0.0
    %8573 = vmatpush.msra.mxu0 0.0
    %8574 = vmatpush.msra.mxu0 0.0
    %8575 = vmatpush.msra.mxu0 0.0
    %8576 = vmatpush.msra.mxu0 0.0
    %8577 = vmatpush.msra.mxu0 0.0
    %8578 = vmatpush.msra.mxu0 0.0
    %8579 = vmatpush.msra.mxu0 0.0
    %8580 = vmatpush.msra.mxu0 0.0
    %8581 = vmatpush.msra.mxu0 0.0
    %8582 = vmatpush.msra.mxu0 0.0
    %8583 = vmatpush.msra.mxu0 0.0
    %8584 = vmatpush.msra.mxu0 0.0
    %8585 = vmatpush.msra.mxu0 %v8443
    %8586 = vmatmul.f32.gmra.mxu0 %v8448
    %v8587 = vpop.f32.mrf.mxu0
    %v8588 = vadd.f32 0.0, %v8587
    %8589 = vdwg.mxu0
    %8590 = vmatpush.msra.mxu0 0.0
    %8591 = vmatpush.msra.mxu0 0.0
    %8592 = vmatpush.msra.mxu0 0.0
    %8593 = vmatpush.msra.mxu0 0.0
    %8594 = vmatpush.msra.mxu0 0.0
    %8595 = vmatpush.msra.mxu0 0.0
    %8596 = vmatpush.msra.mxu0 0.0
    %8597 = vmatpush.msra.mxu0 0.0
    %8598 = vmatpush.msra.mxu0 0.0
    %8599 = vmatpush.msra.mxu0 0.0
    %8600 = vmatpush.msra.mxu0 0.0
    %8601 = vmatpush.msra.mxu0 0.0
    %8602 = vmatpush.msra.mxu0 0.0
    %8603 = vmatpush.msra.mxu0 0.0
    %8604 = vmatpush.msra.mxu0 0.0
    %8605 = vmatpush.msra.mxu0 %v8444
    %8606 = vmatmul.f32.gmra.mxu0 %v8448
    %v8607 = vpop.f32.mrf.mxu0
    %v8608 = vadd.f32 0.0, %v8607
    %8609 = vdwg.mxu0
    %v8610 = vadd.f32 %v8405, %v8468
    %v8611 = vadd.f32 %v8406, %v8488
    %v8612 = vadd.f32 %v8407, %v8508
    %v8613 = vadd.f32 %v8408, %v8528
    %v8614 = vadd.f32 %v8409, %v8548
    %v8615 = vadd.f32 %v8410, %v8568
    %v8616 = vadd.f32 %v8411, %v8588
    %v8617 = vadd.f32 %v8412, %v8608
    %8618 = vrot.lane.b32.xlu0 %v5584, 121
    %v8619 = vpop.permute.xlu0 %8618
    %8620 = vrot.lane.b32.xlu0 %v5585, 121
    %v8621 = vpop.permute.xlu0 %8620
    %8622 = vrot.lane.b32.xlu0 %v5586, 121
    %v8623 = vpop.permute.xlu0 %8622
    %8624 = vrot.lane.b32.xlu0 %v5587, 121
    %v8625 = vpop.permute.xlu0 %8624
    %8626 = vrot.lane.b32.xlu0 %v5588, 121
    %v8627 = vpop.permute.xlu0 %8626
    %8628 = vrot.lane.b32.xlu0 %v5589, 121
    %v8629 = vpop.permute.xlu0 %8628
    %8630 = vrot.lane.b32.xlu0 %v5590, 121
    %v8631 = vpop.permute.xlu0 %8630
    %8632 = vrot.lane.b32.xlu0 %v5591, 121
    %v8633 = vpop.permute.xlu0 %8632
    %v8634 = vsel %vm3259, %v8631, %v8633
    %v8635 = vsel %vm3259, %v8629, %v8631
    %v8636 = vsel %vm3259, %v8627, %v8629
    %v8637 = vsel %vm3259, %v8625, %v8627
    %v8638 = vsel %vm3259, %v8623, %v8625
    %v8639 = vsel %vm3259, %v8621, %v8623
    %v8640 = vsel %vm3259, %v8619, %v8621
    %v8641 = vsel %vm3259, %v8633, %v8619
    %v8642 = vsel %vm3268, %v8640, 0.0
    %v8643 = vsel %vm3269, %v8639, 0.0
    %v8644 = vsel %vm3270, %v8638, 0.0
    %v8645 = vsel %vm3271, %v8637, 0.0
    %v8646 = vsel %vm3272, %v8636, 0.0
    %v8647 = vsel %vm3273, %v8635, 0.0
    %v8648 = vsel %vm3274, %v8634, 0.0
    %v8649 = vsel %vm3275, %v8641, 0.0
    %s8650 = scalar_lea.vmem %s3, 120
    %v8651 = vld [vmem:[%s8650] sm:$0xff]
    %v8653 = vsel %vm207, %v8651, 0
    %8655 = vmatpush.msra.mxu0 0.0
    %8656 = vmatpush.msra.mxu0 0.0
    %8657 = vmatpush.msra.mxu0 0.0
    %8658 = vmatpush.msra.mxu0 0.0
    %8659 = vmatpush.msra.mxu0 0.0
    %8660 = vmatpush.msra.mxu0 0.0
    %8661 = vmatpush.msra.mxu0 0.0
    %8662 = vmatpush.msra.mxu0 0.0
    %8663 = vmatpush.msra.mxu0 0.0
    %8664 = vmatpush.msra.mxu0 0.0
    %8665 = vmatpush.msra.mxu0 0.0
    %8666 = vmatpush.msra.mxu0 0.0
    %8667 = vmatpush.msra.mxu0 0.0
    %8668 = vmatpush.msra.mxu0 0.0
    %8669 = vmatpush.msra.mxu0 0.0
    %8670 = vmatpush.msra.mxu0 %v8642
    %8671 = vmatmul.f32.gmra.mxu0 %v8653
    %v8672 = vpop.f32.mrf.mxu0
    %v8673 = vadd.f32 0.0, %v8672
    %8674 = vdwg.mxu0
    %8675 = vmatpush.msra.mxu0 0.0
    %8676 = vmatpush.msra.mxu0 0.0
    %8677 = vmatpush.msra.mxu0 0.0
    %8678 = vmatpush.msra.mxu0 0.0
    %8679 = vmatpush.msra.mxu0 0.0
    %8680 = vmatpush.msra.mxu0 0.0
    %8681 = vmatpush.msra.mxu0 0.0
    %8682 = vmatpush.msra.mxu0 0.0
    %8683 = vmatpush.msra.mxu0 0.0
    %8684 = vmatpush.msra.mxu0 0.0
    %8685 = vmatpush.msra.mxu0 0.0
    %8686 = vmatpush.msra.mxu0 0.0
    %8687 = vmatpush.msra.mxu0 0.0
    %8688 = vmatpush.msra.mxu0 0.0
    %8689 = vmatpush.msra.mxu0 0.0
    %8690 = vmatpush.msra.mxu0 %v8643
    %8691 = vmatmul.f32.gmra.mxu0 %v8653
    %v8692 = vpop.f32.mrf.mxu0
    %v8693 = vadd.f32 0.0, %v8692
    %8694 = vdwg.mxu0
    %8695 = vmatpush.msra.mxu0 0.0
    %8696 = vmatpush.msra.mxu0 0.0
    %8697 = vmatpush.msra.mxu0 0.0
    %8698 = vmatpush.msra.mxu0 0.0
    %8699 = vmatpush.msra.mxu0 0.0
    %8700 = vmatpush.msra.mxu0 0.0
    %8701 = vmatpush.msra.mxu0 0.0
    %8702 = vmatpush.msra.mxu0 0.0
    %8703 = vmatpush.msra.mxu0 0.0
    %8704 = vmatpush.msra.mxu0 0.0
    %8705 = vmatpush.msra.mxu0 0.0
    %8706 = vmatpush.msra.mxu0 0.0
    %8707 = vmatpush.msra.mxu0 0.0
    %8708 = vmatpush.msra.mxu0 0.0
    %8709 = vmatpush.msra.mxu0 0.0
    %8710 = vmatpush.msra.mxu0 %v8644
    %8711 = vmatmul.f32.gmra.mxu0 %v8653
    %v8712 = vpop.f32.mrf.mxu0
    %v8713 = vadd.f32 0.0, %v8712
    %8714 = vdwg.mxu0
    %8715 = vmatpush.msra.mxu0 0.0
    %8716 = vmatpush.msra.mxu0 0.0
    %8717 = vmatpush.msra.mxu0 0.0
    %8718 = vmatpush.msra.mxu0 0.0
    %8719 = vmatpush.msra.mxu0 0.0
    %8720 = vmatpush.msra.mxu0 0.0
    %8721 = vmatpush.msra.mxu0 0.0
    %8722 = vmatpush.msra.mxu0 0.0
    %8723 = vmatpush.msra.mxu0 0.0
    %8724 = vmatpush.msra.mxu0 0.0
    %8725 = vmatpush.msra.mxu0 0.0
    %8726 = vmatpush.msra.mxu0 0.0
    %8727 = vmatpush.msra.mxu0 0.0
    %8728 = vmatpush.msra.mxu0 0.0
    %8729 = vmatpush.msra.mxu0 0.0
    %8730 = vmatpush.msra.mxu0 %v8645
    %8731 = vmatmul.f32.gmra.mxu0 %v8653
    %v8732 = vpop.f32.mrf.mxu0
    %v8733 = vadd.f32 0.0, %v8732
    %8734 = vdwg.mxu0
    %8735 = vmatpush.msra.mxu0 0.0
    %8736 = vmatpush.msra.mxu0 0.0
    %8737 = vmatpush.msra.mxu0 0.0
    %8738 = vmatpush.msra.mxu0 0.0
    %8739 = vmatpush.msra.mxu0 0.0
    %8740 = vmatpush.msra.mxu0 0.0
    %8741 = vmatpush.msra.mxu0 0.0
    %8742 = vmatpush.msra.mxu0 0.0
    %8743 = vmatpush.msra.mxu0 0.0
    %8744 = vmatpush.msra.mxu0 0.0
    %8745 = vmatpush.msra.mxu0 0.0
    %8746 = vmatpush.msra.mxu0 0.0
    %8747 = vmatpush.msra.mxu0 0.0
    %8748 = vmatpush.msra.mxu0 0.0
    %8749 = vmatpush.msra.mxu0 0.0
    %8750 = vmatpush.msra.mxu0 %v8646
    %8751 = vmatmul.f32.gmra.mxu0 %v8653
    %v8752 = vpop.f32.mrf.mxu0
    %v8753 = vadd.f32 0.0, %v8752
    %8754 = vdwg.mxu0
    %8755 = vmatpush.msra.mxu0 0.0
    %8756 = vmatpush.msra.mxu0 0.0
    %8757 = vmatpush.msra.mxu0 0.0
    %8758 = vmatpush.msra.mxu0 0.0
    %8759 = vmatpush.msra.mxu0 0.0
    %8760 = vmatpush.msra.mxu0 0.0
    %8761 = vmatpush.msra.mxu0 0.0
    %8762 = vmatpush.msra.mxu0 0.0
    %8763 = vmatpush.msra.mxu0 0.0
    %8764 = vmatpush.msra.mxu0 0.0
    %8765 = vmatpush.msra.mxu0 0.0
    %8766 = vmatpush.msra.mxu0 0.0
    %8767 = vmatpush.msra.mxu0 0.0
    %8768 = vmatpush.msra.mxu0 0.0
    %8769 = vmatpush.msra.mxu0 0.0
    %8770 = vmatpush.msra.mxu0 %v8647
    %8771 = vmatmul.f32.gmra.mxu0 %v8653
    %v8772 = vpop.f32.mrf.mxu0
    %v8773 = vadd.f32 0.0, %v8772
    %8774 = vdwg.mxu0
    %8775 = vmatpush.msra.mxu0 0.0
    %8776 = vmatpush.msra.mxu0 0.0
    %8777 = vmatpush.msra.mxu0 0.0
    %8778 = vmatpush.msra.mxu0 0.0
    %8779 = vmatpush.msra.mxu0 0.0
    %8780 = vmatpush.msra.mxu0 0.0
    %8781 = vmatpush.msra.mxu0 0.0
    %8782 = vmatpush.msra.mxu0 0.0
    %8783 = vmatpush.msra.mxu0 0.0
    %8784 = vmatpush.msra.mxu0 0.0
    %8785 = vmatpush.msra.mxu0 0.0
    %8786 = vmatpush.msra.mxu0 0.0
    %8787 = vmatpush.msra.mxu0 0.0
    %8788 = vmatpush.msra.mxu0 0.0
    %8789 = vmatpush.msra.mxu0 0.0
    %8790 = vmatpush.msra.mxu0 %v8648
    %8791 = vmatmul.f32.gmra.mxu0 %v8653
    %v8792 = vpop.f32.mrf.mxu0
    %v8793 = vadd.f32 0.0, %v8792
    %8794 = vdwg.mxu0
    %8795 = vmatpush.msra.mxu0 0.0
    %8796 = vmatpush.msra.mxu0 0.0
    %8797 = vmatpush.msra.mxu0 0.0
    %8798 = vmatpush.msra.mxu0 0.0
    %8799 = vmatpush.msra.mxu0 0.0
    %8800 = vmatpush.msra.mxu0 0.0
    %8801 = vmatpush.msra.mxu0 0.0
    %8802 = vmatpush.msra.mxu0 0.0
    %8803 = vmatpush.msra.mxu0 0.0
    %8804 = vmatpush.msra.mxu0 0.0
    %8805 = vmatpush.msra.mxu0 0.0
    %8806 = vmatpush.msra.mxu0 0.0
    %8807 = vmatpush.msra.mxu0 0.0
    %8808 = vmatpush.msra.mxu0 0.0
    %8809 = vmatpush.msra.mxu0 0.0
    %8810 = vmatpush.msra.mxu0 %v8649
    %8811 = vmatmul.f32.gmra.mxu0 %v8653
    %v8812 = vpop.f32.mrf.mxu0
    %v8813 = vadd.f32 0.0, %v8812
    %8814 = vdwg.mxu0
    %v8815 = vadd.f32 %v8610, %v8673
    %v8816 = vadd.f32 %v8611, %v8693
    %v8817 = vadd.f32 %v8612, %v8713
    %v8818 = vadd.f32 %v8613, %v8733
    %v8819 = vadd.f32 %v8614, %v8753
    %v8820 = vadd.f32 %v8615, %v8773
    %v8821 = vadd.f32 %v8616, %v8793
    %v8822 = vadd.f32 %v8617, %v8813
    %8823 = vrot.lane.b32.xlu0 %v5584, 120
    %v8824 = vpop.permute.xlu0 %8823
    %8825 = vrot.lane.b32.xlu0 %v5585, 120
    %v8826 = vpop.permute.xlu0 %8825
    %8827 = vrot.lane.b32.xlu0 %v5586, 120
    %v8828 = vpop.permute.xlu0 %8827
    %8829 = vrot.lane.b32.xlu0 %v5587, 120
    %v8830 = vpop.permute.xlu0 %8829
    %8831 = vrot.lane.b32.xlu0 %v5588, 120
    %v8832 = vpop.permute.xlu0 %8831
    %8833 = vrot.lane.b32.xlu0 %v5589, 120
    %v8834 = vpop.permute.xlu0 %8833
    %8835 = vrot.lane.b32.xlu0 %v5590, 120
    %v8836 = vpop.permute.xlu0 %8835
    %8837 = vrot.lane.b32.xlu0 %v5591, 120
    %v8838 = vpop.permute.xlu0 %8837
    %v8839 = vsel %vm3473, %v8836, %v8838
    %v8840 = vsel %vm3473, %v8834, %v8836
    %v8841 = vsel %vm3473, %v8832, %v8834
    %v8842 = vsel %vm3473, %v8830, %v8832
    %v8843 = vsel %vm3473, %v8828, %v8830
    %v8844 = vsel %vm3473, %v8826, %v8828
    %v8845 = vsel %vm3473, %v8824, %v8826
    %v8846 = vsel %vm3473, %v8838, %v8824
    %v8847 = vsel %vm98, %v8845, 0.0
    %v8848 = vsel %vm99, %v8844, 0.0
    %v8849 = vsel %vm100, %v8843, 0.0
    %v8850 = vsel %vm101, %v8842, 0.0
    %v8851 = vsel %vm102, %v8841, 0.0
    %v8852 = vsel %vm103, %v8840, 0.0
    %v8853 = vsel %vm104, %v8839, 0.0
    %v8854 = vsel %vm105, %v8846, 0.0
    %s8855 = scalar_lea.vmem %s3, 128
    %v8856 = vld [vmem:[%s8855] sm:$0xff]
    %v8858 = vsel %vm207, %v8856, 0
    %8860 = vmatpush.msra.mxu0 0.0
    %8861 = vmatpush.msra.mxu0 0.0
    %8862 = vmatpush.msra.mxu0 0.0
    %8863 = vmatpush.msra.mxu0 0.0
    %8864 = vmatpush.msra.mxu0 0.0
    %8865 = vmatpush.msra.mxu0 0.0
    %8866 = vmatpush.msra.mxu0 0.0
    %8867 = vmatpush.msra.mxu0 0.0
    %8868 = vmatpush.msra.mxu0 0.0
    %8869 = vmatpush.msra.mxu0 0.0
    %8870 = vmatpush.msra.mxu0 0.0
    %8871 = vmatpush.msra.mxu0 0.0
    %8872 = vmatpush.msra.mxu0 0.0
    %8873 = vmatpush.msra.mxu0 0.0
    %8874 = vmatpush.msra.mxu0 0.0
    %8875 = vmatpush.msra.mxu0 %v8847
    %8876 = vmatmul.f32.gmra.mxu0 %v8858
    %v8877 = vpop.f32.mrf.mxu0
    %v8878 = vadd.f32 0.0, %v8877
    %8879 = vdwg.mxu0
    %8880 = vmatpush.msra.mxu0 0.0
    %8881 = vmatpush.msra.mxu0 0.0
    %8882 = vmatpush.msra.mxu0 0.0
    %8883 = vmatpush.msra.mxu0 0.0
    %8884 = vmatpush.msra.mxu0 0.0
    %8885 = vmatpush.msra.mxu0 0.0
    %8886 = vmatpush.msra.mxu0 0.0
    %8887 = vmatpush.msra.mxu0 0.0
    %8888 = vmatpush.msra.mxu0 0.0
    %8889 = vmatpush.msra.mxu0 0.0
    %8890 = vmatpush.msra.mxu0 0.0
    %8891 = vmatpush.msra.mxu0 0.0
    %8892 = vmatpush.msra.mxu0 0.0
    %8893 = vmatpush.msra.mxu0 0.0
    %8894 = vmatpush.msra.mxu0 0.0
    %8895 = vmatpush.msra.mxu0 %v8848
    %8896 = vmatmul.f32.gmra.mxu0 %v8858
    %v8897 = vpop.f32.mrf.mxu0
    %v8898 = vadd.f32 0.0, %v8897
    %8899 = vdwg.mxu0
    %8900 = vmatpush.msra.mxu0 0.0
    %8901 = vmatpush.msra.mxu0 0.0
    %8902 = vmatpush.msra.mxu0 0.0
    %8903 = vmatpush.msra.mxu0 0.0
    %8904 = vmatpush.msra.mxu0 0.0
    %8905 = vmatpush.msra.mxu0 0.0
    %8906 = vmatpush.msra.mxu0 0.0
    %8907 = vmatpush.msra.mxu0 0.0
    %8908 = vmatpush.msra.mxu0 0.0
    %8909 = vmatpush.msra.mxu0 0.0
    %8910 = vmatpush.msra.mxu0 0.0
    %8911 = vmatpush.msra.mxu0 0.0
    %8912 = vmatpush.msra.mxu0 0.0
    %8913 = vmatpush.msra.mxu0 0.0
    %8914 = vmatpush.msra.mxu0 0.0
    %8915 = vmatpush.msra.mxu0 %v8849
    %8916 = vmatmul.f32.gmra.mxu0 %v8858
    %v8917 = vpop.f32.mrf.mxu0
    %v8918 = vadd.f32 0.0, %v8917
    %8919 = vdwg.mxu0
    %8920 = vmatpush.msra.mxu0 0.0
    %8921 = vmatpush.msra.mxu0 0.0
    %8922 = vmatpush.msra.mxu0 0.0
    %8923 = vmatpush.msra.mxu0 0.0
    %8924 = vmatpush.msra.mxu0 0.0
    %8925 = vmatpush.msra.mxu0 0.0
    %8926 = vmatpush.msra.mxu0 0.0
    %8927 = vmatpush.msra.mxu0 0.0
    %8928 = vmatpush.msra.mxu0 0.0
    %8929 = vmatpush.msra.mxu0 0.0
    %8930 = vmatpush.msra.mxu0 0.0
    %8931 = vmatpush.msra.mxu0 0.0
    %8932 = vmatpush.msra.mxu0 0.0
    %8933 = vmatpush.msra.mxu0 0.0
    %8934 = vmatpush.msra.mxu0 0.0
    %8935 = vmatpush.msra.mxu0 %v8850
    %8936 = vmatmul.f32.gmra.mxu0 %v8858
    %v8937 = vpop.f32.mrf.mxu0
    %v8938 = vadd.f32 0.0, %v8937
    %8939 = vdwg.mxu0
    %8940 = vmatpush.msra.mxu0 0.0
    %8941 = vmatpush.msra.mxu0 0.0
    %8942 = vmatpush.msra.mxu0 0.0
    %8943 = vmatpush.msra.mxu0 0.0
    %8944 = vmatpush.msra.mxu0 0.0
    %8945 = vmatpush.msra.mxu0 0.0
    %8946 = vmatpush.msra.mxu0 0.0
    %8947 = vmatpush.msra.mxu0 0.0
    %8948 = vmatpush.msra.mxu0 0.0
    %8949 = vmatpush.msra.mxu0 0.0
    %8950 = vmatpush.msra.mxu0 0.0
    %8951 = vmatpush.msra.mxu0 0.0
    %8952 = vmatpush.msra.mxu0 0.0
    %8953 = vmatpush.msra.mxu0 0.0
    %8954 = vmatpush.msra.mxu0 0.0
    %8955 = vmatpush.msra.mxu0 %v8851
    %8956 = vmatmul.f32.gmra.mxu0 %v8858
    %v8957 = vpop.f32.mrf.mxu0
    %v8958 = vadd.f32 0.0, %v8957
    %8959 = vdwg.mxu0
    %8960 = vmatpush.msra.mxu0 0.0
    %8961 = vmatpush.msra.mxu0 0.0
    %8962 = vmatpush.msra.mxu0 0.0
    %8963 = vmatpush.msra.mxu0 0.0
    %8964 = vmatpush.msra.mxu0 0.0
    %8965 = vmatpush.msra.mxu0 0.0
    %8966 = vmatpush.msra.mxu0 0.0
    %8967 = vmatpush.msra.mxu0 0.0
    %8968 = vmatpush.msra.mxu0 0.0
    %8969 = vmatpush.msra.mxu0 0.0
    %8970 = vmatpush.msra.mxu0 0.0
    %8971 = vmatpush.msra.mxu0 0.0
    %8972 = vmatpush.msra.mxu0 0.0
    %8973 = vmatpush.msra.mxu0 0.0
    %8974 = vmatpush.msra.mxu0 0.0
    %8975 = vmatpush.msra.mxu0 %v8852
    %8976 = vmatmul.f32.gmra.mxu0 %v8858
    %v8977 = vpop.f32.mrf.mxu0
    %v8978 = vadd.f32 0.0, %v8977
    %8979 = vdwg.mxu0
    %8980 = vmatpush.msra.mxu0 0.0
    %8981 = vmatpush.msra.mxu0 0.0
    %8982 = vmatpush.msra.mxu0 0.0
    %8983 = vmatpush.msra.mxu0 0.0
    %8984 = vmatpush.msra.mxu0 0.0
    %8985 = vmatpush.msra.mxu0 0.0
    %8986 = vmatpush.msra.mxu0 0.0
    %8987 = vmatpush.msra.mxu0 0.0
    %8988 = vmatpush.msra.mxu0 0.0
    %8989 = vmatpush.msra.mxu0 0.0
    %8990 = vmatpush.msra.mxu0 0.0
    %8991 = vmatpush.msra.mxu0 0.0
    %8992 = vmatpush.msra.mxu0 0.0
    %8993 = vmatpush.msra.mxu0 0.0
    %8994 = vmatpush.msra.mxu0 0.0
    %8995 = vmatpush.msra.mxu0 %v8853
    %8996 = vmatmul.f32.gmra.mxu0 %v8858
    %v8997 = vpop.f32.mrf.mxu0
    %v8998 = vadd.f32 0.0, %v8997
    %8999 = vdwg.mxu0
    %9000 = vmatpush.msra.mxu0 0.0
    %9001 = vmatpush.msra.mxu0 0.0
    %9002 = vmatpush.msra.mxu0 0.0
    %9003 = vmatpush.msra.mxu0 0.0
    %9004 = vmatpush.msra.mxu0 0.0
    %9005 = vmatpush.msra.mxu0 0.0
    %9006 = vmatpush.msra.mxu0 0.0
    %9007 = vmatpush.msra.mxu0 0.0
    %9008 = vmatpush.msra.mxu0 0.0
    %9009 = vmatpush.msra.mxu0 0.0
    %9010 = vmatpush.msra.mxu0 0.0
    %9011 = vmatpush.msra.mxu0 0.0
    %9012 = vmatpush.msra.mxu0 0.0
    %9013 = vmatpush.msra.mxu0 0.0
    %9014 = vmatpush.msra.mxu0 0.0
    %9015 = vmatpush.msra.mxu0 %v8854
    %9016 = vmatmul.f32.gmra.mxu0 %v8858
    %v9017 = vpop.f32.mrf.mxu0
    %v9018 = vadd.f32 0.0, %v9017
    %9019 = vdwg.mxu0
    %v9020 = vadd.f32 %v8815, %v8878
    %v9021 = vadd.f32 %v8816, %v8898
    %v9022 = vadd.f32 %v8817, %v8918
    %v9023 = vadd.f32 %v8818, %v8938
    %v9024 = vadd.f32 %v8819, %v8958
    %v9025 = vadd.f32 %v8820, %v8978
    %v9026 = vadd.f32 %v8821, %v8998
    %v9027 = vadd.f32 %v8822, %v9018
    %9028 = vrot.lane.b32.xlu0 %v5584, 119
    %v9029 = vpop.permute.xlu0 %9028
    %9030 = vrot.lane.b32.xlu0 %v5585, 119
    %v9031 = vpop.permute.xlu0 %9030
    %9032 = vrot.lane.b32.xlu0 %v5586, 119
    %v9033 = vpop.permute.xlu0 %9032
    %9034 = vrot.lane.b32.xlu0 %v5587, 119
    %v9035 = vpop.permute.xlu0 %9034
    %9036 = vrot.lane.b32.xlu0 %v5588, 119
    %v9037 = vpop.permute.xlu0 %9036
    %9038 = vrot.lane.b32.xlu0 %v5589, 119
    %v9039 = vpop.permute.xlu0 %9038
    %9040 = vrot.lane.b32.xlu0 %v5590, 119
    %v9041 = vpop.permute.xlu0 %9040
    %9042 = vrot.lane.b32.xlu0 %v5591, 119
    %v9043 = vpop.permute.xlu0 %9042
    %v9044 = vsel %vm3679, %v9041, %v9043
    %v9045 = vsel %vm3679, %v9039, %v9041
    %v9046 = vsel %vm3679, %v9037, %v9039
    %v9047 = vsel %vm3679, %v9035, %v9037
    %v9048 = vsel %vm3679, %v9033, %v9035
    %v9049 = vsel %vm3679, %v9031, %v9033
    %v9050 = vsel %vm3679, %v9029, %v9031
    %v9051 = vsel %vm3679, %v9043, %v9029
    %v9052 = vsel %vm3688, %v9050, 0.0
    %v9053 = vsel %vm3689, %v9049, 0.0
    %v9054 = vsel %vm3690, %v9048, 0.0
    %v9055 = vsel %vm3691, %v9047, 0.0
    %v9056 = vsel %vm3692, %v9046, 0.0
    %v9057 = vsel %vm3693, %v9045, 0.0
    %v9058 = vsel %vm3694, %v9044, 0.0
    %v9059 = vsel %vm3695, %v9051, 0.0
    %s9060 = scalar_lea.vmem %s3, 136
    %v9061 = vld [vmem:[%s9060] sm:$0xff]
    %v9063 = vsel %vm207, %v9061, 0
    %9065 = vmatpush.msra.mxu0 0.0
    %9066 = vmatpush.msra.mxu0 0.0
    %9067 = vmatpush.msra.mxu0 0.0
    %9068 = vmatpush.msra.mxu0 0.0
    %9069 = vmatpush.msra.mxu0 0.0
    %9070 = vmatpush.msra.mxu0 0.0
    %9071 = vmatpush.msra.mxu0 0.0
    %9072 = vmatpush.msra.mxu0 0.0
    %9073 = vmatpush.msra.mxu0 0.0
    %9074 = vmatpush.msra.mxu0 0.0
    %9075 = vmatpush.msra.mxu0 0.0
    %9076 = vmatpush.msra.mxu0 0.0
    %9077 = vmatpush.msra.mxu0 0.0
    %9078 = vmatpush.msra.mxu0 0.0
    %9079 = vmatpush.msra.mxu0 0.0
    %9080 = vmatpush.msra.mxu0 %v9052
    %9081 = vmatmul.f32.gmra.mxu0 %v9063
    %v9082 = vpop.f32.mrf.mxu0
    %v9083 = vadd.f32 0.0, %v9082
    %9084 = vdwg.mxu0
    %9085 = vmatpush.msra.mxu0 0.0
    %9086 = vmatpush.msra.mxu0 0.0
    %9087 = vmatpush.msra.mxu0 0.0
    %9088 = vmatpush.msra.mxu0 0.0
    %9089 = vmatpush.msra.mxu0 0.0
    %9090 = vmatpush.msra.mxu0 0.0
    %9091 = vmatpush.msra.mxu0 0.0
    %9092 = vmatpush.msra.mxu0 0.0
    %9093 = vmatpush.msra.mxu0 0.0
    %9094 = vmatpush.msra.mxu0 0.0
    %9095 = vmatpush.msra.mxu0 0.0
    %9096 = vmatpush.msra.mxu0 0.0
    %9097 = vmatpush.msra.mxu0 0.0
    %9098 = vmatpush.msra.mxu0 0.0
    %9099 = vmatpush.msra.mxu0 0.0
    %9100 = vmatpush.msra.mxu0 %v9053
    %9101 = vmatmul.f32.gmra.mxu0 %v9063
    %v9102 = vpop.f32.mrf.mxu0
    %v9103 = vadd.f32 0.0, %v9102
    %9104 = vdwg.mxu0
    %9105 = vmatpush.msra.mxu0 0.0
    %9106 = vmatpush.msra.mxu0 0.0
    %9107 = vmatpush.msra.mxu0 0.0
    %9108 = vmatpush.msra.mxu0 0.0
    %9109 = vmatpush.msra.mxu0 0.0
    %9110 = vmatpush.msra.mxu0 0.0
    %9111 = vmatpush.msra.mxu0 0.0
    %9112 = vmatpush.msra.mxu0 0.0
    %9113 = vmatpush.msra.mxu0 0.0
    %9114 = vmatpush.msra.mxu0 0.0
    %9115 = vmatpush.msra.mxu0 0.0
    %9116 = vmatpush.msra.mxu0 0.0
    %9117 = vmatpush.msra.mxu0 0.0
    %9118 = vmatpush.msra.mxu0 0.0
    %9119 = vmatpush.msra.mxu0 0.0
    %9120 = vmatpush.msra.mxu0 %v9054
    %9121 = vmatmul.f32.gmra.mxu0 %v9063
    %v9122 = vpop.f32.mrf.mxu0
    %v9123 = vadd.f32 0.0, %v9122
    %9124 = vdwg.mxu0
    %9125 = vmatpush.msra.mxu0 0.0
    %9126 = vmatpush.msra.mxu0 0.0
    %9127 = vmatpush.msra.mxu0 0.0
    %9128 = vmatpush.msra.mxu0 0.0
    %9129 = vmatpush.msra.mxu0 0.0
    %9130 = vmatpush.msra.mxu0 0.0
    %9131 = vmatpush.msra.mxu0 0.0
    %9132 = vmatpush.msra.mxu0 0.0
    %9133 = vmatpush.msra.mxu0 0.0
    %9134 = vmatpush.msra.mxu0 0.0
    %9135 = vmatpush.msra.mxu0 0.0
    %9136 = vmatpush.msra.mxu0 0.0
    %9137 = vmatpush.msra.mxu0 0.0
    %9138 = vmatpush.msra.mxu0 0.0
    %9139 = vmatpush.msra.mxu0 0.0
    %9140 = vmatpush.msra.mxu0 %v9055
    %9141 = vmatmul.f32.gmra.mxu0 %v9063
    %v9142 = vpop.f32.mrf.mxu0
    %v9143 = vadd.f32 0.0, %v9142
    %9144 = vdwg.mxu0
    %9145 = vmatpush.msra.mxu0 0.0
    %9146 = vmatpush.msra.mxu0 0.0
    %9147 = vmatpush.msra.mxu0 0.0
    %9148 = vmatpush.msra.mxu0 0.0
    %9149 = vmatpush.msra.mxu0 0.0
    %9150 = vmatpush.msra.mxu0 0.0
    %9151 = vmatpush.msra.mxu0 0.0
    %9152 = vmatpush.msra.mxu0 0.0
    %9153 = vmatpush.msra.mxu0 0.0
    %9154 = vmatpush.msra.mxu0 0.0
    %9155 = vmatpush.msra.mxu0 0.0
    %9156 = vmatpush.msra.mxu0 0.0
    %9157 = vmatpush.msra.mxu0 0.0
    %9158 = vmatpush.msra.mxu0 0.0
    %9159 = vmatpush.msra.mxu0 0.0
    %9160 = vmatpush.msra.mxu0 %v9056
    %9161 = vmatmul.f32.gmra.mxu0 %v9063
    %v9162 = vpop.f32.mrf.mxu0
    %v9163 = vadd.f32 0.0, %v9162
    %9164 = vdwg.mxu0
    %9165 = vmatpush.msra.mxu0 0.0
    %9166 = vmatpush.msra.mxu0 0.0
    %9167 = vmatpush.msra.mxu0 0.0
    %9168 = vmatpush.msra.mxu0 0.0
    %9169 = vmatpush.msra.mxu0 0.0
    %9170 = vmatpush.msra.mxu0 0.0
    %9171 = vmatpush.msra.mxu0 0.0
    %9172 = vmatpush.msra.mxu0 0.0
    %9173 = vmatpush.msra.mxu0 0.0
    %9174 = vmatpush.msra.mxu0 0.0
    %9175 = vmatpush.msra.mxu0 0.0
    %9176 = vmatpush.msra.mxu0 0.0
    %9177 = vmatpush.msra.mxu0 0.0
    %9178 = vmatpush.msra.mxu0 0.0
    %9179 = vmatpush.msra.mxu0 0.0
    %9180 = vmatpush.msra.mxu0 %v9057
    %9181 = vmatmul.f32.gmra.mxu0 %v9063
    %v9182 = vpop.f32.mrf.mxu0
    %v9183 = vadd.f32 0.0, %v9182
    %9184 = vdwg.mxu0
    %9185 = vmatpush.msra.mxu0 0.0
    %9186 = vmatpush.msra.mxu0 0.0
    %9187 = vmatpush.msra.mxu0 0.0
    %9188 = vmatpush.msra.mxu0 0.0
    %9189 = vmatpush.msra.mxu0 0.0
    %9190 = vmatpush.msra.mxu0 0.0
    %9191 = vmatpush.msra.mxu0 0.0
    %9192 = vmatpush.msra.mxu0 0.0
    %9193 = vmatpush.msra.mxu0 0.0
    %9194 = vmatpush.msra.mxu0 0.0
    %9195 = vmatpush.msra.mxu0 0.0
    %9196 = vmatpush.msra.mxu0 0.0
    %9197 = vmatpush.msra.mxu0 0.0
    %9198 = vmatpush.msra.mxu0 0.0
    %9199 = vmatpush.msra.mxu0 0.0
    %9200 = vmatpush.msra.mxu0 %v9058
    %9201 = vmatmul.f32.gmra.mxu0 %v9063
    %v9202 = vpop.f32.mrf.mxu0
    %v9203 = vadd.f32 0.0, %v9202
    %9204 = vdwg.mxu0
    %9205 = vmatpush.msra.mxu0 0.0
    %9206 = vmatpush.msra.mxu0 0.0
    %9207 = vmatpush.msra.mxu0 0.0
    %9208 = vmatpush.msra.mxu0 0.0
    %9209 = vmatpush.msra.mxu0 0.0
    %9210 = vmatpush.msra.mxu0 0.0
    %9211 = vmatpush.msra.mxu0 0.0
    %9212 = vmatpush.msra.mxu0 0.0
    %9213 = vmatpush.msra.mxu0 0.0
    %9214 = vmatpush.msra.mxu0 0.0
    %9215 = vmatpush.msra.mxu0 0.0
    %9216 = vmatpush.msra.mxu0 0.0
    %9217 = vmatpush.msra.mxu0 0.0
    %9218 = vmatpush.msra.mxu0 0.0
    %9219 = vmatpush.msra.mxu0 0.0
    %9220 = vmatpush.msra.mxu0 %v9059
    %9221 = vmatmul.f32.gmra.mxu0 %v9063
    %v9222 = vpop.f32.mrf.mxu0
    %v9223 = vadd.f32 0.0, %v9222
    %9224 = vdwg.mxu0
    %v9225 = vadd.f32 %v9020, %v9083
    %v9226 = vadd.f32 %v9021, %v9103
    %v9227 = vadd.f32 %v9022, %v9123
    %v9228 = vadd.f32 %v9023, %v9143
    %v9229 = vadd.f32 %v9024, %v9163
    %v9230 = vadd.f32 %v9025, %v9183
    %v9231 = vadd.f32 %v9026, %v9203
    %v9232 = vadd.f32 %v9027, %v9223
    %v9233 = vsel %vm3885, %v5614, 0.0
    %v9234 = vsel %vm3886, %v5613, 0.0
    %v9235 = vsel %vm3887, %v5612, 0.0
    %v9236 = vsel %vm3888, %v5611, 0.0
    %v9237 = vsel %vm3889, %v5610, 0.0
    %v9238 = vsel %vm3890, %v5609, 0.0
    %v9239 = vsel %vm3891, %v5608, 0.0
    %v9240 = vsel %vm3892, %v5615, 0.0
    %s9241 = scalar_lea.vmem %s3, 144
    %v9242 = vld [vmem:[%s9241] sm:$0xff]
    %v9244 = vsel %vm207, %v9242, 0
    %9246 = vmatpush.msra.mxu0 0.0
    %9247 = vmatpush.msra.mxu0 0.0
    %9248 = vmatpush.msra.mxu0 0.0
    %9249 = vmatpush.msra.mxu0 0.0
    %9250 = vmatpush.msra.mxu0 0.0
    %9251 = vmatpush.msra.mxu0 0.0
    %9252 = vmatpush.msra.mxu0 0.0
    %9253 = vmatpush.msra.mxu0 0.0
    %9254 = vmatpush.msra.mxu0 0.0
    %9255 = vmatpush.msra.mxu0 0.0
    %9256 = vmatpush.msra.mxu0 0.0
    %9257 = vmatpush.msra.mxu0 0.0
    %9258 = vmatpush.msra.mxu0 0.0
    %9259 = vmatpush.msra.mxu0 0.0
    %9260 = vmatpush.msra.mxu0 0.0
    %9261 = vmatpush.msra.mxu0 %v9233
    %9262 = vmatmul.f32.gmra.mxu0 %v9244
    %v9263 = vpop.f32.mrf.mxu0
    %v9264 = vadd.f32 0.0, %v9263
    %9265 = vdwg.mxu0
    %9266 = vmatpush.msra.mxu0 0.0
    %9267 = vmatpush.msra.mxu0 0.0
    %9268 = vmatpush.msra.mxu0 0.0
    %9269 = vmatpush.msra.mxu0 0.0
    %9270 = vmatpush.msra.mxu0 0.0
    %9271 = vmatpush.msra.mxu0 0.0
    %9272 = vmatpush.msra.mxu0 0.0
    %9273 = vmatpush.msra.mxu0 0.0
    %9274 = vmatpush.msra.mxu0 0.0
    %9275 = vmatpush.msra.mxu0 0.0
    %9276 = vmatpush.msra.mxu0 0.0
    %9277 = vmatpush.msra.mxu0 0.0
    %9278 = vmatpush.msra.mxu0 0.0
    %9279 = vmatpush.msra.mxu0 0.0
    %9280 = vmatpush.msra.mxu0 0.0
    %9281 = vmatpush.msra.mxu0 %v9234
    %9282 = vmatmul.f32.gmra.mxu0 %v9244
    %v9283 = vpop.f32.mrf.mxu0
    %v9284 = vadd.f32 0.0, %v9283
    %9285 = vdwg.mxu0
    %9286 = vmatpush.msra.mxu0 0.0
    %9287 = vmatpush.msra.mxu0 0.0
    %9288 = vmatpush.msra.mxu0 0.0
    %9289 = vmatpush.msra.mxu0 0.0
    %9290 = vmatpush.msra.mxu0 0.0
    %9291 = vmatpush.msra.mxu0 0.0
    %9292 = vmatpush.msra.mxu0 0.0
    %9293 = vmatpush.msra.mxu0 0.0
    %9294 = vmatpush.msra.mxu0 0.0
    %9295 = vmatpush.msra.mxu0 0.0
    %9296 = vmatpush.msra.mxu0 0.0
    %9297 = vmatpush.msra.mxu0 0.0
    %9298 = vmatpush.msra.mxu0 0.0
    %9299 = vmatpush.msra.mxu0 0.0
    %9300 = vmatpush.msra.mxu0 0.0
    %9301 = vmatpush.msra.mxu0 %v9235
    %9302 = vmatmul.f32.gmra.mxu0 %v9244
    %v9303 = vpop.f32.mrf.mxu0
    %v9304 = vadd.f32 0.0, %v9303
    %9305 = vdwg.mxu0
    %9306 = vmatpush.msra.mxu0 0.0
    %9307 = vmatpush.msra.mxu0 0.0
    %9308 = vmatpush.msra.mxu0 0.0
    %9309 = vmatpush.msra.mxu0 0.0
    %9310 = vmatpush.msra.mxu0 0.0
    %9311 = vmatpush.msra.mxu0 0.0
    %9312 = vmatpush.msra.mxu0 0.0
    %9313 = vmatpush.msra.mxu0 0.0
    %9314 = vmatpush.msra.mxu0 0.0
    %9315 = vmatpush.msra.mxu0 0.0
    %9316 = vmatpush.msra.mxu0 0.0
    %9317 = vmatpush.msra.mxu0 0.0
    %9318 = vmatpush.msra.mxu0 0.0
    %9319 = vmatpush.msra.mxu0 0.0
    %9320 = vmatpush.msra.mxu0 0.0
    %9321 = vmatpush.msra.mxu0 %v9236
    %9322 = vmatmul.f32.gmra.mxu0 %v9244
    %v9323 = vpop.f32.mrf.mxu0
    %v9324 = vadd.f32 0.0, %v9323
    %9325 = vdwg.mxu0
    %9326 = vmatpush.msra.mxu0 0.0
    %9327 = vmatpush.msra.mxu0 0.0
    %9328 = vmatpush.msra.mxu0 0.0
    %9329 = vmatpush.msra.mxu0 0.0
    %9330 = vmatpush.msra.mxu0 0.0
    %9331 = vmatpush.msra.mxu0 0.0
    %9332 = vmatpush.msra.mxu0 0.0
    %9333 = vmatpush.msra.mxu0 0.0
    %9334 = vmatpush.msra.mxu0 0.0
    %9335 = vmatpush.msra.mxu0 0.0
    %9336 = vmatpush.msra.mxu0 0.0
    %9337 = vmatpush.msra.mxu0 0.0
    %9338 = vmatpush.msra.mxu0 0.0
    %9339 = vmatpush.msra.mxu0 0.0
    %9340 = vmatpush.msra.mxu0 0.0
    %9341 = vmatpush.msra.mxu0 %v9237
    %9342 = vmatmul.f32.gmra.mxu0 %v9244
    %v9343 = vpop.f32.mrf.mxu0
    %v9344 = vadd.f32 0.0, %v9343
    %9345 = vdwg.mxu0
    %9346 = vmatpush.msra.mxu0 0.0
    %9347 = vmatpush.msra.mxu0 0.0
    %9348 = vmatpush.msra.mxu0 0.0
    %9349 = vmatpush.msra.mxu0 0.0
    %9350 = vmatpush.msra.mxu0 0.0
    %9351 = vmatpush.msra.mxu0 0.0
    %9352 = vmatpush.msra.mxu0 0.0
    %9353 = vmatpush.msra.mxu0 0.0
    %9354 = vmatpush.msra.mxu0 0.0
    %9355 = vmatpush.msra.mxu0 0.0
    %9356 = vmatpush.msra.mxu0 0.0
    %9357 = vmatpush.msra.mxu0 0.0
    %9358 = vmatpush.msra.mxu0 0.0
    %9359 = vmatpush.msra.mxu0 0.0
    %9360 = vmatpush.msra.mxu0 0.0
    %9361 = vmatpush.msra.mxu0 %v9238
    %9362 = vmatmul.f32.gmra.mxu0 %v9244
    %v9363 = vpop.f32.mrf.mxu0
    %v9364 = vadd.f32 0.0, %v9363
    %9365 = vdwg.mxu0
    %9366 = vmatpush.msra.mxu0 0.0
    %9367 = vmatpush.msra.mxu0 0.0
    %9368 = vmatpush.msra.mxu0 0.0
    %9369 = vmatpush.msra.mxu0 0.0
    %9370 = vmatpush.msra.mxu0 0.0
    %9371 = vmatpush.msra.mxu0 0.0
    %9372 = vmatpush.msra.mxu0 0.0
    %9373 = vmatpush.msra.mxu0 0.0
    %9374 = vmatpush.msra.mxu0 0.0
    %9375 = vmatpush.msra.mxu0 0.0
    %9376 = vmatpush.msra.mxu0 0.0
    %9377 = vmatpush.msra.mxu0 0.0
    %9378 = vmatpush.msra.mxu0 0.0
    %9379 = vmatpush.msra.mxu0 0.0
    %9380 = vmatpush.msra.mxu0 0.0
    %9381 = vmatpush.msra.mxu0 %v9239
    %9382 = vmatmul.f32.gmra.mxu0 %v9244
    %v9383 = vpop.f32.mrf.mxu0
    %v9384 = vadd.f32 0.0, %v9383
    %9385 = vdwg.mxu0
    %9386 = vmatpush.msra.mxu0 0.0
    %9387 = vmatpush.msra.mxu0 0.0
    %9388 = vmatpush.msra.mxu0 0.0
    %9389 = vmatpush.msra.mxu0 0.0
    %9390 = vmatpush.msra.mxu0 0.0
    %9391 = vmatpush.msra.mxu0 0.0
    %9392 = vmatpush.msra.mxu0 0.0
    %9393 = vmatpush.msra.mxu0 0.0
    %9394 = vmatpush.msra.mxu0 0.0
    %9395 = vmatpush.msra.mxu0 0.0
    %9396 = vmatpush.msra.mxu0 0.0
    %9397 = vmatpush.msra.mxu0 0.0
    %9398 = vmatpush.msra.mxu0 0.0
    %9399 = vmatpush.msra.mxu0 0.0
    %9400 = vmatpush.msra.mxu0 0.0
    %9401 = vmatpush.msra.mxu0 %v9240
    %9402 = vmatmul.f32.gmra.mxu0 %v9244
    %v9403 = vpop.f32.mrf.mxu0
    %v9404 = vadd.f32 0.0, %v9403
    %9405 = vdwg.mxu0
    %v9406 = vadd.f32 %v9225, %v9264
    %v9407 = vadd.f32 %v9226, %v9284
    %v9408 = vadd.f32 %v9227, %v9304
    %v9409 = vadd.f32 %v9228, %v9324
    %v9410 = vadd.f32 %v9229, %v9344
    %v9411 = vadd.f32 %v9230, %v9364
    %v9412 = vadd.f32 %v9231, %v9384
    %v9413 = vadd.f32 %v9232, %v9404
    %v9414 = vsel %vm3877, %v5647, 0.0
    %v9415 = vsel %vm3878, %v5646, 0.0
    %v9416 = vsel %vm3879, %v5645, 0.0
    %v9417 = vsel %vm3880, %v5644, 0.0
    %v9418 = vsel %vm3881, %v5643, 0.0
    %v9419 = vsel %vm3882, %v5642, 0.0
    %v9420 = vsel %vm3883, %v5641, 0.0
    %v9421 = vsel %vm3884, %v5648, 0.0
    %s9422 = scalar_lea.vmem %s3, 152
    %v9423 = vld [vmem:[%s9422] sm:$0xff]
    %v9425 = vsel %vm207, %v9423, 0
    %9427 = vmatpush.msra.mxu0 0.0
    %9428 = vmatpush.msra.mxu0 0.0
    %9429 = vmatpush.msra.mxu0 0.0
    %9430 = vmatpush.msra.mxu0 0.0
    %9431 = vmatpush.msra.mxu0 0.0
    %9432 = vmatpush.msra.mxu0 0.0
    %9433 = vmatpush.msra.mxu0 0.0
    %9434 = vmatpush.msra.mxu0 0.0
    %9435 = vmatpush.msra.mxu0 0.0
    %9436 = vmatpush.msra.mxu0 0.0
    %9437 = vmatpush.msra.mxu0 0.0
    %9438 = vmatpush.msra.mxu0 0.0
    %9439 = vmatpush.msra.mxu0 0.0
    %9440 = vmatpush.msra.mxu0 0.0
    %9441 = vmatpush.msra.mxu0 0.0
    %9442 = vmatpush.msra.mxu0 %v9414
    %9443 = vmatmul.f32.gmra.mxu0 %v9425
    %v9444 = vpop.f32.mrf.mxu0
    %v9445 = vadd.f32 0.0, %v9444
    %9446 = vdwg.mxu0
    %9447 = vmatpush.msra.mxu0 0.0
    %9448 = vmatpush.msra.mxu0 0.0
    %9449 = vmatpush.msra.mxu0 0.0
    %9450 = vmatpush.msra.mxu0 0.0
    %9451 = vmatpush.msra.mxu0 0.0
    %9452 = vmatpush.msra.mxu0 0.0
    %9453 = vmatpush.msra.mxu0 0.0
    %9454 = vmatpush.msra.mxu0 0.0
    %9455 = vmatpush.msra.mxu0 0.0
    %9456 = vmatpush.msra.mxu0 0.0
    %9457 = vmatpush.msra.mxu0 0.0
    %9458 = vmatpush.msra.mxu0 0.0
    %9459 = vmatpush.msra.mxu0 0.0
    %9460 = vmatpush.msra.mxu0 0.0
    %9461 = vmatpush.msra.mxu0 0.0
    %9462 = vmatpush.msra.mxu0 %v9415
    %9463 = vmatmul.f32.gmra.mxu0 %v9425
    %v9464 = vpop.f32.mrf.mxu0
    %v9465 = vadd.f32 0.0, %v9464
    %9466 = vdwg.mxu0
    %9467 = vmatpush.msra.mxu0 0.0
    %9468 = vmatpush.msra.mxu0 0.0
    %9469 = vmatpush.msra.mxu0 0.0
    %9470 = vmatpush.msra.mxu0 0.0
    %9471 = vmatpush.msra.mxu0 0.0
    %9472 = vmatpush.msra.mxu0 0.0
    %9473 = vmatpush.msra.mxu0 0.0
    %9474 = vmatpush.msra.mxu0 0.0
    %9475 = vmatpush.msra.mxu0 0.0
    %9476 = vmatpush.msra.mxu0 0.0
    %9477 = vmatpush.msra.mxu0 0.0
    %9478 = vmatpush.msra.mxu0 0.0
    %9479 = vmatpush.msra.mxu0 0.0
    %9480 = vmatpush.msra.mxu0 0.0
    %9481 = vmatpush.msra.mxu0 0.0
    %9482 = vmatpush.msra.mxu0 %v9416
    %9483 = vmatmul.f32.gmra.mxu0 %v9425
    %v9484 = vpop.f32.mrf.mxu0
    %v9485 = vadd.f32 0.0, %v9484
    %9486 = vdwg.mxu0
    %9487 = vmatpush.msra.mxu0 0.0
    %9488 = vmatpush.msra.mxu0 0.0
    %9489 = vmatpush.msra.mxu0 0.0
    %9490 = vmatpush.msra.mxu0 0.0
    %9491 = vmatpush.msra.mxu0 0.0
    %9492 = vmatpush.msra.mxu0 0.0
    %9493 = vmatpush.msra.mxu0 0.0
    %9494 = vmatpush.msra.mxu0 0.0
    %9495 = vmatpush.msra.mxu0 0.0
    %9496 = vmatpush.msra.mxu0 0.0
    %9497 = vmatpush.msra.mxu0 0.0
    %9498 = vmatpush.msra.mxu0 0.0
    %9499 = vmatpush.msra.mxu0 0.0
    %9500 = vmatpush.msra.mxu0 0.0
    %9501 = vmatpush.msra.mxu0 0.0
    %9502 = vmatpush.msra.mxu0 %v9417
    %9503 = vmatmul.f32.gmra.mxu0 %v9425
    %v9504 = vpop.f32.mrf.mxu0
    %v9505 = vadd.f32 0.0, %v9504
    %9506 = vdwg.mxu0
    %9507 = vmatpush.msra.mxu0 0.0
    %9508 = vmatpush.msra.mxu0 0.0
    %9509 = vmatpush.msra.mxu0 0.0
    %9510 = vmatpush.msra.mxu0 0.0
    %9511 = vmatpush.msra.mxu0 0.0
    %9512 = vmatpush.msra.mxu0 0.0
    %9513 = vmatpush.msra.mxu0 0.0
    %9514 = vmatpush.msra.mxu0 0.0
    %9515 = vmatpush.msra.mxu0 0.0
    %9516 = vmatpush.msra.mxu0 0.0
    %9517 = vmatpush.msra.mxu0 0.0
    %9518 = vmatpush.msra.mxu0 0.0
    %9519 = vmatpush.msra.mxu0 0.0
    %9520 = vmatpush.msra.mxu0 0.0
    %9521 = vmatpush.msra.mxu0 0.0
    %9522 = vmatpush.msra.mxu0 %v9418
    %9523 = vmatmul.f32.gmra.mxu0 %v9425
    %v9524 = vpop.f32.mrf.mxu0
    %v9525 = vadd.f32 0.0, %v9524
    %9526 = vdwg.mxu0
    %9527 = vmatpush.msra.mxu0 0.0
    %9528 = vmatpush.msra.mxu0 0.0
    %9529 = vmatpush.msra.mxu0 0.0
    %9530 = vmatpush.msra.mxu0 0.0
    %9531 = vmatpush.msra.mxu0 0.0
    %9532 = vmatpush.msra.mxu0 0.0
    %9533 = vmatpush.msra.mxu0 0.0
    %9534 = vmatpush.msra.mxu0 0.0
    %9535 = vmatpush.msra.mxu0 0.0
    %9536 = vmatpush.msra.mxu0 0.0
    %9537 = vmatpush.msra.mxu0 0.0
    %9538 = vmatpush.msra.mxu0 0.0
    %9539 = vmatpush.msra.mxu0 0.0
    %9540 = vmatpush.msra.mxu0 0.0
    %9541 = vmatpush.msra.mxu0 0.0
    %9542 = vmatpush.msra.mxu0 %v9419
    %9543 = vmatmul.f32.gmra.mxu0 %v9425
    %v9544 = vpop.f32.mrf.mxu0
    %v9545 = vadd.f32 0.0, %v9544
    %9546 = vdwg.mxu0
    %9547 = vmatpush.msra.mxu0 0.0
    %9548 = vmatpush.msra.mxu0 0.0
    %9549 = vmatpush.msra.mxu0 0.0
    %9550 = vmatpush.msra.mxu0 0.0
    %9551 = vmatpush.msra.mxu0 0.0
    %9552 = vmatpush.msra.mxu0 0.0
    %9553 = vmatpush.msra.mxu0 0.0
    %9554 = vmatpush.msra.mxu0 0.0
    %9555 = vmatpush.msra.mxu0 0.0
    %9556 = vmatpush.msra.mxu0 0.0
    %9557 = vmatpush.msra.mxu0 0.0
    %9558 = vmatpush.msra.mxu0 0.0
    %9559 = vmatpush.msra.mxu0 0.0
    %9560 = vmatpush.msra.mxu0 0.0
    %9561 = vmatpush.msra.mxu0 0.0
    %9562 = vmatpush.msra.mxu0 %v9420
    %9563 = vmatmul.f32.gmra.mxu0 %v9425
    %v9564 = vpop.f32.mrf.mxu0
    %v9565 = vadd.f32 0.0, %v9564
    %9566 = vdwg.mxu0
    %9567 = vmatpush.msra.mxu0 0.0
    %9568 = vmatpush.msra.mxu0 0.0
    %9569 = vmatpush.msra.mxu0 0.0
    %9570 = vmatpush.msra.mxu0 0.0
    %9571 = vmatpush.msra.mxu0 0.0
    %9572 = vmatpush.msra.mxu0 0.0
    %9573 = vmatpush.msra.mxu0 0.0
    %9574 = vmatpush.msra.mxu0 0.0
    %9575 = vmatpush.msra.mxu0 0.0
    %9576 = vmatpush.msra.mxu0 0.0
    %9577 = vmatpush.msra.mxu0 0.0
    %9578 = vmatpush.msra.mxu0 0.0
    %9579 = vmatpush.msra.mxu0 0.0
    %9580 = vmatpush.msra.mxu0 0.0
    %9581 = vmatpush.msra.mxu0 0.0
    %9582 = vmatpush.msra.mxu0 %v9421
    %9583 = vmatmul.f32.gmra.mxu0 %v9425
    %v9584 = vpop.f32.mrf.mxu0
    %v9585 = vadd.f32 0.0, %v9584
    %9586 = vdwg.mxu0
    %v9587 = vadd.f32 %v9406, %v9445
    %v9588 = vadd.f32 %v9407, %v9465
    %v9589 = vadd.f32 %v9408, %v9485
    %v9590 = vadd.f32 %v9409, %v9505
    %v9591 = vadd.f32 %v9410, %v9525
    %v9592 = vadd.f32 %v9411, %v9545
    %v9593 = vadd.f32 %v9412, %v9565
    %v9594 = vadd.f32 %v9413, %v9585
    %v9595 = vsel %vm4255, %v6007, 0.0
    %v9596 = vsel %vm4256, %v6006, 0.0
    %v9597 = vsel %vm4257, %v6005, 0.0
    %v9598 = vsel %vm4258, %v6004, 0.0
    %v9599 = vsel %vm4259, %v6003, 0.0
    %v9600 = vsel %vm4260, %v6002, 0.0
    %v9601 = vsel %vm4261, %v6001, 0.0
    %v9602 = vsel %vm4262, %v6008, 0.0
    %s9603 = scalar_lea.vmem %s3, 160
    %v9604 = vld [vmem:[%s9603] sm:$0xff]
    %v9606 = vsel %vm207, %v9604, 0
    %9608 = vmatpush.msra.mxu0 0.0
    %9609 = vmatpush.msra.mxu0 0.0
    %9610 = vmatpush.msra.mxu0 0.0
    %9611 = vmatpush.msra.mxu0 0.0
    %9612 = vmatpush.msra.mxu0 0.0
    %9613 = vmatpush.msra.mxu0 0.0
    %9614 = vmatpush.msra.mxu0 0.0
    %9615 = vmatpush.msra.mxu0 0.0
    %9616 = vmatpush.msra.mxu0 0.0
    %9617 = vmatpush.msra.mxu0 0.0
    %9618 = vmatpush.msra.mxu0 0.0
    %9619 = vmatpush.msra.mxu0 0.0
    %9620 = vmatpush.msra.mxu0 0.0
    %9621 = vmatpush.msra.mxu0 0.0
    %9622 = vmatpush.msra.mxu0 0.0
    %9623 = vmatpush.msra.mxu0 %v9595
    %9624 = vmatmul.f32.gmra.mxu0 %v9606
    %v9625 = vpop.f32.mrf.mxu0
    %v9626 = vadd.f32 0.0, %v9625
    %9627 = vdwg.mxu0
    %9628 = vmatpush.msra.mxu0 0.0
    %9629 = vmatpush.msra.mxu0 0.0
    %9630 = vmatpush.msra.mxu0 0.0
    %9631 = vmatpush.msra.mxu0 0.0
    %9632 = vmatpush.msra.mxu0 0.0
    %9633 = vmatpush.msra.mxu0 0.0
    %9634 = vmatpush.msra.mxu0 0.0
    %9635 = vmatpush.msra.mxu0 0.0
    %9636 = vmatpush.msra.mxu0 0.0
    %9637 = vmatpush.msra.mxu0 0.0
    %9638 = vmatpush.msra.mxu0 0.0
    %9639 = vmatpush.msra.mxu0 0.0
    %9640 = vmatpush.msra.mxu0 0.0
    %9641 = vmatpush.msra.mxu0 0.0
    %9642 = vmatpush.msra.mxu0 0.0
    %9643 = vmatpush.msra.mxu0 %v9596
    %9644 = vmatmul.f32.gmra.mxu0 %v9606
    %v9645 = vpop.f32.mrf.mxu0
    %v9646 = vadd.f32 0.0, %v9645
    %9647 = vdwg.mxu0
    %9648 = vmatpush.msra.mxu0 0.0
    %9649 = vmatpush.msra.mxu0 0.0
    %9650 = vmatpush.msra.mxu0 0.0
    %9651 = vmatpush.msra.mxu0 0.0
    %9652 = vmatpush.msra.mxu0 0.0
    %9653 = vmatpush.msra.mxu0 0.0
    %9654 = vmatpush.msra.mxu0 0.0
    %9655 = vmatpush.msra.mxu0 0.0
    %9656 = vmatpush.msra.mxu0 0.0
    %9657 = vmatpush.msra.mxu0 0.0
    %9658 = vmatpush.msra.mxu0 0.0
    %9659 = vmatpush.msra.mxu0 0.0
    %9660 = vmatpush.msra.mxu0 0.0
    %9661 = vmatpush.msra.mxu0 0.0
    %9662 = vmatpush.msra.mxu0 0.0
    %9663 = vmatpush.msra.mxu0 %v9597
    %9664 = vmatmul.f32.gmra.mxu0 %v9606
    %v9665 = vpop.f32.mrf.mxu0
    %v9666 = vadd.f32 0.0, %v9665
    %9667 = vdwg.mxu0
    %9668 = vmatpush.msra.mxu0 0.0
    %9669 = vmatpush.msra.mxu0 0.0
    %9670 = vmatpush.msra.mxu0 0.0
    %9671 = vmatpush.msra.mxu0 0.0
    %9672 = vmatpush.msra.mxu0 0.0
    %9673 = vmatpush.msra.mxu0 0.0
    %9674 = vmatpush.msra.mxu0 0.0
    %9675 = vmatpush.msra.mxu0 0.0
    %9676 = vmatpush.msra.mxu0 0.0
    %9677 = vmatpush.msra.mxu0 0.0
    %9678 = vmatpush.msra.mxu0 0.0
    %9679 = vmatpush.msra.mxu0 0.0
    %9680 = vmatpush.msra.mxu0 0.0
    %9681 = vmatpush.msra.mxu0 0.0
    %9682 = vmatpush.msra.mxu0 0.0
    %9683 = vmatpush.msra.mxu0 %v9598
    %9684 = vmatmul.f32.gmra.mxu0 %v9606
    %v9685 = vpop.f32.mrf.mxu0
    %v9686 = vadd.f32 0.0, %v9685
    %9687 = vdwg.mxu0
    %9688 = vmatpush.msra.mxu0 0.0
    %9689 = vmatpush.msra.mxu0 0.0
    %9690 = vmatpush.msra.mxu0 0.0
    %9691 = vmatpush.msra.mxu0 0.0
    %9692 = vmatpush.msra.mxu0 0.0
    %9693 = vmatpush.msra.mxu0 0.0
    %9694 = vmatpush.msra.mxu0 0.0
    %9695 = vmatpush.msra.mxu0 0.0
    %9696 = vmatpush.msra.mxu0 0.0
    %9697 = vmatpush.msra.mxu0 0.0
    %9698 = vmatpush.msra.mxu0 0.0
    %9699 = vmatpush.msra.mxu0 0.0
    %9700 = vmatpush.msra.mxu0 0.0
    %9701 = vmatpush.msra.mxu0 0.0
    %9702 = vmatpush.msra.mxu0 0.0
    %9703 = vmatpush.msra.mxu0 %v9599
    %9704 = vmatmul.f32.gmra.mxu0 %v9606
    %v9705 = vpop.f32.mrf.mxu0
    %v9706 = vadd.f32 0.0, %v9705
    %9707 = vdwg.mxu0
    %9708 = vmatpush.msra.mxu0 0.0
    %9709 = vmatpush.msra.mxu0 0.0
    %9710 = vmatpush.msra.mxu0 0.0
    %9711 = vmatpush.msra.mxu0 0.0
    %9712 = vmatpush.msra.mxu0 0.0
    %9713 = vmatpush.msra.mxu0 0.0
    %9714 = vmatpush.msra.mxu0 0.0
    %9715 = vmatpush.msra.mxu0 0.0
    %9716 = vmatpush.msra.mxu0 0.0
    %9717 = vmatpush.msra.mxu0 0.0
    %9718 = vmatpush.msra.mxu0 0.0
    %9719 = vmatpush.msra.mxu0 0.0
    %9720 = vmatpush.msra.mxu0 0.0
    %9721 = vmatpush.msra.mxu0 0.0
    %9722 = vmatpush.msra.mxu0 0.0
    %9723 = vmatpush.msra.mxu0 %v9600
    %9724 = vmatmul.f32.gmra.mxu0 %v9606
    %v9725 = vpop.f32.mrf.mxu0
    %v9726 = vadd.f32 0.0, %v9725
    %9727 = vdwg.mxu0
    %9728 = vmatpush.msra.mxu0 0.0
    %9729 = vmatpush.msra.mxu0 0.0
    %9730 = vmatpush.msra.mxu0 0.0
    %9731 = vmatpush.msra.mxu0 0.0
    %9732 = vmatpush.msra.mxu0 0.0
    %9733 = vmatpush.msra.mxu0 0.0
    %9734 = vmatpush.msra.mxu0 0.0
    %9735 = vmatpush.msra.mxu0 0.0
    %9736 = vmatpush.msra.mxu0 0.0
    %9737 = vmatpush.msra.mxu0 0.0
    %9738 = vmatpush.msra.mxu0 0.0
    %9739 = vmatpush.msra.mxu0 0.0
    %9740 = vmatpush.msra.mxu0 0.0
    %9741 = vmatpush.msra.mxu0 0.0
    %9742 = vmatpush.msra.mxu0 0.0
    %9743 = vmatpush.msra.mxu0 %v9601
    %9744 = vmatmul.f32.gmra.mxu0 %v9606
    %v9745 = vpop.f32.mrf.mxu0
    %v9746 = vadd.f32 0.0, %v9745
    %9747 = vdwg.mxu0
    %9748 = vmatpush.msra.mxu0 0.0
    %9749 = vmatpush.msra.mxu0 0.0
    %9750 = vmatpush.msra.mxu0 0.0
    %9751 = vmatpush.msra.mxu0 0.0
    %9752 = vmatpush.msra.mxu0 0.0
    %9753 = vmatpush.msra.mxu0 0.0
    %9754 = vmatpush.msra.mxu0 0.0
    %9755 = vmatpush.msra.mxu0 0.0
    %9756 = vmatpush.msra.mxu0 0.0
    %9757 = vmatpush.msra.mxu0 0.0
    %9758 = vmatpush.msra.mxu0 0.0
    %9759 = vmatpush.msra.mxu0 0.0
    %9760 = vmatpush.msra.mxu0 0.0
    %9761 = vmatpush.msra.mxu0 0.0
    %9762 = vmatpush.msra.mxu0 0.0
    %9763 = vmatpush.msra.mxu0 %v9602
    %9764 = vmatmul.f32.gmra.mxu0 %v9606
    %v9765 = vpop.f32.mrf.mxu0
    %v9766 = vadd.f32 0.0, %v9765
    %9767 = vdwg.mxu0
    %v9768 = vadd.f32 %v9587, %v9626
    %v9769 = vadd.f32 %v9588, %v9646
    %v9770 = vadd.f32 %v9589, %v9666
    %v9771 = vadd.f32 %v9590, %v9686
    %v9772 = vadd.f32 %v9591, %v9706
    %v9773 = vadd.f32 %v9592, %v9726
    %v9774 = vadd.f32 %v9593, %v9746
    %v9775 = vadd.f32 %v9594, %v9766
    %v9776 = vsel %vm4444, %v6212, 0.0
    %v9777 = vsel %vm4445, %v6211, 0.0
    %v9778 = vsel %vm4446, %v6210, 0.0
    %v9779 = vsel %vm4447, %v6209, 0.0
    %v9780 = vsel %vm4448, %v6208, 0.0
    %v9781 = vsel %vm4449, %v6207, 0.0
    %v9782 = vsel %vm4450, %v6206, 0.0
    %v9783 = vsel %vm4451, %v6213, 0.0
    %s9784 = scalar_lea.vmem %s3, 168
    %v9785 = vld [vmem:[%s9784] sm:$0xff]
    %v9787 = vsel %vm207, %v9785, 0
    %9789 = vmatpush.msra.mxu0 0.0
    %9790 = vmatpush.msra.mxu0 0.0
    %9791 = vmatpush.msra.mxu0 0.0
    %9792 = vmatpush.msra.mxu0 0.0
    %9793 = vmatpush.msra.mxu0 0.0
    %9794 = vmatpush.msra.mxu0 0.0
    %9795 = vmatpush.msra.mxu0 0.0
    %9796 = vmatpush.msra.mxu0 0.0
    %9797 = vmatpush.msra.mxu0 0.0
    %9798 = vmatpush.msra.mxu0 0.0
    %9799 = vmatpush.msra.mxu0 0.0
    %9800 = vmatpush.msra.mxu0 0.0
    %9801 = vmatpush.msra.mxu0 0.0
    %9802 = vmatpush.msra.mxu0 0.0
    %9803 = vmatpush.msra.mxu0 0.0
    %9804 = vmatpush.msra.mxu0 %v9776
    %9805 = vmatmul.f32.gmra.mxu0 %v9787
    %v9806 = vpop.f32.mrf.mxu0
    %v9807 = vadd.f32 0.0, %v9806
    %9808 = vdwg.mxu0
    %9809 = vmatpush.msra.mxu0 0.0
    %9810 = vmatpush.msra.mxu0 0.0
    %9811 = vmatpush.msra.mxu0 0.0
    %9812 = vmatpush.msra.mxu0 0.0
    %9813 = vmatpush.msra.mxu0 0.0
    %9814 = vmatpush.msra.mxu0 0.0
    %9815 = vmatpush.msra.mxu0 0.0
    %9816 = vmatpush.msra.mxu0 0.0
    %9817 = vmatpush.msra.mxu0 0.0
    %9818 = vmatpush.msra.mxu0 0.0
    %9819 = vmatpush.msra.mxu0 0.0
    %9820 = vmatpush.msra.mxu0 0.0
    %9821 = vmatpush.msra.mxu0 0.0
    %9822 = vmatpush.msra.mxu0 0.0
    %9823 = vmatpush.msra.mxu0 0.0
    %9824 = vmatpush.msra.mxu0 %v9777
    %9825 = vmatmul.f32.gmra.mxu0 %v9787
    %v9826 = vpop.f32.mrf.mxu0
    %v9827 = vadd.f32 0.0, %v9826
    %9828 = vdwg.mxu0
    %9829 = vmatpush.msra.mxu0 0.0
    %9830 = vmatpush.msra.mxu0 0.0
    %9831 = vmatpush.msra.mxu0 0.0
    %9832 = vmatpush.msra.mxu0 0.0
    %9833 = vmatpush.msra.mxu0 0.0
    %9834 = vmatpush.msra.mxu0 0.0
    %9835 = vmatpush.msra.mxu0 0.0
    %9836 = vmatpush.msra.mxu0 0.0
    %9837 = vmatpush.msra.mxu0 0.0
    %9838 = vmatpush.msra.mxu0 0.0
    %9839 = vmatpush.msra.mxu0 0.0
    %9840 = vmatpush.msra.mxu0 0.0
    %9841 = vmatpush.msra.mxu0 0.0
    %9842 = vmatpush.msra.mxu0 0.0
    %9843 = vmatpush.msra.mxu0 0.0
    %9844 = vmatpush.msra.mxu0 %v9778
    %9845 = vmatmul.f32.gmra.mxu0 %v9787
    %v9846 = vpop.f32.mrf.mxu0
    %v9847 = vadd.f32 0.0, %v9846
    %9848 = vdwg.mxu0
    %9849 = vmatpush.msra.mxu0 0.0
    %9850 = vmatpush.msra.mxu0 0.0
    %9851 = vmatpush.msra.mxu0 0.0
    %9852 = vmatpush.msra.mxu0 0.0
    %9853 = vmatpush.msra.mxu0 0.0
    %9854 = vmatpush.msra.mxu0 0.0
    %9855 = vmatpush.msra.mxu0 0.0
    %9856 = vmatpush.msra.mxu0 0.0
    %9857 = vmatpush.msra.mxu0 0.0
    %9858 = vmatpush.msra.mxu0 0.0
    %9859 = vmatpush.msra.mxu0 0.0
    %9860 = vmatpush.msra.mxu0 0.0
    %9861 = vmatpush.msra.mxu0 0.0
    %9862 = vmatpush.msra.mxu0 0.0
    %9863 = vmatpush.msra.mxu0 0.0
    %9864 = vmatpush.msra.mxu0 %v9779
    %9865 = vmatmul.f32.gmra.mxu0 %v9787
    %v9866 = vpop.f32.mrf.mxu0
    %v9867 = vadd.f32 0.0, %v9866
    %9868 = vdwg.mxu0
    %9869 = vmatpush.msra.mxu0 0.0
    %9870 = vmatpush.msra.mxu0 0.0
    %9871 = vmatpush.msra.mxu0 0.0
    %9872 = vmatpush.msra.mxu0 0.0
    %9873 = vmatpush.msra.mxu0 0.0
    %9874 = vmatpush.msra.mxu0 0.0
    %9875 = vmatpush.msra.mxu0 0.0
    %9876 = vmatpush.msra.mxu0 0.0
    %9877 = vmatpush.msra.mxu0 0.0
    %9878 = vmatpush.msra.mxu0 0.0
    %9879 = vmatpush.msra.mxu0 0.0
    %9880 = vmatpush.msra.mxu0 0.0
    %9881 = vmatpush.msra.mxu0 0.0
    %9882 = vmatpush.msra.mxu0 0.0
    %9883 = vmatpush.msra.mxu0 0.0
    %9884 = vmatpush.msra.mxu0 %v9780
    %9885 = vmatmul.f32.gmra.mxu0 %v9787
    %v9886 = vpop.f32.mrf.mxu0
    %v9887 = vadd.f32 0.0, %v9886
    %9888 = vdwg.mxu0
    %9889 = vmatpush.msra.mxu0 0.0
    %9890 = vmatpush.msra.mxu0 0.0
    %9891 = vmatpush.msra.mxu0 0.0
    %9892 = vmatpush.msra.mxu0 0.0
    %9893 = vmatpush.msra.mxu0 0.0
    %9894 = vmatpush.msra.mxu0 0.0
    %9895 = vmatpush.msra.mxu0 0.0
    %9896 = vmatpush.msra.mxu0 0.0
    %9897 = vmatpush.msra.mxu0 0.0
    %9898 = vmatpush.msra.mxu0 0.0
    %9899 = vmatpush.msra.mxu0 0.0
    %9900 = vmatpush.msra.mxu0 0.0
    %9901 = vmatpush.msra.mxu0 0.0
    %9902 = vmatpush.msra.mxu0 0.0
    %9903 = vmatpush.msra.mxu0 0.0
    %9904 = vmatpush.msra.mxu0 %v9781
    %9905 = vmatmul.f32.gmra.mxu0 %v9787
    %v9906 = vpop.f32.mrf.mxu0
    %v9907 = vadd.f32 0.0, %v9906
    %9908 = vdwg.mxu0
    %9909 = vmatpush.msra.mxu0 0.0
    %9910 = vmatpush.msra.mxu0 0.0
    %9911 = vmatpush.msra.mxu0 0.0
    %9912 = vmatpush.msra.mxu0 0.0
    %9913 = vmatpush.msra.mxu0 0.0
    %9914 = vmatpush.msra.mxu0 0.0
    %9915 = vmatpush.msra.mxu0 0.0
    %9916 = vmatpush.msra.mxu0 0.0
    %9917 = vmatpush.msra.mxu0 0.0
    %9918 = vmatpush.msra.mxu0 0.0
    %9919 = vmatpush.msra.mxu0 0.0
    %9920 = vmatpush.msra.mxu0 0.0
    %9921 = vmatpush.msra.mxu0 0.0
    %9922 = vmatpush.msra.mxu0 0.0
    %9923 = vmatpush.msra.mxu0 0.0
    %9924 = vmatpush.msra.mxu0 %v9782
    %9925 = vmatmul.f32.gmra.mxu0 %v9787
    %v9926 = vpop.f32.mrf.mxu0
    %v9927 = vadd.f32 0.0, %v9926
    %9928 = vdwg.mxu0
    %9929 = vmatpush.msra.mxu0 0.0
    %9930 = vmatpush.msra.mxu0 0.0
    %9931 = vmatpush.msra.mxu0 0.0
    %9932 = vmatpush.msra.mxu0 0.0
    %9933 = vmatpush.msra.mxu0 0.0
    %9934 = vmatpush.msra.mxu0 0.0
    %9935 = vmatpush.msra.mxu0 0.0
    %9936 = vmatpush.msra.mxu0 0.0
    %9937 = vmatpush.msra.mxu0 0.0
    %9938 = vmatpush.msra.mxu0 0.0
    %9939 = vmatpush.msra.mxu0 0.0
    %9940 = vmatpush.msra.mxu0 0.0
    %9941 = vmatpush.msra.mxu0 0.0
    %9942 = vmatpush.msra.mxu0 0.0
    %9943 = vmatpush.msra.mxu0 0.0
    %9944 = vmatpush.msra.mxu0 %v9783
    %9945 = vmatmul.f32.gmra.mxu0 %v9787
    %v9946 = vpop.f32.mrf.mxu0
    %v9947 = vadd.f32 0.0, %v9946
    %9948 = vdwg.mxu0
    %v9949 = vadd.f32 %v9768, %v9807
    %v9950 = vadd.f32 %v9769, %v9827
    %v9951 = vadd.f32 %v9770, %v9847
    %v9952 = vadd.f32 %v9771, %v9867
    %v9953 = vadd.f32 %v9772, %v9887
    %v9954 = vadd.f32 %v9773, %v9907
    %v9955 = vadd.f32 %v9774, %v9927
    %v9956 = vadd.f32 %v9775, %v9947
    %v9957 = vsel %vm82, %v6417, 0.0
    %v9958 = vsel %vm83, %v6416, 0.0
    %v9959 = vsel %vm84, %v6415, 0.0
    %v9960 = vsel %vm85, %v6414, 0.0
    %v9961 = vsel %vm86, %v6413, 0.0
    %v9962 = vsel %vm87, %v6412, 0.0
    %v9963 = vsel %vm88, %v6411, 0.0
    %v9964 = vsel %vm89, %v6418, 0.0
    %s9965 = scalar_lea.vmem %s3, 176
    %v9966 = vld [vmem:[%s9965] sm:$0xff]
    %v9968 = vsel %vm207, %v9966, 0
    %9970 = vmatpush.msra.mxu0 0.0
    %9971 = vmatpush.msra.mxu0 0.0
    %9972 = vmatpush.msra.mxu0 0.0
    %9973 = vmatpush.msra.mxu0 0.0
    %9974 = vmatpush.msra.mxu0 0.0
    %9975 = vmatpush.msra.mxu0 0.0
    %9976 = vmatpush.msra.mxu0 0.0
    %9977 = vmatpush.msra.mxu0 0.0
    %9978 = vmatpush.msra.mxu0 0.0
    %9979 = vmatpush.msra.mxu0 0.0
    %9980 = vmatpush.msra.mxu0 0.0
    %9981 = vmatpush.msra.mxu0 0.0
    %9982 = vmatpush.msra.mxu0 0.0
    %9983 = vmatpush.msra.mxu0 0.0
    %9984 = vmatpush.msra.mxu0 0.0
    %9985 = vmatpush.msra.mxu0 %v9957
    %9986 = vmatmul.f32.gmra.mxu0 %v9968
    %v9987 = vpop.f32.mrf.mxu0
    %v9988 = vadd.f32 0.0, %v9987
    %9989 = vdwg.mxu0
    %9990 = vmatpush.msra.mxu0 0.0
    %9991 = vmatpush.msra.mxu0 0.0
    %9992 = vmatpush.msra.mxu0 0.0
    %9993 = vmatpush.msra.mxu0 0.0
    %9994 = vmatpush.msra.mxu0 0.0
    %9995 = vmatpush.msra.mxu0 0.0
    %9996 = vmatpush.msra.mxu0 0.0
    %9997 = vmatpush.msra.mxu0 0.0
    %9998 = vmatpush.msra.mxu0 0.0
    %9999 = vmatpush.msra.mxu0 0.0
    %10000 = vmatpush.msra.mxu0 0.0
    %10001 = vmatpush.msra.mxu0 0.0
    %10002 = vmatpush.msra.mxu0 0.0
    %10003 = vmatpush.msra.mxu0 0.0
    %10004 = vmatpush.msra.mxu0 0.0
    %10005 = vmatpush.msra.mxu0 %v9958
    %10006 = vmatmul.f32.gmra.mxu0 %v9968
    %v10007 = vpop.f32.mrf.mxu0
    %v10008 = vadd.f32 0.0, %v10007
    %10009 = vdwg.mxu0
    %10010 = vmatpush.msra.mxu0 0.0
    %10011 = vmatpush.msra.mxu0 0.0
    %10012 = vmatpush.msra.mxu0 0.0
    %10013 = vmatpush.msra.mxu0 0.0
    %10014 = vmatpush.msra.mxu0 0.0
    %10015 = vmatpush.msra.mxu0 0.0
    %10016 = vmatpush.msra.mxu0 0.0
    %10017 = vmatpush.msra.mxu0 0.0
    %10018 = vmatpush.msra.mxu0 0.0
    %10019 = vmatpush.msra.mxu0 0.0
    %10020 = vmatpush.msra.mxu0 0.0
    %10021 = vmatpush.msra.mxu0 0.0
    %10022 = vmatpush.msra.mxu0 0.0
    %10023 = vmatpush.msra.mxu0 0.0
    %10024 = vmatpush.msra.mxu0 0.0
    %10025 = vmatpush.msra.mxu0 %v9959
    %10026 = vmatmul.f32.gmra.mxu0 %v9968
    %v10027 = vpop.f32.mrf.mxu0
    %v10028 = vadd.f32 0.0, %v10027
    %10029 = vdwg.mxu0
    %10030 = vmatpush.msra.mxu0 0.0
    %10031 = vmatpush.msra.mxu0 0.0
    %10032 = vmatpush.msra.mxu0 0.0
    %10033 = vmatpush.msra.mxu0 0.0
    %10034 = vmatpush.msra.mxu0 0.0
    %10035 = vmatpush.msra.mxu0 0.0
    %10036 = vmatpush.msra.mxu0 0.0
    %10037 = vmatpush.msra.mxu0 0.0
    %10038 = vmatpush.msra.mxu0 0.0
    %10039 = vmatpush.msra.mxu0 0.0
    %10040 = vmatpush.msra.mxu0 0.0
    %10041 = vmatpush.msra.mxu0 0.0
    %10042 = vmatpush.msra.mxu0 0.0
    %10043 = vmatpush.msra.mxu0 0.0
    %10044 = vmatpush.msra.mxu0 0.0
    %10045 = vmatpush.msra.mxu0 %v9960
    %10046 = vmatmul.f32.gmra.mxu0 %v9968
    %v10047 = vpop.f32.mrf.mxu0
    %v10048 = vadd.f32 0.0, %v10047
    %10049 = vdwg.mxu0
    %10050 = vmatpush.msra.mxu0 0.0
    %10051 = vmatpush.msra.mxu0 0.0
    %10052 = vmatpush.msra.mxu0 0.0
    %10053 = vmatpush.msra.mxu0 0.0
    %10054 = vmatpush.msra.mxu0 0.0
    %10055 = vmatpush.msra.mxu0 0.0
    %10056 = vmatpush.msra.mxu0 0.0
    %10057 = vmatpush.msra.mxu0 0.0
    %10058 = vmatpush.msra.mxu0 0.0
    %10059 = vmatpush.msra.mxu0 0.0
    %10060 = vmatpush.msra.mxu0 0.0
    %10061 = vmatpush.msra.mxu0 0.0
    %10062 = vmatpush.msra.mxu0 0.0
    %10063 = vmatpush.msra.mxu0 0.0
    %10064 = vmatpush.msra.mxu0 0.0
    %10065 = vmatpush.msra.mxu0 %v9961
    %10066 = vmatmul.f32.gmra.mxu0 %v9968
    %v10067 = vpop.f32.mrf.mxu0
    %v10068 = vadd.f32 0.0, %v10067
    %10069 = vdwg.mxu0
    %10070 = vmatpush.msra.mxu0 0.0
    %10071 = vmatpush.msra.mxu0 0.0
    %10072 = vmatpush.msra.mxu0 0.0
    %10073 = vmatpush.msra.mxu0 0.0
    %10074 = vmatpush.msra.mxu0 0.0
    %10075 = vmatpush.msra.mxu0 0.0
    %10076 = vmatpush.msra.mxu0 0.0
    %10077 = vmatpush.msra.mxu0 0.0
    %10078 = vmatpush.msra.mxu0 0.0
    %10079 = vmatpush.msra.mxu0 0.0
    %10080 = vmatpush.msra.mxu0 0.0
    %10081 = vmatpush.msra.mxu0 0.0
    %10082 = vmatpush.msra.mxu0 0.0
    %10083 = vmatpush.msra.mxu0 0.0
    %10084 = vmatpush.msra.mxu0 0.0
    %10085 = vmatpush.msra.mxu0 %v9962
    %10086 = vmatmul.f32.gmra.mxu0 %v9968
    %v10087 = vpop.f32.mrf.mxu0
    %v10088 = vadd.f32 0.0, %v10087
    %10089 = vdwg.mxu0
    %10090 = vmatpush.msra.mxu0 0.0
    %10091 = vmatpush.msra.mxu0 0.0
    %10092 = vmatpush.msra.mxu0 0.0
    %10093 = vmatpush.msra.mxu0 0.0
    %10094 = vmatpush.msra.mxu0 0.0
    %10095 = vmatpush.msra.mxu0 0.0
    %10096 = vmatpush.msra.mxu0 0.0
    %10097 = vmatpush.msra.mxu0 0.0
    %10098 = vmatpush.msra.mxu0 0.0
    %10099 = vmatpush.msra.mxu0 0.0
    %10100 = vmatpush.msra.mxu0 0.0
    %10101 = vmatpush.msra.mxu0 0.0
    %10102 = vmatpush.msra.mxu0 0.0
    %10103 = vmatpush.msra.mxu0 0.0
    %10104 = vmatpush.msra.mxu0 0.0
    %10105 = vmatpush.msra.mxu0 %v9963
    %10106 = vmatmul.f32.gmra.mxu0 %v9968
    %v10107 = vpop.f32.mrf.mxu0
    %v10108 = vadd.f32 0.0, %v10107
    %10109 = vdwg.mxu0
    %10110 = vmatpush.msra.mxu0 0.0
    %10111 = vmatpush.msra.mxu0 0.0
    %10112 = vmatpush.msra.mxu0 0.0
    %10113 = vmatpush.msra.mxu0 0.0
    %10114 = vmatpush.msra.mxu0 0.0
    %10115 = vmatpush.msra.mxu0 0.0
    %10116 = vmatpush.msra.mxu0 0.0
    %10117 = vmatpush.msra.mxu0 0.0
    %10118 = vmatpush.msra.mxu0 0.0
    %10119 = vmatpush.msra.mxu0 0.0
    %10120 = vmatpush.msra.mxu0 0.0
    %10121 = vmatpush.msra.mxu0 0.0
    %10122 = vmatpush.msra.mxu0 0.0
    %10123 = vmatpush.msra.mxu0 0.0
    %10124 = vmatpush.msra.mxu0 0.0
    %10125 = vmatpush.msra.mxu0 %v9964
    %10126 = vmatmul.f32.gmra.mxu0 %v9968
    %v10127 = vpop.f32.mrf.mxu0
    %v10128 = vadd.f32 0.0, %v10127
    %10129 = vdwg.mxu0
    %v10130 = vadd.f32 %v9949, %v9988
    %v10131 = vadd.f32 %v9950, %v10008
    %v10132 = vadd.f32 %v9951, %v10028
    %v10133 = vadd.f32 %v9952, %v10048
    %v10134 = vadd.f32 %v9953, %v10068
    %v10135 = vadd.f32 %v9954, %v10088
    %v10136 = vadd.f32 %v9955, %v10108
    %v10137 = vadd.f32 %v9956, %v10128
    %v10138 = vsel %vm4814, %v6622, 0.0
    %v10139 = vsel %vm4815, %v6621, 0.0
    %v10140 = vsel %vm4816, %v6620, 0.0
    %v10141 = vsel %vm4817, %v6619, 0.0
    %v10142 = vsel %vm4818, %v6618, 0.0
    %v10143 = vsel %vm4819, %v6617, 0.0
    %v10144 = vsel %vm4820, %v6616, 0.0
    %v10145 = vsel %vm4821, %v6623, 0.0
    %s10146 = scalar_lea.vmem %s3, 184
    %v10147 = vld [vmem:[%s10146] sm:$0xff]
    %v10149 = vsel %vm207, %v10147, 0
    %10151 = vmatpush.msra.mxu0 0.0
    %10152 = vmatpush.msra.mxu0 0.0
    %10153 = vmatpush.msra.mxu0 0.0
    %10154 = vmatpush.msra.mxu0 0.0
    %10155 = vmatpush.msra.mxu0 0.0
    %10156 = vmatpush.msra.mxu0 0.0
    %10157 = vmatpush.msra.mxu0 0.0
    %10158 = vmatpush.msra.mxu0 0.0
    %10159 = vmatpush.msra.mxu0 0.0
    %10160 = vmatpush.msra.mxu0 0.0
    %10161 = vmatpush.msra.mxu0 0.0
    %10162 = vmatpush.msra.mxu0 0.0
    %10163 = vmatpush.msra.mxu0 0.0
    %10164 = vmatpush.msra.mxu0 0.0
    %10165 = vmatpush.msra.mxu0 0.0
    %10166 = vmatpush.msra.mxu0 %v10138
    %10167 = vmatmul.f32.gmra.mxu0 %v10149
    %v10168 = vpop.f32.mrf.mxu0
    %v10169 = vadd.f32 0.0, %v10168
    %10170 = vdwg.mxu0
    %10171 = vmatpush.msra.mxu0 0.0
    %10172 = vmatpush.msra.mxu0 0.0
    %10173 = vmatpush.msra.mxu0 0.0
    %10174 = vmatpush.msra.mxu0 0.0
    %10175 = vmatpush.msra.mxu0 0.0
    %10176 = vmatpush.msra.mxu0 0.0
    %10177 = vmatpush.msra.mxu0 0.0
    %10178 = vmatpush.msra.mxu0 0.0
    %10179 = vmatpush.msra.mxu0 0.0
    %10180 = vmatpush.msra.mxu0 0.0
    %10181 = vmatpush.msra.mxu0 0.0
    %10182 = vmatpush.msra.mxu0 0.0
    %10183 = vmatpush.msra.mxu0 0.0
    %10184 = vmatpush.msra.mxu0 0.0
    %10185 = vmatpush.msra.mxu0 0.0
    %10186 = vmatpush.msra.mxu0 %v10139
    %10187 = vmatmul.f32.gmra.mxu0 %v10149
    %v10188 = vpop.f32.mrf.mxu0
    %v10189 = vadd.f32 0.0, %v10188
    %10190 = vdwg.mxu0
    %10191 = vmatpush.msra.mxu0 0.0
    %10192 = vmatpush.msra.mxu0 0.0
    %10193 = vmatpush.msra.mxu0 0.0
    %10194 = vmatpush.msra.mxu0 0.0
    %10195 = vmatpush.msra.mxu0 0.0
    %10196 = vmatpush.msra.mxu0 0.0
    %10197 = vmatpush.msra.mxu0 0.0
    %10198 = vmatpush.msra.mxu0 0.0
    %10199 = vmatpush.msra.mxu0 0.0
    %10200 = vmatpush.msra.mxu0 0.0
    %10201 = vmatpush.msra.mxu0 0.0
    %10202 = vmatpush.msra.mxu0 0.0
    %10203 = vmatpush.msra.mxu0 0.0
    %10204 = vmatpush.msra.mxu0 0.0
    %10205 = vmatpush.msra.mxu0 0.0
    %10206 = vmatpush.msra.mxu0 %v10140
    %10207 = vmatmul.f32.gmra.mxu0 %v10149
    %v10208 = vpop.f32.mrf.mxu0
    %v10209 = vadd.f32 0.0, %v10208
    %10210 = vdwg.mxu0
    %10211 = vmatpush.msra.mxu0 0.0
    %10212 = vmatpush.msra.mxu0 0.0
    %10213 = vmatpush.msra.mxu0 0.0
    %10214 = vmatpush.msra.mxu0 0.0
    %10215 = vmatpush.msra.mxu0 0.0
    %10216 = vmatpush.msra.mxu0 0.0
    %10217 = vmatpush.msra.mxu0 0.0
    %10218 = vmatpush.msra.mxu0 0.0
    %10219 = vmatpush.msra.mxu0 0.0
    %10220 = vmatpush.msra.mxu0 0.0
    %10221 = vmatpush.msra.mxu0 0.0
    %10222 = vmatpush.msra.mxu0 0.0
    %10223 = vmatpush.msra.mxu0 0.0
    %10224 = vmatpush.msra.mxu0 0.0
    %10225 = vmatpush.msra.mxu0 0.0
    %10226 = vmatpush.msra.mxu0 %v10141
    %10227 = vmatmul.f32.gmra.mxu0 %v10149
    %v10228 = vpop.f32.mrf.mxu0
    %v10229 = vadd.f32 0.0, %v10228
    %10230 = vdwg.mxu0
    %10231 = vmatpush.msra.mxu0 0.0
    %10232 = vmatpush.msra.mxu0 0.0
    %10233 = vmatpush.msra.mxu0 0.0
    %10234 = vmatpush.msra.mxu0 0.0
    %10235 = vmatpush.msra.mxu0 0.0
    %10236 = vmatpush.msra.mxu0 0.0
    %10237 = vmatpush.msra.mxu0 0.0
    %10238 = vmatpush.msra.mxu0 0.0
    %10239 = vmatpush.msra.mxu0 0.0
    %10240 = vmatpush.msra.mxu0 0.0
    %10241 = vmatpush.msra.mxu0 0.0
    %10242 = vmatpush.msra.mxu0 0.0
    %10243 = vmatpush.msra.mxu0 0.0
    %10244 = vmatpush.msra.mxu0 0.0
    %10245 = vmatpush.msra.mxu0 0.0
    %10246 = vmatpush.msra.mxu0 %v10142
    %10247 = vmatmul.f32.gmra.mxu0 %v10149
    %v10248 = vpop.f32.mrf.mxu0
    %v10249 = vadd.f32 0.0, %v10248
    %10250 = vdwg.mxu0
    %10251 = vmatpush.msra.mxu0 0.0
    %10252 = vmatpush.msra.mxu0 0.0
    %10253 = vmatpush.msra.mxu0 0.0
    %10254 = vmatpush.msra.mxu0 0.0
    %10255 = vmatpush.msra.mxu0 0.0
    %10256 = vmatpush.msra.mxu0 0.0
    %10257 = vmatpush.msra.mxu0 0.0
    %10258 = vmatpush.msra.mxu0 0.0
    %10259 = vmatpush.msra.mxu0 0.0
    %10260 = vmatpush.msra.mxu0 0.0
    %10261 = vmatpush.msra.mxu0 0.0
    %10262 = vmatpush.msra.mxu0 0.0
    %10263 = vmatpush.msra.mxu0 0.0
    %10264 = vmatpush.msra.mxu0 0.0
    %10265 = vmatpush.msra.mxu0 0.0
    %10266 = vmatpush.msra.mxu0 %v10143
    %10267 = vmatmul.f32.gmra.mxu0 %v10149
    %v10268 = vpop.f32.mrf.mxu0
    %v10269 = vadd.f32 0.0, %v10268
    %10270 = vdwg.mxu0
    %10271 = vmatpush.msra.mxu0 0.0
    %10272 = vmatpush.msra.mxu0 0.0
    %10273 = vmatpush.msra.mxu0 0.0
    %10274 = vmatpush.msra.mxu0 0.0
    %10275 = vmatpush.msra.mxu0 0.0
    %10276 = vmatpush.msra.mxu0 0.0
    %10277 = vmatpush.msra.mxu0 0.0
    %10278 = vmatpush.msra.mxu0 0.0
    %10279 = vmatpush.msra.mxu0 0.0
    %10280 = vmatpush.msra.mxu0 0.0
    %10281 = vmatpush.msra.mxu0 0.0
    %10282 = vmatpush.msra.mxu0 0.0
    %10283 = vmatpush.msra.mxu0 0.0
    %10284 = vmatpush.msra.mxu0 0.0
    %10285 = vmatpush.msra.mxu0 0.0
    %10286 = vmatpush.msra.mxu0 %v10144
    %10287 = vmatmul.f32.gmra.mxu0 %v10149
    %v10288 = vpop.f32.mrf.mxu0
    %v10289 = vadd.f32 0.0, %v10288
    %10290 = vdwg.mxu0
    %10291 = vmatpush.msra.mxu0 0.0
    %10292 = vmatpush.msra.mxu0 0.0
    %10293 = vmatpush.msra.mxu0 0.0
    %10294 = vmatpush.msra.mxu0 0.0
    %10295 = vmatpush.msra.mxu0 0.0
    %10296 = vmatpush.msra.mxu0 0.0
    %10297 = vmatpush.msra.mxu0 0.0
    %10298 = vmatpush.msra.mxu0 0.0
    %10299 = vmatpush.msra.mxu0 0.0
    %10300 = vmatpush.msra.mxu0 0.0
    %10301 = vmatpush.msra.mxu0 0.0
    %10302 = vmatpush.msra.mxu0 0.0
    %10303 = vmatpush.msra.mxu0 0.0
    %10304 = vmatpush.msra.mxu0 0.0
    %10305 = vmatpush.msra.mxu0 0.0
    %10306 = vmatpush.msra.mxu0 %v10145
    %10307 = vmatmul.f32.gmra.mxu0 %v10149
    %v10308 = vpop.f32.mrf.mxu0
    %v10309 = vadd.f32 0.0, %v10308
    %10310 = vdwg.mxu0
    %v10311 = vadd.f32 %v10130, %v10169
    %v10312 = vadd.f32 %v10131, %v10189
    %v10313 = vadd.f32 %v10132, %v10209
    %v10314 = vadd.f32 %v10133, %v10229
    %v10315 = vadd.f32 %v10134, %v10249
    %v10316 = vadd.f32 %v10135, %v10269
    %v10317 = vadd.f32 %v10136, %v10289
    %v10318 = vadd.f32 %v10137, %v10309
    %v10319 = vsel %vm5011, %v6827, 0.0
    %v10320 = vsel %vm5012, %v6826, 0.0
    %v10321 = vsel %vm5013, %v6825, 0.0
    %v10322 = vsel %vm5014, %v6824, 0.0
    %v10323 = vsel %vm5015, %v6823, 0.0
    %v10324 = vsel %vm5016, %v6822, 0.0
    %v10325 = vsel %vm5017, %v6821, 0.0
    %v10326 = vsel %vm5018, %v6828, 0.0
    %s10327 = scalar_lea.vmem %s3, 192
    %v10328 = vld [vmem:[%s10327] sm:$0xff]
    %v10330 = vsel %vm207, %v10328, 0
    %10332 = vmatpush.msra.mxu0 0.0
    %10333 = vmatpush.msra.mxu0 0.0
    %10334 = vmatpush.msra.mxu0 0.0
    %10335 = vmatpush.msra.mxu0 0.0
    %10336 = vmatpush.msra.mxu0 0.0
    %10337 = vmatpush.msra.mxu0 0.0
    %10338 = vmatpush.msra.mxu0 0.0
    %10339 = vmatpush.msra.mxu0 0.0
    %10340 = vmatpush.msra.mxu0 0.0
    %10341 = vmatpush.msra.mxu0 0.0
    %10342 = vmatpush.msra.mxu0 0.0
    %10343 = vmatpush.msra.mxu0 0.0
    %10344 = vmatpush.msra.mxu0 0.0
    %10345 = vmatpush.msra.mxu0 0.0
    %10346 = vmatpush.msra.mxu0 0.0
    %10347 = vmatpush.msra.mxu0 %v10319
    %10348 = vmatmul.f32.gmra.mxu0 %v10330
    %v10349 = vpop.f32.mrf.mxu0
    %v10350 = vadd.f32 0.0, %v10349
    %10351 = vdwg.mxu0
    %10352 = vmatpush.msra.mxu0 0.0
    %10353 = vmatpush.msra.mxu0 0.0
    %10354 = vmatpush.msra.mxu0 0.0
    %10355 = vmatpush.msra.mxu0 0.0
    %10356 = vmatpush.msra.mxu0 0.0
    %10357 = vmatpush.msra.mxu0 0.0
    %10358 = vmatpush.msra.mxu0 0.0
    %10359 = vmatpush.msra.mxu0 0.0
    %10360 = vmatpush.msra.mxu0 0.0
    %10361 = vmatpush.msra.mxu0 0.0
    %10362 = vmatpush.msra.mxu0 0.0
    %10363 = vmatpush.msra.mxu0 0.0
    %10364 = vmatpush.msra.mxu0 0.0
    %10365 = vmatpush.msra.mxu0 0.0
    %10366 = vmatpush.msra.mxu0 0.0
    %10367 = vmatpush.msra.mxu0 %v10320
    %10368 = vmatmul.f32.gmra.mxu0 %v10330
    %v10369 = vpop.f32.mrf.mxu0
    %v10370 = vadd.f32 0.0, %v10369
    %10371 = vdwg.mxu0
    %10372 = vmatpush.msra.mxu0 0.0
    %10373 = vmatpush.msra.mxu0 0.0
    %10374 = vmatpush.msra.mxu0 0.0
    %10375 = vmatpush.msra.mxu0 0.0
    %10376 = vmatpush.msra.mxu0 0.0
    %10377 = vmatpush.msra.mxu0 0.0
    %10378 = vmatpush.msra.mxu0 0.0
    %10379 = vmatpush.msra.mxu0 0.0
    %10380 = vmatpush.msra.mxu0 0.0
    %10381 = vmatpush.msra.mxu0 0.0
    %10382 = vmatpush.msra.mxu0 0.0
    %10383 = vmatpush.msra.mxu0 0.0
    %10384 = vmatpush.msra.mxu0 0.0
    %10385 = vmatpush.msra.mxu0 0.0
    %10386 = vmatpush.msra.mxu0 0.0
    %10387 = vmatpush.msra.mxu0 %v10321
    %10388 = vmatmul.f32.gmra.mxu0 %v10330
    %v10389 = vpop.f32.mrf.mxu0
    %v10390 = vadd.f32 0.0, %v10389
    %10391 = vdwg.mxu0
    %10392 = vmatpush.msra.mxu0 0.0
    %10393 = vmatpush.msra.mxu0 0.0
    %10394 = vmatpush.msra.mxu0 0.0
    %10395 = vmatpush.msra.mxu0 0.0
    %10396 = vmatpush.msra.mxu0 0.0
    %10397 = vmatpush.msra.mxu0 0.0
    %10398 = vmatpush.msra.mxu0 0.0
    %10399 = vmatpush.msra.mxu0 0.0
    %10400 = vmatpush.msra.mxu0 0.0
    %10401 = vmatpush.msra.mxu0 0.0
    %10402 = vmatpush.msra.mxu0 0.0
    %10403 = vmatpush.msra.mxu0 0.0
    %10404 = vmatpush.msra.mxu0 0.0
    %10405 = vmatpush.msra.mxu0 0.0
    %10406 = vmatpush.msra.mxu0 0.0
    %10407 = vmatpush.msra.mxu0 %v10322
    %10408 = vmatmul.f32.gmra.mxu0 %v10330
    %v10409 = vpop.f32.mrf.mxu0
    %v10410 = vadd.f32 0.0, %v10409
    %10411 = vdwg.mxu0
    %10412 = vmatpush.msra.mxu0 0.0
    %10413 = vmatpush.msra.mxu0 0.0
    %10414 = vmatpush.msra.mxu0 0.0
    %10415 = vmatpush.msra.mxu0 0.0
    %10416 = vmatpush.msra.mxu0 0.0
    %10417 = vmatpush.msra.mxu0 0.0
    %10418 = vmatpush.msra.mxu0 0.0
    %10419 = vmatpush.msra.mxu0 0.0
    %10420 = vmatpush.msra.mxu0 0.0
    %10421 = vmatpush.msra.mxu0 0.0
    %10422 = vmatpush.msra.mxu0 0.0
    %10423 = vmatpush.msra.mxu0 0.0
    %10424 = vmatpush.msra.mxu0 0.0
    %10425 = vmatpush.msra.mxu0 0.0
    %10426 = vmatpush.msra.mxu0 0.0
    %10427 = vmatpush.msra.mxu0 %v10323
    %10428 = vmatmul.f32.gmra.mxu0 %v10330
    %v10429 = vpop.f32.mrf.mxu0
    %v10430 = vadd.f32 0.0, %v10429
    %10431 = vdwg.mxu0
    %10432 = vmatpush.msra.mxu0 0.0
    %10433 = vmatpush.msra.mxu0 0.0
    %10434 = vmatpush.msra.mxu0 0.0
    %10435 = vmatpush.msra.mxu0 0.0
    %10436 = vmatpush.msra.mxu0 0.0
    %10437 = vmatpush.msra.mxu0 0.0
    %10438 = vmatpush.msra.mxu0 0.0
    %10439 = vmatpush.msra.mxu0 0.0
    %10440 = vmatpush.msra.mxu0 0.0
    %10441 = vmatpush.msra.mxu0 0.0
    %10442 = vmatpush.msra.mxu0 0.0
    %10443 = vmatpush.msra.mxu0 0.0
    %10444 = vmatpush.msra.mxu0 0.0
    %10445 = vmatpush.msra.mxu0 0.0
    %10446 = vmatpush.msra.mxu0 0.0
    %10447 = vmatpush.msra.mxu0 %v10324
    %10448 = vmatmul.f32.gmra.mxu0 %v10330
    %v10449 = vpop.f32.mrf.mxu0
    %v10450 = vadd.f32 0.0, %v10449
    %10451 = vdwg.mxu0
    %10452 = vmatpush.msra.mxu0 0.0
    %10453 = vmatpush.msra.mxu0 0.0
    %10454 = vmatpush.msra.mxu0 0.0
    %10455 = vmatpush.msra.mxu0 0.0
    %10456 = vmatpush.msra.mxu0 0.0
    %10457 = vmatpush.msra.mxu0 0.0
    %10458 = vmatpush.msra.mxu0 0.0
    %10459 = vmatpush.msra.mxu0 0.0
    %10460 = vmatpush.msra.mxu0 0.0
    %10461 = vmatpush.msra.mxu0 0.0
    %10462 = vmatpush.msra.mxu0 0.0
    %10463 = vmatpush.msra.mxu0 0.0
    %10464 = vmatpush.msra.mxu0 0.0
    %10465 = vmatpush.msra.mxu0 0.0
    %10466 = vmatpush.msra.mxu0 0.0
    %10467 = vmatpush.msra.mxu0 %v10325
    %10468 = vmatmul.f32.gmra.mxu0 %v10330
    %v10469 = vpop.f32.mrf.mxu0
    %v10470 = vadd.f32 0.0, %v10469
    %10471 = vdwg.mxu0
    %10472 = vmatpush.msra.mxu0 0.0
    %10473 = vmatpush.msra.mxu0 0.0
    %10474 = vmatpush.msra.mxu0 0.0
    %10475 = vmatpush.msra.mxu0 0.0
    %10476 = vmatpush.msra.mxu0 0.0
    %10477 = vmatpush.msra.mxu0 0.0
    %10478 = vmatpush.msra.mxu0 0.0
    %10479 = vmatpush.msra.mxu0 0.0
    %10480 = vmatpush.msra.mxu0 0.0
    %10481 = vmatpush.msra.mxu0 0.0
    %10482 = vmatpush.msra.mxu0 0.0
    %10483 = vmatpush.msra.mxu0 0.0
    %10484 = vmatpush.msra.mxu0 0.0
    %10485 = vmatpush.msra.mxu0 0.0
    %10486 = vmatpush.msra.mxu0 0.0
    %10487 = vmatpush.msra.mxu0 %v10326
    %10488 = vmatmul.f32.gmra.mxu0 %v10330
    %v10489 = vpop.f32.mrf.mxu0
    %v10490 = vadd.f32 0.0, %v10489
    %10491 = vdwg.mxu0
    %v10492 = vadd.f32 %v10311, %v10350
    %v10493 = vadd.f32 %v10312, %v10370
    %v10494 = vadd.f32 %v10313, %v10390
    %v10495 = vadd.f32 %v10314, %v10410
    %v10496 = vadd.f32 %v10315, %v10430
    %v10497 = vadd.f32 %v10316, %v10450
    %v10498 = vadd.f32 %v10317, %v10470
    %v10499 = vadd.f32 %v10318, %v10490
    %v10500 = vsel %vm5003, %v7032, 0.0
    %v10501 = vsel %vm5004, %v7031, 0.0
    %v10502 = vsel %vm5005, %v7030, 0.0
    %v10503 = vsel %vm5006, %v7029, 0.0
    %v10504 = vsel %vm5007, %v7028, 0.0
    %v10505 = vsel %vm5008, %v7027, 0.0
    %v10506 = vsel %vm5009, %v7026, 0.0
    %v10507 = vsel %vm5010, %v7033, 0.0
    %s10508 = scalar_lea.vmem %s3, 200
    %v10509 = vld [vmem:[%s10508] sm:$0xff]
    %v10511 = vsel %vm207, %v10509, 0
    %10513 = vmatpush.msra.mxu0 0.0
    %10514 = vmatpush.msra.mxu0 0.0
    %10515 = vmatpush.msra.mxu0 0.0
    %10516 = vmatpush.msra.mxu0 0.0
    %10517 = vmatpush.msra.mxu0 0.0
    %10518 = vmatpush.msra.mxu0 0.0
    %10519 = vmatpush.msra.mxu0 0.0
    %10520 = vmatpush.msra.mxu0 0.0
    %10521 = vmatpush.msra.mxu0 0.0
    %10522 = vmatpush.msra.mxu0 0.0
    %10523 = vmatpush.msra.mxu0 0.0
    %10524 = vmatpush.msra.mxu0 0.0
    %10525 = vmatpush.msra.mxu0 0.0
    %10526 = vmatpush.msra.mxu0 0.0
    %10527 = vmatpush.msra.mxu0 0.0
    %10528 = vmatpush.msra.mxu0 %v10500
    %10529 = vmatmul.f32.gmra.mxu0 %v10511
    %v10530 = vpop.f32.mrf.mxu0
    %v10531 = vadd.f32 0.0, %v10530
    %10532 = vdwg.mxu0
    %10533 = vmatpush.msra.mxu0 0.0
    %10534 = vmatpush.msra.mxu0 0.0
    %10535 = vmatpush.msra.mxu0 0.0
    %10536 = vmatpush.msra.mxu0 0.0
    %10537 = vmatpush.msra.mxu0 0.0
    %10538 = vmatpush.msra.mxu0 0.0
    %10539 = vmatpush.msra.mxu0 0.0
    %10540 = vmatpush.msra.mxu0 0.0
    %10541 = vmatpush.msra.mxu0 0.0
    %10542 = vmatpush.msra.mxu0 0.0
    %10543 = vmatpush.msra.mxu0 0.0
    %10544 = vmatpush.msra.mxu0 0.0
    %10545 = vmatpush.msra.mxu0 0.0
    %10546 = vmatpush.msra.mxu0 0.0
    %10547 = vmatpush.msra.mxu0 0.0
    %10548 = vmatpush.msra.mxu0 %v10501
    %10549 = vmatmul.f32.gmra.mxu0 %v10511
    %v10550 = vpop.f32.mrf.mxu0
    %v10551 = vadd.f32 0.0, %v10550
    %10552 = vdwg.mxu0
    %10553 = vmatpush.msra.mxu0 0.0
    %10554 = vmatpush.msra.mxu0 0.0
    %10555 = vmatpush.msra.mxu0 0.0
    %10556 = vmatpush.msra.mxu0 0.0
    %10557 = vmatpush.msra.mxu0 0.0
    %10558 = vmatpush.msra.mxu0 0.0
    %10559 = vmatpush.msra.mxu0 0.0
    %10560 = vmatpush.msra.mxu0 0.0
    %10561 = vmatpush.msra.mxu0 0.0
    %10562 = vmatpush.msra.mxu0 0.0
    %10563 = vmatpush.msra.mxu0 0.0
    %10564 = vmatpush.msra.mxu0 0.0
    %10565 = vmatpush.msra.mxu0 0.0
    %10566 = vmatpush.msra.mxu0 0.0
    %10567 = vmatpush.msra.mxu0 0.0
    %10568 = vmatpush.msra.mxu0 %v10502
    %10569 = vmatmul.f32.gmra.mxu0 %v10511
    %v10570 = vpop.f32.mrf.mxu0
    %v10571 = vadd.f32 0.0, %v10570
    %10572 = vdwg.mxu0
    %10573 = vmatpush.msra.mxu0 0.0
    %10574 = vmatpush.msra.mxu0 0.0
    %10575 = vmatpush.msra.mxu0 0.0
    %10576 = vmatpush.msra.mxu0 0.0
    %10577 = vmatpush.msra.mxu0 0.0
    %10578 = vmatpush.msra.mxu0 0.0
    %10579 = vmatpush.msra.mxu0 0.0
    %10580 = vmatpush.msra.mxu0 0.0
    %10581 = vmatpush.msra.mxu0 0.0
    %10582 = vmatpush.msra.mxu0 0.0
    %10583 = vmatpush.msra.mxu0 0.0
    %10584 = vmatpush.msra.mxu0 0.0
    %10585 = vmatpush.msra.mxu0 0.0
    %10586 = vmatpush.msra.mxu0 0.0
    %10587 = vmatpush.msra.mxu0 0.0
    %10588 = vmatpush.msra.mxu0 %v10503
    %10589 = vmatmul.f32.gmra.mxu0 %v10511
    %v10590 = vpop.f32.mrf.mxu0
    %v10591 = vadd.f32 0.0, %v10590
    %10592 = vdwg.mxu0
    %10593 = vmatpush.msra.mxu0 0.0
    %10594 = vmatpush.msra.mxu0 0.0
    %10595 = vmatpush.msra.mxu0 0.0
    %10596 = vmatpush.msra.mxu0 0.0
    %10597 = vmatpush.msra.mxu0 0.0
    %10598 = vmatpush.msra.mxu0 0.0
    %10599 = vmatpush.msra.mxu0 0.0
    %10600 = vmatpush.msra.mxu0 0.0
    %10601 = vmatpush.msra.mxu0 0.0
    %10602 = vmatpush.msra.mxu0 0.0
    %10603 = vmatpush.msra.mxu0 0.0
    %10604 = vmatpush.msra.mxu0 0.0
    %10605 = vmatpush.msra.mxu0 0.0
    %10606 = vmatpush.msra.mxu0 0.0
    %10607 = vmatpush.msra.mxu0 0.0
    %10608 = vmatpush.msra.mxu0 %v10504
    %10609 = vmatmul.f32.gmra.mxu0 %v10511
    %v10610 = vpop.f32.mrf.mxu0
    %v10611 = vadd.f32 0.0, %v10610
    %10612 = vdwg.mxu0
    %10613 = vmatpush.msra.mxu0 0.0
    %10614 = vmatpush.msra.mxu0 0.0
    %10615 = vmatpush.msra.mxu0 0.0
    %10616 = vmatpush.msra.mxu0 0.0
    %10617 = vmatpush.msra.mxu0 0.0
    %10618 = vmatpush.msra.mxu0 0.0
    %10619 = vmatpush.msra.mxu0 0.0
    %10620 = vmatpush.msra.mxu0 0.0
    %10621 = vmatpush.msra.mxu0 0.0
    %10622 = vmatpush.msra.mxu0 0.0
    %10623 = vmatpush.msra.mxu0 0.0
    %10624 = vmatpush.msra.mxu0 0.0
    %10625 = vmatpush.msra.mxu0 0.0
    %10626 = vmatpush.msra.mxu0 0.0
    %10627 = vmatpush.msra.mxu0 0.0
    %10628 = vmatpush.msra.mxu0 %v10505
    %10629 = vmatmul.f32.gmra.mxu0 %v10511
    %v10630 = vpop.f32.mrf.mxu0
    %v10631 = vadd.f32 0.0, %v10630
    %10632 = vdwg.mxu0
    %10633 = vmatpush.msra.mxu0 0.0
    %10634 = vmatpush.msra.mxu0 0.0
    %10635 = vmatpush.msra.mxu0 0.0
    %10636 = vmatpush.msra.mxu0 0.0
    %10637 = vmatpush.msra.mxu0 0.0
    %10638 = vmatpush.msra.mxu0 0.0
    %10639 = vmatpush.msra.mxu0 0.0
    %10640 = vmatpush.msra.mxu0 0.0
    %10641 = vmatpush.msra.mxu0 0.0
    %10642 = vmatpush.msra.mxu0 0.0
    %10643 = vmatpush.msra.mxu0 0.0
    %10644 = vmatpush.msra.mxu0 0.0
    %10645 = vmatpush.msra.mxu0 0.0
    %10646 = vmatpush.msra.mxu0 0.0
    %10647 = vmatpush.msra.mxu0 0.0
    %10648 = vmatpush.msra.mxu0 %v10506
    %10649 = vmatmul.f32.gmra.mxu0 %v10511
    %v10650 = vpop.f32.mrf.mxu0
    %v10651 = vadd.f32 0.0, %v10650
    %10652 = vdwg.mxu0
    %10653 = vmatpush.msra.mxu0 0.0
    %10654 = vmatpush.msra.mxu0 0.0
    %10655 = vmatpush.msra.mxu0 0.0
    %10656 = vmatpush.msra.mxu0 0.0
    %10657 = vmatpush.msra.mxu0 0.0
    %10658 = vmatpush.msra.mxu0 0.0
    %10659 = vmatpush.msra.mxu0 0.0
    %10660 = vmatpush.msra.mxu0 0.0
    %10661 = vmatpush.msra.mxu0 0.0
    %10662 = vmatpush.msra.mxu0 0.0
    %10663 = vmatpush.msra.mxu0 0.0
    %10664 = vmatpush.msra.mxu0 0.0
    %10665 = vmatpush.msra.mxu0 0.0
    %10666 = vmatpush.msra.mxu0 0.0
    %10667 = vmatpush.msra.mxu0 0.0
    %10668 = vmatpush.msra.mxu0 %v10507
    %10669 = vmatmul.f32.gmra.mxu0 %v10511
    %v10670 = vpop.f32.mrf.mxu0
    %v10671 = vadd.f32 0.0, %v10670
    %10672 = vdwg.mxu0
    %v10673 = vadd.f32 %v10492, %v10531
    %v10674 = vadd.f32 %v10493, %v10551
    %v10675 = vadd.f32 %v10494, %v10571
    %v10676 = vadd.f32 %v10495, %v10591
    %v10677 = vadd.f32 %v10496, %v10611
    %v10678 = vadd.f32 %v10497, %v10631
    %v10679 = vadd.f32 %v10498, %v10651
    %v10680 = vadd.f32 %v10499, %v10671
    %v10681 = vsel %vm5381, %v7237, 0.0
    %v10682 = vsel %vm5382, %v7236, 0.0
    %v10683 = vsel %vm5383, %v7235, 0.0
    %v10684 = vsel %vm5384, %v7234, 0.0
    %v10685 = vsel %vm5385, %v7233, 0.0
    %v10686 = vsel %vm5386, %v7232, 0.0
    %v10687 = vsel %vm5387, %v7231, 0.0
    %v10688 = vsel %vm5388, %v7238, 0.0
    %s10689 = scalar_lea.vmem %s3, 208
    %v10690 = vld [vmem:[%s10689] sm:$0xff]
    %v10692 = vsel %vm207, %v10690, 0
    %10694 = vmatpush.msra.mxu0 0.0
    %10695 = vmatpush.msra.mxu0 0.0
    %10696 = vmatpush.msra.mxu0 0.0
    %10697 = vmatpush.msra.mxu0 0.0
    %10698 = vmatpush.msra.mxu0 0.0
    %10699 = vmatpush.msra.mxu0 0.0
    %10700 = vmatpush.msra.mxu0 0.0
    %10701 = vmatpush.msra.mxu0 0.0
    %10702 = vmatpush.msra.mxu0 0.0
    %10703 = vmatpush.msra.mxu0 0.0
    %10704 = vmatpush.msra.mxu0 0.0
    %10705 = vmatpush.msra.mxu0 0.0
    %10706 = vmatpush.msra.mxu0 0.0
    %10707 = vmatpush.msra.mxu0 0.0
    %10708 = vmatpush.msra.mxu0 0.0
    %10709 = vmatpush.msra.mxu0 %v10681
    %10710 = vmatmul.f32.gmra.mxu0 %v10692
    %v10711 = vpop.f32.mrf.mxu0
    %v10712 = vadd.f32 0.0, %v10711
    %10713 = vdwg.mxu0
    %10714 = vmatpush.msra.mxu0 0.0
    %10715 = vmatpush.msra.mxu0 0.0
    %10716 = vmatpush.msra.mxu0 0.0
    %10717 = vmatpush.msra.mxu0 0.0
    %10718 = vmatpush.msra.mxu0 0.0
    %10719 = vmatpush.msra.mxu0 0.0
    %10720 = vmatpush.msra.mxu0 0.0
    %10721 = vmatpush.msra.mxu0 0.0
    %10722 = vmatpush.msra.mxu0 0.0
    %10723 = vmatpush.msra.mxu0 0.0
    %10724 = vmatpush.msra.mxu0 0.0
    %10725 = vmatpush.msra.mxu0 0.0
    %10726 = vmatpush.msra.mxu0 0.0
    %10727 = vmatpush.msra.mxu0 0.0
    %10728 = vmatpush.msra.mxu0 0.0
    %10729 = vmatpush.msra.mxu0 %v10682
    %10730 = vmatmul.f32.gmra.mxu0 %v10692
    %v10731 = vpop.f32.mrf.mxu0
    %v10732 = vadd.f32 0.0, %v10731
    %10733 = vdwg.mxu0
    %10734 = vmatpush.msra.mxu0 0.0
    %10735 = vmatpush.msra.mxu0 0.0
    %10736 = vmatpush.msra.mxu0 0.0
    %10737 = vmatpush.msra.mxu0 0.0
    %10738 = vmatpush.msra.mxu0 0.0
    %10739 = vmatpush.msra.mxu0 0.0
    %10740 = vmatpush.msra.mxu0 0.0
    %10741 = vmatpush.msra.mxu0 0.0
    %10742 = vmatpush.msra.mxu0 0.0
    %10743 = vmatpush.msra.mxu0 0.0
    %10744 = vmatpush.msra.mxu0 0.0
    %10745 = vmatpush.msra.mxu0 0.0
    %10746 = vmatpush.msra.mxu0 0.0
    %10747 = vmatpush.msra.mxu0 0.0
    %10748 = vmatpush.msra.mxu0 0.0
    %10749 = vmatpush.msra.mxu0 %v10683
    %10750 = vmatmul.f32.gmra.mxu0 %v10692
    %v10751 = vpop.f32.mrf.mxu0
    %v10752 = vadd.f32 0.0, %v10751
    %10753 = vdwg.mxu0
    %10754 = vmatpush.msra.mxu0 0.0
    %10755 = vmatpush.msra.mxu0 0.0
    %10756 = vmatpush.msra.mxu0 0.0
    %10757 = vmatpush.msra.mxu0 0.0
    %10758 = vmatpush.msra.mxu0 0.0
    %10759 = vmatpush.msra.mxu0 0.0
    %10760 = vmatpush.msra.mxu0 0.0
    %10761 = vmatpush.msra.mxu0 0.0
    %10762 = vmatpush.msra.mxu0 0.0
    %10763 = vmatpush.msra.mxu0 0.0
    %10764 = vmatpush.msra.mxu0 0.0
    %10765 = vmatpush.msra.mxu0 0.0
    %10766 = vmatpush.msra.mxu0 0.0
    %10767 = vmatpush.msra.mxu0 0.0
    %10768 = vmatpush.msra.mxu0 0.0
    %10769 = vmatpush.msra.mxu0 %v10684
    %10770 = vmatmul.f32.gmra.mxu0 %v10692
    %v10771 = vpop.f32.mrf.mxu0
    %v10772 = vadd.f32 0.0, %v10771
    %10773 = vdwg.mxu0
    %10774 = vmatpush.msra.mxu0 0.0
    %10775 = vmatpush.msra.mxu0 0.0
    %10776 = vmatpush.msra.mxu0 0.0
    %10777 = vmatpush.msra.mxu0 0.0
    %10778 = vmatpush.msra.mxu0 0.0
    %10779 = vmatpush.msra.mxu0 0.0
    %10780 = vmatpush.msra.mxu0 0.0
    %10781 = vmatpush.msra.mxu0 0.0
    %10782 = vmatpush.msra.mxu0 0.0
    %10783 = vmatpush.msra.mxu0 0.0
    %10784 = vmatpush.msra.mxu0 0.0
    %10785 = vmatpush.msra.mxu0 0.0
    %10786 = vmatpush.msra.mxu0 0.0
    %10787 = vmatpush.msra.mxu0 0.0
    %10788 = vmatpush.msra.mxu0 0.0
    %10789 = vmatpush.msra.mxu0 %v10685
    %10790 = vmatmul.f32.gmra.mxu0 %v10692
    %v10791 = vpop.f32.mrf.mxu0
    %v10792 = vadd.f32 0.0, %v10791
    %10793 = vdwg.mxu0
    %10794 = vmatpush.msra.mxu0 0.0
    %10795 = vmatpush.msra.mxu0 0.0
    %10796 = vmatpush.msra.mxu0 0.0
    %10797 = vmatpush.msra.mxu0 0.0
    %10798 = vmatpush.msra.mxu0 0.0
    %10799 = vmatpush.msra.mxu0 0.0
    %10800 = vmatpush.msra.mxu0 0.0
    %10801 = vmatpush.msra.mxu0 0.0
    %10802 = vmatpush.msra.mxu0 0.0
    %10803 = vmatpush.msra.mxu0 0.0
    %10804 = vmatpush.msra.mxu0 0.0
    %10805 = vmatpush.msra.mxu0 0.0
    %10806 = vmatpush.msra.mxu0 0.0
    %10807 = vmatpush.msra.mxu0 0.0
    %10808 = vmatpush.msra.mxu0 0.0
    %10809 = vmatpush.msra.mxu0 %v10686
    %10810 = vmatmul.f32.gmra.mxu0 %v10692
    %v10811 = vpop.f32.mrf.mxu0
    %v10812 = vadd.f32 0.0, %v10811
    %10813 = vdwg.mxu0
    %10814 = vmatpush.msra.mxu0 0.0
    %10815 = vmatpush.msra.mxu0 0.0
    %10816 = vmatpush.msra.mxu0 0.0
    %10817 = vmatpush.msra.mxu0 0.0
    %10818 = vmatpush.msra.mxu0 0.0
    %10819 = vmatpush.msra.mxu0 0.0
    %10820 = vmatpush.msra.mxu0 0.0
    %10821 = vmatpush.msra.mxu0 0.0
    %10822 = vmatpush.msra.mxu0 0.0
    %10823 = vmatpush.msra.mxu0 0.0
    %10824 = vmatpush.msra.mxu0 0.0
    %10825 = vmatpush.msra.mxu0 0.0
    %10826 = vmatpush.msra.mxu0 0.0
    %10827 = vmatpush.msra.mxu0 0.0
    %10828 = vmatpush.msra.mxu0 0.0
    %10829 = vmatpush.msra.mxu0 %v10687
    %10830 = vmatmul.f32.gmra.mxu0 %v10692
    %v10831 = vpop.f32.mrf.mxu0
    %v10832 = vadd.f32 0.0, %v10831
    %10833 = vdwg.mxu0
    %10834 = vmatpush.msra.mxu0 0.0
    %10835 = vmatpush.msra.mxu0 0.0
    %10836 = vmatpush.msra.mxu0 0.0
    %10837 = vmatpush.msra.mxu0 0.0
    %10838 = vmatpush.msra.mxu0 0.0
    %10839 = vmatpush.msra.mxu0 0.0
    %10840 = vmatpush.msra.mxu0 0.0
    %10841 = vmatpush.msra.mxu0 0.0
    %10842 = vmatpush.msra.mxu0 0.0
    %10843 = vmatpush.msra.mxu0 0.0
    %10844 = vmatpush.msra.mxu0 0.0
    %10845 = vmatpush.msra.mxu0 0.0
    %10846 = vmatpush.msra.mxu0 0.0
    %10847 = vmatpush.msra.mxu0 0.0
    %10848 = vmatpush.msra.mxu0 0.0
    %10849 = vmatpush.msra.mxu0 %v10688
    %10850 = vmatmul.f32.gmra.mxu0 %v10692
    %v10851 = vpop.f32.mrf.mxu0
    %v10852 = vadd.f32 0.0, %v10851
    %10853 = vdwg.mxu0
    %v10854 = vadd.f32 %v10673, %v10712
    %v10855 = vadd.f32 %v10674, %v10732
    %v10856 = vadd.f32 %v10675, %v10752
    %v10857 = vadd.f32 %v10676, %v10772
    %v10858 = vadd.f32 %v10677, %v10792
    %v10859 = vadd.f32 %v10678, %v10812
    %v10860 = vadd.f32 %v10679, %v10832
    %v10861 = vadd.f32 %v10680, %v10852
    %v10862 = vld [vmem:[%s4] sm:$0xff]
    %10864 = vset.pattern.permute.xlu0 0
    %10865 = vperm.xlu0 %10864, %v10862
    %v10866 = vpop.permute.xlu0 %10865
    %v10868 = vadd.f32 %v10854, %v10866
    %v10869 = vadd.f32 %v10855, %v10866
    %v10870 = vadd.f32 %v10856, %v10866
    %v10871 = vadd.f32 %v10857, %v10866
    %v10872 = vadd.f32 %v10858, %v10866
    %v10873 = vadd.f32 %v10859, %v10866
    %v10874 = vadd.f32 %v10860, %v10866
    %v10875 = vadd.f32 %v10861, %v10866
    %s10876 = sld [smem:[#allocation2]]
    %s10877 = smul.f32 %s10876, 0.001
    %v10878 = vstv %s10877
    %v10879 = vmul.f32 %v10878, %v10868
    %v10880 = vmul.f32 %v10878, %v10869
    %v10881 = vmul.f32 %v10878, %v10870
    %v10882 = vmul.f32 %v10878, %v10871
    %v10883 = vmul.f32 %v10878, %v10872
    %v10884 = vmul.f32 %v10878, %v10873
    %v10885 = vmul.f32 %v10878, %v10874
    %v10886 = vmul.f32 %v10878, %v10875
    %v10887 = vadd.f32 %v10879, %v66
    %v10888 = vadd.f32 %v10880, %v67
    %v10889 = vadd.f32 %v10881, %v68
    %v10890 = vadd.f32 %v10882, %v69
    %v10891 = vadd.f32 %v10883, %v70
    %v10892 = vadd.f32 %v10884, %v71
    %v10893 = vadd.f32 %v10885, %v72
    %v10894 = vadd.f32 %v10886, %v73
    %10895 = vst [vmem:[#allocation3] sm:$0xff] %v10887
    %10896 = vst [vmem:[#allocation3 + $0x8] sm:$0xff] %v10888
    %10897 = vst [vmem:[#allocation3 + $0x10] sm:$0xff] %v10889
    %10898 = vst [vmem:[#allocation3 + $0x18] sm:$0xff] %v10890
    %10899 = vst [vmem:[#allocation3 + $0x20] sm:$0xff] %v10891
    %10900 = vst [vmem:[#allocation3 + $0x28] sm:$0xff] %v10892
    %10901 = vst [vmem:[#allocation3 + $0x30] sm:$0xff] %v10893
    %10902 = vst [vmem:[#allocation3 + $0x38] sm:$0xff] %v10894
    // Predicated region
    $region26: #{tpu_custom_call.1} parent=1 // pred_check
      _
    $region27: #{tpu_custom_call.1} parent=1 // pred_check_branch
      %10904 = sbr.rel (0) target = $region29
    $region28: #{tpu_custom_call.1} parent=1 // pred_region
      %10906 = vsyncadd [#allocation4], 0
      %s10908 = sshll.u32 [#allocation3], 4
      %s10909 = int_to_ptr.vmem [resolvable:$true] %s10908
      %s10910 = sshll.u32 %s6, 4
      %s10911 = int_to_ptr.hbm [resolvable:$true] %s10910
      %10913 = dma.vmem_to_hbm [thread:$0]  %s10909, 1024, %s10911, [#allocation4]
    $region29: #{tpu_custom_call.1} parent=1 // pred_fallthru
      _
    // Predicated region
    $region30: #{tpu_custom_call.1} parent=1 // pred_check
      _
    $region31: #{tpu_custom_call.1} parent=1 // pred_check_branch
      %10915 = sbr.rel (0) target = $region33
    $region32: #{tpu_custom_call.1} parent=1 // pred_region
      %10917 = dma.done [#allocation4], 1024
    $region33: #{tpu_custom_call.1} parent=1 // pred_fallthru
      _
    %10918 = vsyncpa [#allocation4], 1

</llo_original>
